<compile_context>
chip_gen: v7x
topology: tpu7x:2x2x1
jax: 0.10.0
libtpu: 0.0.40
codegen_flags: <defaults>
</compile_context>

<pallas_src>
import functools

import jax
import jax.numpy as jnp
from jax import lax
from jax.experimental import pallas as pl
from jax.experimental.pallas import tpu as pltpu

BN_EPS = 1e-5
LANE = 128


def _round_up(x, m):
    return (x + m - 1) // m * m


def _fold_bn(bn):
    gamma, beta, rmean, rvar = bn
    scale = gamma / jnp.sqrt(rvar + BN_EPS)
    return scale, beta - rmean * scale


# --------------------------------------------------------------------------
# Fused basic-block kernel (NB images per grid step)
# --------------------------------------------------------------------------
def _make_block_kernel(*, NB, M, Mo, Wp, Wo, img_rows, rows_scr, stride,
                       has_projection):
    """Activations are flattened row-major (H, W) slabs with row stride Wp and
    a lane-dense (multiple-of-128) channel dim.  Each 3x3 conv is ONE MXU
    matmul with the 9 taps concatenated along K."""

    def kernel(*refs):
        if has_projection:
            (x_ref, w1_ref, b1_ref, w2_ref, b2_ref,
             wsc_ref, bsc_ref, o_ref, scr) = refs
        else:
            (x_ref, w1_ref, b1_ref, w2_ref, b2_ref, o_ref, scr) = refs

        # Zero the out1 scratch (incl. halo rows) EVERY grid step: the batch
        # axis is "parallel", so the grid may be sharded across TensorCores and
        # a once-per-call init is not safe.  Cheap VPU stores, hidden under MXU.
        scr[...] = jnp.zeros_like(scr)

        # 1.0 on valid output columns, 0.0 on the Wp-Wo overhang columns per
        # row; once stored into the scratch the zeroed overhang doubles as
        # conv2's left/right zero padding.
        col = lax.broadcasted_iota(jnp.int32, (M, 1), 0) % Wp
        mask = (col < Wo).astype(jnp.float32)

        for img in range(NB):
            x0 = img * img_rows          # this image's base row in the x block
            s0 = img * rows_scr          # ... in the out1 scratch
            o0 = img * Mo                # ... in the output block

            def x_rows(off, x0=x0):
                # rows {x0 + off + stride*t : t in [0, M)} of the padded image
                if stride == 1:
                    return x_ref[x0 + off:x0 + off + M, :]
                return x_ref[pl.ds(x0 + off, M, stride=stride), :]

            # ---- conv1 (3x3, `stride`) + folded bn1 + relu: one matmul ------
            lhs1 = jnp.concatenate(
                [x_rows(kh * Wp + kw) for kh in range(3) for kw in range(3)],
                axis=1)
            acc1 = jnp.dot(lhs1, w1_ref[...],
                           preferred_element_type=jnp.float32)
            out1 = jnp.maximum(acc1 + b1_ref[...], 0.0) * mask
            scr[s0 + Wp + 1:s0 + Wp + 1 + M, :] = out1.astype(scr.dtype)

            # ---- shortcut: 1x1 conv + folded bn, or identity ----------------
            centre = x_rows(Wp + 1)
            if has_projection:
                res = jnp.dot(centre, wsc_ref[...],
                              preferred_element_type=jnp.float32) + bsc_ref[...]
            else:
                res = centre.astype(jnp.float32)

            # ---- conv2 (3x3, stride 1) + folded bn2 + add + relu ------------
            lhs2 = jnp.concatenate(
                [scr[s0 + kh * Wp + kw:s0 + kh * Wp + kw + M, :]
                 for kh in range(3) for kw in range(3)], axis=1)
            acc2 = jnp.dot(lhs2, w2_ref[...],
                           preferred_element_type=jnp.float32)
            o_ref[o0:o0 + M, :] = jnp.maximum(
                acc2 + b2_ref[...] + res, 0.0).astype(o_ref.dtype)
            if Mo > M:  # zero the 8-row alignment tail (sliced off in wrapper)
                o_ref[o0 + M:o0 + Mo, :] = jnp.zeros(
                    (Mo - M, o_ref.shape[-1]), o_ref.dtype)

    return kernel


# --------------------------------------------------------------------------
# ModifiedBasicBlock forward (NHWC activations, HWIO weights)
# --------------------------------------------------------------------------
def modified_basic_block(x, params, stride=1, nb=None):
    """x: (B, H, W, Cin) float32 NHWC. Returns (B, Ho, Wo, planes) float32."""
    w1, bn1, w2, bn2, wsc, bnsc = params
    B, H, W, Cin = x.shape
    planes = w1.shape[-1]
    Ho = (H - 1) // stride + 1
    Wo = (W - 1) // stride + 1
    Wp = W + 2                        # flat row stride of the 1-px padded image
    pad_bottom = stride * Ho + 2 - H  # slack so every tap read stays in-image
    Hp = H + 1 + pad_bottom
    while (Hp * Wp) % 8:              # keep per-image row count 8-aligned
        Hp += 1
        pad_bottom += 1
    img_rows = Hp * Wp
    M = Ho * Wp                       # matmul rows (Wo valid + overhang / row)
    Mo = _round_up(M, 8)              # 8-aligned output rows per image
    rows_scr = (Ho + 3) * Wp          # out1 scratch rows per image (with halo)
    Ci = _round_up(Cin, LANE)         # lane-dense channel dims
    Co = _round_up(planes, LANE)
    has_projection = (stride != 1) or (Cin != planes)

    # Fold eval-mode BatchNorm into the conv weights; pad channels to 128 and
    # pre-stack the 9 taps along K so each conv is a single (.., 9*C)x(9*C, C)
    # matmul in the kernel.
    s1, c1 = _fold_bn(bn1)
    s2, c2 = _fold_bn(bn2)
    w1f = jnp.zeros((9, Ci, Co), jnp.float32)
    w1f = w1f.at[:, :Cin, :planes].set((w1 * s1).reshape(9, Cin, planes))
    w1f = w1f.reshape(9 * Ci, Co).astype(jnp.bfloat16)
    w2f = jnp.zeros((9, Co, Co), jnp.float32)
    w2f = w2f.at[:, :planes, :planes].set((w2 * s2).reshape(9, planes, planes))
    w2f = w2f.reshape(9 * Co, Co).astype(jnp.bfloat16)
    b1 = jnp.zeros((1, Co), jnp.float32).at[0, :planes].set(c1)
    b2 = jnp.zeros((1, Co), jnp.float32).at[0, :planes].set(c2)

    # Wrapper-side prep: 1-px halo + bottom slack, bf16 cast, lane padding,
    # free reshape to the flat (rows, channels) layout.
    xpad = jnp.pad(x.astype(jnp.bfloat16),
                   ((0, 0), (1, pad_bottom), (1, 1), (0, Ci - Cin)))
    x2 = xpad.reshape(B * img_rows, Ci)

    # Pick how many images to process per grid step against a VMEM budget
    # (conservative: double-buffered blocks + scratch + K-concat temporaries).
    per_img = (2 * img_rows * Ci * 2 + 2 * Mo * Co * 4 + rows_scr * Co * 2
               + M * 9 * Ci * 2 + M * 9 * Co * 2 + 3 * M * Co * 4)
    fixed = 2 * (9 * Ci * Co + 9 * Co * Co + Ci * Co + 3 * Co) * 2 + (2 << 20)
    if nb is None:
        nb = 1
        for cand in range(1, B + 1):
            if B % cand == 0 and fixed + cand * per_img <= (24 << 20):
                nb = cand
    assert B % nb == 0

    args = [x2, w1f, b1, w2f, b2]
    in_specs = [
        pl.BlockSpec((nb * img_rows, Ci), lambda b: (b, 0)),
        pl.BlockSpec((9 * Ci, Co), lambda b: (0, 0)),
        pl.BlockSpec((1, Co), lambda b: (0, 0)),
        pl.BlockSpec((9 * Co, Co), lambda b: (0, 0)),
        pl.BlockSpec((1, Co), lambda b: (0, 0)),
    ]
    if has_projection:
        ssc, csc = _fold_bn(bnsc)
        wscf = jnp.zeros((Ci, Co), jnp.float32)
        wscf = wscf.at[:Cin, :planes].set(wsc.reshape(Cin, planes) * ssc)
        wscf = wscf.astype(jnp.bfloat16)
        bsc = jnp.zeros((1, Co), jnp.float32).at[0, :planes].set(csc)
        args += [wscf, bsc]
        in_specs += [pl.BlockSpec((Ci, Co), lambda b: (0, 0)),
                     pl.BlockSpec((1, Co), lambda b: (0, 0))]

    out_flat = pl.pallas_call(
        _make_block_kernel(NB=nb, M=M, Mo=Mo, Wp=Wp, Wo=Wo, img_rows=img_rows,
                           rows_scr=rows_scr, stride=stride,
                           has_projection=has_projection),
        out_shape=jax.ShapeDtypeStruct((B * Mo, Co), jnp.float32),
        grid=(B // nb,),
        in_specs=in_specs,
        out_specs=pl.BlockSpec((nb * Mo, Co), lambda b: (b, 0)),
        scratch_shapes=[pltpu.VMEM((nb * rows_scr, Co), jnp.bfloat16)],
        compiler_params=pltpu.CompilerParams(
            dimension_semantics=("parallel",),
            vmem_limit_bytes=32 * 1024 * 1024),
    )(*args)

    # One wrapper slice removes both the per-row overhang columns and the
    # 128-lane channel padding (the channel slice is needed anyway).
    out = out_flat.reshape(B, Mo, Co)[:, :M, :].reshape(B, Ho, Wp, Co)
    return out[:, :, :Wo, :planes]


# --------------------------------------------------------------------------
# Pure-JAX references for verification
# --------------------------------------------------------------------------
def reference_block(x, params, stride=1):
    """Pure-f32 lax reference of the PyTorch module (eval-mode BN)."""
    w1, bn1, w2, bn2, wsc, bnsc = params

    def conv(a, w, s, pad):
        return lax.conv_general_dilated(
            a, w, (s, s), pad, dimension_numbers=("NHWC", "HWIO", "NHWC"),
            precision=lax.Precision.HIGHEST)

    def bn(a, p):
        g, b, m, v = p
        return (a - m) * (g / jnp.sqrt(v + BN_EPS)) + b

    out = jax.nn.relu(bn(conv(x, w1, stride, ((1, 1), (1, 1))), bn1))
    out = bn(conv(out, w2, 1, ((1, 1), (1, 1))), bn2)
    if stride != 1 or x.shape[-1] != w1.shape[-1]:
        sc = bn(conv(x, wsc, stride, ((0, 0), (0, 0))), bnsc)
    else:
        sc = x
    return jax.nn.relu(out + sc)


def reference_block_bf16(x, params, stride=1):
    """lax reference with the kernel's exact numerics (folded BN, bf16 matmul
    operands, f32 accumulation) -- isolates kernel correctness from rounding."""
    w1, bn1, w2, bn2, wsc, bnsc = params
    Cin, planes = x.shape[-1], w1.shape[-1]

    def conv(a, w, s, pad):
        return lax.conv_general_dilated(
            a, w, (s, s), pad, dimension_numbers=("NHWC", "HWIO", "NHWC"),
            preferred_element_type=jnp.float32)

    s1, c1 = _fold_bn(bn1)
    s2, c2 = _fold_bn(bn2)
    xb = x.astype(jnp.bfloat16)
    out1 = jax.nn.relu(conv(xb, (w1 * s1).astype(jnp.bfloat16), stride,
                            ((1, 1), (1, 1))) + c1)
    out2 = conv(out1.astype(jnp.bfloat16), (w2 * s2).astype(jnp.bfloat16), 1,
                ((1, 1), (1, 1))) + c2
    if stride != 1 or Cin != planes:
        ssc, csc = _fold_bn(bnsc)
        sc = conv(xb, (wsc * ssc).astype(jnp.bfloat16), stride,
                  ((0, 0), (0, 0))) + csc
    else:
        sc = xb.astype(jnp.float32)
    return jax.nn.relu(out2 + sc)


# --------------------------------------------------------------------------
# Deterministic synthetic parameters (matching the module's shapes)
# --------------------------------------------------------------------------
def init_params(key, in_planes, planes):
    ks = jax.random.split(key, 6)

    def bn_params(k):
        k1, k2, k3, k4 = jax.random.split(k, 4)
        gamma = jax.random.uniform(k1, (planes,), jnp.float32, 0.5, 1.5)
        beta = 0.1 * jax.random.normal(k2, (planes,), jnp.float32)
        rmean = 0.1 * jax.random.normal(k3, (planes,), jnp.float32)
        rvar = jax.random.uniform(k4, (planes,), jnp.float32, 0.5, 1.5)
        return (gamma, beta, rmean, rvar)

    w1 = 0.1 * jax.random.normal(ks[0], (3, 3, in_planes, planes), jnp.float32)
    w2 = 0.1 * jax.random.normal(ks[1], (3, 3, planes, planes), jnp.float32)
    wsc = 0.1 * jax.random.normal(ks[2], (1, 1, in_planes, planes), jnp.float32)
    return (w1, bn_params(ks[3]), w2, bn_params(ks[4]), wsc, bn_params(ks[5]))


if __name__ == "__main__":
    root = jax.random.PRNGKey(0)

    def run_case(case_id, in_planes, planes, stride, batch=2, nb=None):
        kx, kp = jax.random.split(jax.random.fold_in(root, case_id))
        H = W = 16
        x_nchw = jax.random.normal(kx, (batch, in_planes, H, W), jnp.float32)
        x = jnp.transpose(x_nchw, (0, 2, 3, 1))     # PyTorch NCHW -> NHWC
        params = init_params(kp, in_planes, planes)

        run = jax.jit(functools.partial(modified_basic_block,
                                        stride=stride, nb=nb))
        out = jax.block_until_ready(run(x, params))

        ref_bf16 = reference_block_bf16(x, params, stride=stride)
        ref_f32 = reference_block(x, params, stride=stride)
        assert out.shape == ref_f32.shape, (out.shape, ref_f32.shape)

        # Tight check vs. a reference with identical numerics (bf16 operands,
        # f32 accumulation): validates the Pallas kernel itself.
        err = float(jnp.max(jnp.abs(out - ref_bf16)))
        assert err < 5e-3, f"case {case_id}: kernel vs bf16 reference: {err}"

        # Loose check vs. pure-f32 module semantics (slack for bf16 rounding).
        ok = bool(jnp.allclose(out, ref_f32, atol=1e-1, rtol=1e-1))
        assert ok, (f"case {case_id}: drift vs f32 reference: "
                    f"{float(jnp.max(jnp.abs(out - ref_f32)))}")

    run_case(0, 4, 8, 1)                   # projection shortcut (Cin != planes)
    run_case(1, 8, 8, 1, batch=4, nb=2)    # identity shortcut, 2 grid steps
    run_case(2, 4, 8, 2)                   # stride-2 projection path
    print("KERNEL_OK")
</pallas_src>

<mosaic_0001>
module attributes {stable_mosaic.version = 11 : i64} {
  func.func @kernel(%arg0: i32, %arg1: memref<720x128xbf16, #tpu.memory_space<vmem>>, %arg2: memref<1152x128xbf16, #tpu.memory_space<vmem>>, %arg3: memref<1x128xf32, #tpu.memory_space<vmem>>, %arg4: memref<1152x128xbf16, #tpu.memory_space<vmem>>, %arg5: memref<1x128xf32, #tpu.memory_space<vmem>>, %arg6: memref<128x128xbf16, #tpu.memory_space<vmem>>, %arg7: memref<1x128xf32, #tpu.memory_space<vmem>>, %arg8: memref<576x128xf32, #tpu.memory_space<vmem>>, %arg9: memref<684x128xbf16, #tpu.memory_space<vmem>>) attributes {dimension_semantics = [#tpu.dimension_semantics<parallel>], iteration_bounds = array<i64: 1>, scalar_prefetch = 0 : i64, scratch_operands = 1 : i64, tpu.core_type = #tpu.core_type<tc>, window_params = [{transform_indices = @transform_0, window_bounds = array<i64: 720, 128>}, {pipeline_mode = #tpu.pipeline_mode<synchronous>, transform_indices = @transform_1, window_bounds = array<i64: 1152, 128>}, {pipeline_mode = #tpu.pipeline_mode<synchronous>, transform_indices = @transform_2, window_bounds = array<i64: 1, 128>}, {pipeline_mode = #tpu.pipeline_mode<synchronous>, transform_indices = @transform_3, window_bounds = array<i64: 1152, 128>}, {pipeline_mode = #tpu.pipeline_mode<synchronous>, transform_indices = @transform_4, window_bounds = array<i64: 1, 128>}, {pipeline_mode = #tpu.pipeline_mode<synchronous>, transform_indices = @transform_5, window_bounds = array<i64: 128, 128>}, {pipeline_mode = #tpu.pipeline_mode<synchronous>, transform_indices = @transform_6, window_bounds = array<i64: 1, 128>}, {transform_indices = @transform_7, window_bounds = array<i64: 576, 128>}]} {
    %cst = arith.constant 0.000000e+00 : bf16
    %0 = vector.broadcast %cst : bf16 to vector<684x128xbf16>
    %c0 = arith.constant 0 : index
    %c0_0 = arith.constant 0 : index
    %1 = vector.load %arg9[%c0, %c0_0] : memref<684x128xbf16, #tpu.memory_space<vmem>>, vector<684x128xbf16>
    tpu.vector_store %arg9[%c0, %c0_0], %0 {strides = array<i32>} : memref<684x128xbf16, #tpu.memory_space<vmem>>, vector<684x128xbf16>,
    %2 = tpu.iota {dimensions = array<i32: 0>} : vector<288x1xi32>
    %c18_i32 = arith.constant 18 : i32
    %c0_i32 = arith.constant 0 : i32
    %3 = arith.cmpi eq, %c18_i32, %c0_i32 : i32
    %c1_i32 = arith.constant 1 : i32
    %4 = arith.select %3, %c1_i32, %c18_i32 : i32
    %5 = vector.broadcast %4 : i32 to vector<288x1xi32>
    %6 = arith.remsi %2, %5 : vector<288x1xi32>
    %c0_i32_1 = arith.constant 0 : i32
    %7 = vector.broadcast %c0_i32_1 : i32 to vector<288x1xi32>
    %8 = arith.cmpi ne, %6, %7 : vector<288x1xi32>
    %c0_i32_2 = arith.constant 0 : i32
    %9 = vector.broadcast %c0_i32_2 : i32 to vector<288x1xi32>
    %10 = arith.cmpi slt, %6, %9 : vector<288x1xi32>
    %c0_i32_3 = arith.constant 0 : i32
    %11 = arith.cmpi slt, %4, %c0_i32_3 : i32
    %12 = vector.broadcast %11 : i1 to vector<288x1xi1>
    %13 = vector.broadcast %12 : vector<288x1xi1> to vector<288x1xi1>
    %14 = arith.xori %10, %13 : vector<288x1xi1>
    %15 = arith.andi %14, %8 : vector<288x1xi1>
    %16 = vector.broadcast %4 : i32 to vector<288x1xi32>
    %17 = arith.addi %6, %16 : vector<288x1xi32>
    %18 = arith.select %15, %17, %6 : vector<288x1xi1>, vector<288x1xi32>
    %c16_i32 = arith.constant 16 : i32
    %19 = vector.broadcast %c16_i32 : i32 to vector<288x1xi32>
    %20 = arith.cmpi slt, %18, %19 : vector<288x1xi32>
    %21 = arith.extui %20 : vector<288x1xi1> to vector<288x1xi32>
    %22 = arith.sitofp %21 : vector<288x1xi32> to vector<288x1xf32>
    %c0_4 = arith.constant 0 : index
    %c0_5 = arith.constant 0 : index
    %23 = vector.load %arg1[%c0_4, %c0_5] : memref<720x128xbf16, #tpu.memory_space<vmem>>, vector<288x128xbf16>
    %c1 = arith.constant 1 : index
    %c0_6 = arith.constant 0 : index
    %24 = vector.load %arg1[%c1, %c0_6] : memref<720x128xbf16, #tpu.memory_space<vmem>>, vector<288x128xbf16>
    %c2 = arith.constant 2 : index
    %c0_7 = arith.constant 0 : index
    %25 = vector.load %arg1[%c2, %c0_7] : memref<720x128xbf16, #tpu.memory_space<vmem>>, vector<288x128xbf16>
    %c18 = arith.constant 18 : index
    %c0_8 = arith.constant 0 : index
    %26 = vector.load %arg1[%c18, %c0_8] : memref<720x128xbf16, #tpu.memory_space<vmem>>, vector<288x128xbf16>
    %c19 = arith.constant 19 : index
    %c0_9 = arith.constant 0 : index
    %27 = vector.load %arg1[%c19, %c0_9] : memref<720x128xbf16, #tpu.memory_space<vmem>>, vector<288x128xbf16>
    %c20 = arith.constant 20 : index
    %c0_10 = arith.constant 0 : index
    %28 = vector.load %arg1[%c20, %c0_10] : memref<720x128xbf16, #tpu.memory_space<vmem>>, vector<288x128xbf16>
    %c36 = arith.constant 36 : index
    %c0_11 = arith.constant 0 : index
    %29 = vector.load %arg1[%c36, %c0_11] : memref<720x128xbf16, #tpu.memory_space<vmem>>, vector<288x128xbf16>
    %c37 = arith.constant 37 : index
    %c0_12 = arith.constant 0 : index
    %30 = vector.load %arg1[%c37, %c0_12] : memref<720x128xbf16, #tpu.memory_space<vmem>>, vector<288x128xbf16>
    %c38 = arith.constant 38 : index
    %c0_13 = arith.constant 0 : index
    %31 = vector.load %arg1[%c38, %c0_13] : memref<720x128xbf16, #tpu.memory_space<vmem>>, vector<288x128xbf16>
    %32 = tpu.concatenate %23, %24, %25, %26, %27, %28, %29, %30, %31 in 1 : vector<288x128xbf16>, vector<288x128xbf16>, vector<288x128xbf16>, vector<288x128xbf16>, vector<288x128xbf16>, vector<288x128xbf16>, vector<288x128xbf16>, vector<288x128xbf16>, vector<288x128xbf16> -> vector<288x1152xbf16>
    %c0_14 = arith.constant 0 : index
    %c0_15 = arith.constant 0 : index
    %33 = vector.load %arg2[%c0_14, %c0_15] : memref<1152x128xbf16, #tpu.memory_space<vmem>>, vector<1152x128xbf16>
    %cst_16 = arith.constant dense<0.000000e+00> : vector<288x128xf32>
    %34 = tpu.matmul %32, %33, %cst_16 {dimension_numbers = #tpu.dot_dimension_numbers<[1], [0], [0], [1], [0, 0, 1, 1], [], []>} : vector<288x1152xbf16>, vector<1152x128xbf16>, vector<288x128xf32> -> vector<288x128xf32>
    %c0_17 = arith.constant 0 : index
    %c0_18 = arith.constant 0 : index
    %35 = vector.load %arg3[%c0_17, %c0_18] : memref<1x128xf32, #tpu.memory_space<vmem>>, vector<1x128xf32>
    %36 = vector.broadcast %35 : vector<1x128xf32> to vector<288x128xf32>
    %37 = arith.addf %34, %36 : vector<288x128xf32>
    %cst_19 = arith.constant 0.000000e+00 : f32
    %38 = vector.broadcast %cst_19 : f32 to vector<288x128xf32>
    %39 = arith.maximumf %37, %38 : vector<288x128xf32>
    %40 = vector.broadcast %22 : vector<288x1xf32> to vector<288x128xf32>
    %41 = arith.mulf %39, %40 : vector<288x128xf32>
    %42 = arith.truncf %41 : vector<288x128xf32> to vector<288x128xbf16>
    %c19_20 = arith.constant 19 : index
    %c0_21 = arith.constant 0 : index
    %43 = vector.load %arg9[%c19_20, %c0_21] : memref<684x128xbf16, #tpu.memory_space<vmem>>, vector<288x128xbf16>
    tpu.vector_store %arg9[%c19_20, %c0_21], %42 {strides = array<i32>} : memref<684x128xbf16, #tpu.memory_space<vmem>>, vector<288x128xbf16>,
    %c19_22 = arith.constant 19 : index
    %c0_23 = arith.constant 0 : index
    %44 = vector.load %arg1[%c19_22, %c0_23] : memref<720x128xbf16, #tpu.memory_space<vmem>>, vector<288x128xbf16>
    %c0_24 = arith.constant 0 : index
    %c0_25 = arith.constant 0 : index
    %45 = vector.load %arg6[%c0_24, %c0_25] : memref<128x128xbf16, #tpu.memory_space<vmem>>, vector<128x128xbf16>
    %cst_26 = arith.constant dense<0.000000e+00> : vector<288x128xf32>
    %46 = tpu.matmul %44, %45, %cst_26 {dimension_numbers = #tpu.dot_dimension_numbers<[1], [0], [0], [1], [0, 0, 1, 1], [], []>} : vector<288x128xbf16>, vector<128x128xbf16>, vector<288x128xf32> -> vector<288x128xf32>
    %c0_27 = arith.constant 0 : index
    %c0_28 = arith.constant 0 : index
    %47 = vector.load %arg7[%c0_27, %c0_28] : memref<1x128xf32, #tpu.memory_space<vmem>>, vector<1x128xf32>
    %48 = vector.broadcast %47 : vector<1x128xf32> to vector<288x128xf32>
    %49 = arith.addf %46, %48 : vector<288x128xf32>
    %c0_29 = arith.constant 0 : index
    %c0_30 = arith.constant 0 : index
    %50 = vector.load %arg9[%c0_29, %c0_30] : memref<684x128xbf16, #tpu.memory_space<vmem>>, vector<288x128xbf16>
    %c1_31 = arith.constant 1 : index
    %c0_32 = arith.constant 0 : index
    %51 = vector.load %arg9[%c1_31, %c0_32] : memref<684x128xbf16, #tpu.memory_space<vmem>>, vector<288x128xbf16>
    %c2_33 = arith.constant 2 : index
    %c0_34 = arith.constant 0 : index
    %52 = vector.load %arg9[%c2_33, %c0_34] : memref<684x128xbf16, #tpu.memory_space<vmem>>, vector<288x128xbf16>
    %c18_35 = arith.constant 18 : index
    %c0_36 = arith.constant 0 : index
    %53 = vector.load %arg9[%c18_35, %c0_36] : memref<684x128xbf16, #tpu.memory_space<vmem>>, vector<288x128xbf16>
    %c19_37 = arith.constant 19 : index
    %c0_38 = arith.constant 0 : index
    %54 = vector.load %arg9[%c19_37, %c0_38] : memref<684x128xbf16, #tpu.memory_space<vmem>>, vector<288x128xbf16>
    %c20_39 = arith.constant 20 : index
    %c0_40 = arith.constant 0 : index
    %55 = vector.load %arg9[%c20_39, %c0_40] : memref<684x128xbf16, #tpu.memory_space<vmem>>, vector<288x128xbf16>
    %c36_41 = arith.constant 36 : index
    %c0_42 = arith.constant 0 : index
    %56 = vector.load %arg9[%c36_41, %c0_42] : memref<684x128xbf16, #tpu.memory_space<vmem>>, vector<288x128xbf16>
    %c37_43 = arith.constant 37 : index
    %c0_44 = arith.constant 0 : index
    %57 = vector.load %arg9[%c37_43, %c0_44] : memref<684x128xbf16, #tpu.memory_space<vmem>>, vector<288x128xbf16>
    %c38_45 = arith.constant 38 : index
    %c0_46 = arith.constant 0 : index
    %58 = vector.load %arg9[%c38_45, %c0_46] : memref<684x128xbf16, #tpu.memory_space<vmem>>, vector<288x128xbf16>
    %59 = tpu.concatenate %50, %51, %52, %53, %54, %55, %56, %57, %58 in 1 : vector<288x128xbf16>, vector<288x128xbf16>, vector<288x128xbf16>, vector<288x128xbf16>, vector<288x128xbf16>, vector<288x128xbf16>, vector<288x128xbf16>, vector<288x128xbf16>, vector<288x128xbf16> -> vector<288x1152xbf16>
    %c0_47 = arith.constant 0 : index
    %c0_48 = arith.constant 0 : index
    %60 = vector.load %arg4[%c0_47, %c0_48] : memref<1152x128xbf16, #tpu.memory_space<vmem>>, vector<1152x128xbf16>
    %cst_49 = arith.constant dense<0.000000e+00> : vector<288x128xf32>
    %61 = tpu.matmul %59, %60, %cst_49 {dimension_numbers = #tpu.dot_dimension_numbers<[1], [0], [0], [1], [0, 0, 1, 1], [], []>} : vector<288x1152xbf16>, vector<1152x128xbf16>, vector<288x128xf32> -> vector<288x128xf32>
    %c0_50 = arith.constant 0 : index
    %c0_51 = arith.constant 0 : index
    %62 = vector.load %arg5[%c0_50, %c0_51] : memref<1x128xf32, #tpu.memory_space<vmem>>, vector<1x128xf32>
    %63 = vector.broadcast %62 : vector<1x128xf32> to vector<288x128xf32>
    %64 = arith.addf %61, %63 : vector<288x128xf32>
    %65 = arith.addf %64, %49 : vector<288x128xf32>
    %cst_52 = arith.constant 0.000000e+00 : f32
    %66 = vector.broadcast %cst_52 : f32 to vector<288x128xf32>
    %67 = arith.maximumf %65, %66 : vector<288x128xf32>
    %c0_53 = arith.constant 0 : index
    %c0_54 = arith.constant 0 : index
    %68 = vector.load %arg8[%c0_53, %c0_54] : memref<576x128xf32, #tpu.memory_space<vmem>>, vector<288x128xf32>
    tpu.vector_store %arg8[%c0_53, %c0_54], %67 {strides = array<i32>} : memref<576x128xf32, #tpu.memory_space<vmem>>, vector<288x128xf32>,
    %c360 = arith.constant 360 : index
    %c0_55 = arith.constant 0 : index
    %69 = vector.load %arg1[%c360, %c0_55] : memref<720x128xbf16, #tpu.memory_space<vmem>>, vector<288x128xbf16>
    %c361 = arith.constant 361 : index
    %c0_56 = arith.constant 0 : index
    %70 = vector.load %arg1[%c361, %c0_56] : memref<720x128xbf16, #tpu.memory_space<vmem>>, vector<288x128xbf16>
    %c362 = arith.constant 362 : index
    %c0_57 = arith.constant 0 : index
    %71 = vector.load %arg1[%c362, %c0_57] : memref<720x128xbf16, #tpu.memory_space<vmem>>, vector<288x128xbf16>
    %c378 = arith.constant 378 : index
    %c0_58 = arith.constant 0 : index
    %72 = vector.load %arg1[%c378, %c0_58] : memref<720x128xbf16, #tpu.memory_space<vmem>>, vector<288x128xbf16>
    %c379 = arith.constant 379 : index
    %c0_59 = arith.constant 0 : index
    %73 = vector.load %arg1[%c379, %c0_59] : memref<720x128xbf16, #tpu.memory_space<vmem>>, vector<288x128xbf16>
    %c380 = arith.constant 380 : index
    %c0_60 = arith.constant 0 : index
    %74 = vector.load %arg1[%c380, %c0_60] : memref<720x128xbf16, #tpu.memory_space<vmem>>, vector<288x128xbf16>
    %c396 = arith.constant 396 : index
    %c0_61 = arith.constant 0 : index
    %75 = vector.load %arg1[%c396, %c0_61] : memref<720x128xbf16, #tpu.memory_space<vmem>>, vector<288x128xbf16>
    %c397 = arith.constant 397 : index
    %c0_62 = arith.constant 0 : index
    %76 = vector.load %arg1[%c397, %c0_62] : memref<720x128xbf16, #tpu.memory_space<vmem>>, vector<288x128xbf16>
    %c398 = arith.constant 398 : index
    %c0_63 = arith.constant 0 : index
    %77 = vector.load %arg1[%c398, %c0_63] : memref<720x128xbf16, #tpu.memory_space<vmem>>, vector<288x128xbf16>
    %78 = tpu.concatenate %69, %70, %71, %72, %73, %74, %75, %76, %77 in 1 : vector<288x128xbf16>, vector<288x128xbf16>, vector<288x128xbf16>, vector<288x128xbf16>, vector<288x128xbf16>, vector<288x128xbf16>, vector<288x128xbf16>, vector<288x128xbf16>, vector<288x128xbf16> -> vector<288x1152xbf16>
    %c0_64 = arith.constant 0 : index
    %c0_65 = arith.constant 0 : index
    %79 = vector.load %arg2[%c0_64, %c0_65] : memref<1152x128xbf16, #tpu.memory_space<vmem>>, vector<1152x128xbf16>
    %cst_66 = arith.constant dense<0.000000e+00> : vector<288x128xf32>
    %80 = tpu.matmul %78, %79, %cst_66 {dimension_numbers = #tpu.dot_dimension_numbers<[1], [0], [0], [1], [0, 0, 1, 1], [], []>} : vector<288x1152xbf16>, vector<1152x128xbf16>, vector<288x128xf32> -> vector<288x128xf32>
    %c0_67 = arith.constant 0 : index
    %c0_68 = arith.constant 0 : index
    %81 = vector.load %arg3[%c0_67, %c0_68] : memref<1x128xf32, #tpu.memory_space<vmem>>, vector<1x128xf32>
    %82 = vector.broadcast %81 : vector<1x128xf32> to vector<288x128xf32>
    %83 = arith.addf %80, %82 : vector<288x128xf32>
    %cst_69 = arith.constant 0.000000e+00 : f32
    %84 = vector.broadcast %cst_69 : f32 to vector<288x128xf32>
    %85 = arith.maximumf %83, %84 : vector<288x128xf32>
    %86 = vector.broadcast %22 : vector<288x1xf32> to vector<288x128xf32>
    %87 = arith.mulf %85, %86 : vector<288x128xf32>
    %88 = arith.truncf %87 : vector<288x128xf32> to vector<288x128xbf16>
    %c361_70 = arith.constant 361 : index
    %c0_71 = arith.constant 0 : index
    %89 = vector.load %arg9[%c361_70, %c0_71] : memref<684x128xbf16, #tpu.memory_space<vmem>>, vector<288x128xbf16>
    tpu.vector_store %arg9[%c361_70, %c0_71], %88 {strides = array<i32>} : memref<684x128xbf16, #tpu.memory_space<vmem>>, vector<288x128xbf16>,
    %c379_72 = arith.constant 379 : index
    %c0_73 = arith.constant 0 : index
    %90 = vector.load %arg1[%c379_72, %c0_73] : memref<720x128xbf16, #tpu.memory_space<vmem>>, vector<288x128xbf16>
    %c0_74 = arith.constant 0 : index
    %c0_75 = arith.constant 0 : index
    %91 = vector.load %arg6[%c0_74, %c0_75] : memref<128x128xbf16, #tpu.memory_space<vmem>>, vector<128x128xbf16>
    %cst_76 = arith.constant dense<0.000000e+00> : vector<288x128xf32>
    %92 = tpu.matmul %90, %91, %cst_76 {dimension_numbers = #tpu.dot_dimension_numbers<[1], [0], [0], [1], [0, 0, 1, 1], [], []>} : vector<288x128xbf16>, vector<128x128xbf16>, vector<288x128xf32> -> vector<288x128xf32>
    %c0_77 = arith.constant 0 : index
    %c0_78 = arith.constant 0 : index
    %93 = vector.load %arg7[%c0_77, %c0_78] : memref<1x128xf32, #tpu.memory_space<vmem>>, vector<1x128xf32>
    %94 = vector.broadcast %93 : vector<1x128xf32> to vector<288x128xf32>
    %95 = arith.addf %92, %94 : vector<288x128xf32>
    %c342 = arith.constant 342 : index
    %c0_79 = arith.constant 0 : index
    %96 = vector.load %arg9[%c342, %c0_79] : memref<684x128xbf16, #tpu.memory_space<vmem>>, vector<288x128xbf16>
    %c343 = arith.constant 343 : index
    %c0_80 = arith.constant 0 : index
    %97 = vector.load %arg9[%c343, %c0_80] : memref<684x128xbf16, #tpu.memory_space<vmem>>, vector<288x128xbf16>
    %c344 = arith.constant 344 : index
    %c0_81 = arith.constant 0 : index
    %98 = vector.load %arg9[%c344, %c0_81] : memref<684x128xbf16, #tpu.memory_space<vmem>>, vector<288x128xbf16>
    %c360_82 = arith.constant 360 : index
    %c0_83 = arith.constant 0 : index
    %99 = vector.load %arg9[%c360_82, %c0_83] : memref<684x128xbf16, #tpu.memory_space<vmem>>, vector<288x128xbf16>
    %c361_84 = arith.constant 361 : index
    %c0_85 = arith.constant 0 : index
    %100 = vector.load %arg9[%c361_84, %c0_85] : memref<684x128xbf16, #tpu.memory_space<vmem>>, vector<288x128xbf16>
    %c362_86 = arith.constant 362 : index
    %c0_87 = arith.constant 0 : index
    %101 = vector.load %arg9[%c362_86, %c0_87] : memref<684x128xbf16, #tpu.memory_space<vmem>>, vector<288x128xbf16>
    %c378_88 = arith.constant 378 : index
    %c0_89 = arith.constant 0 : index
    %102 = vector.load %arg9[%c378_88, %c0_89] : memref<684x128xbf16, #tpu.memory_space<vmem>>, vector<288x128xbf16>
    %c379_90 = arith.constant 379 : index
    %c0_91 = arith.constant 0 : index
    %103 = vector.load %arg9[%c379_90, %c0_91] : memref<684x128xbf16, #tpu.memory_space<vmem>>, vector<288x128xbf16>
    %c380_92 = arith.constant 380 : index
    %c0_93 = arith.constant 0 : index
    %104 = vector.load %arg9[%c380_92, %c0_93] : memref<684x128xbf16, #tpu.memory_space<vmem>>, vector<288x128xbf16>
    %105 = tpu.concatenate %96, %97, %98, %99, %100, %101, %102, %103, %104 in 1 : vector<288x128xbf16>, vector<288x128xbf16>, vector<288x128xbf16>, vector<288x128xbf16>, vector<288x128xbf16>, vector<288x128xbf16>, vector<288x128xbf16>, vector<288x128xbf16>, vector<288x128xbf16> -> vector<288x1152xbf16>
    %c0_94 = arith.constant 0 : index
    %c0_95 = arith.constant 0 : index
    %106 = vector.load %arg4[%c0_94, %c0_95] : memref<1152x128xbf16, #tpu.memory_space<vmem>>, vector<1152x128xbf16>
    %cst_96 = arith.constant dense<0.000000e+00> : vector<288x128xf32>
    %107 = tpu.matmul %105, %106, %cst_96 {dimension_numbers = #tpu.dot_dimension_numbers<[1], [0], [0], [1], [0, 0, 1, 1], [], []>} : vector<288x1152xbf16>, vector<1152x128xbf16>, vector<288x128xf32> -> vector<288x128xf32>
    %c0_97 = arith.constant 0 : index
    %c0_98 = arith.constant 0 : index
    %108 = vector.load %arg5[%c0_97, %c0_98] : memref<1x128xf32, #tpu.memory_space<vmem>>, vector<1x128xf32>
    %109 = vector.broadcast %108 : vector<1x128xf32> to vector<288x128xf32>
    %110 = arith.addf %107, %109 : vector<288x128xf32>
    %111 = arith.addf %110, %95 : vector<288x128xf32>
    %cst_99 = arith.constant 0.000000e+00 : f32
    %112 = vector.broadcast %cst_99 : f32 to vector<288x128xf32>
    %113 = arith.maximumf %111, %112 : vector<288x128xf32>
    %c288 = arith.constant 288 : index
    %c0_100 = arith.constant 0 : index
    %114 = vector.load %arg8[%c288, %c0_100] : memref<576x128xf32, #tpu.memory_space<vmem>>, vector<288x128xf32>
    tpu.vector_store %arg8[%c288, %c0_100], %113 {strides = array<i32>} : memref<576x128xf32, #tpu.memory_space<vmem>>, vector<288x128xf32>,
    return
  }
  func.func @transform_0(%arg0: i32) -> (i32, i32) {
    %c0_i32 = arith.constant 0 : i32
    %c0_i32_0 = arith.constant 0 : i32
    return %arg0, %c0_i32 : i32, i32
  }
  func.func @transform_1(%arg0: i32) -> (i32, i32) {
    %c0_i32 = arith.constant 0 : i32
    %c0_i32_0 = arith.constant 0 : i32
    %c0_i32_1 = arith.constant 0 : i32
    return %c0_i32, %c0_i32_0 : i32, i32
  }
  func.func @transform_2(%arg0: i32) -> (i32, i32) {
    %c0_i32 = arith.constant 0 : i32
    %c0_i32_0 = arith.constant 0 : i32
    %c0_i32_1 = arith.constant 0 : i32
    return %c0_i32, %c0_i32_0 : i32, i32
  }
  func.func @transform_3(%arg0: i32) -> (i32, i32) {
    %c0_i32 = arith.constant 0 : i32
    %c0_i32_0 = arith.constant 0 : i32
    %c0_i32_1 = arith.constant 0 : i32
    return %c0_i32, %c0_i32_0 : i32, i32
  }
  func.func @transform_4(%arg0: i32) -> (i32, i32) {
    %c0_i32 = arith.constant 0 : i32
    %c0_i32_0 = arith.constant 0 : i32
    %c0_i32_1 = arith.constant 0 : i32
    return %c0_i32, %c0_i32_0 : i32, i32
  }
  func.func @transform_5(%arg0: i32) -> (i32, i32) {
    %c0_i32 = arith.constant 0 : i32
    %c0_i32_0 = arith.constant 0 : i32
    %c0_i32_1 = arith.constant 0 : i32
    return %c0_i32, %c0_i32_0 : i32, i32
  }
  func.func @transform_6(%arg0: i32) -> (i32, i32) {
    %c0_i32 = arith.constant 0 : i32
    %c0_i32_0 = arith.constant 0 : i32
    %c0_i32_1 = arith.constant 0 : i32
    return %c0_i32, %c0_i32_0 : i32, i32
  }
  func.func @transform_7(%arg0: i32) -> (i32, i32) {
    %c0_i32 = arith.constant 0 : i32
    %c0_i32_0 = arith.constant 0 : i32
    return %arg0, %c0_i32 : i32, i32
  }
}

</mosaic_0001>

<llo_original>
// kernel: modified_basic_block.1
$region0: #{modified_basic_block.1}
  #allocation0 [shape = 'u32[]', space=smem, size = 0x4, offset = 0x4, fixed_abs, tag = 'smem constant byte address 0x4 - core index']
  #allocation1 [shape = 'u32[144,128]{1,0:T(1,128)}', space=vmem, size = 0x12000, scoped, tag = 'internal scratch']
  #allocation2 [shape = 'bf16[684,128]{1,0:T(8,128)(2,1)}', space=vmem, size = 0x2b000, scoped, tag = 'scratch operand']
  %s0 = inlined_call_operand.vmem [shape: bf16[720,128], index: 0, kind: input, shape index: {}]
  %s1 = inlined_call_operand.vmem [shape: bf16[1152,128], index: 1, kind: input, shape index: {}]
  %s2 = inlined_call_operand.vmem [shape: f32[1,128], index: 2, kind: input, shape index: {}]
  %s3 = inlined_call_operand.vmem [shape: bf16[1152,128], index: 3, kind: input, shape index: {}]
  %s4 = inlined_call_operand.vmem [shape: f32[1,128], index: 4, kind: input, shape index: {}]
  %s5 = inlined_call_operand.vmem [shape: bf16[128,128], index: 5, kind: input, shape index: {}]
  %s6 = inlined_call_operand.vmem [shape: f32[1,128], index: 6, kind: input, shape index: {}]
  %s7 = inlined_call_operand.vmem [shape: f32[576,128], index: 7, kind: output, shape index: {}]
  %s8 = sld [smem:[#allocation0]]
  $region38: #{modified_basic_block.1} parent=0
    _
  %s10 = ssub.s32 1, %s8
  %s11 = scalar_select 0, %s10, %s8
  // Predicated region
  $region2: #{modified_basic_block.1} parent=0 // pred_check
    _
  $region3: #{modified_basic_block.1} parent=0 // pred_check_branch
    %13 = sbr.rel (0) target = $region5
  $region4: #{modified_basic_block.1} parent=0 // pred_region
    _
  $region5: #{modified_basic_block.1} parent=0 // pred_fallthru
    _
  // Predicated region
  $region6: #{modified_basic_block.1} parent=0 // pred_check
    _
  $region7: #{modified_basic_block.1} parent=0 // pred_check_branch
    %15 = sbr.rel (0) target = $region9
  $region8: #{modified_basic_block.1} parent=0 // pred_region
    _
  $region9: #{modified_basic_block.1} parent=0 // pred_fallthru
    _
  // Predicated region
  $region10: #{modified_basic_block.1} parent=0 // pred_check
    _
  $region11: #{modified_basic_block.1} parent=0 // pred_check_branch
    %17 = sbr.rel (0) target = $region13
  $region12: #{modified_basic_block.1} parent=0 // pred_region
    _
  $region13: #{modified_basic_block.1} parent=0 // pred_fallthru
    _
  // Predicated region
  $region14: #{modified_basic_block.1} parent=0 // pred_check
    _
  $region15: #{modified_basic_block.1} parent=0 // pred_check_branch
    %19 = sbr.rel (0) target = $region17
  $region16: #{modified_basic_block.1} parent=0 // pred_region
    _
  $region17: #{modified_basic_block.1} parent=0 // pred_fallthru
    _
  // Predicated region
  $region18: #{modified_basic_block.1} parent=0 // pred_check
    _
  $region19: #{modified_basic_block.1} parent=0 // pred_check_branch
    %21 = sbr.rel (0) target = $region21
  $region20: #{modified_basic_block.1} parent=0 // pred_region
    _
  $region21: #{modified_basic_block.1} parent=0 // pred_fallthru
    _
  // Predicated region
  $region22: #{modified_basic_block.1} parent=0 // pred_check
    _
  $region23: #{modified_basic_block.1} parent=0 // pred_check_branch
    %23 = sbr.rel (0) target = $region25
  $region24: #{modified_basic_block.1} parent=0 // pred_region
    _
  $region25: #{modified_basic_block.1} parent=0 // pred_fallthru
    _
  // Predicated region
  $region26: #{modified_basic_block.1} parent=0 // pred_check
    _
  $region27: #{modified_basic_block.1} parent=0 // pred_check_branch
    %25 = sbr.rel (0) target = $region29
  $region28: #{modified_basic_block.1} parent=0 // pred_region
    _
  $region29: #{modified_basic_block.1} parent=0 // pred_fallthru
    _
  %27 = vst [vmem:[#allocation2] sm:$0xf] 0
  %28 = vst [vmem:[#allocation2 + $0x4] sm:$0xf] 0
  %29 = vst [vmem:[#allocation2 + $0x8] sm:$0xf] 0
  %30 = vst [vmem:[#allocation2 + $0xc] sm:$0xf] 0
  %31 = vst [vmem:[#allocation2 + $0x10] sm:$0xf] 0
  %32 = vst [vmem:[#allocation2 + $0x14] sm:$0xf] 0
  %33 = vst [vmem:[#allocation2 + $0x18] sm:$0xf] 0
  %34 = vst [vmem:[#allocation2 + $0x1c] sm:$0xf] 0
  %35 = vst [vmem:[#allocation2 + $0x20] sm:$0xf] 0
  %36 = vst [vmem:[#allocation2 + $0x24] sm:$0xf] 0
  %37 = vst [vmem:[#allocation2 + $0x28] sm:$0xf] 0
  %38 = vst [vmem:[#allocation2 + $0x2c] sm:$0xf] 0
  %39 = vst [vmem:[#allocation2 + $0x30] sm:$0xf] 0
  %40 = vst [vmem:[#allocation2 + $0x34] sm:$0xf] 0
  %41 = vst [vmem:[#allocation2 + $0x38] sm:$0xf] 0
  %42 = vst [vmem:[#allocation2 + $0x3c] sm:$0xf] 0
  %43 = vst [vmem:[#allocation2 + $0x40] sm:$0xf] 0
  %44 = vst [vmem:[#allocation2 + $0x44] sm:$0xf] 0
  %45 = vst [vmem:[#allocation2 + $0x48] sm:$0xf] 0
  %46 = vst [vmem:[#allocation2 + $0x4c] sm:$0xf] 0
  %47 = vst [vmem:[#allocation2 + $0x50] sm:$0xf] 0
  %48 = vst [vmem:[#allocation2 + $0x54] sm:$0xf] 0
  %49 = vst [vmem:[#allocation2 + $0x58] sm:$0xf] 0
  %50 = vst [vmem:[#allocation2 + $0x5c] sm:$0xf] 0
  %51 = vst [vmem:[#allocation2 + $0x60] sm:$0xf] 0
  %52 = vst [vmem:[#allocation2 + $0x64] sm:$0xf] 0
  %53 = vst [vmem:[#allocation2 + $0x68] sm:$0xf] 0
  %54 = vst [vmem:[#allocation2 + $0x6c] sm:$0xf] 0
  %55 = vst [vmem:[#allocation2 + $0x70] sm:$0xf] 0
  %56 = vst [vmem:[#allocation2 + $0x74] sm:$0xf] 0
  %57 = vst [vmem:[#allocation2 + $0x78] sm:$0xf] 0
  %58 = vst [vmem:[#allocation2 + $0x7c] sm:$0xf] 0
  %59 = vst [vmem:[#allocation2 + $0x80] sm:$0xf] 0
  %60 = vst [vmem:[#allocation2 + $0x84] sm:$0xf] 0
  %61 = vst [vmem:[#allocation2 + $0x88] sm:$0xf] 0
  %62 = vst [vmem:[#allocation2 + $0x8c] sm:$0xf] 0
  %63 = vst [vmem:[#allocation2 + $0x90] sm:$0xf] 0
  %64 = vst [vmem:[#allocation2 + $0x94] sm:$0xf] 0
  %65 = vst [vmem:[#allocation2 + $0x98] sm:$0xf] 0
  %66 = vst [vmem:[#allocation2 + $0x9c] sm:$0xf] 0
  %67 = vst [vmem:[#allocation2 + $0xa0] sm:$0xf] 0
  %68 = vst [vmem:[#allocation2 + $0xa4] sm:$0xf] 0
  %69 = vst [vmem:[#allocation2 + $0xa8] sm:$0xf] 0
  %70 = vst [vmem:[#allocation2 + $0xac] sm:$0xf] 0
  %71 = vst [vmem:[#allocation2 + $0xb0] sm:$0xf] 0
  %72 = vst [vmem:[#allocation2 + $0xb4] sm:$0xf] 0
  %73 = vst [vmem:[#allocation2 + $0xb8] sm:$0xf] 0
  %74 = vst [vmem:[#allocation2 + $0xbc] sm:$0xf] 0
  %75 = vst [vmem:[#allocation2 + $0xc0] sm:$0xf] 0
  %76 = vst [vmem:[#allocation2 + $0xc4] sm:$0xf] 0
  %77 = vst [vmem:[#allocation2 + $0xc8] sm:$0xf] 0
  %78 = vst [vmem:[#allocation2 + $0xcc] sm:$0xf] 0
  %79 = vst [vmem:[#allocation2 + $0xd0] sm:$0xf] 0
  %80 = vst [vmem:[#allocation2 + $0xd4] sm:$0xf] 0
  %81 = vst [vmem:[#allocation2 + $0xd8] sm:$0xf] 0
  %82 = vst [vmem:[#allocation2 + $0xdc] sm:$0xf] 0
  %83 = vst [vmem:[#allocation2 + $0xe0] sm:$0xf] 0
  %84 = vst [vmem:[#allocation2 + $0xe4] sm:$0xf] 0
  %85 = vst [vmem:[#allocation2 + $0xe8] sm:$0xf] 0
  %86 = vst [vmem:[#allocation2 + $0xec] sm:$0xf] 0
  %87 = vst [vmem:[#allocation2 + $0xf0] sm:$0xf] 0
  %88 = vst [vmem:[#allocation2 + $0xf4] sm:$0xf] 0
  %89 = vst [vmem:[#allocation2 + $0xf8] sm:$0xf] 0
  %90 = vst [vmem:[#allocation2 + $0xfc] sm:$0xf] 0
  %91 = vst [vmem:[#allocation2 + $0x100] sm:$0xf] 0
  %92 = vst [vmem:[#allocation2 + $0x104] sm:$0xf] 0
  %93 = vst [vmem:[#allocation2 + $0x108] sm:$0xf] 0
  %94 = vst [vmem:[#allocation2 + $0x10c] sm:$0xf] 0
  %95 = vst [vmem:[#allocation2 + $0x110] sm:$0xf] 0
  %96 = vst [vmem:[#allocation2 + $0x114] sm:$0xf] 0
  %97 = vst [vmem:[#allocation2 + $0x118] sm:$0xf] 0
  %98 = vst [vmem:[#allocation2 + $0x11c] sm:$0xf] 0
  %99 = vst [vmem:[#allocation2 + $0x120] sm:$0xf] 0
  %100 = vst [vmem:[#allocation2 + $0x124] sm:$0xf] 0
  %101 = vst [vmem:[#allocation2 + $0x128] sm:$0xf] 0
  %102 = vst [vmem:[#allocation2 + $0x12c] sm:$0xf] 0
  %103 = vst [vmem:[#allocation2 + $0x130] sm:$0xf] 0
  %104 = vst [vmem:[#allocation2 + $0x134] sm:$0xf] 0
  %105 = vst [vmem:[#allocation2 + $0x138] sm:$0xf] 0
  %106 = vst [vmem:[#allocation2 + $0x13c] sm:$0xf] 0
  %107 = vst [vmem:[#allocation2 + $0x140] sm:$0xf] 0
  %108 = vst [vmem:[#allocation2 + $0x144] sm:$0xf] 0
  %109 = vst [vmem:[#allocation2 + $0x148] sm:$0xf] 0
  %110 = vst [vmem:[#allocation2 + $0x14c] sm:$0xf] 0
  %111 = vst [vmem:[#allocation2 + $0x150] sm:$0xf] 0
  %112 = vst [vmem:[#allocation2 + $0x154] sm:$0x3] 0
  %v113 = vlaneseq
  %v114 = vshrl.u32 %v113, 7
  %v115 = vadd.s32 %v114, 8
  %v116 = vadd.s32 %v114, 16
  %v117 = vadd.s32 %v114, 24
  %v118 = vadd.s32 %v114, 32
  %v119 = vadd.s32 %v114, 40
  %v120 = vadd.s32 %v114, 48
  %v121 = vadd.s32 %v114, 56
  %v122 = vadd.s32 %v114, 64
  %v123 = vadd.s32 %v114, 72
  %v124 = vadd.s32 %v114, 80
  %v125 = vadd.s32 %v114, 88
  %v126 = vadd.s32 %v114, 96
  %v127 = vadd.s32 %v114, 104
  %v128 = vadd.s32 %v114, 112
  %v129 = vadd.s32 %v114, 120
  %v130 = vadd.s32 %v114, 128
  %v131 = vadd.s32 %v114, 136
  %v132 = vadd.s32 %v114, 144
  %v133 = vadd.s32 %v114, 152
  %v134 = vadd.s32 %v114, 160
  %v135 = vadd.s32 %v114, 168
  %v136 = vadd.s32 %v114, 176
  %v137 = vadd.s32 %v114, 184
  %v138 = vadd.s32 %v114, 192
  %v139 = vadd.s32 %v114, 200
  %v140 = vadd.s32 %v114, 208
  %v141 = vadd.s32 %v114, 216
  %v142 = vadd.s32 %v114, 224
  %v143 = vadd.s32 %v114, 232
  %v144 = vadd.s32 %v114, 240
  %v145 = vadd.s32 %v114, 248
  %v146 = vadd.s32 %v114, 256
  %v147 = vadd.s32 %v114, 264
  %v148 = vadd.s32 %v114, 272
  %v149 = vadd.s32 %v114, 280
  %vm150 = vcmp.lt.s32.totalorder %v114, 0
  %v151 = vsub.s32 0, %v114
  %v152 = vsel %vm150, %v151, %v114
  %v153 = vmul.u32.u64.compose %v152, 3817748708
  %v154 = vextract.low.u32 %v153
  %v155 = vextract.high.u32 %v153
  %v156 = vshrl.u32 %v155, 4
  %v157 = vmul.u32 %v156, 18
  %v158 = vsub.s32 %v152, %v157
  %v159 = vsub.s32 0, %v158
  %v160 = vsel %vm150, %v159, %v158
  %vm161 = vcmp.lt.s32.totalorder %v115, 0
  %v162 = vsub.s32 0, %v115
  %v163 = vsel %vm161, %v162, %v115
  %v164 = vmul.u32.u64.compose %v163, 3817748708
  %v165 = vextract.low.u32 %v164
  %v166 = vextract.high.u32 %v164
  %v167 = vshrl.u32 %v166, 4
  %v168 = vmul.u32 %v167, 18
  %v169 = vsub.s32 %v163, %v168
  %v170 = vsub.s32 0, %v169
  %v171 = vsel %vm161, %v170, %v169
  %vm172 = vcmp.lt.s32.totalorder %v116, 0
  %v173 = vsub.s32 0, %v116
  %v174 = vsel %vm172, %v173, %v116
  %v175 = vmul.u32.u64.compose %v174, 3817748708
  %v176 = vextract.low.u32 %v175
  %v177 = vextract.high.u32 %v175
  %v178 = vshrl.u32 %v177, 4
  %v179 = vmul.u32 %v178, 18
  %v180 = vsub.s32 %v174, %v179
  %v181 = vsub.s32 0, %v180
  %v182 = vsel %vm172, %v181, %v180
  %vm183 = vcmp.lt.s32.totalorder %v117, 0
  %v184 = vsub.s32 0, %v117
  %v185 = vsel %vm183, %v184, %v117
  %v186 = vmul.u32.u64.compose %v185, 3817748708
  %v187 = vextract.low.u32 %v186
  %v188 = vextract.high.u32 %v186
  %v189 = vshrl.u32 %v188, 4
  %v190 = vmul.u32 %v189, 18
  %v191 = vsub.s32 %v185, %v190
  %v192 = vsub.s32 0, %v191
  %v193 = vsel %vm183, %v192, %v191
  %vm194 = vcmp.lt.s32.totalorder %v118, 0
  %v195 = vsub.s32 0, %v118
  %v196 = vsel %vm194, %v195, %v118
  %v197 = vmul.u32.u64.compose %v196, 3817748708
  %v198 = vextract.low.u32 %v197
  %v199 = vextract.high.u32 %v197
  %v200 = vshrl.u32 %v199, 4
  %v201 = vmul.u32 %v200, 18
  %v202 = vsub.s32 %v196, %v201
  %v203 = vsub.s32 0, %v202
  %v204 = vsel %vm194, %v203, %v202
  %vm205 = vcmp.lt.s32.totalorder %v119, 0
  %v206 = vsub.s32 0, %v119
  %v207 = vsel %vm205, %v206, %v119
  %v208 = vmul.u32.u64.compose %v207, 3817748708
  %v209 = vextract.low.u32 %v208
  %v210 = vextract.high.u32 %v208
  %v211 = vshrl.u32 %v210, 4
  %v212 = vmul.u32 %v211, 18
  %v213 = vsub.s32 %v207, %v212
  %v214 = vsub.s32 0, %v213
  %v215 = vsel %vm205, %v214, %v213
  %vm216 = vcmp.lt.s32.totalorder %v120, 0
  %v217 = vsub.s32 0, %v120
  %v218 = vsel %vm216, %v217, %v120
  %v219 = vmul.u32.u64.compose %v218, 3817748708
  %v220 = vextract.low.u32 %v219
  %v221 = vextract.high.u32 %v219
  %v222 = vshrl.u32 %v221, 4
  %v223 = vmul.u32 %v222, 18
  %v224 = vsub.s32 %v218, %v223
  %v225 = vsub.s32 0, %v224
  %v226 = vsel %vm216, %v225, %v224
  %vm227 = vcmp.lt.s32.totalorder %v121, 0
  %v228 = vsub.s32 0, %v121
  %v229 = vsel %vm227, %v228, %v121
  %v230 = vmul.u32.u64.compose %v229, 3817748708
  %v231 = vextract.low.u32 %v230
  %v232 = vextract.high.u32 %v230
  %v233 = vshrl.u32 %v232, 4
  %v234 = vmul.u32 %v233, 18
  %v235 = vsub.s32 %v229, %v234
  %v236 = vsub.s32 0, %v235
  %v237 = vsel %vm227, %v236, %v235
  %vm238 = vcmp.lt.s32.totalorder %v122, 0
  %v239 = vsub.s32 0, %v122
  %v240 = vsel %vm238, %v239, %v122
  %v241 = vmul.u32.u64.compose %v240, 3817748708
  %v242 = vextract.low.u32 %v241
  %v243 = vextract.high.u32 %v241
  %v244 = vshrl.u32 %v243, 4
  %v245 = vmul.u32 %v244, 18
  %v246 = vsub.s32 %v240, %v245
  %v247 = vsub.s32 0, %v246
  %v248 = vsel %vm238, %v247, %v246
  %vm249 = vcmp.lt.s32.totalorder %v123, 0
  %v250 = vsub.s32 0, %v123
  %v251 = vsel %vm249, %v250, %v123
  %v252 = vmul.u32.u64.compose %v251, 3817748708
  %v253 = vextract.low.u32 %v252
  %v254 = vextract.high.u32 %v252
  %v255 = vshrl.u32 %v254, 4
  %v256 = vmul.u32 %v255, 18
  %v257 = vsub.s32 %v251, %v256
  %v258 = vsub.s32 0, %v257
  %v259 = vsel %vm249, %v258, %v257
  %vm260 = vcmp.lt.s32.totalorder %v124, 0
  %v261 = vsub.s32 0, %v124
  %v262 = vsel %vm260, %v261, %v124
  %v263 = vmul.u32.u64.compose %v262, 3817748708
  %v264 = vextract.low.u32 %v263
  %v265 = vextract.high.u32 %v263
  %v266 = vshrl.u32 %v265, 4
  %v267 = vmul.u32 %v266, 18
  %v268 = vsub.s32 %v262, %v267
  %v269 = vsub.s32 0, %v268
  %v270 = vsel %vm260, %v269, %v268
  %vm271 = vcmp.lt.s32.totalorder %v125, 0
  %v272 = vsub.s32 0, %v125
  %v273 = vsel %vm271, %v272, %v125
  %v274 = vmul.u32.u64.compose %v273, 3817748708
  %v275 = vextract.low.u32 %v274
  %v276 = vextract.high.u32 %v274
  %v277 = vshrl.u32 %v276, 4
  %v278 = vmul.u32 %v277, 18
  %v279 = vsub.s32 %v273, %v278
  %v280 = vsub.s32 0, %v279
  %v281 = vsel %vm271, %v280, %v279
  %vm282 = vcmp.lt.s32.totalorder %v126, 0
  %v283 = vsub.s32 0, %v126
  %v284 = vsel %vm282, %v283, %v126
  %v285 = vmul.u32.u64.compose %v284, 3817748708
  %v286 = vextract.low.u32 %v285
  %v287 = vextract.high.u32 %v285
  %v288 = vshrl.u32 %v287, 4
  %v289 = vmul.u32 %v288, 18
  %v290 = vsub.s32 %v284, %v289
  %v291 = vsub.s32 0, %v290
  %v292 = vsel %vm282, %v291, %v290
  %vm293 = vcmp.lt.s32.totalorder %v127, 0
  %v294 = vsub.s32 0, %v127
  %v295 = vsel %vm293, %v294, %v127
  %v296 = vmul.u32.u64.compose %v295, 3817748708
  %v297 = vextract.low.u32 %v296
  %v298 = vextract.high.u32 %v296
  %v299 = vshrl.u32 %v298, 4
  %v300 = vmul.u32 %v299, 18
  %v301 = vsub.s32 %v295, %v300
  %v302 = vsub.s32 0, %v301
  %v303 = vsel %vm293, %v302, %v301
  %vm304 = vcmp.lt.s32.totalorder %v128, 0
  %v305 = vsub.s32 0, %v128
  %v306 = vsel %vm304, %v305, %v128
  %v307 = vmul.u32.u64.compose %v306, 3817748708
  %v308 = vextract.low.u32 %v307
  %v309 = vextract.high.u32 %v307
  %v310 = vshrl.u32 %v309, 4
  %v311 = vmul.u32 %v310, 18
  %v312 = vsub.s32 %v306, %v311
  %v313 = vsub.s32 0, %v312
  %v314 = vsel %vm304, %v313, %v312
  %vm315 = vcmp.lt.s32.totalorder %v129, 0
  %v316 = vsub.s32 0, %v129
  %v317 = vsel %vm315, %v316, %v129
  %v318 = vmul.u32.u64.compose %v317, 3817748708
  %v319 = vextract.low.u32 %v318
  %v320 = vextract.high.u32 %v318
  %v321 = vshrl.u32 %v320, 4
  %v322 = vmul.u32 %v321, 18
  %v323 = vsub.s32 %v317, %v322
  %v324 = vsub.s32 0, %v323
  %v325 = vsel %vm315, %v324, %v323
  %vm326 = vcmp.lt.s32.totalorder %v130, 0
  %v327 = vsub.s32 0, %v130
  %v328 = vsel %vm326, %v327, %v130
  %v329 = vmul.u32.u64.compose %v328, 3817748708
  %v330 = vextract.low.u32 %v329
  %v331 = vextract.high.u32 %v329
  %v332 = vshrl.u32 %v331, 4
  %v333 = vmul.u32 %v332, 18
  %v334 = vsub.s32 %v328, %v333
  %v335 = vsub.s32 0, %v334
  %v336 = vsel %vm326, %v335, %v334
  %vm337 = vcmp.lt.s32.totalorder %v131, 0
  %v338 = vsub.s32 0, %v131
  %v339 = vsel %vm337, %v338, %v131
  %v340 = vmul.u32.u64.compose %v339, 3817748708
  %v341 = vextract.low.u32 %v340
  %v342 = vextract.high.u32 %v340
  %v343 = vshrl.u32 %v342, 4
  %v344 = vmul.u32 %v343, 18
  %v345 = vsub.s32 %v339, %v344
  %v346 = vsub.s32 0, %v345
  %v347 = vsel %vm337, %v346, %v345
  %vm348 = vcmp.lt.s32.totalorder %v132, 0
  %v349 = vsub.s32 0, %v132
  %v350 = vsel %vm348, %v349, %v132
  %v351 = vmul.u32.u64.compose %v350, 3817748708
  %v352 = vextract.low.u32 %v351
  %v353 = vextract.high.u32 %v351
  %v354 = vshrl.u32 %v353, 4
  %v355 = vmul.u32 %v354, 18
  %v356 = vsub.s32 %v350, %v355
  %v357 = vsub.s32 0, %v356
  %v358 = vsel %vm348, %v357, %v356
  %vm359 = vcmp.lt.s32.totalorder %v133, 0
  %v360 = vsub.s32 0, %v133
  %v361 = vsel %vm359, %v360, %v133
  %v362 = vmul.u32.u64.compose %v361, 3817748708
  %v363 = vextract.low.u32 %v362
  %v364 = vextract.high.u32 %v362
  %v365 = vshrl.u32 %v364, 4
  %v366 = vmul.u32 %v365, 18
  %v367 = vsub.s32 %v361, %v366
  %v368 = vsub.s32 0, %v367
  %v369 = vsel %vm359, %v368, %v367
  %vm370 = vcmp.lt.s32.totalorder %v134, 0
  %v371 = vsub.s32 0, %v134
  %v372 = vsel %vm370, %v371, %v134
  %v373 = vmul.u32.u64.compose %v372, 3817748708
  %v374 = vextract.low.u32 %v373
  %v375 = vextract.high.u32 %v373
  %v376 = vshrl.u32 %v375, 4
  %v377 = vmul.u32 %v376, 18
  %v378 = vsub.s32 %v372, %v377
  %v379 = vsub.s32 0, %v378
  %v380 = vsel %vm370, %v379, %v378
  %vm381 = vcmp.lt.s32.totalorder %v135, 0
  %v382 = vsub.s32 0, %v135
  %v383 = vsel %vm381, %v382, %v135
  %v384 = vmul.u32.u64.compose %v383, 3817748708
  %v385 = vextract.low.u32 %v384
  %v386 = vextract.high.u32 %v384
  %v387 = vshrl.u32 %v386, 4
  %v388 = vmul.u32 %v387, 18
  %v389 = vsub.s32 %v383, %v388
  %v390 = vsub.s32 0, %v389
  %v391 = vsel %vm381, %v390, %v389
  %vm392 = vcmp.lt.s32.totalorder %v136, 0
  %v393 = vsub.s32 0, %v136
  %v394 = vsel %vm392, %v393, %v136
  %v395 = vmul.u32.u64.compose %v394, 3817748708
  %v396 = vextract.low.u32 %v395
  %v397 = vextract.high.u32 %v395
  %v398 = vshrl.u32 %v397, 4
  %v399 = vmul.u32 %v398, 18
  %v400 = vsub.s32 %v394, %v399
  %v401 = vsub.s32 0, %v400
  %v402 = vsel %vm392, %v401, %v400
  %vm403 = vcmp.lt.s32.totalorder %v137, 0
  %v404 = vsub.s32 0, %v137
  %v405 = vsel %vm403, %v404, %v137
  %v406 = vmul.u32.u64.compose %v405, 3817748708
  %v407 = vextract.low.u32 %v406
  %v408 = vextract.high.u32 %v406
  %v409 = vshrl.u32 %v408, 4
  %v410 = vmul.u32 %v409, 18
  %v411 = vsub.s32 %v405, %v410
  %v412 = vsub.s32 0, %v411
  %v413 = vsel %vm403, %v412, %v411
  %vm414 = vcmp.lt.s32.totalorder %v138, 0
  %v415 = vsub.s32 0, %v138
  %v416 = vsel %vm414, %v415, %v138
  %v417 = vmul.u32.u64.compose %v416, 3817748708
  %v418 = vextract.low.u32 %v417
  %v419 = vextract.high.u32 %v417
  %v420 = vshrl.u32 %v419, 4
  %v421 = vmul.u32 %v420, 18
  %v422 = vsub.s32 %v416, %v421
  %v423 = vsub.s32 0, %v422
  %v424 = vsel %vm414, %v423, %v422
  %vm425 = vcmp.lt.s32.totalorder %v139, 0
  %v426 = vsub.s32 0, %v139
  %v427 = vsel %vm425, %v426, %v139
  %v428 = vmul.u32.u64.compose %v427, 3817748708
  %v429 = vextract.low.u32 %v428
  %v430 = vextract.high.u32 %v428
  %v431 = vshrl.u32 %v430, 4
  %v432 = vmul.u32 %v431, 18
  %v433 = vsub.s32 %v427, %v432
  %v434 = vsub.s32 0, %v433
  %v435 = vsel %vm425, %v434, %v433
  %vm436 = vcmp.lt.s32.totalorder %v140, 0
  %v437 = vsub.s32 0, %v140
  %v438 = vsel %vm436, %v437, %v140
  %v439 = vmul.u32.u64.compose %v438, 3817748708
  %v440 = vextract.low.u32 %v439
  %v441 = vextract.high.u32 %v439
  %v442 = vshrl.u32 %v441, 4
  %v443 = vmul.u32 %v442, 18
  %v444 = vsub.s32 %v438, %v443
  %v445 = vsub.s32 0, %v444
  %v446 = vsel %vm436, %v445, %v444
  %vm447 = vcmp.lt.s32.totalorder %v141, 0
  %v448 = vsub.s32 0, %v141
  %v449 = vsel %vm447, %v448, %v141
  %v450 = vmul.u32.u64.compose %v449, 3817748708
  %v451 = vextract.low.u32 %v450
  %v452 = vextract.high.u32 %v450
  %v453 = vshrl.u32 %v452, 4
  %v454 = vmul.u32 %v453, 18
  %v455 = vsub.s32 %v449, %v454
  %v456 = vsub.s32 0, %v455
  %v457 = vsel %vm447, %v456, %v455
  %vm458 = vcmp.lt.s32.totalorder %v142, 0
  %v459 = vsub.s32 0, %v142
  %v460 = vsel %vm458, %v459, %v142
  %v461 = vmul.u32.u64.compose %v460, 3817748708
  %v462 = vextract.low.u32 %v461
  %v463 = vextract.high.u32 %v461
  %v464 = vshrl.u32 %v463, 4
  %v465 = vmul.u32 %v464, 18
  %v466 = vsub.s32 %v460, %v465
  %v467 = vsub.s32 0, %v466
  %v468 = vsel %vm458, %v467, %v466
  %vm469 = vcmp.lt.s32.totalorder %v143, 0
  %v470 = vsub.s32 0, %v143
  %v471 = vsel %vm469, %v470, %v143
  %v472 = vmul.u32.u64.compose %v471, 3817748708
  %v473 = vextract.low.u32 %v472
  %v474 = vextract.high.u32 %v472
  %v475 = vshrl.u32 %v474, 4
  %v476 = vmul.u32 %v475, 18
  %v477 = vsub.s32 %v471, %v476
  %v478 = vsub.s32 0, %v477
  %v479 = vsel %vm469, %v478, %v477
  %vm480 = vcmp.lt.s32.totalorder %v144, 0
  %v481 = vsub.s32 0, %v144
  %v482 = vsel %vm480, %v481, %v144
  %v483 = vmul.u32.u64.compose %v482, 3817748708
  %v484 = vextract.low.u32 %v483
  %v485 = vextract.high.u32 %v483
  %v486 = vshrl.u32 %v485, 4
  %v487 = vmul.u32 %v486, 18
  %v488 = vsub.s32 %v482, %v487
  %v489 = vsub.s32 0, %v488
  %v490 = vsel %vm480, %v489, %v488
  %vm491 = vcmp.lt.s32.totalorder %v145, 0
  %v492 = vsub.s32 0, %v145
  %v493 = vsel %vm491, %v492, %v145
  %v494 = vmul.u32.u64.compose %v493, 3817748708
  %v495 = vextract.low.u32 %v494
  %v496 = vextract.high.u32 %v494
  %v497 = vshrl.u32 %v496, 4
  %v498 = vmul.u32 %v497, 18
  %v499 = vsub.s32 %v493, %v498
  %v500 = vsub.s32 0, %v499
  %v501 = vsel %vm491, %v500, %v499
  %vm502 = vcmp.lt.s32.totalorder %v146, 0
  %v503 = vsub.s32 0, %v146
  %v504 = vsel %vm502, %v503, %v146
  %v505 = vmul.u32.u64.compose %v504, 3817748708
  %v506 = vextract.low.u32 %v505
  %v507 = vextract.high.u32 %v505
  %v508 = vshrl.u32 %v507, 4
  %v509 = vmul.u32 %v508, 18
  %v510 = vsub.s32 %v504, %v509
  %v511 = vsub.s32 0, %v510
  %v512 = vsel %vm502, %v511, %v510
  %vm513 = vcmp.lt.s32.totalorder %v147, 0
  %v514 = vsub.s32 0, %v147
  %v515 = vsel %vm513, %v514, %v147
  %v516 = vmul.u32.u64.compose %v515, 3817748708
  %v517 = vextract.low.u32 %v516
  %v518 = vextract.high.u32 %v516
  %v519 = vshrl.u32 %v518, 4
  %v520 = vmul.u32 %v519, 18
  %v521 = vsub.s32 %v515, %v520
  %v522 = vsub.s32 0, %v521
  %v523 = vsel %vm513, %v522, %v521
  %vm524 = vcmp.lt.s32.totalorder %v148, 0
  %v525 = vsub.s32 0, %v148
  %v526 = vsel %vm524, %v525, %v148
  %v527 = vmul.u32.u64.compose %v526, 3817748708
  %v528 = vextract.low.u32 %v527
  %v529 = vextract.high.u32 %v527
  %v530 = vshrl.u32 %v529, 4
  %v531 = vmul.u32 %v530, 18
  %v532 = vsub.s32 %v526, %v531
  %v533 = vsub.s32 0, %v532
  %v534 = vsel %vm524, %v533, %v532
  %vm535 = vcmp.lt.s32.totalorder %v149, 0
  %v536 = vsub.s32 0, %v149
  %v537 = vsel %vm535, %v536, %v149
  %v538 = vmul.u32.u64.compose %v537, 3817748708
  %v539 = vextract.low.u32 %v538
  %v540 = vextract.high.u32 %v538
  %v541 = vshrl.u32 %v540, 4
  %v542 = vmul.u32 %v541, 18
  %v543 = vsub.s32 %v537, %v542
  %v544 = vsub.s32 0, %v543
  %v545 = vsel %vm535, %v544, %v543
  %vm546 = vcmp.ne.s32.totalorder %v160, 0
  %vm547 = vcmp.ne.s32.totalorder %v171, 0
  %vm548 = vcmp.ne.s32.totalorder %v182, 0
  %vm549 = vcmp.ne.s32.totalorder %v193, 0
  %vm550 = vcmp.ne.s32.totalorder %v204, 0
  %vm551 = vcmp.ne.s32.totalorder %v215, 0
  %vm552 = vcmp.ne.s32.totalorder %v226, 0
  %vm553 = vcmp.ne.s32.totalorder %v237, 0
  %vm554 = vcmp.ne.s32.totalorder %v248, 0
  %vm555 = vcmp.ne.s32.totalorder %v259, 0
  %vm556 = vcmp.ne.s32.totalorder %v270, 0
  %vm557 = vcmp.ne.s32.totalorder %v281, 0
  %vm558 = vcmp.ne.s32.totalorder %v292, 0
  %vm559 = vcmp.ne.s32.totalorder %v303, 0
  %vm560 = vcmp.ne.s32.totalorder %v314, 0
  %vm561 = vcmp.ne.s32.totalorder %v325, 0
  %vm562 = vcmp.ne.s32.totalorder %v336, 0
  %vm563 = vcmp.ne.s32.totalorder %v347, 0
  %vm564 = vcmp.ne.s32.totalorder %v358, 0
  %vm565 = vcmp.ne.s32.totalorder %v369, 0
  %vm566 = vcmp.ne.s32.totalorder %v380, 0
  %vm567 = vcmp.ne.s32.totalorder %v391, 0
  %vm568 = vcmp.ne.s32.totalorder %v402, 0
  %vm569 = vcmp.ne.s32.totalorder %v413, 0
  %vm570 = vcmp.ne.s32.totalorder %v424, 0
  %vm571 = vcmp.ne.s32.totalorder %v435, 0
  %vm572 = vcmp.ne.s32.totalorder %v446, 0
  %vm573 = vcmp.ne.s32.totalorder %v457, 0
  %vm574 = vcmp.ne.s32.totalorder %v468, 0
  %vm575 = vcmp.ne.s32.totalorder %v479, 0
  %vm576 = vcmp.ne.s32.totalorder %v490, 0
  %vm577 = vcmp.ne.s32.totalorder %v501, 0
  %vm578 = vcmp.ne.s32.totalorder %v512, 0
  %vm579 = vcmp.ne.s32.totalorder %v523, 0
  %vm580 = vcmp.ne.s32.totalorder %v534, 0
  %vm581 = vcmp.ne.s32.totalorder %v545, 0
  %vm582 = vcmp.lt.s32.totalorder %v160, 0
  %vm583 = vcmp.lt.s32.totalorder %v171, 0
  %vm584 = vcmp.lt.s32.totalorder %v182, 0
  %vm585 = vcmp.lt.s32.totalorder %v193, 0
  %vm586 = vcmp.lt.s32.totalorder %v204, 0
  %vm587 = vcmp.lt.s32.totalorder %v215, 0
  %vm588 = vcmp.lt.s32.totalorder %v226, 0
  %vm589 = vcmp.lt.s32.totalorder %v237, 0
  %vm590 = vcmp.lt.s32.totalorder %v248, 0
  %vm591 = vcmp.lt.s32.totalorder %v259, 0
  %vm592 = vcmp.lt.s32.totalorder %v270, 0
  %vm593 = vcmp.lt.s32.totalorder %v281, 0
  %vm594 = vcmp.lt.s32.totalorder %v292, 0
  %vm595 = vcmp.lt.s32.totalorder %v303, 0
  %vm596 = vcmp.lt.s32.totalorder %v314, 0
  %vm597 = vcmp.lt.s32.totalorder %v325, 0
  %vm598 = vcmp.lt.s32.totalorder %v336, 0
  %vm599 = vcmp.lt.s32.totalorder %v347, 0
  %vm600 = vcmp.lt.s32.totalorder %v358, 0
  %vm601 = vcmp.lt.s32.totalorder %v369, 0
  %vm602 = vcmp.lt.s32.totalorder %v380, 0
  %vm603 = vcmp.lt.s32.totalorder %v391, 0
  %vm604 = vcmp.lt.s32.totalorder %v402, 0
  %vm605 = vcmp.lt.s32.totalorder %v413, 0
  %vm606 = vcmp.lt.s32.totalorder %v424, 0
  %vm607 = vcmp.lt.s32.totalorder %v435, 0
  %vm608 = vcmp.lt.s32.totalorder %v446, 0
  %vm609 = vcmp.lt.s32.totalorder %v457, 0
  %vm610 = vcmp.lt.s32.totalorder %v468, 0
  %vm611 = vcmp.lt.s32.totalorder %v479, 0
  %vm612 = vcmp.lt.s32.totalorder %v490, 0
  %vm613 = vcmp.lt.s32.totalorder %v501, 0
  %vm614 = vcmp.lt.s32.totalorder %v512, 0
  %vm615 = vcmp.lt.s32.totalorder %v523, 0
  %vm616 = vcmp.lt.s32.totalorder %v534, 0
  %vm617 = vcmp.lt.s32.totalorder %v545, 0
  %vm618 = vmand %vm582, %vm546
  %vm619 = vmand %vm583, %vm547
  %vm620 = vmand %vm584, %vm548
  %vm621 = vmand %vm585, %vm549
  %vm622 = vmand %vm586, %vm550
  %vm623 = vmand %vm587, %vm551
  %vm624 = vmand %vm588, %vm552
  %vm625 = vmand %vm589, %vm553
  %vm626 = vmand %vm590, %vm554
  %vm627 = vmand %vm591, %vm555
  %vm628 = vmand %vm592, %vm556
  %vm629 = vmand %vm593, %vm557
  %vm630 = vmand %vm594, %vm558
  %vm631 = vmand %vm595, %vm559
  %vm632 = vmand %vm596, %vm560
  %vm633 = vmand %vm597, %vm561
  %vm634 = vmand %vm598, %vm562
  %vm635 = vmand %vm599, %vm563
  %vm636 = vmand %vm600, %vm564
  %vm637 = vmand %vm601, %vm565
  %vm638 = vmand %vm602, %vm566
  %vm639 = vmand %vm603, %vm567
  %vm640 = vmand %vm604, %vm568
  %vm641 = vmand %vm605, %vm569
  %vm642 = vmand %vm606, %vm570
  %vm643 = vmand %vm607, %vm571
  %vm644 = vmand %vm608, %vm572
  %vm645 = vmand %vm609, %vm573
  %vm646 = vmand %vm610, %vm574
  %vm647 = vmand %vm611, %vm575
  %vm648 = vmand %vm612, %vm576
  %vm649 = vmand %vm613, %vm577
  %vm650 = vmand %vm614, %vm578
  %vm651 = vmand %vm615, %vm579
  %vm652 = vmand %vm616, %vm580
  %vm653 = vmand %vm617, %vm581
  %v654 = vadd.s32 %v160, 18
  %v655 = vadd.s32 %v171, 18
  %v656 = vadd.s32 %v182, 18
  %v657 = vadd.s32 %v193, 18
  %v658 = vadd.s32 %v204, 18
  %v659 = vadd.s32 %v215, 18
  %v660 = vadd.s32 %v226, 18
  %v661 = vadd.s32 %v237, 18
  %v662 = vadd.s32 %v248, 18
  %v663 = vadd.s32 %v259, 18
  %v664 = vadd.s32 %v270, 18
  %v665 = vadd.s32 %v281, 18
  %v666 = vadd.s32 %v292, 18
  %v667 = vadd.s32 %v303, 18
  %v668 = vadd.s32 %v314, 18
  %v669 = vadd.s32 %v325, 18
  %v670 = vadd.s32 %v336, 18
  %v671 = vadd.s32 %v347, 18
  %v672 = vadd.s32 %v358, 18
  %v673 = vadd.s32 %v369, 18
  %v674 = vadd.s32 %v380, 18
  %v675 = vadd.s32 %v391, 18
  %v676 = vadd.s32 %v402, 18
  %v677 = vadd.s32 %v413, 18
  %v678 = vadd.s32 %v424, 18
  %v679 = vadd.s32 %v435, 18
  %v680 = vadd.s32 %v446, 18
  %v681 = vadd.s32 %v457, 18
  %v682 = vadd.s32 %v468, 18
  %v683 = vadd.s32 %v479, 18
  %v684 = vadd.s32 %v490, 18
  %v685 = vadd.s32 %v501, 18
  %v686 = vadd.s32 %v512, 18
  %v687 = vadd.s32 %v523, 18
  %v688 = vadd.s32 %v534, 18
  %v689 = vadd.s32 %v545, 18
  %v690 = vsel %vm618, %v654, %v160
  %v691 = vsel %vm619, %v655, %v171
  %v692 = vsel %vm620, %v656, %v182
  %v693 = vsel %vm621, %v657, %v193
  %v694 = vsel %vm622, %v658, %v204
  %v695 = vsel %vm623, %v659, %v215
  %v696 = vsel %vm624, %v660, %v226
  %v697 = vsel %vm625, %v661, %v237
  %v698 = vsel %vm626, %v662, %v248
  %v699 = vsel %vm627, %v663, %v259
  %v700 = vsel %vm628, %v664, %v270
  %v701 = vsel %vm629, %v665, %v281
  %v702 = vsel %vm630, %v666, %v292
  %v703 = vsel %vm631, %v667, %v303
  %v704 = vsel %vm632, %v668, %v314
  %v705 = vsel %vm633, %v669, %v325
  %v706 = vsel %vm634, %v670, %v336
  %v707 = vsel %vm635, %v671, %v347
  %v708 = vsel %vm636, %v672, %v358
  %v709 = vsel %vm637, %v673, %v369
  %v710 = vsel %vm638, %v674, %v380
  %v711 = vsel %vm639, %v675, %v391
  %v712 = vsel %vm640, %v676, %v402
  %v713 = vsel %vm641, %v677, %v413
  %v714 = vsel %vm642, %v678, %v424
  %v715 = vsel %vm643, %v679, %v435
  %v716 = vsel %vm644, %v680, %v446
  %v717 = vsel %vm645, %v681, %v457
  %v718 = vsel %vm646, %v682, %v468
  %v719 = vsel %vm647, %v683, %v479
  %v720 = vsel %vm648, %v684, %v490
  %v721 = vsel %vm649, %v685, %v501
  %v722 = vsel %vm650, %v686, %v512
  %v723 = vsel %vm651, %v687, %v523
  %v724 = vsel %vm652, %v688, %v534
  %v725 = vsel %vm653, %v689, %v545
  %vm726 = vcmp.lt.s32.totalorder %v690, 16
  %vm727 = vcmp.lt.s32.totalorder %v691, 16
  %vm728 = vcmp.lt.s32.totalorder %v692, 16
  %vm729 = vcmp.lt.s32.totalorder %v693, 16
  %vm730 = vcmp.lt.s32.totalorder %v694, 16
  %vm731 = vcmp.lt.s32.totalorder %v695, 16
  %vm732 = vcmp.lt.s32.totalorder %v696, 16
  %vm733 = vcmp.lt.s32.totalorder %v697, 16
  %vm734 = vcmp.lt.s32.totalorder %v698, 16
  %vm735 = vcmp.lt.s32.totalorder %v699, 16
  %vm736 = vcmp.lt.s32.totalorder %v700, 16
  %vm737 = vcmp.lt.s32.totalorder %v701, 16
  %vm738 = vcmp.lt.s32.totalorder %v702, 16
  %vm739 = vcmp.lt.s32.totalorder %v703, 16
  %vm740 = vcmp.lt.s32.totalorder %v704, 16
  %vm741 = vcmp.lt.s32.totalorder %v705, 16
  %vm742 = vcmp.lt.s32.totalorder %v706, 16
  %vm743 = vcmp.lt.s32.totalorder %v707, 16
  %vm744 = vcmp.lt.s32.totalorder %v708, 16
  %vm745 = vcmp.lt.s32.totalorder %v709, 16
  %vm746 = vcmp.lt.s32.totalorder %v710, 16
  %vm747 = vcmp.lt.s32.totalorder %v711, 16
  %vm748 = vcmp.lt.s32.totalorder %v712, 16
  %vm749 = vcmp.lt.s32.totalorder %v713, 16
  %vm750 = vcmp.lt.s32.totalorder %v714, 16
  %vm751 = vcmp.lt.s32.totalorder %v715, 16
  %vm752 = vcmp.lt.s32.totalorder %v716, 16
  %vm753 = vcmp.lt.s32.totalorder %v717, 16
  %vm754 = vcmp.lt.s32.totalorder %v718, 16
  %vm755 = vcmp.lt.s32.totalorder %v719, 16
  %vm756 = vcmp.lt.s32.totalorder %v720, 16
  %vm757 = vcmp.lt.s32.totalorder %v721, 16
  %vm758 = vcmp.lt.s32.totalorder %v722, 16
  %vm759 = vcmp.lt.s32.totalorder %v723, 16
  %vm760 = vcmp.lt.s32.totalorder %v724, 16
  %vm761 = vcmp.lt.s32.totalorder %v725, 16
  %v762 = vsel %vm726, 1, 0
  %v763 = vsel %vm727, 1, 0
  %v764 = vsel %vm728, 1, 0
  %v765 = vsel %vm729, 1, 0
  %v766 = vsel %vm730, 1, 0
  %v767 = vsel %vm731, 1, 0
  %v768 = vsel %vm732, 1, 0
  %v769 = vsel %vm733, 1, 0
  %v770 = vsel %vm734, 1, 0
  %v771 = vsel %vm735, 1, 0
  %v772 = vsel %vm736, 1, 0
  %v773 = vsel %vm737, 1, 0
  %v774 = vsel %vm738, 1, 0
  %v775 = vsel %vm739, 1, 0
  %v776 = vsel %vm740, 1, 0
  %v777 = vsel %vm741, 1, 0
  %v778 = vsel %vm742, 1, 0
  %v779 = vsel %vm743, 1, 0
  %v780 = vsel %vm744, 1, 0
  %v781 = vsel %vm745, 1, 0
  %v782 = vsel %vm746, 1, 0
  %v783 = vsel %vm747, 1, 0
  %v784 = vsel %vm748, 1, 0
  %v785 = vsel %vm749, 1, 0
  %v786 = vsel %vm750, 1, 0
  %v787 = vsel %vm751, 1, 0
  %v788 = vsel %vm752, 1, 0
  %v789 = vsel %vm753, 1, 0
  %v790 = vsel %vm754, 1, 0
  %v791 = vsel %vm755, 1, 0
  %v792 = vsel %vm756, 1, 0
  %v793 = vsel %vm757, 1, 0
  %v794 = vsel %vm758, 1, 0
  %v795 = vsel %vm759, 1, 0
  %v796 = vsel %vm760, 1, 0
  %v797 = vsel %vm761, 1, 0
  %v798 = vcvt.s32.f32 %v762
  %v799 = vcvt.s32.f32 %v763
  %v800 = vcvt.s32.f32 %v764
  %v801 = vcvt.s32.f32 %v765
  %v802 = vcvt.s32.f32 %v766
  %v803 = vcvt.s32.f32 %v767
  %v804 = vcvt.s32.f32 %v768
  %v805 = vcvt.s32.f32 %v769
  %v806 = vcvt.s32.f32 %v770
  %v807 = vcvt.s32.f32 %v771
  %v808 = vcvt.s32.f32 %v772
  %v809 = vcvt.s32.f32 %v773
  %v810 = vcvt.s32.f32 %v774
  %v811 = vcvt.s32.f32 %v775
  %v812 = vcvt.s32.f32 %v776
  %v813 = vcvt.s32.f32 %v777
  %v814 = vcvt.s32.f32 %v778
  %v815 = vcvt.s32.f32 %v779
  %v816 = vcvt.s32.f32 %v780
  %v817 = vcvt.s32.f32 %v781
  %v818 = vcvt.s32.f32 %v782
  %v819 = vcvt.s32.f32 %v783
  %v820 = vcvt.s32.f32 %v784
  %v821 = vcvt.s32.f32 %v785
  %v822 = vcvt.s32.f32 %v786
  %v823 = vcvt.s32.f32 %v787
  %v824 = vcvt.s32.f32 %v788
  %v825 = vcvt.s32.f32 %v789
  %v826 = vcvt.s32.f32 %v790
  %v827 = vcvt.s32.f32 %v791
  %v828 = vcvt.s32.f32 %v792
  %v829 = vcvt.s32.f32 %v793
  %v830 = vcvt.s32.f32 %v794
  %v831 = vcvt.s32.f32 %v795
  %v832 = vcvt.s32.f32 %v796
  %v833 = vcvt.s32.f32 %v797
  %v834 = vld [vmem:[%s0] sm:$0xf]
  %v835 = vld [vmem:[%s0 + $0x4] sm:$0xf]
  %v836 = vld [vmem:[%s0 + $0x8] sm:$0xf]
  %v837 = vld [vmem:[%s0 + $0xc] sm:$0xf]
  %v838 = vld [vmem:[%s0 + $0x10] sm:$0xf]
  %v839 = vld [vmem:[%s0 + $0x14] sm:$0xf]
  %v840 = vld [vmem:[%s0 + $0x18] sm:$0xf]
  %v841 = vld [vmem:[%s0 + $0x1c] sm:$0xf]
  %v842 = vld [vmem:[%s0 + $0x20] sm:$0xf]
  %v843 = vld [vmem:[%s0 + $0x24] sm:$0xf]
  %v844 = vld [vmem:[%s0 + $0x28] sm:$0xf]
  %v845 = vld [vmem:[%s0 + $0x2c] sm:$0xf]
  %v846 = vld [vmem:[%s0 + $0x30] sm:$0xf]
  %v847 = vld [vmem:[%s0 + $0x34] sm:$0xf]
  %v848 = vld [vmem:[%s0 + $0x38] sm:$0xf]
  %v849 = vld [vmem:[%s0 + $0x3c] sm:$0xf]
  %v850 = vld [vmem:[%s0 + $0x40] sm:$0xf]
  %v851 = vld [vmem:[%s0 + $0x44] sm:$0xf]
  %v852 = vld [vmem:[%s0 + $0x48] sm:$0xf]
  %v853 = vld [vmem:[%s0 + $0x4c] sm:$0xf]
  %v854 = vld [vmem:[%s0 + $0x50] sm:$0xf]
  %v855 = vld [vmem:[%s0 + $0x54] sm:$0xf]
  %v856 = vld [vmem:[%s0 + $0x58] sm:$0xf]
  %v857 = vld [vmem:[%s0 + $0x5c] sm:$0xf]
  %v858 = vld [vmem:[%s0 + $0x60] sm:$0xf]
  %v859 = vld [vmem:[%s0 + $0x64] sm:$0xf]
  %v860 = vld [vmem:[%s0 + $0x68] sm:$0xf]
  %v861 = vld [vmem:[%s0 + $0x6c] sm:$0xf]
  %v862 = vld [vmem:[%s0 + $0x70] sm:$0xf]
  %v863 = vld [vmem:[%s0 + $0x74] sm:$0xf]
  %v864 = vld [vmem:[%s0 + $0x78] sm:$0xf]
  %v865 = vld [vmem:[%s0 + $0x7c] sm:$0xf]
  %v866 = vld [vmem:[%s0 + $0x80] sm:$0xf]
  %v867 = vld [vmem:[%s0 + $0x84] sm:$0xf]
  %v868 = vld [vmem:[%s0 + $0x88] sm:$0xf]
  %v869 = vld [vmem:[%s0 + $0x8c] sm:$0xf]
  %v870 = vld [vmem:[%s0 + $0x90] sm:$0x1]
  %v871 = vld [vmem:[%s0] sm:$0xe]
  %v872 = vld [vmem:[%s0 + $0x8] sm:$0xe]
  %v873 = vld [vmem:[%s0 + $0x90] sm:$0xf]
  %v874 = vld [vmem:[%s0 + $0x94] sm:$0xf]
  %v875 = vld [vmem:[%s0 + $0x98] sm:$0x1]
  %v876 = vld [vmem:[%s0 + $0x98] sm:$0x3]
  %v877 = vld [vmem:[%s0 + $0x8] sm:$0xc]
  %v878 = vld [vmem:[%s0 + $0x10] sm:$0xc]
  %v879 = vld [vmem:[%s0 + $0x98] sm:$0xf]
  %v880 = vld [vmem:[%s0 + $0x9c] sm:$0xf]
  %v881 = vld [vmem:[%s0 + $0xa0] sm:$0x3]
  %v882 = vld [vmem:[%s0 + $0xa0] sm:$0x7]
  %v883 = vld [vmem:[%s0 + $0x10] sm:$0x8]
  %v920 = vunpack.c.l.b16 %v834
  %v921 = vunpack.c.l.b16 %v835
  %v922 = vunpack.c.l.b16 %v836
  %v923 = vunpack.c.l.b16 %v837
  %v924 = vunpack.c.l.b16 %v838
  %v925 = vunpack.c.l.b16 %v839
  %v926 = vunpack.c.l.b16 %v840
  %v927 = vunpack.c.l.b16 %v841
  %v928 = vunpack.c.l.b16 %v842
  %v929 = vunpack.c.l.b16 %v843
  %v930 = vunpack.c.l.b16 %v844
  %v931 = vunpack.c.l.b16 %v845
  %v932 = vunpack.c.l.b16 %v846
  %v933 = vunpack.c.l.b16 %v847
  %v934 = vunpack.c.l.b16 %v848
  %v935 = vunpack.c.l.b16 %v849
  %v936 = vunpack.c.l.b16 %v850
  %v937 = vunpack.c.l.b16 %v851
  %v938 = vunpack.c.l.b16 %v852
  %v939 = vunpack.c.l.b16 %v853
  %v940 = vunpack.c.l.b16 %v854
  %v941 = vunpack.c.l.b16 %v855
  %v942 = vunpack.c.l.b16 %v856
  %v943 = vunpack.c.l.b16 %v857
  %v944 = vunpack.c.l.b16 %v858
  %v945 = vunpack.c.l.b16 %v859
  %v946 = vunpack.c.l.b16 %v860
  %v947 = vunpack.c.l.b16 %v861
  %v948 = vunpack.c.l.b16 %v862
  %v949 = vunpack.c.l.b16 %v863
  %v950 = vunpack.c.l.b16 %v864
  %v951 = vunpack.c.l.b16 %v865
  %v952 = vunpack.c.l.b16 %v866
  %v953 = vunpack.c.l.b16 %v867
  %v954 = vunpack.c.l.b16 %v868
  %v955 = vunpack.c.l.b16 %v869
  %v956 = vpack.c.b16 %v921, %v920
  %v957 = vpack.c.b16 %v923, %v922
  %v958 = vpack.c.b16 %v925, %v924
  %v959 = vpack.c.b16 %v927, %v926
  %v960 = vpack.c.b16 %v929, %v928
  %v961 = vpack.c.b16 %v931, %v930
  %v962 = vpack.c.b16 %v933, %v932
  %v963 = vpack.c.b16 %v935, %v934
  %v964 = vpack.c.b16 %v937, %v936
  %v965 = vpack.c.b16 %v939, %v938
  %v966 = vpack.c.b16 %v941, %v940
  %v967 = vpack.c.b16 %v943, %v942
  %v968 = vpack.c.b16 %v945, %v944
  %v969 = vpack.c.b16 %v947, %v946
  %v970 = vpack.c.b16 %v949, %v948
  %v971 = vpack.c.b16 %v951, %v950
  %v972 = vpack.c.b16 %v953, %v952
  %v973 = vpack.c.b16 %v955, %v954
  %v993 = vunpack.c.l.b16 %v870
  %v994 = vpack.c.b16 %v993, %v993
  %vm995 = vsmask.f32 7424
  %v997 = vshrl.u32 %v956, 16
  %v999 = vshll.u32 %v956, 16
  %v1001 = vrot.slane %v999, 1
  %v1002 = vor.u32 %v997, %v1001
  %v1004 = vshll.u32 %v957, 16
  %v1006 = vrot.slane %v1004, 1
  %v1007 = vsel %vm995, %v1002, %v1006
  %v1008 = vshrl.u32 %v957, 16
  %v1010 = vor.u32 %v1008, %v1006
  %v1012 = vshll.u32 %v958, 16
  %v1014 = vrot.slane %v1012, 1
  %v1015 = vsel %vm995, %v1010, %v1014
  %v1016 = vshrl.u32 %v958, 16
  %v1018 = vor.u32 %v1016, %v1014
  %v1020 = vshll.u32 %v959, 16
  %v1022 = vrot.slane %v1020, 1
  %v1023 = vsel %vm995, %v1018, %v1022
  %v1024 = vshrl.u32 %v959, 16
  %v1026 = vor.u32 %v1024, %v1022
  %v1028 = vshll.u32 %v960, 16
  %v1030 = vrot.slane %v1028, 1
  %v1031 = vsel %vm995, %v1026, %v1030
  %v1032 = vshrl.u32 %v960, 16
  %v1034 = vor.u32 %v1032, %v1030
  %v1036 = vshll.u32 %v961, 16
  %v1038 = vrot.slane %v1036, 1
  %v1039 = vsel %vm995, %v1034, %v1038
  %v1040 = vshrl.u32 %v961, 16
  %v1042 = vor.u32 %v1040, %v1038
  %v1044 = vshll.u32 %v962, 16
  %v1046 = vrot.slane %v1044, 1
  %v1047 = vsel %vm995, %v1042, %v1046
  %v1048 = vshrl.u32 %v962, 16
  %v1050 = vor.u32 %v1048, %v1046
  %v1052 = vshll.u32 %v963, 16
  %v1054 = vrot.slane %v1052, 1
  %v1055 = vsel %vm995, %v1050, %v1054
  %v1056 = vshrl.u32 %v963, 16
  %v1058 = vor.u32 %v1056, %v1054
  %v1060 = vshll.u32 %v964, 16
  %v1062 = vrot.slane %v1060, 1
  %v1063 = vsel %vm995, %v1058, %v1062
  %v1064 = vshrl.u32 %v964, 16
  %v1066 = vor.u32 %v1064, %v1062
  %v1068 = vshll.u32 %v965, 16
  %v1070 = vrot.slane %v1068, 1
  %v1071 = vsel %vm995, %v1066, %v1070
  %v1072 = vshrl.u32 %v965, 16
  %v1074 = vor.u32 %v1072, %v1070
  %v1076 = vshll.u32 %v966, 16
  %v1078 = vrot.slane %v1076, 1
  %v1079 = vsel %vm995, %v1074, %v1078
  %v1080 = vshrl.u32 %v966, 16
  %v1082 = vor.u32 %v1080, %v1078
  %v1084 = vshll.u32 %v967, 16
  %v1086 = vrot.slane %v1084, 1
  %v1087 = vsel %vm995, %v1082, %v1086
  %v1088 = vshrl.u32 %v967, 16
  %v1090 = vor.u32 %v1088, %v1086
  %v1092 = vshll.u32 %v968, 16
  %v1094 = vrot.slane %v1092, 1
  %v1095 = vsel %vm995, %v1090, %v1094
  %v1096 = vshrl.u32 %v968, 16
  %v1098 = vor.u32 %v1096, %v1094
  %v1100 = vshll.u32 %v969, 16
  %v1102 = vrot.slane %v1100, 1
  %v1103 = vsel %vm995, %v1098, %v1102
  %v1104 = vshrl.u32 %v969, 16
  %v1106 = vor.u32 %v1104, %v1102
  %v1108 = vshll.u32 %v970, 16
  %v1110 = vrot.slane %v1108, 1
  %v1111 = vsel %vm995, %v1106, %v1110
  %v1112 = vshrl.u32 %v970, 16
  %v1114 = vor.u32 %v1112, %v1110
  %v1116 = vshll.u32 %v971, 16
  %v1118 = vrot.slane %v1116, 1
  %v1119 = vsel %vm995, %v1114, %v1118
  %v1120 = vshrl.u32 %v971, 16
  %v1122 = vor.u32 %v1120, %v1118
  %v1124 = vshll.u32 %v972, 16
  %v1126 = vrot.slane %v1124, 1
  %v1127 = vsel %vm995, %v1122, %v1126
  %v1128 = vshrl.u32 %v972, 16
  %v1130 = vor.u32 %v1128, %v1126
  %v1132 = vshll.u32 %v973, 16
  %v1134 = vrot.slane %v1132, 1
  %v1135 = vsel %vm995, %v1130, %v1134
  %v1136 = vshrl.u32 %v973, 16
  %v1138 = vor.u32 %v1136, %v1134
  %v1140 = vshll.u32 %v994, 16
  %v1142 = vrot.slane %v1140, 1
  %v1143 = vsel %vm995, %v1138, %v1142
  %v1163 = vunpack.c.l.b16 %v871
  %v1164 = vpack.c.b16 %v921, %v1163
  %vm1165 = vcmask 1046528
  %v1166 = vrot.slane %v1164, 1
  %v1167 = vrot.slane %v957, 1
  %v1168 = vsel %vm1165, %v1166, %v1167
  %v1169 = vrot.slane %v958, 1
  %v1170 = vsel %vm1165, %v1167, %v1169
  %v1171 = vrot.slane %v959, 1
  %v1172 = vsel %vm1165, %v1169, %v1171
  %v1173 = vrot.slane %v960, 1
  %v1174 = vsel %vm1165, %v1171, %v1173
  %v1175 = vrot.slane %v961, 1
  %v1176 = vsel %vm1165, %v1173, %v1175
  %v1177 = vrot.slane %v962, 1
  %v1178 = vsel %vm1165, %v1175, %v1177
  %v1179 = vrot.slane %v963, 1
  %v1180 = vsel %vm1165, %v1177, %v1179
  %v1181 = vrot.slane %v964, 1
  %v1182 = vsel %vm1165, %v1179, %v1181
  %v1183 = vrot.slane %v965, 1
  %v1184 = vsel %vm1165, %v1181, %v1183
  %v1185 = vrot.slane %v966, 1
  %v1186 = vsel %vm1165, %v1183, %v1185
  %v1187 = vrot.slane %v967, 1
  %v1188 = vsel %vm1165, %v1185, %v1187
  %v1189 = vrot.slane %v968, 1
  %v1190 = vsel %vm1165, %v1187, %v1189
  %v1191 = vrot.slane %v969, 1
  %v1192 = vsel %vm1165, %v1189, %v1191
  %v1193 = vrot.slane %v970, 1
  %v1194 = vsel %vm1165, %v1191, %v1193
  %v1195 = vrot.slane %v971, 1
  %v1196 = vsel %vm1165, %v1193, %v1195
  %v1197 = vrot.slane %v972, 1
  %v1198 = vsel %vm1165, %v1195, %v1197
  %v1199 = vrot.slane %v973, 1
  %v1200 = vsel %vm1165, %v1197, %v1199
  %v1201 = vrot.slane %v994, 1
  %v1202 = vsel %vm1165, %v1199, %v1201
  %v1225 = vunpack.c.l.b16 %v872
  %v1226 = vunpack.c.l.b16 %v873
  %v1227 = vunpack.c.l.b16 %v874
  %v1228 = vunpack.c.l.b16 %v875
  %v1229 = vpack.c.b16 %v923, %v1225
  %v1230 = vpack.c.b16 %v1227, %v1226
  %v1231 = vpack.c.b16 %v1228, %v1228
  %v1232 = vrot.slane %v1229, 1
  %v1233 = vsel %vm1165, %v1232, %v1169
  %v1234 = vrot.slane %v1230, 1
  %v1235 = vsel %vm1165, %v1199, %v1234
  %v1236 = vrot.slane %v1231, 1
  %v1237 = vsel %vm1165, %v1234, %v1236
  %v1242 = vunpack.c.l.b16 %v876
  %v1243 = vpack.c.b16 %v1242, %v1242
  %vm1244 = vsmask.f32 6400
  %v1246 = vshrl.u32 %v1229, 16
  %v1248 = vrot.slane %v1246, 1
  %v1249 = vshll.u32 %v1229, 16
  %v1251 = vrot.slane %v1249, 2
  %v1252 = vor.u32 %v1248, %v1251
  %v1253 = vrot.slane %v1016, 1
  %v1254 = vrot.slane %v1012, 2
  %v1255 = vor.u32 %v1253, %v1254
  %v1256 = vsel %vm1244, %v1252, %v1255
  %v1257 = vrot.slane %v1024, 1
  %v1258 = vrot.slane %v1020, 2
  %v1259 = vor.u32 %v1257, %v1258
  %v1260 = vsel %vm1244, %v1255, %v1259
  %v1261 = vrot.slane %v1032, 1
  %v1262 = vrot.slane %v1028, 2
  %v1263 = vor.u32 %v1261, %v1262
  %v1264 = vsel %vm1244, %v1259, %v1263
  %v1265 = vrot.slane %v1040, 1
  %v1266 = vrot.slane %v1036, 2
  %v1267 = vor.u32 %v1265, %v1266
  %v1268 = vsel %vm1244, %v1263, %v1267
  %v1269 = vrot.slane %v1048, 1
  %v1270 = vrot.slane %v1044, 2
  %v1271 = vor.u32 %v1269, %v1270
  %v1272 = vsel %vm1244, %v1267, %v1271
  %v1273 = vrot.slane %v1056, 1
  %v1274 = vrot.slane %v1052, 2
  %v1275 = vor.u32 %v1273, %v1274
  %v1276 = vsel %vm1244, %v1271, %v1275
  %v1277 = vrot.slane %v1064, 1
  %v1278 = vrot.slane %v1060, 2
  %v1279 = vor.u32 %v1277, %v1278
  %v1280 = vsel %vm1244, %v1275, %v1279
  %v1281 = vrot.slane %v1072, 1
  %v1282 = vrot.slane %v1068, 2
  %v1283 = vor.u32 %v1281, %v1282
  %v1284 = vsel %vm1244, %v1279, %v1283
  %v1285 = vrot.slane %v1080, 1
  %v1286 = vrot.slane %v1076, 2
  %v1287 = vor.u32 %v1285, %v1286
  %v1288 = vsel %vm1244, %v1283, %v1287
  %v1289 = vrot.slane %v1088, 1
  %v1290 = vrot.slane %v1084, 2
  %v1291 = vor.u32 %v1289, %v1290
  %v1292 = vsel %vm1244, %v1287, %v1291
  %v1293 = vrot.slane %v1096, 1
  %v1294 = vrot.slane %v1092, 2
  %v1295 = vor.u32 %v1293, %v1294
  %v1296 = vsel %vm1244, %v1291, %v1295
  %v1297 = vrot.slane %v1104, 1
  %v1298 = vrot.slane %v1100, 2
  %v1299 = vor.u32 %v1297, %v1298
  %v1300 = vsel %vm1244, %v1295, %v1299
  %v1301 = vrot.slane %v1112, 1
  %v1302 = vrot.slane %v1108, 2
  %v1303 = vor.u32 %v1301, %v1302
  %v1304 = vsel %vm1244, %v1299, %v1303
  %v1305 = vrot.slane %v1120, 1
  %v1306 = vrot.slane %v1116, 2
  %v1307 = vor.u32 %v1305, %v1306
  %v1308 = vsel %vm1244, %v1303, %v1307
  %v1309 = vrot.slane %v1128, 1
  %v1310 = vrot.slane %v1124, 2
  %v1311 = vor.u32 %v1309, %v1310
  %v1312 = vsel %vm1244, %v1307, %v1311
  %v1313 = vrot.slane %v1136, 1
  %v1314 = vrot.slane %v1132, 2
  %v1315 = vor.u32 %v1313, %v1314
  %v1316 = vsel %vm1244, %v1311, %v1315
  %v1318 = vshrl.u32 %v1230, 16
  %v1320 = vrot.slane %v1318, 1
  %v1321 = vshll.u32 %v1230, 16
  %v1323 = vrot.slane %v1321, 2
  %v1324 = vor.u32 %v1320, %v1323
  %v1325 = vsel %vm1244, %v1315, %v1324
  %v1327 = vshrl.u32 %v1243, 16
  %v1329 = vrot.slane %v1327, 1
  %v1330 = vshll.u32 %v1243, 16
  %v1332 = vrot.slane %v1330, 2
  %v1333 = vor.u32 %v1329, %v1332
  %v1334 = vsel %vm1244, %v1324, %v1333
  %v1354 = vunpack.c.l.b16 %v877
  %v1355 = vpack.c.b16 %v923, %v1354
  %vm1356 = vcmask 1045504
  %v1357 = vrot.slane %v1355, 2
  %v1358 = vrot.slane %v958, 2
  %v1359 = vsel %vm1356, %v1357, %v1358
  %v1360 = vrot.slane %v959, 2
  %v1361 = vsel %vm1356, %v1358, %v1360
  %v1362 = vrot.slane %v960, 2
  %v1363 = vsel %vm1356, %v1360, %v1362
  %v1364 = vrot.slane %v961, 2
  %v1365 = vsel %vm1356, %v1362, %v1364
  %v1366 = vrot.slane %v962, 2
  %v1367 = vsel %vm1356, %v1364, %v1366
  %v1368 = vrot.slane %v963, 2
  %v1369 = vsel %vm1356, %v1366, %v1368
  %v1370 = vrot.slane %v964, 2
  %v1371 = vsel %vm1356, %v1368, %v1370
  %v1372 = vrot.slane %v965, 2
  %v1373 = vsel %vm1356, %v1370, %v1372
  %v1374 = vrot.slane %v966, 2
  %v1375 = vsel %vm1356, %v1372, %v1374
  %v1376 = vrot.slane %v967, 2
  %v1377 = vsel %vm1356, %v1374, %v1376
  %v1378 = vrot.slane %v968, 2
  %v1379 = vsel %vm1356, %v1376, %v1378
  %v1380 = vrot.slane %v969, 2
  %v1381 = vsel %vm1356, %v1378, %v1380
  %v1382 = vrot.slane %v970, 2
  %v1383 = vsel %vm1356, %v1380, %v1382
  %v1384 = vrot.slane %v971, 2
  %v1385 = vsel %vm1356, %v1382, %v1384
  %v1386 = vrot.slane %v972, 2
  %v1387 = vsel %vm1356, %v1384, %v1386
  %v1388 = vrot.slane %v973, 2
  %v1389 = vsel %vm1356, %v1386, %v1388
  %v1390 = vrot.slane %v1230, 2
  %v1391 = vsel %vm1356, %v1388, %v1390
  %v1392 = vrot.slane %v1243, 2
  %v1393 = vsel %vm1356, %v1390, %v1392
  %v1416 = vunpack.c.l.b16 %v878
  %v1417 = vunpack.c.l.b16 %v879
  %v1418 = vunpack.c.l.b16 %v880
  %v1419 = vunpack.c.l.b16 %v881
  %v1420 = vpack.c.b16 %v925, %v1416
  %v1421 = vpack.c.b16 %v1418, %v1417
  %v1422 = vpack.c.b16 %v1419, %v1419
  %v1423 = vrot.slane %v1420, 2
  %v1424 = vsel %vm1356, %v1423, %v1360
  %v1425 = vrot.slane %v1421, 2
  %v1426 = vsel %vm1356, %v1390, %v1425
  %v1427 = vrot.slane %v1422, 2
  %v1428 = vsel %vm1356, %v1425, %v1427
  %v1433 = vunpack.c.l.b16 %v882
  %v1434 = vpack.c.b16 %v1433, %v1433
  %vm1435 = vsmask.f32 5376
  %v1437 = vshrl.u32 %v1420, 16
  %v1439 = vrot.slane %v1437, 2
  %v1440 = vshll.u32 %v1420, 16
  %v1442 = vrot.slane %v1440, 3
  %v1443 = vor.u32 %v1439, %v1442
  %v1444 = vrot.slane %v1024, 2
  %v1445 = vrot.slane %v1020, 3
  %v1446 = vor.u32 %v1444, %v1445
  %v1447 = vsel %vm1435, %v1443, %v1446
  %v1448 = vrot.slane %v1032, 2
  %v1449 = vrot.slane %v1028, 3
  %v1450 = vor.u32 %v1448, %v1449
  %v1451 = vsel %vm1435, %v1446, %v1450
  %v1452 = vrot.slane %v1040, 2
  %v1453 = vrot.slane %v1036, 3
  %v1454 = vor.u32 %v1452, %v1453
  %v1455 = vsel %vm1435, %v1450, %v1454
  %v1456 = vrot.slane %v1048, 2
  %v1457 = vrot.slane %v1044, 3
  %v1458 = vor.u32 %v1456, %v1457
  %v1459 = vsel %vm1435, %v1454, %v1458
  %v1460 = vrot.slane %v1056, 2
  %v1461 = vrot.slane %v1052, 3
  %v1462 = vor.u32 %v1460, %v1461
  %v1463 = vsel %vm1435, %v1458, %v1462
  %v1464 = vrot.slane %v1064, 2
  %v1465 = vrot.slane %v1060, 3
  %v1466 = vor.u32 %v1464, %v1465
  %v1467 = vsel %vm1435, %v1462, %v1466
  %v1468 = vrot.slane %v1072, 2
  %v1469 = vrot.slane %v1068, 3
  %v1470 = vor.u32 %v1468, %v1469
  %v1471 = vsel %vm1435, %v1466, %v1470
  %v1472 = vrot.slane %v1080, 2
  %v1473 = vrot.slane %v1076, 3
  %v1474 = vor.u32 %v1472, %v1473
  %v1475 = vsel %vm1435, %v1470, %v1474
  %v1476 = vrot.slane %v1088, 2
  %v1477 = vrot.slane %v1084, 3
  %v1478 = vor.u32 %v1476, %v1477
  %v1479 = vsel %vm1435, %v1474, %v1478
  %v1480 = vrot.slane %v1096, 2
  %v1481 = vrot.slane %v1092, 3
  %v1482 = vor.u32 %v1480, %v1481
  %v1483 = vsel %vm1435, %v1478, %v1482
  %v1484 = vrot.slane %v1104, 2
  %v1485 = vrot.slane %v1100, 3
  %v1486 = vor.u32 %v1484, %v1485
  %v1487 = vsel %vm1435, %v1482, %v1486
  %v1488 = vrot.slane %v1112, 2
  %v1489 = vrot.slane %v1108, 3
  %v1490 = vor.u32 %v1488, %v1489
  %v1491 = vsel %vm1435, %v1486, %v1490
  %v1492 = vrot.slane %v1120, 2
  %v1493 = vrot.slane %v1116, 3
  %v1494 = vor.u32 %v1492, %v1493
  %v1495 = vsel %vm1435, %v1490, %v1494
  %v1496 = vrot.slane %v1128, 2
  %v1497 = vrot.slane %v1124, 3
  %v1498 = vor.u32 %v1496, %v1497
  %v1499 = vsel %vm1435, %v1494, %v1498
  %v1500 = vrot.slane %v1136, 2
  %v1501 = vrot.slane %v1132, 3
  %v1502 = vor.u32 %v1500, %v1501
  %v1503 = vsel %vm1435, %v1498, %v1502
  %v1504 = vrot.slane %v1318, 2
  %v1505 = vrot.slane %v1321, 3
  %v1506 = vor.u32 %v1504, %v1505
  %v1507 = vsel %vm1435, %v1502, %v1506
  %v1509 = vshrl.u32 %v1421, 16
  %v1511 = vrot.slane %v1509, 2
  %v1512 = vshll.u32 %v1421, 16
  %v1514 = vrot.slane %v1512, 3
  %v1515 = vor.u32 %v1511, %v1514
  %v1516 = vsel %vm1435, %v1506, %v1515
  %v1518 = vshrl.u32 %v1434, 16
  %v1520 = vrot.slane %v1518, 2
  %v1521 = vshll.u32 %v1434, 16
  %v1523 = vrot.slane %v1521, 3
  %v1524 = vor.u32 %v1520, %v1523
  %v1525 = vsel %vm1435, %v1515, %v1524
  %v1545 = vunpack.c.l.b16 %v883
  %v1546 = vpack.c.b16 %v925, %v1545
  %vm1547 = vcmask 1044480
  %v1548 = vrot.slane %v1546, 3
  %v1549 = vrot.slane %v959, 3
  %v1550 = vsel %vm1547, %v1548, %v1549
  %v1551 = vrot.slane %v960, 3
  %v1552 = vsel %vm1547, %v1549, %v1551
  %v1553 = vrot.slane %v961, 3
  %v1554 = vsel %vm1547, %v1551, %v1553
  %v1555 = vrot.slane %v962, 3
  %v1556 = vsel %vm1547, %v1553, %v1555
  %v1557 = vrot.slane %v963, 3
  %v1558 = vsel %vm1547, %v1555, %v1557
  %v1559 = vrot.slane %v964, 3
  %v1560 = vsel %vm1547, %v1557, %v1559
  %v1561 = vrot.slane %v965, 3
  %v1562 = vsel %vm1547, %v1559, %v1561
  %v1563 = vrot.slane %v966, 3
  %v1564 = vsel %vm1547, %v1561, %v1563
  %v1565 = vrot.slane %v967, 3
  %v1566 = vsel %vm1547, %v1563, %v1565
  %v1567 = vrot.slane %v968, 3
  %v1568 = vsel %vm1547, %v1565, %v1567
  %v1569 = vrot.slane %v969, 3
  %v1570 = vsel %vm1547, %v1567, %v1569
  %v1571 = vrot.slane %v970, 3
  %v1572 = vsel %vm1547, %v1569, %v1571
  %v1573 = vrot.slane %v971, 3
  %v1574 = vsel %vm1547, %v1571, %v1573
  %v1575 = vrot.slane %v972, 3
  %v1576 = vsel %vm1547, %v1573, %v1575
  %v1577 = vrot.slane %v973, 3
  %v1578 = vsel %vm1547, %v1575, %v1577
  %v1579 = vrot.slane %v1230, 3
  %v1580 = vsel %vm1547, %v1577, %v1579
  %v1581 = vrot.slane %v1421, 3
  %v1582 = vsel %vm1547, %v1579, %v1581
  %v1583 = vrot.slane %v1434, 3
  %v1584 = vsel %vm1547, %v1581, %v1583
  %v1603 = vld [vmem:[%s1] sm:$0xf]
  %v1604 = vld [vmem:[%s1 + $0x4] sm:$0xf]
  %v1605 = vld [vmem:[%s1 + $0x8] sm:$0xf]
  %v1606 = vld [vmem:[%s1 + $0xc] sm:$0xf]
  %v1607 = vld [vmem:[%s1 + $0x10] sm:$0xf]
  %v1608 = vld [vmem:[%s1 + $0x14] sm:$0xf]
  %v1609 = vld [vmem:[%s1 + $0x18] sm:$0xf]
  %v1610 = vld [vmem:[%s1 + $0x1c] sm:$0xf]
  %v1611 = vld [vmem:[%s1 + $0x20] sm:$0xf]
  %v1612 = vld [vmem:[%s1 + $0x24] sm:$0xf]
  %v1613 = vld [vmem:[%s1 + $0x28] sm:$0xf]
  %v1614 = vld [vmem:[%s1 + $0x2c] sm:$0xf]
  %v1615 = vld [vmem:[%s1 + $0x30] sm:$0xf]
  %v1616 = vld [vmem:[%s1 + $0x34] sm:$0xf]
  %v1617 = vld [vmem:[%s1 + $0x38] sm:$0xf]
  %v1618 = vld [vmem:[%s1 + $0x3c] sm:$0xf]
  %v1619 = vld [vmem:[%s1 + $0x40] sm:$0xf]
  %v1620 = vld [vmem:[%s1 + $0x44] sm:$0xf]
  %v1621 = vld [vmem:[%s1 + $0x48] sm:$0xf]
  %v1622 = vld [vmem:[%s1 + $0x4c] sm:$0xf]
  %v1623 = vld [vmem:[%s1 + $0x50] sm:$0xf]
  %v1624 = vld [vmem:[%s1 + $0x54] sm:$0xf]
  %v1625 = vld [vmem:[%s1 + $0x58] sm:$0xf]
  %v1626 = vld [vmem:[%s1 + $0x5c] sm:$0xf]
  %v1627 = vld [vmem:[%s1 + $0x60] sm:$0xf]
  %v1628 = vld [vmem:[%s1 + $0x64] sm:$0xf]
  %v1629 = vld [vmem:[%s1 + $0x68] sm:$0xf]
  %v1630 = vld [vmem:[%s1 + $0x6c] sm:$0xf]
  %v1631 = vld [vmem:[%s1 + $0x70] sm:$0xf]
  %v1632 = vld [vmem:[%s1 + $0x74] sm:$0xf]
  %v1633 = vld [vmem:[%s1 + $0x78] sm:$0xf]
  %v1634 = vld [vmem:[%s1 + $0x7c] sm:$0xf]
  %v1635 = vld [vmem:[%s1 + $0x80] sm:$0xf]
  %v1636 = vld [vmem:[%s1 + $0x84] sm:$0xf]
  %v1637 = vld [vmem:[%s1 + $0x88] sm:$0xf]
  %v1638 = vld [vmem:[%s1 + $0x8c] sm:$0xf]
  %v1639 = vld [vmem:[%s1 + $0x90] sm:$0xf]
  %v1640 = vld [vmem:[%s1 + $0x94] sm:$0xf]
  %v1641 = vld [vmem:[%s1 + $0x98] sm:$0xf]
  %v1642 = vld [vmem:[%s1 + $0x9c] sm:$0xf]
  %v1643 = vld [vmem:[%s1 + $0xa0] sm:$0xf]
  %v1644 = vld [vmem:[%s1 + $0xa4] sm:$0xf]
  %v1645 = vld [vmem:[%s1 + $0xa8] sm:$0xf]
  %v1646 = vld [vmem:[%s1 + $0xac] sm:$0xf]
  %v1647 = vld [vmem:[%s1 + $0xb0] sm:$0xf]
  %v1648 = vld [vmem:[%s1 + $0xb4] sm:$0xf]
  %v1649 = vld [vmem:[%s1 + $0xb8] sm:$0xf]
  %v1650 = vld [vmem:[%s1 + $0xbc] sm:$0xf]
  %v1651 = vld [vmem:[%s1 + $0xc0] sm:$0xf]
  %v1652 = vld [vmem:[%s1 + $0xc4] sm:$0xf]
  %v1653 = vld [vmem:[%s1 + $0xc8] sm:$0xf]
  %v1654 = vld [vmem:[%s1 + $0xcc] sm:$0xf]
  %v1655 = vld [vmem:[%s1 + $0xd0] sm:$0xf]
  %v1656 = vld [vmem:[%s1 + $0xd4] sm:$0xf]
  %v1657 = vld [vmem:[%s1 + $0xd8] sm:$0xf]
  %v1658 = vld [vmem:[%s1 + $0xdc] sm:$0xf]
  %v1659 = vld [vmem:[%s1 + $0xe0] sm:$0xf]
  %v1660 = vld [vmem:[%s1 + $0xe4] sm:$0xf]
  %v1661 = vld [vmem:[%s1 + $0xe8] sm:$0xf]
  %v1662 = vld [vmem:[%s1 + $0xec] sm:$0xf]
  %v1663 = vld [vmem:[%s1 + $0xf0] sm:$0xf]
  %v1664 = vld [vmem:[%s1 + $0xf4] sm:$0xf]
  %v1665 = vld [vmem:[%s1 + $0xf8] sm:$0xf]
  %v1666 = vld [vmem:[%s1 + $0xfc] sm:$0xf]
  %v1667 = vld [vmem:[%s1 + $0x100] sm:$0xf]
  %v1668 = vld [vmem:[%s1 + $0x104] sm:$0xf]
  %v1669 = vld [vmem:[%s1 + $0x108] sm:$0xf]
  %v1670 = vld [vmem:[%s1 + $0x10c] sm:$0xf]
  %v1671 = vld [vmem:[%s1 + $0x110] sm:$0xf]
  %v1672 = vld [vmem:[%s1 + $0x114] sm:$0xf]
  %v1673 = vld [vmem:[%s1 + $0x118] sm:$0xf]
  %v1674 = vld [vmem:[%s1 + $0x11c] sm:$0xf]
  %v1675 = vld [vmem:[%s1 + $0x120] sm:$0xf]
  %v1676 = vld [vmem:[%s1 + $0x124] sm:$0xf]
  %v1677 = vld [vmem:[%s1 + $0x128] sm:$0xf]
  %v1678 = vld [vmem:[%s1 + $0x12c] sm:$0xf]
  %v1679 = vld [vmem:[%s1 + $0x130] sm:$0xf]
  %v1680 = vld [vmem:[%s1 + $0x134] sm:$0xf]
  %v1681 = vld [vmem:[%s1 + $0x138] sm:$0xf]
  %v1682 = vld [vmem:[%s1 + $0x13c] sm:$0xf]
  %v1683 = vld [vmem:[%s1 + $0x140] sm:$0xf]
  %v1684 = vld [vmem:[%s1 + $0x144] sm:$0xf]
  %v1685 = vld [vmem:[%s1 + $0x148] sm:$0xf]
  %v1686 = vld [vmem:[%s1 + $0x14c] sm:$0xf]
  %v1687 = vld [vmem:[%s1 + $0x150] sm:$0xf]
  %v1688 = vld [vmem:[%s1 + $0x154] sm:$0xf]
  %v1689 = vld [vmem:[%s1 + $0x158] sm:$0xf]
  %v1690 = vld [vmem:[%s1 + $0x15c] sm:$0xf]
  %v1691 = vld [vmem:[%s1 + $0x160] sm:$0xf]
  %v1692 = vld [vmem:[%s1 + $0x164] sm:$0xf]
  %v1693 = vld [vmem:[%s1 + $0x168] sm:$0xf]
  %v1694 = vld [vmem:[%s1 + $0x16c] sm:$0xf]
  %v1695 = vld [vmem:[%s1 + $0x170] sm:$0xf]
  %v1696 = vld [vmem:[%s1 + $0x174] sm:$0xf]
  %v1697 = vld [vmem:[%s1 + $0x178] sm:$0xf]
  %v1698 = vld [vmem:[%s1 + $0x17c] sm:$0xf]
  %v1699 = vld [vmem:[%s1 + $0x180] sm:$0xf]
  %v1700 = vld [vmem:[%s1 + $0x184] sm:$0xf]
  %v1701 = vld [vmem:[%s1 + $0x188] sm:$0xf]
  %v1702 = vld [vmem:[%s1 + $0x18c] sm:$0xf]
  %v1703 = vld [vmem:[%s1 + $0x190] sm:$0xf]
  %v1704 = vld [vmem:[%s1 + $0x194] sm:$0xf]
  %v1705 = vld [vmem:[%s1 + $0x198] sm:$0xf]
  %v1706 = vld [vmem:[%s1 + $0x19c] sm:$0xf]
  %v1707 = vld [vmem:[%s1 + $0x1a0] sm:$0xf]
  %v1708 = vld [vmem:[%s1 + $0x1a4] sm:$0xf]
  %v1709 = vld [vmem:[%s1 + $0x1a8] sm:$0xf]
  %v1710 = vld [vmem:[%s1 + $0x1ac] sm:$0xf]
  %v1711 = vld [vmem:[%s1 + $0x1b0] sm:$0xf]
  %v1712 = vld [vmem:[%s1 + $0x1b4] sm:$0xf]
  %v1713 = vld [vmem:[%s1 + $0x1b8] sm:$0xf]
  %v1714 = vld [vmem:[%s1 + $0x1bc] sm:$0xf]
  %v1715 = vld [vmem:[%s1 + $0x1c0] sm:$0xf]
  %v1716 = vld [vmem:[%s1 + $0x1c4] sm:$0xf]
  %v1717 = vld [vmem:[%s1 + $0x1c8] sm:$0xf]
  %v1718 = vld [vmem:[%s1 + $0x1cc] sm:$0xf]
  %v1719 = vld [vmem:[%s1 + $0x1d0] sm:$0xf]
  %v1720 = vld [vmem:[%s1 + $0x1d4] sm:$0xf]
  %v1721 = vld [vmem:[%s1 + $0x1d8] sm:$0xf]
  %v1722 = vld [vmem:[%s1 + $0x1dc] sm:$0xf]
  %v1723 = vld [vmem:[%s1 + $0x1e0] sm:$0xf]
  %v1724 = vld [vmem:[%s1 + $0x1e4] sm:$0xf]
  %v1725 = vld [vmem:[%s1 + $0x1e8] sm:$0xf]
  %v1726 = vld [vmem:[%s1 + $0x1ec] sm:$0xf]
  %v1727 = vld [vmem:[%s1 + $0x1f0] sm:$0xf]
  %v1728 = vld [vmem:[%s1 + $0x1f4] sm:$0xf]
  %v1729 = vld [vmem:[%s1 + $0x1f8] sm:$0xf]
  %v1730 = vld [vmem:[%s1 + $0x1fc] sm:$0xf]
  %v1731 = vld [vmem:[%s1 + $0x200] sm:$0xf]
  %v1732 = vld [vmem:[%s1 + $0x204] sm:$0xf]
  %v1733 = vld [vmem:[%s1 + $0x208] sm:$0xf]
  %v1734 = vld [vmem:[%s1 + $0x20c] sm:$0xf]
  %v1735 = vld [vmem:[%s1 + $0x210] sm:$0xf]
  %v1736 = vld [vmem:[%s1 + $0x214] sm:$0xf]
  %v1737 = vld [vmem:[%s1 + $0x218] sm:$0xf]
  %v1738 = vld [vmem:[%s1 + $0x21c] sm:$0xf]
  %v1739 = vld [vmem:[%s1 + $0x220] sm:$0xf]
  %v1740 = vld [vmem:[%s1 + $0x224] sm:$0xf]
  %v1741 = vld [vmem:[%s1 + $0x228] sm:$0xf]
  %v1742 = vld [vmem:[%s1 + $0x22c] sm:$0xf]
  %v1743 = vld [vmem:[%s1 + $0x230] sm:$0xf]
  %v1744 = vld [vmem:[%s1 + $0x234] sm:$0xf]
  %v1745 = vld [vmem:[%s1 + $0x238] sm:$0xf]
  %v1746 = vld [vmem:[%s1 + $0x23c] sm:$0xf]
  %v1747 = vld [vmem:[%s2] sm:$0x1]
  %v1749 = vlaneseq
  %v1750 = vshrl.u32 %v1749, 7
  %v1751 = vsub.s32 0, %v1750
  %v1752 = vrot.slane %v1747, %v1751
  %v1898 = vunpack.c.l.b16 %v1603
  %v1899 = vunpack.c.l.b16 %v1604
  %v1900 = vunpack.c.l.b16 %v1605
  %v1901 = vunpack.c.l.b16 %v1606
  %v1902 = vunpack.c.l.b16 %v1607
  %v1903 = vunpack.c.l.b16 %v1608
  %v1904 = vunpack.c.l.b16 %v1609
  %v1905 = vunpack.c.l.b16 %v1610
  %v1906 = vunpack.c.l.b16 %v1611
  %v1907 = vunpack.c.l.b16 %v1612
  %v1908 = vunpack.c.l.b16 %v1613
  %v1909 = vunpack.c.l.b16 %v1614
  %v1910 = vunpack.c.l.b16 %v1615
  %v1911 = vunpack.c.l.b16 %v1616
  %v1912 = vunpack.c.l.b16 %v1617
  %v1913 = vunpack.c.l.b16 %v1618
  %v1914 = vunpack.c.l.b16 %v1619
  %v1915 = vunpack.c.l.b16 %v1620
  %v1916 = vunpack.c.l.b16 %v1621
  %v1917 = vunpack.c.l.b16 %v1622
  %v1918 = vunpack.c.l.b16 %v1623
  %v1919 = vunpack.c.l.b16 %v1624
  %v1920 = vunpack.c.l.b16 %v1625
  %v1921 = vunpack.c.l.b16 %v1626
  %v1922 = vunpack.c.l.b16 %v1627
  %v1923 = vunpack.c.l.b16 %v1628
  %v1924 = vunpack.c.l.b16 %v1629
  %v1925 = vunpack.c.l.b16 %v1630
  %v1926 = vunpack.c.l.b16 %v1631
  %v1927 = vunpack.c.l.b16 %v1632
  %v1928 = vunpack.c.l.b16 %v1633
  %v1929 = vunpack.c.l.b16 %v1634
  %v1930 = vunpack.c.l.b16 %v1635
  %v1931 = vunpack.c.l.b16 %v1636
  %v1932 = vunpack.c.l.b16 %v1637
  %v1933 = vunpack.c.l.b16 %v1638
  %v1934 = vunpack.c.l.b16 %v1639
  %v1935 = vunpack.c.l.b16 %v1640
  %v1936 = vunpack.c.l.b16 %v1641
  %v1937 = vunpack.c.l.b16 %v1642
  %v1938 = vunpack.c.l.b16 %v1643
  %v1939 = vunpack.c.l.b16 %v1644
  %v1940 = vunpack.c.l.b16 %v1645
  %v1941 = vunpack.c.l.b16 %v1646
  %v1942 = vunpack.c.l.b16 %v1647
  %v1943 = vunpack.c.l.b16 %v1648
  %v1944 = vunpack.c.l.b16 %v1649
  %v1945 = vunpack.c.l.b16 %v1650
  %v1946 = vunpack.c.l.b16 %v1651
  %v1947 = vunpack.c.l.b16 %v1652
  %v1948 = vunpack.c.l.b16 %v1653
  %v1949 = vunpack.c.l.b16 %v1654
  %v1950 = vunpack.c.l.b16 %v1655
  %v1951 = vunpack.c.l.b16 %v1656
  %v1952 = vunpack.c.l.b16 %v1657
  %v1953 = vunpack.c.l.b16 %v1658
  %v1954 = vunpack.c.l.b16 %v1659
  %v1955 = vunpack.c.l.b16 %v1660
  %v1956 = vunpack.c.l.b16 %v1661
  %v1957 = vunpack.c.l.b16 %v1662
  %v1958 = vunpack.c.l.b16 %v1663
  %v1959 = vunpack.c.l.b16 %v1664
  %v1960 = vunpack.c.l.b16 %v1665
  %v1961 = vunpack.c.l.b16 %v1666
  %v1962 = vunpack.c.l.b16 %v1667
  %v1963 = vunpack.c.l.b16 %v1668
  %v1964 = vunpack.c.l.b16 %v1669
  %v1965 = vunpack.c.l.b16 %v1670
  %v1966 = vunpack.c.l.b16 %v1671
  %v1967 = vunpack.c.l.b16 %v1672
  %v1968 = vunpack.c.l.b16 %v1673
  %v1969 = vunpack.c.l.b16 %v1674
  %v1970 = vunpack.c.l.b16 %v1675
  %v1971 = vunpack.c.l.b16 %v1676
  %v1972 = vunpack.c.l.b16 %v1677
  %v1973 = vunpack.c.l.b16 %v1678
  %v1974 = vunpack.c.l.b16 %v1679
  %v1975 = vunpack.c.l.b16 %v1680
  %v1976 = vunpack.c.l.b16 %v1681
  %v1977 = vunpack.c.l.b16 %v1682
  %v1978 = vunpack.c.l.b16 %v1683
  %v1979 = vunpack.c.l.b16 %v1684
  %v1980 = vunpack.c.l.b16 %v1685
  %v1981 = vunpack.c.l.b16 %v1686
  %v1982 = vunpack.c.l.b16 %v1687
  %v1983 = vunpack.c.l.b16 %v1688
  %v1984 = vunpack.c.l.b16 %v1689
  %v1985 = vunpack.c.l.b16 %v1690
  %v1986 = vunpack.c.l.b16 %v1691
  %v1987 = vunpack.c.l.b16 %v1692
  %v1988 = vunpack.c.l.b16 %v1693
  %v1989 = vunpack.c.l.b16 %v1694
  %v1990 = vunpack.c.l.b16 %v1695
  %v1991 = vunpack.c.l.b16 %v1696
  %v1992 = vunpack.c.l.b16 %v1697
  %v1993 = vunpack.c.l.b16 %v1698
  %v1994 = vunpack.c.l.b16 %v1699
  %v1995 = vunpack.c.l.b16 %v1700
  %v1996 = vunpack.c.l.b16 %v1701
  %v1997 = vunpack.c.l.b16 %v1702
  %v1998 = vunpack.c.l.b16 %v1703
  %v1999 = vunpack.c.l.b16 %v1704
  %v2000 = vunpack.c.l.b16 %v1705
  %v2001 = vunpack.c.l.b16 %v1706
  %v2002 = vunpack.c.l.b16 %v1707
  %v2003 = vunpack.c.l.b16 %v1708
  %v2004 = vunpack.c.l.b16 %v1709
  %v2005 = vunpack.c.l.b16 %v1710
  %v2006 = vunpack.c.l.b16 %v1711
  %v2007 = vunpack.c.l.b16 %v1712
  %v2008 = vunpack.c.l.b16 %v1713
  %v2009 = vunpack.c.l.b16 %v1714
  %v2010 = vunpack.c.l.b16 %v1715
  %v2011 = vunpack.c.l.b16 %v1716
  %v2012 = vunpack.c.l.b16 %v1717
  %v2013 = vunpack.c.l.b16 %v1718
  %v2014 = vunpack.c.l.b16 %v1719
  %v2015 = vunpack.c.l.b16 %v1720
  %v2016 = vunpack.c.l.b16 %v1721
  %v2017 = vunpack.c.l.b16 %v1722
  %v2018 = vunpack.c.l.b16 %v1723
  %v2019 = vunpack.c.l.b16 %v1724
  %v2020 = vunpack.c.l.b16 %v1725
  %v2021 = vunpack.c.l.b16 %v1726
  %v2022 = vunpack.c.l.b16 %v1727
  %v2023 = vunpack.c.l.b16 %v1728
  %v2024 = vunpack.c.l.b16 %v1729
  %v2025 = vunpack.c.l.b16 %v1730
  %v2026 = vunpack.c.l.b16 %v1731
  %v2027 = vunpack.c.l.b16 %v1732
  %v2028 = vunpack.c.l.b16 %v1733
  %v2029 = vunpack.c.l.b16 %v1734
  %v2030 = vunpack.c.l.b16 %v1735
  %v2031 = vunpack.c.l.b16 %v1736
  %v2032 = vunpack.c.l.b16 %v1737
  %v2033 = vunpack.c.l.b16 %v1738
  %v2034 = vunpack.c.l.b16 %v1739
  %v2035 = vunpack.c.l.b16 %v1740
  %v2036 = vunpack.c.l.b16 %v1741
  %v2037 = vunpack.c.l.b16 %v1742
  %v2038 = vunpack.c.l.b16 %v1743
  %v2039 = vunpack.c.l.b16 %v1744
  %v2040 = vunpack.c.l.b16 %v1745
  %v2041 = vunpack.c.l.b16 %v1746
  %v2042 = vpack.c.b16 %v1899, %v1898
  %v2043 = vpack.c.b16 %v1901, %v1900
  %v2044 = vpack.c.b16 %v1903, %v1902
  %v2045 = vpack.c.b16 %v1905, %v1904
  %v2046 = vpack.c.b16 %v1907, %v1906
  %v2047 = vpack.c.b16 %v1909, %v1908
  %v2048 = vpack.c.b16 %v1911, %v1910
  %v2049 = vpack.c.b16 %v1913, %v1912
  %v2050 = vpack.c.b16 %v1915, %v1914
  %v2051 = vpack.c.b16 %v1917, %v1916
  %v2052 = vpack.c.b16 %v1919, %v1918
  %v2053 = vpack.c.b16 %v1921, %v1920
  %v2054 = vpack.c.b16 %v1923, %v1922
  %v2055 = vpack.c.b16 %v1925, %v1924
  %v2056 = vpack.c.b16 %v1927, %v1926
  %v2057 = vpack.c.b16 %v1929, %v1928
  %v2058 = vpack.c.b16 %v1931, %v1930
  %v2059 = vpack.c.b16 %v1933, %v1932
  %v2060 = vpack.c.b16 %v1935, %v1934
  %v2061 = vpack.c.b16 %v1937, %v1936
  %v2062 = vpack.c.b16 %v1939, %v1938
  %v2063 = vpack.c.b16 %v1941, %v1940
  %v2064 = vpack.c.b16 %v1943, %v1942
  %v2065 = vpack.c.b16 %v1945, %v1944
  %v2066 = vpack.c.b16 %v1947, %v1946
  %v2067 = vpack.c.b16 %v1949, %v1948
  %v2068 = vpack.c.b16 %v1951, %v1950
  %v2069 = vpack.c.b16 %v1953, %v1952
  %v2070 = vpack.c.b16 %v1955, %v1954
  %v2071 = vpack.c.b16 %v1957, %v1956
  %v2072 = vpack.c.b16 %v1959, %v1958
  %v2073 = vpack.c.b16 %v1961, %v1960
  %v2074 = vpack.c.b16 %v1963, %v1962
  %v2075 = vpack.c.b16 %v1965, %v1964
  %v2076 = vpack.c.b16 %v1967, %v1966
  %v2077 = vpack.c.b16 %v1969, %v1968
  %v2078 = vpack.c.b16 %v1971, %v1970
  %v2079 = vpack.c.b16 %v1973, %v1972
  %v2080 = vpack.c.b16 %v1975, %v1974
  %v2081 = vpack.c.b16 %v1977, %v1976
  %v2082 = vpack.c.b16 %v1979, %v1978
  %v2083 = vpack.c.b16 %v1981, %v1980
  %v2084 = vpack.c.b16 %v1983, %v1982
  %v2085 = vpack.c.b16 %v1985, %v1984
  %v2086 = vpack.c.b16 %v1987, %v1986
  %v2087 = vpack.c.b16 %v1989, %v1988
  %v2088 = vpack.c.b16 %v1991, %v1990
  %v2089 = vpack.c.b16 %v1993, %v1992
  %v2090 = vpack.c.b16 %v1995, %v1994
  %v2091 = vpack.c.b16 %v1997, %v1996
  %v2092 = vpack.c.b16 %v1999, %v1998
  %v2093 = vpack.c.b16 %v2001, %v2000
  %v2094 = vpack.c.b16 %v2003, %v2002
  %v2095 = vpack.c.b16 %v2005, %v2004
  %v2096 = vpack.c.b16 %v2007, %v2006
  %v2097 = vpack.c.b16 %v2009, %v2008
  %v2098 = vpack.c.b16 %v2011, %v2010
  %v2099 = vpack.c.b16 %v2013, %v2012
  %v2100 = vpack.c.b16 %v2015, %v2014
  %v2101 = vpack.c.b16 %v2017, %v2016
  %v2102 = vpack.c.b16 %v2019, %v2018
  %v2103 = vpack.c.b16 %v2021, %v2020
  %v2104 = vpack.c.b16 %v2023, %v2022
  %v2105 = vpack.c.b16 %v2025, %v2024
  %v2106 = vpack.c.b16 %v2027, %v2026
  %v2107 = vpack.c.b16 %v2029, %v2028
  %v2108 = vpack.c.b16 %v2031, %v2030
  %v2109 = vpack.c.b16 %v2033, %v2032
  %v2110 = vpack.c.b16 %v2035, %v2034
  %v2111 = vpack.c.b16 %v2037, %v2036
  %v2112 = vpack.c.b16 %v2039, %v2038
  %v2113 = vpack.c.b16 %v2041, %v2040
  %2186 = vmatprep.subr.bf16.mxu0 0
  %2187 = vmatpush1.bf16.msra.mxu0 %v2042
  %2188 = vmatprep.subr.bf16.mxu0 0
  %2189 = vmatpush1.bf16.msra.mxu0 %v2043
  %2190 = vmatprep.subr.bf16.mxu0 0
  %2191 = vmatpush1.bf16.msra.mxu0 %v2044
  %2192 = vmatprep.subr.bf16.mxu0 0
  %2193 = vmatpush1.bf16.msra.mxu0 %v2045
  %2194 = vmatprep.subr.bf16.mxu0 0
  %2195 = vmatpush1.bf16.msra.mxu0 %v2046
  %2196 = vmatprep.subr.bf16.mxu0 0
  %2197 = vmatpush1.bf16.msra.mxu0 %v2047
  %2198 = vmatprep.subr.bf16.mxu0 0
  %2199 = vmatpush1.bf16.msra.mxu0 %v2048
  %2200 = vmatprep.subr.bf16.mxu0 0
  %2201 = vmatpush1.bf16.msra.mxu0 %v2049
  %2202 = vmatprep.subr.bf16.mxu0 0
  %2203 = vmatpush1.bf16.msra.mxu0 %v2050
  %2204 = vmatprep.subr.bf16.mxu0 0
  %2205 = vmatpush1.bf16.msra.mxu0 %v2051
  %2206 = vmatprep.subr.bf16.mxu0 0
  %2207 = vmatpush1.bf16.msra.mxu0 %v2052
  %2208 = vmatprep.subr.bf16.mxu0 0
  %2209 = vmatpush1.bf16.msra.mxu0 %v2053
  %2210 = vmatprep.subr.bf16.mxu0 0
  %2211 = vmatpush1.bf16.msra.mxu0 %v2054
  %2212 = vmatprep.subr.bf16.mxu0 0
  %2213 = vmatpush1.bf16.msra.mxu0 %v2055
  %2214 = vmatprep.subr.bf16.mxu0 0
  %2215 = vmatpush1.bf16.msra.mxu0 %v2056
  %2216 = vmatprep.subr.bf16.mxu0 0
  %2217 = vmatpush1.bf16.msra.mxu0 %v2057
  %2218 = vmatprep.mubr.bf16.mxu0 %v1007
  %2219 = vmatmul.mubr.bf16.gmra.mrb[0].mxu0 %v956
  %v2220 = vpop.f32.mrb[0].mxu0
  %v2221 = vadd.f32 %v1752, %v2220
  %v2222 = vpop.f32.mrb[0].mxu0
  %v2223 = vpop.f32.mrb[0].mxu0
  %v2224 = vadd.f32 %v1752, %v2223
  %v2225 = vpop.f32.mrb[0].mxu0
  %2226 = vmatprep.mubr.bf16.mxu0 %v1015
  %2227 = vmatmul.mubr.bf16.gmra.mrb[0].mxu0 %v957
  %v2228 = vpop.f32.mrb[0].mxu0
  %v2229 = vadd.f32 %v1752, %v2228
  %v2230 = vpop.f32.mrb[0].mxu0
  %v2231 = vpop.f32.mrb[0].mxu0
  %v2232 = vadd.f32 %v1752, %v2231
  %v2233 = vpop.f32.mrb[0].mxu0
  %2234 = vmatprep.mubr.bf16.mxu0 %v1023
  %2235 = vmatmul.mubr.bf16.gmra.mrb[0].mxu0 %v958
  %v2236 = vpop.f32.mrb[0].mxu0
  %v2237 = vadd.f32 %v1752, %v2236
  %v2238 = vpop.f32.mrb[0].mxu0
  %v2239 = vpop.f32.mrb[0].mxu0
  %v2240 = vadd.f32 %v1752, %v2239
  %v2241 = vpop.f32.mrb[0].mxu0
  %2242 = vmatprep.mubr.bf16.mxu0 %v1031
  %2243 = vmatmul.mubr.bf16.gmra.mrb[0].mxu0 %v959
  %v2244 = vpop.f32.mrb[0].mxu0
  %v2245 = vadd.f32 %v1752, %v2244
  %v2246 = vpop.f32.mrb[0].mxu0
  %v2247 = vpop.f32.mrb[0].mxu0
  %v2248 = vadd.f32 %v1752, %v2247
  %v2249 = vpop.f32.mrb[0].mxu0
  %2250 = vmatprep.mubr.bf16.mxu0 %v1039
  %2251 = vmatmul.mubr.bf16.gmra.mrb[0].mxu0 %v960
  %v2252 = vpop.f32.mrb[0].mxu0
  %v2253 = vadd.f32 %v1752, %v2252
  %v2254 = vpop.f32.mrb[0].mxu0
  %v2255 = vpop.f32.mrb[0].mxu0
  %v2256 = vadd.f32 %v1752, %v2255
  %v2257 = vpop.f32.mrb[0].mxu0
  %2258 = vmatprep.mubr.bf16.mxu0 %v1047
  %2259 = vmatmul.mubr.bf16.gmra.mrb[0].mxu0 %v961
  %v2260 = vpop.f32.mrb[0].mxu0
  %v2261 = vadd.f32 %v1752, %v2260
  %v2262 = vpop.f32.mrb[0].mxu0
  %v2263 = vpop.f32.mrb[0].mxu0
  %v2264 = vadd.f32 %v1752, %v2263
  %v2265 = vpop.f32.mrb[0].mxu0
  %2266 = vmatprep.mubr.bf16.mxu0 %v1055
  %2267 = vmatmul.mubr.bf16.gmra.mrb[0].mxu0 %v962
  %v2268 = vpop.f32.mrb[0].mxu0
  %v2269 = vadd.f32 %v1752, %v2268
  %v2270 = vpop.f32.mrb[0].mxu0
  %v2271 = vpop.f32.mrb[0].mxu0
  %v2272 = vadd.f32 %v1752, %v2271
  %v2273 = vpop.f32.mrb[0].mxu0
  %2274 = vmatprep.mubr.bf16.mxu0 %v1063
  %2275 = vmatmul.mubr.bf16.gmra.mrb[0].mxu0 %v963
  %v2276 = vpop.f32.mrb[0].mxu0
  %v2277 = vadd.f32 %v1752, %v2276
  %v2278 = vpop.f32.mrb[0].mxu0
  %v2279 = vpop.f32.mrb[0].mxu0
  %v2280 = vadd.f32 %v1752, %v2279
  %v2281 = vpop.f32.mrb[0].mxu0
  %2282 = vmatprep.mubr.bf16.mxu0 %v1071
  %2283 = vmatmul.mubr.bf16.gmra.mrb[0].mxu0 %v964
  %v2284 = vpop.f32.mrb[0].mxu0
  %v2285 = vadd.f32 %v1752, %v2284
  %v2286 = vpop.f32.mrb[0].mxu0
  %v2287 = vpop.f32.mrb[0].mxu0
  %v2288 = vadd.f32 %v1752, %v2287
  %v2289 = vpop.f32.mrb[0].mxu0
  %2290 = vmatprep.mubr.bf16.mxu0 %v1079
  %2291 = vmatmul.mubr.bf16.gmra.mrb[0].mxu0 %v965
  %v2292 = vpop.f32.mrb[0].mxu0
  %v2293 = vadd.f32 %v1752, %v2292
  %v2294 = vpop.f32.mrb[0].mxu0
  %v2295 = vpop.f32.mrb[0].mxu0
  %v2296 = vadd.f32 %v1752, %v2295
  %v2297 = vpop.f32.mrb[0].mxu0
  %2298 = vmatprep.mubr.bf16.mxu0 %v1087
  %2299 = vmatmul.mubr.bf16.gmra.mrb[0].mxu0 %v966
  %v2300 = vpop.f32.mrb[0].mxu0
  %v2301 = vadd.f32 %v1752, %v2300
  %v2302 = vpop.f32.mrb[0].mxu0
  %v2303 = vpop.f32.mrb[0].mxu0
  %v2304 = vadd.f32 %v1752, %v2303
  %v2305 = vpop.f32.mrb[0].mxu0
  %2306 = vmatprep.mubr.bf16.mxu0 %v1095
  %2307 = vmatmul.mubr.bf16.gmra.mrb[0].mxu0 %v967
  %v2308 = vpop.f32.mrb[0].mxu0
  %v2309 = vadd.f32 %v1752, %v2308
  %v2310 = vpop.f32.mrb[0].mxu0
  %v2311 = vpop.f32.mrb[0].mxu0
  %v2312 = vadd.f32 %v1752, %v2311
  %v2313 = vpop.f32.mrb[0].mxu0
  %2314 = vmatprep.mubr.bf16.mxu0 %v1103
  %2315 = vmatmul.mubr.bf16.gmra.mrb[0].mxu0 %v968
  %v2316 = vpop.f32.mrb[0].mxu0
  %v2317 = vadd.f32 %v1752, %v2316
  %v2318 = vpop.f32.mrb[0].mxu0
  %v2319 = vpop.f32.mrb[0].mxu0
  %v2320 = vadd.f32 %v1752, %v2319
  %v2321 = vpop.f32.mrb[0].mxu0
  %2322 = vmatprep.mubr.bf16.mxu0 %v1111
  %2323 = vmatmul.mubr.bf16.gmra.mrb[0].mxu0 %v969
  %v2324 = vpop.f32.mrb[0].mxu0
  %v2325 = vadd.f32 %v1752, %v2324
  %v2326 = vpop.f32.mrb[0].mxu0
  %v2327 = vpop.f32.mrb[0].mxu0
  %v2328 = vadd.f32 %v1752, %v2327
  %v2329 = vpop.f32.mrb[0].mxu0
  %2330 = vmatprep.mubr.bf16.mxu0 %v1119
  %2331 = vmatmul.mubr.bf16.gmra.mrb[0].mxu0 %v970
  %v2332 = vpop.f32.mrb[0].mxu0
  %v2333 = vadd.f32 %v1752, %v2332
  %v2334 = vpop.f32.mrb[0].mxu0
  %v2335 = vpop.f32.mrb[0].mxu0
  %v2336 = vadd.f32 %v1752, %v2335
  %v2337 = vpop.f32.mrb[0].mxu0
  %2338 = vmatprep.mubr.bf16.mxu0 %v1127
  %2339 = vmatmul.mubr.bf16.gmra.mrb[0].mxu0 %v971
  %v2340 = vpop.f32.mrb[0].mxu0
  %v2341 = vadd.f32 %v1752, %v2340
  %v2342 = vpop.f32.mrb[0].mxu0
  %v2343 = vpop.f32.mrb[0].mxu0
  %v2344 = vadd.f32 %v1752, %v2343
  %v2345 = vpop.f32.mrb[0].mxu0
  %2346 = vmatprep.mubr.bf16.mxu0 %v1135
  %2347 = vmatmul.mubr.bf16.gmra.mrb[0].mxu0 %v972
  %v2348 = vpop.f32.mrb[0].mxu0
  %v2349 = vadd.f32 %v1752, %v2348
  %v2350 = vpop.f32.mrb[0].mxu0
  %v2351 = vpop.f32.mrb[0].mxu0
  %v2352 = vadd.f32 %v1752, %v2351
  %v2353 = vpop.f32.mrb[0].mxu0
  %2354 = vmatprep.mubr.bf16.mxu0 %v1143
  %2355 = vmatmul.mubr.bf16.gmra.mrb[0].mxu0 %v973
  %v2356 = vpop.f32.mrb[0].mxu0
  %v2357 = vadd.f32 %v1752, %v2356
  %v2358 = vpop.f32.mrb[0].mxu0
  %v2359 = vpop.f32.mrb[0].mxu0
  %v2360 = vadd.f32 %v1752, %v2359
  %v2361 = vpop.f32.mrb[0].mxu0
  %2362 = vdwg.mxu0
  %2363 = vmatprep.subr.bf16.mxu0 0
  %2364 = vmatpush1.bf16.msra.mxu0 %v2058
  %2365 = vmatprep.subr.bf16.mxu0 0
  %2366 = vmatpush1.bf16.msra.mxu0 %v2059
  %2367 = vmatprep.subr.bf16.mxu0 0
  %2368 = vmatpush1.bf16.msra.mxu0 %v2060
  %2369 = vmatprep.subr.bf16.mxu0 0
  %2370 = vmatpush1.bf16.msra.mxu0 %v2061
  %2371 = vmatprep.subr.bf16.mxu0 0
  %2372 = vmatpush1.bf16.msra.mxu0 %v2062
  %2373 = vmatprep.subr.bf16.mxu0 0
  %2374 = vmatpush1.bf16.msra.mxu0 %v2063
  %2375 = vmatprep.subr.bf16.mxu0 0
  %2376 = vmatpush1.bf16.msra.mxu0 %v2064
  %2377 = vmatprep.subr.bf16.mxu0 0
  %2378 = vmatpush1.bf16.msra.mxu0 %v2065
  %2379 = vmatprep.subr.bf16.mxu0 0
  %2380 = vmatpush1.bf16.msra.mxu0 %v2066
  %2381 = vmatprep.subr.bf16.mxu0 0
  %2382 = vmatpush1.bf16.msra.mxu0 %v2067
  %2383 = vmatprep.subr.bf16.mxu0 0
  %2384 = vmatpush1.bf16.msra.mxu0 %v2068
  %2385 = vmatprep.subr.bf16.mxu0 0
  %2386 = vmatpush1.bf16.msra.mxu0 %v2069
  %2387 = vmatprep.subr.bf16.mxu0 0
  %2388 = vmatpush1.bf16.msra.mxu0 %v2070
  %2389 = vmatprep.subr.bf16.mxu0 0
  %2390 = vmatpush1.bf16.msra.mxu0 %v2071
  %2391 = vmatprep.subr.bf16.mxu0 0
  %2392 = vmatpush1.bf16.msra.mxu0 %v2072
  %2393 = vmatprep.subr.bf16.mxu0 0
  %2394 = vmatpush1.bf16.msra.mxu0 %v2073
  %2395 = vmatprep.mubr.bf16.mxu0 %v1233
  %2396 = vmatmul.mubr.bf16.gmra.mrb[0].mxu0 %v1168
  %v2397 = vpop.f32.mrb[0].mxu0
  %v2398 = vadd.f32 %v2221, %v2397
  %v2399 = vpop.f32.mrb[0].mxu0
  %v2400 = vpop.f32.mrb[0].mxu0
  %v2401 = vadd.f32 %v2224, %v2400
  %v2402 = vpop.f32.mrb[0].mxu0
  %2403 = vmatprep.mubr.bf16.mxu0 %v1172
  %2404 = vmatmul.mubr.bf16.gmra.mrb[0].mxu0 %v1170
  %v2405 = vpop.f32.mrb[0].mxu0
  %v2406 = vadd.f32 %v2229, %v2405
  %v2407 = vpop.f32.mrb[0].mxu0
  %v2408 = vpop.f32.mrb[0].mxu0
  %v2409 = vadd.f32 %v2232, %v2408
  %v2410 = vpop.f32.mrb[0].mxu0
  %2411 = vmatprep.mubr.bf16.mxu0 %v1174
  %2412 = vmatmul.mubr.bf16.gmra.mrb[0].mxu0 %v1172
  %v2413 = vpop.f32.mrb[0].mxu0
  %v2414 = vadd.f32 %v2237, %v2413
  %v2415 = vpop.f32.mrb[0].mxu0
  %v2416 = vpop.f32.mrb[0].mxu0
  %v2417 = vadd.f32 %v2240, %v2416
  %v2418 = vpop.f32.mrb[0].mxu0
  %2419 = vmatprep.mubr.bf16.mxu0 %v1176
  %2420 = vmatmul.mubr.bf16.gmra.mrb[0].mxu0 %v1174
  %v2421 = vpop.f32.mrb[0].mxu0
  %v2422 = vadd.f32 %v2245, %v2421
  %v2423 = vpop.f32.mrb[0].mxu0
  %v2424 = vpop.f32.mrb[0].mxu0
  %v2425 = vadd.f32 %v2248, %v2424
  %v2426 = vpop.f32.mrb[0].mxu0
  %2427 = vmatprep.mubr.bf16.mxu0 %v1178
  %2428 = vmatmul.mubr.bf16.gmra.mrb[0].mxu0 %v1176
  %v2429 = vpop.f32.mrb[0].mxu0
  %v2430 = vadd.f32 %v2253, %v2429
  %v2431 = vpop.f32.mrb[0].mxu0
  %v2432 = vpop.f32.mrb[0].mxu0
  %v2433 = vadd.f32 %v2256, %v2432
  %v2434 = vpop.f32.mrb[0].mxu0
  %2435 = vmatprep.mubr.bf16.mxu0 %v1180
  %2436 = vmatmul.mubr.bf16.gmra.mrb[0].mxu0 %v1178
  %v2437 = vpop.f32.mrb[0].mxu0
  %v2438 = vadd.f32 %v2261, %v2437
  %v2439 = vpop.f32.mrb[0].mxu0
  %v2440 = vpop.f32.mrb[0].mxu0
  %v2441 = vadd.f32 %v2264, %v2440
  %v2442 = vpop.f32.mrb[0].mxu0
  %2443 = vmatprep.mubr.bf16.mxu0 %v1182
  %2444 = vmatmul.mubr.bf16.gmra.mrb[0].mxu0 %v1180
  %v2445 = vpop.f32.mrb[0].mxu0
  %v2446 = vadd.f32 %v2269, %v2445
  %v2447 = vpop.f32.mrb[0].mxu0
  %v2448 = vpop.f32.mrb[0].mxu0
  %v2449 = vadd.f32 %v2272, %v2448
  %v2450 = vpop.f32.mrb[0].mxu0
  %2451 = vmatprep.mubr.bf16.mxu0 %v1184
  %2452 = vmatmul.mubr.bf16.gmra.mrb[0].mxu0 %v1182
  %v2453 = vpop.f32.mrb[0].mxu0
  %v2454 = vadd.f32 %v2277, %v2453
  %v2455 = vpop.f32.mrb[0].mxu0
  %v2456 = vpop.f32.mrb[0].mxu0
  %v2457 = vadd.f32 %v2280, %v2456
  %v2458 = vpop.f32.mrb[0].mxu0
  %2459 = vmatprep.mubr.bf16.mxu0 %v1186
  %2460 = vmatmul.mubr.bf16.gmra.mrb[0].mxu0 %v1184
  %v2461 = vpop.f32.mrb[0].mxu0
  %v2462 = vadd.f32 %v2285, %v2461
  %v2463 = vpop.f32.mrb[0].mxu0
  %v2464 = vpop.f32.mrb[0].mxu0
  %v2465 = vadd.f32 %v2288, %v2464
  %v2466 = vpop.f32.mrb[0].mxu0
  %2467 = vmatprep.mubr.bf16.mxu0 %v1188
  %2468 = vmatmul.mubr.bf16.gmra.mrb[0].mxu0 %v1186
  %v2469 = vpop.f32.mrb[0].mxu0
  %v2470 = vadd.f32 %v2293, %v2469
  %v2471 = vpop.f32.mrb[0].mxu0
  %v2472 = vpop.f32.mrb[0].mxu0
  %v2473 = vadd.f32 %v2296, %v2472
  %v2474 = vpop.f32.mrb[0].mxu0
  %2475 = vmatprep.mubr.bf16.mxu0 %v1190
  %2476 = vmatmul.mubr.bf16.gmra.mrb[0].mxu0 %v1188
  %v2477 = vpop.f32.mrb[0].mxu0
  %v2478 = vadd.f32 %v2301, %v2477
  %v2479 = vpop.f32.mrb[0].mxu0
  %v2480 = vpop.f32.mrb[0].mxu0
  %v2481 = vadd.f32 %v2304, %v2480
  %v2482 = vpop.f32.mrb[0].mxu0
  %2483 = vmatprep.mubr.bf16.mxu0 %v1192
  %2484 = vmatmul.mubr.bf16.gmra.mrb[0].mxu0 %v1190
  %v2485 = vpop.f32.mrb[0].mxu0
  %v2486 = vadd.f32 %v2309, %v2485
  %v2487 = vpop.f32.mrb[0].mxu0
  %v2488 = vpop.f32.mrb[0].mxu0
  %v2489 = vadd.f32 %v2312, %v2488
  %v2490 = vpop.f32.mrb[0].mxu0
  %2491 = vmatprep.mubr.bf16.mxu0 %v1194
  %2492 = vmatmul.mubr.bf16.gmra.mrb[0].mxu0 %v1192
  %v2493 = vpop.f32.mrb[0].mxu0
  %v2494 = vadd.f32 %v2317, %v2493
  %v2495 = vpop.f32.mrb[0].mxu0
  %v2496 = vpop.f32.mrb[0].mxu0
  %v2497 = vadd.f32 %v2320, %v2496
  %v2498 = vpop.f32.mrb[0].mxu0
  %2499 = vmatprep.mubr.bf16.mxu0 %v1196
  %2500 = vmatmul.mubr.bf16.gmra.mrb[0].mxu0 %v1194
  %v2501 = vpop.f32.mrb[0].mxu0
  %v2502 = vadd.f32 %v2325, %v2501
  %v2503 = vpop.f32.mrb[0].mxu0
  %v2504 = vpop.f32.mrb[0].mxu0
  %v2505 = vadd.f32 %v2328, %v2504
  %v2506 = vpop.f32.mrb[0].mxu0
  %2507 = vmatprep.mubr.bf16.mxu0 %v1198
  %2508 = vmatmul.mubr.bf16.gmra.mrb[0].mxu0 %v1196
  %v2509 = vpop.f32.mrb[0].mxu0
  %v2510 = vadd.f32 %v2333, %v2509
  %v2511 = vpop.f32.mrb[0].mxu0
  %v2512 = vpop.f32.mrb[0].mxu0
  %v2513 = vadd.f32 %v2336, %v2512
  %v2514 = vpop.f32.mrb[0].mxu0
  %2515 = vmatprep.mubr.bf16.mxu0 %v1200
  %2516 = vmatmul.mubr.bf16.gmra.mrb[0].mxu0 %v1198
  %v2517 = vpop.f32.mrb[0].mxu0
  %v2518 = vadd.f32 %v2341, %v2517
  %v2519 = vpop.f32.mrb[0].mxu0
  %v2520 = vpop.f32.mrb[0].mxu0
  %v2521 = vadd.f32 %v2344, %v2520
  %v2522 = vpop.f32.mrb[0].mxu0
  %2523 = vmatprep.mubr.bf16.mxu0 %v1235
  %2524 = vmatmul.mubr.bf16.gmra.mrb[0].mxu0 %v1200
  %v2525 = vpop.f32.mrb[0].mxu0
  %v2526 = vadd.f32 %v2349, %v2525
  %v2527 = vpop.f32.mrb[0].mxu0
  %v2528 = vpop.f32.mrb[0].mxu0
  %v2529 = vadd.f32 %v2352, %v2528
  %v2530 = vpop.f32.mrb[0].mxu0
  %2531 = vmatprep.mubr.bf16.mxu0 %v1237
  %2532 = vmatmul.mubr.bf16.gmra.mrb[0].mxu0 %v1202
  %v2533 = vpop.f32.mrb[0].mxu0
  %v2534 = vadd.f32 %v2357, %v2533
  %v2535 = vpop.f32.mrb[0].mxu0
  %v2536 = vpop.f32.mrb[0].mxu0
  %v2537 = vadd.f32 %v2360, %v2536
  %v2538 = vpop.f32.mrb[0].mxu0
  %2539 = vdwg.mxu0
  %2540 = vmatprep.subr.bf16.mxu0 0
  %2541 = vmatpush1.bf16.msra.mxu0 %v2074
  %2542 = vmatprep.subr.bf16.mxu0 0
  %2543 = vmatpush1.bf16.msra.mxu0 %v2075
  %2544 = vmatprep.subr.bf16.mxu0 0
  %2545 = vmatpush1.bf16.msra.mxu0 %v2076
  %2546 = vmatprep.subr.bf16.mxu0 0
  %2547 = vmatpush1.bf16.msra.mxu0 %v2077
  %2548 = vmatprep.subr.bf16.mxu0 0
  %2549 = vmatpush1.bf16.msra.mxu0 %v2078
  %2550 = vmatprep.subr.bf16.mxu0 0
  %2551 = vmatpush1.bf16.msra.mxu0 %v2079
  %2552 = vmatprep.subr.bf16.mxu0 0
  %2553 = vmatpush1.bf16.msra.mxu0 %v2080
  %2554 = vmatprep.subr.bf16.mxu0 0
  %2555 = vmatpush1.bf16.msra.mxu0 %v2081
  %2556 = vmatprep.subr.bf16.mxu0 0
  %2557 = vmatpush1.bf16.msra.mxu0 %v2082
  %2558 = vmatprep.subr.bf16.mxu0 0
  %2559 = vmatpush1.bf16.msra.mxu0 %v2083
  %2560 = vmatprep.subr.bf16.mxu0 0
  %2561 = vmatpush1.bf16.msra.mxu0 %v2084
  %2562 = vmatprep.subr.bf16.mxu0 0
  %2563 = vmatpush1.bf16.msra.mxu0 %v2085
  %2564 = vmatprep.subr.bf16.mxu0 0
  %2565 = vmatpush1.bf16.msra.mxu0 %v2086
  %2566 = vmatprep.subr.bf16.mxu0 0
  %2567 = vmatpush1.bf16.msra.mxu0 %v2087
  %2568 = vmatprep.subr.bf16.mxu0 0
  %2569 = vmatpush1.bf16.msra.mxu0 %v2088
  %2570 = vmatprep.subr.bf16.mxu0 0
  %2571 = vmatpush1.bf16.msra.mxu0 %v2089
  %2572 = vmatprep.mubr.bf16.mxu0 %v1359
  %2573 = vmatmul.mubr.bf16.gmra.mrb[0].mxu0 %v1256
  %v2574 = vpop.f32.mrb[0].mxu0
  %v2575 = vadd.f32 %v2398, %v2574
  %v2576 = vpop.f32.mrb[0].mxu0
  %v2577 = vpop.f32.mrb[0].mxu0
  %v2578 = vadd.f32 %v2401, %v2577
  %v2579 = vpop.f32.mrb[0].mxu0
  %2580 = vmatprep.mubr.bf16.mxu0 %v1361
  %2581 = vmatmul.mubr.bf16.gmra.mrb[0].mxu0 %v1260
  %v2582 = vpop.f32.mrb[0].mxu0
  %v2583 = vadd.f32 %v2406, %v2582
  %v2584 = vpop.f32.mrb[0].mxu0
  %v2585 = vpop.f32.mrb[0].mxu0
  %v2586 = vadd.f32 %v2409, %v2585
  %v2587 = vpop.f32.mrb[0].mxu0
  %2588 = vmatprep.mubr.bf16.mxu0 %v1363
  %2589 = vmatmul.mubr.bf16.gmra.mrb[0].mxu0 %v1264
  %v2590 = vpop.f32.mrb[0].mxu0
  %v2591 = vadd.f32 %v2414, %v2590
  %v2592 = vpop.f32.mrb[0].mxu0
  %v2593 = vpop.f32.mrb[0].mxu0
  %v2594 = vadd.f32 %v2417, %v2593
  %v2595 = vpop.f32.mrb[0].mxu0
  %2596 = vmatprep.mubr.bf16.mxu0 %v1365
  %2597 = vmatmul.mubr.bf16.gmra.mrb[0].mxu0 %v1268
  %v2598 = vpop.f32.mrb[0].mxu0
  %v2599 = vadd.f32 %v2422, %v2598
  %v2600 = vpop.f32.mrb[0].mxu0
  %v2601 = vpop.f32.mrb[0].mxu0
  %v2602 = vadd.f32 %v2425, %v2601
  %v2603 = vpop.f32.mrb[0].mxu0
  %2604 = vmatprep.mubr.bf16.mxu0 %v1367
  %2605 = vmatmul.mubr.bf16.gmra.mrb[0].mxu0 %v1272
  %v2606 = vpop.f32.mrb[0].mxu0
  %v2607 = vadd.f32 %v2430, %v2606
  %v2608 = vpop.f32.mrb[0].mxu0
  %v2609 = vpop.f32.mrb[0].mxu0
  %v2610 = vadd.f32 %v2433, %v2609
  %v2611 = vpop.f32.mrb[0].mxu0
  %2612 = vmatprep.mubr.bf16.mxu0 %v1369
  %2613 = vmatmul.mubr.bf16.gmra.mrb[0].mxu0 %v1276
  %v2614 = vpop.f32.mrb[0].mxu0
  %v2615 = vadd.f32 %v2438, %v2614
  %v2616 = vpop.f32.mrb[0].mxu0
  %v2617 = vpop.f32.mrb[0].mxu0
  %v2618 = vadd.f32 %v2441, %v2617
  %v2619 = vpop.f32.mrb[0].mxu0
  %2620 = vmatprep.mubr.bf16.mxu0 %v1371
  %2621 = vmatmul.mubr.bf16.gmra.mrb[0].mxu0 %v1280
  %v2622 = vpop.f32.mrb[0].mxu0
  %v2623 = vadd.f32 %v2446, %v2622
  %v2624 = vpop.f32.mrb[0].mxu0
  %v2625 = vpop.f32.mrb[0].mxu0
  %v2626 = vadd.f32 %v2449, %v2625
  %v2627 = vpop.f32.mrb[0].mxu0
  %2628 = vmatprep.mubr.bf16.mxu0 %v1373
  %2629 = vmatmul.mubr.bf16.gmra.mrb[0].mxu0 %v1284
  %v2630 = vpop.f32.mrb[0].mxu0
  %v2631 = vadd.f32 %v2454, %v2630
  %v2632 = vpop.f32.mrb[0].mxu0
  %v2633 = vpop.f32.mrb[0].mxu0
  %v2634 = vadd.f32 %v2457, %v2633
  %v2635 = vpop.f32.mrb[0].mxu0
  %2636 = vmatprep.mubr.bf16.mxu0 %v1375
  %2637 = vmatmul.mubr.bf16.gmra.mrb[0].mxu0 %v1288
  %v2638 = vpop.f32.mrb[0].mxu0
  %v2639 = vadd.f32 %v2462, %v2638
  %v2640 = vpop.f32.mrb[0].mxu0
  %v2641 = vpop.f32.mrb[0].mxu0
  %v2642 = vadd.f32 %v2465, %v2641
  %v2643 = vpop.f32.mrb[0].mxu0
  %2644 = vmatprep.mubr.bf16.mxu0 %v1377
  %2645 = vmatmul.mubr.bf16.gmra.mrb[0].mxu0 %v1292
  %v2646 = vpop.f32.mrb[0].mxu0
  %v2647 = vadd.f32 %v2470, %v2646
  %v2648 = vpop.f32.mrb[0].mxu0
  %v2649 = vpop.f32.mrb[0].mxu0
  %v2650 = vadd.f32 %v2473, %v2649
  %v2651 = vpop.f32.mrb[0].mxu0
  %2652 = vmatprep.mubr.bf16.mxu0 %v1379
  %2653 = vmatmul.mubr.bf16.gmra.mrb[0].mxu0 %v1296
  %v2654 = vpop.f32.mrb[0].mxu0
  %v2655 = vadd.f32 %v2478, %v2654
  %v2656 = vpop.f32.mrb[0].mxu0
  %v2657 = vpop.f32.mrb[0].mxu0
  %v2658 = vadd.f32 %v2481, %v2657
  %v2659 = vpop.f32.mrb[0].mxu0
  %2660 = vmatprep.mubr.bf16.mxu0 %v1381
  %2661 = vmatmul.mubr.bf16.gmra.mrb[0].mxu0 %v1300
  %v2662 = vpop.f32.mrb[0].mxu0
  %v2663 = vadd.f32 %v2486, %v2662
  %v2664 = vpop.f32.mrb[0].mxu0
  %v2665 = vpop.f32.mrb[0].mxu0
  %v2666 = vadd.f32 %v2489, %v2665
  %v2667 = vpop.f32.mrb[0].mxu0
  %2668 = vmatprep.mubr.bf16.mxu0 %v1383
  %2669 = vmatmul.mubr.bf16.gmra.mrb[0].mxu0 %v1304
  %v2670 = vpop.f32.mrb[0].mxu0
  %v2671 = vadd.f32 %v2494, %v2670
  %v2672 = vpop.f32.mrb[0].mxu0
  %v2673 = vpop.f32.mrb[0].mxu0
  %v2674 = vadd.f32 %v2497, %v2673
  %v2675 = vpop.f32.mrb[0].mxu0
  %2676 = vmatprep.mubr.bf16.mxu0 %v1385
  %2677 = vmatmul.mubr.bf16.gmra.mrb[0].mxu0 %v1308
  %v2678 = vpop.f32.mrb[0].mxu0
  %v2679 = vadd.f32 %v2502, %v2678
  %v2680 = vpop.f32.mrb[0].mxu0
  %v2681 = vpop.f32.mrb[0].mxu0
  %v2682 = vadd.f32 %v2505, %v2681
  %v2683 = vpop.f32.mrb[0].mxu0
  %2684 = vmatprep.mubr.bf16.mxu0 %v1387
  %2685 = vmatmul.mubr.bf16.gmra.mrb[0].mxu0 %v1312
  %v2686 = vpop.f32.mrb[0].mxu0
  %v2687 = vadd.f32 %v2510, %v2686
  %v2688 = vpop.f32.mrb[0].mxu0
  %v2689 = vpop.f32.mrb[0].mxu0
  %v2690 = vadd.f32 %v2513, %v2689
  %v2691 = vpop.f32.mrb[0].mxu0
  %2692 = vmatprep.mubr.bf16.mxu0 %v1389
  %2693 = vmatmul.mubr.bf16.gmra.mrb[0].mxu0 %v1316
  %v2694 = vpop.f32.mrb[0].mxu0
  %v2695 = vadd.f32 %v2518, %v2694
  %v2696 = vpop.f32.mrb[0].mxu0
  %v2697 = vpop.f32.mrb[0].mxu0
  %v2698 = vadd.f32 %v2521, %v2697
  %v2699 = vpop.f32.mrb[0].mxu0
  %2700 = vmatprep.mubr.bf16.mxu0 %v1391
  %2701 = vmatmul.mubr.bf16.gmra.mrb[0].mxu0 %v1325
  %v2702 = vpop.f32.mrb[0].mxu0
  %v2703 = vadd.f32 %v2526, %v2702
  %v2704 = vpop.f32.mrb[0].mxu0
  %v2705 = vpop.f32.mrb[0].mxu0
  %v2706 = vadd.f32 %v2529, %v2705
  %v2707 = vpop.f32.mrb[0].mxu0
  %2708 = vmatprep.mubr.bf16.mxu0 %v1393
  %2709 = vmatmul.mubr.bf16.gmra.mrb[0].mxu0 %v1334
  %v2710 = vpop.f32.mrb[0].mxu0
  %v2711 = vadd.f32 %v2534, %v2710
  %v2712 = vpop.f32.mrb[0].mxu0
  %v2713 = vpop.f32.mrb[0].mxu0
  %v2714 = vadd.f32 %v2537, %v2713
  %v2715 = vpop.f32.mrb[0].mxu0
  %2716 = vdwg.mxu0
  %2717 = vmatprep.subr.bf16.mxu0 0
  %2718 = vmatpush1.bf16.msra.mxu0 %v2090
  %2719 = vmatprep.subr.bf16.mxu0 0
  %2720 = vmatpush1.bf16.msra.mxu0 %v2091
  %2721 = vmatprep.subr.bf16.mxu0 0
  %2722 = vmatpush1.bf16.msra.mxu0 %v2092
  %2723 = vmatprep.subr.bf16.mxu0 0
  %2724 = vmatpush1.bf16.msra.mxu0 %v2093
  %2725 = vmatprep.subr.bf16.mxu0 0
  %2726 = vmatpush1.bf16.msra.mxu0 %v2094
  %2727 = vmatprep.subr.bf16.mxu0 0
  %2728 = vmatpush1.bf16.msra.mxu0 %v2095
  %2729 = vmatprep.subr.bf16.mxu0 0
  %2730 = vmatpush1.bf16.msra.mxu0 %v2096
  %2731 = vmatprep.subr.bf16.mxu0 0
  %2732 = vmatpush1.bf16.msra.mxu0 %v2097
  %2733 = vmatprep.subr.bf16.mxu0 0
  %2734 = vmatpush1.bf16.msra.mxu0 %v2098
  %2735 = vmatprep.subr.bf16.mxu0 0
  %2736 = vmatpush1.bf16.msra.mxu0 %v2099
  %2737 = vmatprep.subr.bf16.mxu0 0
  %2738 = vmatpush1.bf16.msra.mxu0 %v2100
  %2739 = vmatprep.subr.bf16.mxu0 0
  %2740 = vmatpush1.bf16.msra.mxu0 %v2101
  %2741 = vmatprep.subr.bf16.mxu0 0
  %2742 = vmatpush1.bf16.msra.mxu0 %v2102
  %2743 = vmatprep.subr.bf16.mxu0 0
  %2744 = vmatpush1.bf16.msra.mxu0 %v2103
  %2745 = vmatprep.subr.bf16.mxu0 0
  %2746 = vmatpush1.bf16.msra.mxu0 %v2104
  %2747 = vmatprep.subr.bf16.mxu0 0
  %2748 = vmatpush1.bf16.msra.mxu0 %v2105
  %2749 = vmatprep.mubr.bf16.mxu0 %v1447
  %2750 = vmatmul.mubr.bf16.gmra.mrb[0].mxu0 %v1424
  %v2751 = vpop.f32.mrb[0].mxu0
  %v2752 = vadd.f32 %v2575, %v2751
  %v2753 = vpop.f32.mrb[0].mxu0
  %v2754 = vpop.f32.mrb[0].mxu0
  %v2755 = vadd.f32 %v2578, %v2754
  %v2756 = vpop.f32.mrb[0].mxu0
  %2757 = vmatprep.mubr.bf16.mxu0 %v1451
  %2758 = vmatmul.mubr.bf16.gmra.mrb[0].mxu0 %v1363
  %v2759 = vpop.f32.mrb[0].mxu0
  %v2760 = vadd.f32 %v2583, %v2759
  %v2761 = vpop.f32.mrb[0].mxu0
  %v2762 = vpop.f32.mrb[0].mxu0
  %v2763 = vadd.f32 %v2586, %v2762
  %v2764 = vpop.f32.mrb[0].mxu0
  %2765 = vmatprep.mubr.bf16.mxu0 %v1455
  %2766 = vmatmul.mubr.bf16.gmra.mrb[0].mxu0 %v1365
  %v2767 = vpop.f32.mrb[0].mxu0
  %v2768 = vadd.f32 %v2591, %v2767
  %v2769 = vpop.f32.mrb[0].mxu0
  %v2770 = vpop.f32.mrb[0].mxu0
  %v2771 = vadd.f32 %v2594, %v2770
  %v2772 = vpop.f32.mrb[0].mxu0
  %2773 = vmatprep.mubr.bf16.mxu0 %v1459
  %2774 = vmatmul.mubr.bf16.gmra.mrb[0].mxu0 %v1367
  %v2775 = vpop.f32.mrb[0].mxu0
  %v2776 = vadd.f32 %v2599, %v2775
  %v2777 = vpop.f32.mrb[0].mxu0
  %v2778 = vpop.f32.mrb[0].mxu0
  %v2779 = vadd.f32 %v2602, %v2778
  %v2780 = vpop.f32.mrb[0].mxu0
  %2781 = vmatprep.mubr.bf16.mxu0 %v1463
  %2782 = vmatmul.mubr.bf16.gmra.mrb[0].mxu0 %v1369
  %v2783 = vpop.f32.mrb[0].mxu0
  %v2784 = vadd.f32 %v2607, %v2783
  %v2785 = vpop.f32.mrb[0].mxu0
  %v2786 = vpop.f32.mrb[0].mxu0
  %v2787 = vadd.f32 %v2610, %v2786
  %v2788 = vpop.f32.mrb[0].mxu0
  %2789 = vmatprep.mubr.bf16.mxu0 %v1467
  %2790 = vmatmul.mubr.bf16.gmra.mrb[0].mxu0 %v1371
  %v2791 = vpop.f32.mrb[0].mxu0
  %v2792 = vadd.f32 %v2615, %v2791
  %v2793 = vpop.f32.mrb[0].mxu0
  %v2794 = vpop.f32.mrb[0].mxu0
  %v2795 = vadd.f32 %v2618, %v2794
  %v2796 = vpop.f32.mrb[0].mxu0
  %2797 = vmatprep.mubr.bf16.mxu0 %v1471
  %2798 = vmatmul.mubr.bf16.gmra.mrb[0].mxu0 %v1373
  %v2799 = vpop.f32.mrb[0].mxu0
  %v2800 = vadd.f32 %v2623, %v2799
  %v2801 = vpop.f32.mrb[0].mxu0
  %v2802 = vpop.f32.mrb[0].mxu0
  %v2803 = vadd.f32 %v2626, %v2802
  %v2804 = vpop.f32.mrb[0].mxu0
  %2805 = vmatprep.mubr.bf16.mxu0 %v1475
  %2806 = vmatmul.mubr.bf16.gmra.mrb[0].mxu0 %v1375
  %v2807 = vpop.f32.mrb[0].mxu0
  %v2808 = vadd.f32 %v2631, %v2807
  %v2809 = vpop.f32.mrb[0].mxu0
  %v2810 = vpop.f32.mrb[0].mxu0
  %v2811 = vadd.f32 %v2634, %v2810
  %v2812 = vpop.f32.mrb[0].mxu0
  %2813 = vmatprep.mubr.bf16.mxu0 %v1479
  %2814 = vmatmul.mubr.bf16.gmra.mrb[0].mxu0 %v1377
  %v2815 = vpop.f32.mrb[0].mxu0
  %v2816 = vadd.f32 %v2639, %v2815
  %v2817 = vpop.f32.mrb[0].mxu0
  %v2818 = vpop.f32.mrb[0].mxu0
  %v2819 = vadd.f32 %v2642, %v2818
  %v2820 = vpop.f32.mrb[0].mxu0
  %2821 = vmatprep.mubr.bf16.mxu0 %v1483
  %2822 = vmatmul.mubr.bf16.gmra.mrb[0].mxu0 %v1379
  %v2823 = vpop.f32.mrb[0].mxu0
  %v2824 = vadd.f32 %v2647, %v2823
  %v2825 = vpop.f32.mrb[0].mxu0
  %v2826 = vpop.f32.mrb[0].mxu0
  %v2827 = vadd.f32 %v2650, %v2826
  %v2828 = vpop.f32.mrb[0].mxu0
  %2829 = vmatprep.mubr.bf16.mxu0 %v1487
  %2830 = vmatmul.mubr.bf16.gmra.mrb[0].mxu0 %v1381
  %v2831 = vpop.f32.mrb[0].mxu0
  %v2832 = vadd.f32 %v2655, %v2831
  %v2833 = vpop.f32.mrb[0].mxu0
  %v2834 = vpop.f32.mrb[0].mxu0
  %v2835 = vadd.f32 %v2658, %v2834
  %v2836 = vpop.f32.mrb[0].mxu0
  %2837 = vmatprep.mubr.bf16.mxu0 %v1491
  %2838 = vmatmul.mubr.bf16.gmra.mrb[0].mxu0 %v1383
  %v2839 = vpop.f32.mrb[0].mxu0
  %v2840 = vadd.f32 %v2663, %v2839
  %v2841 = vpop.f32.mrb[0].mxu0
  %v2842 = vpop.f32.mrb[0].mxu0
  %v2843 = vadd.f32 %v2666, %v2842
  %v2844 = vpop.f32.mrb[0].mxu0
  %2845 = vmatprep.mubr.bf16.mxu0 %v1495
  %2846 = vmatmul.mubr.bf16.gmra.mrb[0].mxu0 %v1385
  %v2847 = vpop.f32.mrb[0].mxu0
  %v2848 = vadd.f32 %v2671, %v2847
  %v2849 = vpop.f32.mrb[0].mxu0
  %v2850 = vpop.f32.mrb[0].mxu0
  %v2851 = vadd.f32 %v2674, %v2850
  %v2852 = vpop.f32.mrb[0].mxu0
  %2853 = vmatprep.mubr.bf16.mxu0 %v1499
  %2854 = vmatmul.mubr.bf16.gmra.mrb[0].mxu0 %v1387
  %v2855 = vpop.f32.mrb[0].mxu0
  %v2856 = vadd.f32 %v2679, %v2855
  %v2857 = vpop.f32.mrb[0].mxu0
  %v2858 = vpop.f32.mrb[0].mxu0
  %v2859 = vadd.f32 %v2682, %v2858
  %v2860 = vpop.f32.mrb[0].mxu0
  %2861 = vmatprep.mubr.bf16.mxu0 %v1503
  %2862 = vmatmul.mubr.bf16.gmra.mrb[0].mxu0 %v1389
  %v2863 = vpop.f32.mrb[0].mxu0
  %v2864 = vadd.f32 %v2687, %v2863
  %v2865 = vpop.f32.mrb[0].mxu0
  %v2866 = vpop.f32.mrb[0].mxu0
  %v2867 = vadd.f32 %v2690, %v2866
  %v2868 = vpop.f32.mrb[0].mxu0
  %2869 = vmatprep.mubr.bf16.mxu0 %v1507
  %2870 = vmatmul.mubr.bf16.gmra.mrb[0].mxu0 %v1391
  %v2871 = vpop.f32.mrb[0].mxu0
  %v2872 = vadd.f32 %v2695, %v2871
  %v2873 = vpop.f32.mrb[0].mxu0
  %v2874 = vpop.f32.mrb[0].mxu0
  %v2875 = vadd.f32 %v2698, %v2874
  %v2876 = vpop.f32.mrb[0].mxu0
  %2877 = vmatprep.mubr.bf16.mxu0 %v1516
  %2878 = vmatmul.mubr.bf16.gmra.mrb[0].mxu0 %v1426
  %v2879 = vpop.f32.mrb[0].mxu0
  %v2880 = vadd.f32 %v2703, %v2879
  %v2881 = vpop.f32.mrb[0].mxu0
  %v2882 = vpop.f32.mrb[0].mxu0
  %v2883 = vadd.f32 %v2706, %v2882
  %v2884 = vpop.f32.mrb[0].mxu0
  %2885 = vmatprep.mubr.bf16.mxu0 %v1525
  %2886 = vmatmul.mubr.bf16.gmra.mrb[0].mxu0 %v1428
  %v2887 = vpop.f32.mrb[0].mxu0
  %v2888 = vadd.f32 %v2711, %v2887
  %v2889 = vpop.f32.mrb[0].mxu0
  %v2890 = vpop.f32.mrb[0].mxu0
  %v2891 = vadd.f32 %v2714, %v2890
  %v2892 = vpop.f32.mrb[0].mxu0
  %2893 = vdwg.mxu0
  %2894 = vmatprep.subr.bf16.mxu0 0
  %2895 = vmatpush1.bf16.msra.mxu0 %v2106
  %2896 = vmatprep.subr.bf16.mxu0 0
  %2897 = vmatpush1.bf16.msra.mxu0 %v2107
  %2898 = vmatprep.subr.bf16.mxu0 0
  %2899 = vmatpush1.bf16.msra.mxu0 %v2108
  %2900 = vmatprep.subr.bf16.mxu0 0
  %2901 = vmatpush1.bf16.msra.mxu0 %v2109
  %2902 = vmatprep.subr.bf16.mxu0 0
  %2903 = vmatpush1.bf16.msra.mxu0 %v2110
  %2904 = vmatprep.subr.bf16.mxu0 0
  %2905 = vmatpush1.bf16.msra.mxu0 %v2111
  %2906 = vmatprep.subr.bf16.mxu0 0
  %2907 = vmatpush1.bf16.msra.mxu0 %v2112
  %2908 = vmatprep.subr.bf16.mxu0 0
  %2909 = vmatpush1.bf16.msra.mxu0 %v2113
  %2910 = vmatprep.subr.bf16.mxu0 0
  %2911 = vmatpush1.bf16.msra.mxu0 0
  %2912 = vmatprep.subr.bf16.mxu0 0
  %2913 = vmatpush1.bf16.msra.mxu0 0
  %2914 = vmatprep.subr.bf16.mxu0 0
  %2915 = vmatpush1.bf16.msra.mxu0 0
  %2916 = vmatprep.subr.bf16.mxu0 0
  %2917 = vmatpush1.bf16.msra.mxu0 0
  %2918 = vmatprep.subr.bf16.mxu0 0
  %2919 = vmatpush1.bf16.msra.mxu0 0
  %2920 = vmatprep.subr.bf16.mxu0 0
  %2921 = vmatpush1.bf16.msra.mxu0 0
  %2922 = vmatprep.subr.bf16.mxu0 0
  %2923 = vmatpush1.bf16.msra.mxu0 0
  %2924 = vmatprep.subr.bf16.mxu0 0
  %2925 = vmatpush1.bf16.msra.mxu0 0
  %2926 = vmatprep.mubr.bf16.mxu0 0
  %2927 = vmatmul.mubr.bf16.gmra.mrb[0].mxu0 %v1550
  %v2928 = vpop.f32.mrb[0].mxu0
  %v2929 = vadd.f32 %v2752, %v2928
  %v2930 = vpop.f32.mrb[0].mxu0
  %v2931 = vpop.f32.mrb[0].mxu0
  %v2932 = vadd.f32 %v2755, %v2931
  %v2933 = vpop.f32.mrb[0].mxu0
  %2934 = vmatprep.mubr.bf16.mxu0 0
  %2935 = vmatmul.mubr.bf16.gmra.mrb[0].mxu0 %v1552
  %v2936 = vpop.f32.mrb[0].mxu0
  %v2937 = vadd.f32 %v2760, %v2936
  %v2938 = vpop.f32.mrb[0].mxu0
  %v2939 = vpop.f32.mrb[0].mxu0
  %v2940 = vadd.f32 %v2763, %v2939
  %v2941 = vpop.f32.mrb[0].mxu0
  %2942 = vmatprep.mubr.bf16.mxu0 0
  %2943 = vmatmul.mubr.bf16.gmra.mrb[0].mxu0 %v1554
  %v2944 = vpop.f32.mrb[0].mxu0
  %v2945 = vadd.f32 %v2768, %v2944
  %v2946 = vpop.f32.mrb[0].mxu0
  %v2947 = vpop.f32.mrb[0].mxu0
  %v2948 = vadd.f32 %v2771, %v2947
  %v2949 = vpop.f32.mrb[0].mxu0
  %2950 = vmatprep.mubr.bf16.mxu0 0
  %2951 = vmatmul.mubr.bf16.gmra.mrb[0].mxu0 %v1556
  %v2952 = vpop.f32.mrb[0].mxu0
  %v2953 = vadd.f32 %v2776, %v2952
  %v2954 = vpop.f32.mrb[0].mxu0
  %v2955 = vpop.f32.mrb[0].mxu0
  %v2956 = vadd.f32 %v2779, %v2955
  %v2957 = vpop.f32.mrb[0].mxu0
  %2958 = vmatprep.mubr.bf16.mxu0 0
  %2959 = vmatmul.mubr.bf16.gmra.mrb[0].mxu0 %v1558
  %v2960 = vpop.f32.mrb[0].mxu0
  %v2961 = vadd.f32 %v2784, %v2960
  %v2962 = vpop.f32.mrb[0].mxu0
  %v2963 = vpop.f32.mrb[0].mxu0
  %v2964 = vadd.f32 %v2787, %v2963
  %v2965 = vpop.f32.mrb[0].mxu0
  %2966 = vmatprep.mubr.bf16.mxu0 0
  %2967 = vmatmul.mubr.bf16.gmra.mrb[0].mxu0 %v1560
  %v2968 = vpop.f32.mrb[0].mxu0
  %v2969 = vadd.f32 %v2792, %v2968
  %v2970 = vpop.f32.mrb[0].mxu0
  %v2971 = vpop.f32.mrb[0].mxu0
  %v2972 = vadd.f32 %v2795, %v2971
  %v2973 = vpop.f32.mrb[0].mxu0
  %2974 = vmatprep.mubr.bf16.mxu0 0
  %2975 = vmatmul.mubr.bf16.gmra.mrb[0].mxu0 %v1562
  %v2976 = vpop.f32.mrb[0].mxu0
  %v2977 = vadd.f32 %v2800, %v2976
  %v2978 = vpop.f32.mrb[0].mxu0
  %v2979 = vpop.f32.mrb[0].mxu0
  %v2980 = vadd.f32 %v2803, %v2979
  %v2981 = vpop.f32.mrb[0].mxu0
  %2982 = vmatprep.mubr.bf16.mxu0 0
  %2983 = vmatmul.mubr.bf16.gmra.mrb[0].mxu0 %v1564
  %v2984 = vpop.f32.mrb[0].mxu0
  %v2985 = vadd.f32 %v2808, %v2984
  %v2986 = vpop.f32.mrb[0].mxu0
  %v2987 = vpop.f32.mrb[0].mxu0
  %v2988 = vadd.f32 %v2811, %v2987
  %v2989 = vpop.f32.mrb[0].mxu0
  %2990 = vmatprep.mubr.bf16.mxu0 0
  %2991 = vmatmul.mubr.bf16.gmra.mrb[0].mxu0 %v1566
  %v2992 = vpop.f32.mrb[0].mxu0
  %v2993 = vadd.f32 %v2816, %v2992
  %v2994 = vpop.f32.mrb[0].mxu0
  %v2995 = vpop.f32.mrb[0].mxu0
  %v2996 = vadd.f32 %v2819, %v2995
  %v2997 = vpop.f32.mrb[0].mxu0
  %2998 = vmatprep.mubr.bf16.mxu0 0
  %2999 = vmatmul.mubr.bf16.gmra.mrb[0].mxu0 %v1568
  %v3000 = vpop.f32.mrb[0].mxu0
  %v3001 = vadd.f32 %v2824, %v3000
  %v3002 = vpop.f32.mrb[0].mxu0
  %v3003 = vpop.f32.mrb[0].mxu0
  %v3004 = vadd.f32 %v2827, %v3003
  %v3005 = vpop.f32.mrb[0].mxu0
  %3006 = vmatprep.mubr.bf16.mxu0 0
  %3007 = vmatmul.mubr.bf16.gmra.mrb[0].mxu0 %v1570
  %v3008 = vpop.f32.mrb[0].mxu0
  %v3009 = vadd.f32 %v2832, %v3008
  %v3010 = vpop.f32.mrb[0].mxu0
  %v3011 = vpop.f32.mrb[0].mxu0
  %v3012 = vadd.f32 %v2835, %v3011
  %v3013 = vpop.f32.mrb[0].mxu0
  %3014 = vmatprep.mubr.bf16.mxu0 0
  %3015 = vmatmul.mubr.bf16.gmra.mrb[0].mxu0 %v1572
  %v3016 = vpop.f32.mrb[0].mxu0
  %v3017 = vadd.f32 %v2840, %v3016
  %v3018 = vpop.f32.mrb[0].mxu0
  %v3019 = vpop.f32.mrb[0].mxu0
  %v3020 = vadd.f32 %v2843, %v3019
  %v3021 = vpop.f32.mrb[0].mxu0
  %3022 = vmatprep.mubr.bf16.mxu0 0
  %3023 = vmatmul.mubr.bf16.gmra.mrb[0].mxu0 %v1574
  %v3024 = vpop.f32.mrb[0].mxu0
  %v3025 = vadd.f32 %v2848, %v3024
  %v3026 = vpop.f32.mrb[0].mxu0
  %v3027 = vpop.f32.mrb[0].mxu0
  %v3028 = vadd.f32 %v2851, %v3027
  %v3029 = vpop.f32.mrb[0].mxu0
  %3030 = vmatprep.mubr.bf16.mxu0 0
  %3031 = vmatmul.mubr.bf16.gmra.mrb[0].mxu0 %v1576
  %v3032 = vpop.f32.mrb[0].mxu0
  %v3033 = vadd.f32 %v2856, %v3032
  %v3034 = vpop.f32.mrb[0].mxu0
  %v3035 = vpop.f32.mrb[0].mxu0
  %v3036 = vadd.f32 %v2859, %v3035
  %v3037 = vpop.f32.mrb[0].mxu0
  %3038 = vmatprep.mubr.bf16.mxu0 0
  %3039 = vmatmul.mubr.bf16.gmra.mrb[0].mxu0 %v1578
  %v3040 = vpop.f32.mrb[0].mxu0
  %v3041 = vadd.f32 %v2864, %v3040
  %v3042 = vpop.f32.mrb[0].mxu0
  %v3043 = vpop.f32.mrb[0].mxu0
  %v3044 = vadd.f32 %v2867, %v3043
  %v3045 = vpop.f32.mrb[0].mxu0
  %3046 = vmatprep.mubr.bf16.mxu0 0
  %3047 = vmatmul.mubr.bf16.gmra.mrb[0].mxu0 %v1580
  %v3048 = vpop.f32.mrb[0].mxu0
  %v3049 = vadd.f32 %v2872, %v3048
  %v3050 = vpop.f32.mrb[0].mxu0
  %v3051 = vpop.f32.mrb[0].mxu0
  %v3052 = vadd.f32 %v2875, %v3051
  %v3053 = vpop.f32.mrb[0].mxu0
  %3054 = vmatprep.mubr.bf16.mxu0 0
  %3055 = vmatmul.mubr.bf16.gmra.mrb[0].mxu0 %v1582
  %v3056 = vpop.f32.mrb[0].mxu0
  %v3057 = vadd.f32 %v2880, %v3056
  %v3058 = vpop.f32.mrb[0].mxu0
  %v3059 = vpop.f32.mrb[0].mxu0
  %v3060 = vadd.f32 %v2883, %v3059
  %v3061 = vpop.f32.mrb[0].mxu0
  %3062 = vmatprep.mubr.bf16.mxu0 0
  %3063 = vmatmul.mubr.bf16.gmra.mrb[0].mxu0 %v1584
  %v3064 = vpop.f32.mrb[0].mxu0
  %v3065 = vadd.f32 %v2888, %v3064
  %v3066 = vpop.f32.mrb[0].mxu0
  %v3067 = vpop.f32.mrb[0].mxu0
  %v3068 = vadd.f32 %v2891, %v3067
  %v3069 = vpop.f32.mrb[0].mxu0
  %3070 = vdwg.mxu0
  %v3071 = vmax.f32 %v2929, 0.0
  %v3072 = vmax.f32 %v2932, 0.0
  %v3073 = vmax.f32 %v2937, 0.0
  %v3074 = vmax.f32 %v2940, 0.0
  %v3075 = vmax.f32 %v2945, 0.0
  %v3076 = vmax.f32 %v2948, 0.0
  %v3077 = vmax.f32 %v2953, 0.0
  %v3078 = vmax.f32 %v2956, 0.0
  %v3079 = vmax.f32 %v2961, 0.0
  %v3080 = vmax.f32 %v2964, 0.0
  %v3081 = vmax.f32 %v2969, 0.0
  %v3082 = vmax.f32 %v2972, 0.0
  %v3083 = vmax.f32 %v2977, 0.0
  %v3084 = vmax.f32 %v2980, 0.0
  %v3085 = vmax.f32 %v2985, 0.0
  %v3086 = vmax.f32 %v2988, 0.0
  %v3087 = vmax.f32 %v2993, 0.0
  %v3088 = vmax.f32 %v2996, 0.0
  %v3089 = vmax.f32 %v3001, 0.0
  %v3090 = vmax.f32 %v3004, 0.0
  %v3091 = vmax.f32 %v3009, 0.0
  %v3092 = vmax.f32 %v3012, 0.0
  %v3093 = vmax.f32 %v3017, 0.0
  %v3094 = vmax.f32 %v3020, 0.0
  %v3095 = vmax.f32 %v3025, 0.0
  %v3096 = vmax.f32 %v3028, 0.0
  %v3097 = vmax.f32 %v3033, 0.0
  %v3098 = vmax.f32 %v3036, 0.0
  %v3099 = vmax.f32 %v3041, 0.0
  %v3100 = vmax.f32 %v3044, 0.0
  %v3101 = vmax.f32 %v3049, 0.0
  %v3102 = vmax.f32 %v3052, 0.0
  %v3103 = vmax.f32 %v3057, 0.0
  %v3104 = vmax.f32 %v3060, 0.0
  %v3105 = vmax.f32 %v3065, 0.0
  %v3106 = vmax.f32 %v3068, 0.0
  %v3107 = vmul.f32 %v3071, %v798
  %v3108 = vmul.f32 %v3072, %v799
  %v3109 = vmul.f32 %v3073, %v800
  %v3110 = vmul.f32 %v3074, %v801
  %v3111 = vmul.f32 %v3075, %v802
  %v3112 = vmul.f32 %v3076, %v803
  %v3113 = vmul.f32 %v3077, %v804
  %v3114 = vmul.f32 %v3078, %v805
  %v3115 = vmul.f32 %v3079, %v806
  %v3116 = vmul.f32 %v3080, %v807
  %v3117 = vmul.f32 %v3081, %v808
  %v3118 = vmul.f32 %v3082, %v809
  %v3119 = vmul.f32 %v3083, %v810
  %v3120 = vmul.f32 %v3084, %v811
  %v3121 = vmul.f32 %v3085, %v812
  %v3122 = vmul.f32 %v3086, %v813
  %v3123 = vmul.f32 %v3087, %v814
  %v3124 = vmul.f32 %v3088, %v815
  %v3125 = vmul.f32 %v3089, %v816
  %v3126 = vmul.f32 %v3090, %v817
  %v3127 = vmul.f32 %v3091, %v818
  %v3128 = vmul.f32 %v3092, %v819
  %v3129 = vmul.f32 %v3093, %v820
  %v3130 = vmul.f32 %v3094, %v821
  %v3131 = vmul.f32 %v3095, %v822
  %v3132 = vmul.f32 %v3096, %v823
  %v3133 = vmul.f32 %v3097, %v824
  %v3134 = vmul.f32 %v3098, %v825
  %v3135 = vmul.f32 %v3099, %v826
  %v3136 = vmul.f32 %v3100, %v827
  %v3137 = vmul.f32 %v3101, %v828
  %v3138 = vmul.f32 %v3102, %v829
  %v3139 = vmul.f32 %v3103, %v830
  %v3140 = vmul.f32 %v3104, %v831
  %v3141 = vmul.f32 %v3105, %v832
  %v3142 = vmul.f32 %v3106, %v833
  %v3143 = vpack.c.bf16 %v3108, %v3107
  %v3144 = vpack.c.bf16 %v3110, %v3109
  %v3145 = vpack.c.bf16 %v3112, %v3111
  %v3146 = vpack.c.bf16 %v3114, %v3113
  %v3147 = vpack.c.bf16 %v3116, %v3115
  %v3148 = vpack.c.bf16 %v3118, %v3117
  %v3149 = vpack.c.bf16 %v3120, %v3119
  %v3150 = vpack.c.bf16 %v3122, %v3121
  %v3151 = vpack.c.bf16 %v3124, %v3123
  %v3152 = vpack.c.bf16 %v3126, %v3125
  %v3153 = vpack.c.bf16 %v3128, %v3127
  %v3154 = vpack.c.bf16 %v3130, %v3129
  %v3155 = vpack.c.bf16 %v3132, %v3131
  %v3156 = vpack.c.bf16 %v3134, %v3133
  %v3157 = vpack.c.bf16 %v3136, %v3135
  %v3158 = vpack.c.bf16 %v3138, %v3137
  %v3159 = vpack.c.bf16 %v3140, %v3139
  %v3160 = vpack.c.bf16 %v3142, %v3141
  %v3179 = vunpack.c.l.b16 %v3143
  %v3180 = vunpack.c.h.b16 %v3143
  %v3181 = vunpack.c.l.b16 %v3144
  %v3182 = vunpack.c.h.b16 %v3144
  %v3183 = vunpack.c.l.b16 %v3145
  %v3184 = vunpack.c.h.b16 %v3145
  %v3185 = vunpack.c.l.b16 %v3146
  %v3186 = vunpack.c.h.b16 %v3146
  %v3187 = vunpack.c.l.b16 %v3147
  %v3188 = vunpack.c.h.b16 %v3147
  %v3189 = vunpack.c.l.b16 %v3148
  %v3190 = vunpack.c.h.b16 %v3148
  %v3191 = vunpack.c.l.b16 %v3149
  %v3192 = vunpack.c.h.b16 %v3149
  %v3193 = vunpack.c.l.b16 %v3150
  %v3194 = vunpack.c.h.b16 %v3150
  %v3195 = vunpack.c.l.b16 %v3151
  %v3196 = vunpack.c.h.b16 %v3151
  %v3197 = vunpack.c.l.b16 %v3152
  %v3198 = vunpack.c.h.b16 %v3152
  %v3199 = vunpack.c.l.b16 %v3153
  %v3200 = vunpack.c.h.b16 %v3153
  %v3201 = vunpack.c.l.b16 %v3154
  %v3202 = vunpack.c.h.b16 %v3154
  %v3203 = vunpack.c.l.b16 %v3155
  %v3204 = vunpack.c.h.b16 %v3155
  %v3205 = vunpack.c.l.b16 %v3156
  %v3206 = vunpack.c.h.b16 %v3156
  %v3207 = vunpack.c.l.b16 %v3157
  %v3208 = vunpack.c.h.b16 %v3157
  %v3209 = vunpack.c.l.b16 %v3158
  %v3210 = vunpack.c.h.b16 %v3158
  %v3211 = vunpack.c.l.b16 %v3159
  %v3212 = vunpack.c.h.b16 %v3159
  %v3213 = vunpack.c.l.b16 %v3160
  %v3214 = vunpack.c.h.b16 %v3160
  %v3215 = vpack.c.b16 %v3179, %v3179
  %v3216 = vpack.c.b16 %v3180, %v3180
  %v3217 = vpack.c.b16 %v3181, %v3181
  %v3218 = vpack.c.b16 %v3182, %v3182
  %v3219 = vpack.c.b16 %v3183, %v3183
  %v3220 = vpack.c.b16 %v3184, %v3184
  %v3221 = vpack.c.b16 %v3185, %v3185
  %v3222 = vpack.c.b16 %v3186, %v3186
  %v3223 = vpack.c.b16 %v3187, %v3187
  %v3224 = vpack.c.b16 %v3188, %v3188
  %v3225 = vpack.c.b16 %v3189, %v3189
  %v3226 = vpack.c.b16 %v3190, %v3190
  %v3227 = vpack.c.b16 %v3191, %v3191
  %v3228 = vpack.c.b16 %v3192, %v3192
  %v3229 = vpack.c.b16 %v3193, %v3193
  %v3230 = vpack.c.b16 %v3194, %v3194
  %v3231 = vpack.c.b16 %v3195, %v3195
  %v3232 = vpack.c.b16 %v3196, %v3196
  %v3233 = vpack.c.b16 %v3197, %v3197
  %v3234 = vpack.c.b16 %v3198, %v3198
  %v3235 = vpack.c.b16 %v3199, %v3199
  %v3236 = vpack.c.b16 %v3200, %v3200
  %v3237 = vpack.c.b16 %v3201, %v3201
  %v3238 = vpack.c.b16 %v3202, %v3202
  %v3239 = vpack.c.b16 %v3203, %v3203
  %v3240 = vpack.c.b16 %v3204, %v3204
  %v3241 = vpack.c.b16 %v3205, %v3205
  %v3242 = vpack.c.b16 %v3206, %v3206
  %v3243 = vpack.c.b16 %v3207, %v3207
  %v3244 = vpack.c.b16 %v3208, %v3208
  %v3245 = vpack.c.b16 %v3209, %v3209
  %v3246 = vpack.c.b16 %v3210, %v3210
  %v3247 = vpack.c.b16 %v3211, %v3211
  %v3248 = vpack.c.b16 %v3212, %v3212
  %v3249 = vpack.c.b16 %v3213, %v3213
  %v3250 = vpack.c.b16 %v3214, %v3214
  %vm3251 = vsmask.f32 1280
  %vm3252 = vsmask.f32 5392
  %vm3253 = vmor %vm3251, %vm3252
  %v3255 = vshrl.u32 %v3215, 16
  %v3257 = vrot.slane %v3255, 6
  %v3258 = vshll.u32 %v3215, 16
  %v3260 = vrot.slane %v3258, 7
  %v3261 = vor.u32 %v3257, %v3260
  %v3262 = vrot.slane %v3261, 4
  %v3264 = vshrl.u32 %v3216, 16
  %v3266 = vrot.slane %v3264, 6
  %v3267 = vshll.u32 %v3216, 16
  %v3269 = vrot.slane %v3267, 7
  %v3270 = vor.u32 %v3266, %v3269
  %v3271 = vsel %vm3253, %v3262, %v3270
  %v3272 = vrot.slane %v3270, 4
  %v3274 = vshrl.u32 %v3217, 16
  %v3276 = vrot.slane %v3274, 6
  %v3277 = vshll.u32 %v3217, 16
  %v3279 = vrot.slane %v3277, 7
  %v3280 = vor.u32 %v3276, %v3279
  %v3281 = vsel %vm3253, %v3272, %v3280
  %v3282 = vrot.slane %v3280, 4
  %v3284 = vshrl.u32 %v3218, 16
  %v3286 = vrot.slane %v3284, 6
  %v3287 = vshll.u32 %v3218, 16
  %v3289 = vrot.slane %v3287, 7
  %v3290 = vor.u32 %v3286, %v3289
  %v3291 = vsel %vm3253, %v3282, %v3290
  %v3292 = vrot.slane %v3290, 4
  %v3294 = vshrl.u32 %v3219, 16
  %v3296 = vrot.slane %v3294, 6
  %v3297 = vshll.u32 %v3219, 16
  %v3299 = vrot.slane %v3297, 7
  %v3300 = vor.u32 %v3296, %v3299
  %v3301 = vsel %vm3253, %v3292, %v3300
  %v3302 = vrot.slane %v3300, 4
  %v3304 = vshrl.u32 %v3220, 16
  %v3306 = vrot.slane %v3304, 6
  %v3307 = vshll.u32 %v3220, 16
  %v3309 = vrot.slane %v3307, 7
  %v3310 = vor.u32 %v3306, %v3309
  %v3311 = vsel %vm3253, %v3302, %v3310
  %v3312 = vrot.slane %v3310, 4
  %v3314 = vshrl.u32 %v3221, 16
  %v3316 = vrot.slane %v3314, 6
  %v3317 = vshll.u32 %v3221, 16
  %v3319 = vrot.slane %v3317, 7
  %v3320 = vor.u32 %v3316, %v3319
  %v3321 = vsel %vm3253, %v3312, %v3320
  %v3322 = vrot.slane %v3320, 4
  %v3324 = vshrl.u32 %v3222, 16
  %v3326 = vrot.slane %v3324, 6
  %v3327 = vshll.u32 %v3222, 16
  %v3329 = vrot.slane %v3327, 7
  %v3330 = vor.u32 %v3326, %v3329
  %v3331 = vsel %vm3253, %v3322, %v3330
  %v3332 = vrot.slane %v3330, 4
  %v3334 = vshrl.u32 %v3223, 16
  %v3336 = vrot.slane %v3334, 6
  %v3337 = vshll.u32 %v3223, 16
  %v3339 = vrot.slane %v3337, 7
  %v3340 = vor.u32 %v3336, %v3339
  %v3341 = vsel %vm3253, %v3332, %v3340
  %v3342 = vrot.slane %v3340, 4
  %v3344 = vshrl.u32 %v3224, 16
  %v3346 = vrot.slane %v3344, 6
  %v3347 = vshll.u32 %v3224, 16
  %v3349 = vrot.slane %v3347, 7
  %v3350 = vor.u32 %v3346, %v3349
  %v3351 = vsel %vm3253, %v3342, %v3350
  %v3352 = vrot.slane %v3350, 4
  %v3354 = vshrl.u32 %v3225, 16
  %v3356 = vrot.slane %v3354, 6
  %v3357 = vshll.u32 %v3225, 16
  %v3359 = vrot.slane %v3357, 7
  %v3360 = vor.u32 %v3356, %v3359
  %v3361 = vsel %vm3253, %v3352, %v3360
  %v3362 = vrot.slane %v3360, 4
  %v3364 = vshrl.u32 %v3226, 16
  %v3366 = vrot.slane %v3364, 6
  %v3367 = vshll.u32 %v3226, 16
  %v3369 = vrot.slane %v3367, 7
  %v3370 = vor.u32 %v3366, %v3369
  %v3371 = vsel %vm3253, %v3362, %v3370
  %v3372 = vrot.slane %v3370, 4
  %v3374 = vshrl.u32 %v3227, 16
  %v3376 = vrot.slane %v3374, 6
  %v3377 = vshll.u32 %v3227, 16
  %v3379 = vrot.slane %v3377, 7
  %v3380 = vor.u32 %v3376, %v3379
  %v3381 = vsel %vm3253, %v3372, %v3380
  %v3382 = vrot.slane %v3380, 4
  %v3384 = vshrl.u32 %v3228, 16
  %v3386 = vrot.slane %v3384, 6
  %v3387 = vshll.u32 %v3228, 16
  %v3389 = vrot.slane %v3387, 7
  %v3390 = vor.u32 %v3386, %v3389
  %v3391 = vsel %vm3253, %v3382, %v3390
  %v3392 = vrot.slane %v3390, 4
  %v3394 = vshrl.u32 %v3229, 16
  %v3396 = vrot.slane %v3394, 6
  %v3397 = vshll.u32 %v3229, 16
  %v3399 = vrot.slane %v3397, 7
  %v3400 = vor.u32 %v3396, %v3399
  %v3401 = vsel %vm3253, %v3392, %v3400
  %v3402 = vrot.slane %v3400, 4
  %v3404 = vshrl.u32 %v3230, 16
  %v3406 = vrot.slane %v3404, 6
  %v3407 = vshll.u32 %v3230, 16
  %v3409 = vrot.slane %v3407, 7
  %v3410 = vor.u32 %v3406, %v3409
  %v3411 = vsel %vm3253, %v3402, %v3410
  %v3412 = vrot.slane %v3410, 4
  %v3414 = vshrl.u32 %v3231, 16
  %v3416 = vrot.slane %v3414, 6
  %v3417 = vshll.u32 %v3231, 16
  %v3419 = vrot.slane %v3417, 7
  %v3420 = vor.u32 %v3416, %v3419
  %v3421 = vsel %vm3253, %v3412, %v3420
  %v3422 = vrot.slane %v3420, 4
  %v3424 = vshrl.u32 %v3232, 16
  %v3426 = vrot.slane %v3424, 6
  %v3427 = vshll.u32 %v3232, 16
  %v3429 = vrot.slane %v3427, 7
  %v3430 = vor.u32 %v3426, %v3429
  %v3431 = vsel %vm3253, %v3422, %v3430
  %v3432 = vrot.slane %v3430, 4
  %v3434 = vshrl.u32 %v3233, 16
  %v3436 = vrot.slane %v3434, 6
  %v3437 = vshll.u32 %v3233, 16
  %v3439 = vrot.slane %v3437, 7
  %v3440 = vor.u32 %v3436, %v3439
  %v3441 = vsel %vm3253, %v3432, %v3440
  %v3442 = vrot.slane %v3440, 4
  %v3444 = vshrl.u32 %v3234, 16
  %v3446 = vrot.slane %v3444, 6
  %v3447 = vshll.u32 %v3234, 16
  %v3449 = vrot.slane %v3447, 7
  %v3450 = vor.u32 %v3446, %v3449
  %v3451 = vsel %vm3253, %v3442, %v3450
  %v3452 = vrot.slane %v3450, 4
  %v3454 = vshrl.u32 %v3235, 16
  %v3456 = vrot.slane %v3454, 6
  %v3457 = vshll.u32 %v3235, 16
  %v3459 = vrot.slane %v3457, 7
  %v3460 = vor.u32 %v3456, %v3459
  %v3461 = vsel %vm3253, %v3452, %v3460
  %v3462 = vrot.slane %v3460, 4
  %v3464 = vshrl.u32 %v3236, 16
  %v3466 = vrot.slane %v3464, 6
  %v3467 = vshll.u32 %v3236, 16
  %v3469 = vrot.slane %v3467, 7
  %v3470 = vor.u32 %v3466, %v3469
  %v3471 = vsel %vm3253, %v3462, %v3470
  %v3472 = vrot.slane %v3470, 4
  %v3474 = vshrl.u32 %v3237, 16
  %v3476 = vrot.slane %v3474, 6
  %v3477 = vshll.u32 %v3237, 16
  %v3479 = vrot.slane %v3477, 7
  %v3480 = vor.u32 %v3476, %v3479
  %v3481 = vsel %vm3253, %v3472, %v3480
  %v3482 = vrot.slane %v3480, 4
  %v3484 = vshrl.u32 %v3238, 16
  %v3486 = vrot.slane %v3484, 6
  %v3487 = vshll.u32 %v3238, 16
  %v3489 = vrot.slane %v3487, 7
  %v3490 = vor.u32 %v3486, %v3489
  %v3491 = vsel %vm3253, %v3482, %v3490
  %v3492 = vrot.slane %v3490, 4
  %v3494 = vshrl.u32 %v3239, 16
  %v3496 = vrot.slane %v3494, 6
  %v3497 = vshll.u32 %v3239, 16
  %v3499 = vrot.slane %v3497, 7
  %v3500 = vor.u32 %v3496, %v3499
  %v3501 = vsel %vm3253, %v3492, %v3500
  %v3502 = vrot.slane %v3500, 4
  %v3504 = vshrl.u32 %v3240, 16
  %v3506 = vrot.slane %v3504, 6
  %v3507 = vshll.u32 %v3240, 16
  %v3509 = vrot.slane %v3507, 7
  %v3510 = vor.u32 %v3506, %v3509
  %v3511 = vsel %vm3253, %v3502, %v3510
  %v3512 = vrot.slane %v3510, 4
  %v3514 = vshrl.u32 %v3241, 16
  %v3516 = vrot.slane %v3514, 6
  %v3517 = vshll.u32 %v3241, 16
  %v3519 = vrot.slane %v3517, 7
  %v3520 = vor.u32 %v3516, %v3519
  %v3521 = vsel %vm3253, %v3512, %v3520
  %v3522 = vrot.slane %v3520, 4
  %v3524 = vshrl.u32 %v3242, 16
  %v3526 = vrot.slane %v3524, 6
  %v3527 = vshll.u32 %v3242, 16
  %v3529 = vrot.slane %v3527, 7
  %v3530 = vor.u32 %v3526, %v3529
  %v3531 = vsel %vm3253, %v3522, %v3530
  %v3532 = vrot.slane %v3530, 4
  %v3534 = vshrl.u32 %v3243, 16
  %v3536 = vrot.slane %v3534, 6
  %v3537 = vshll.u32 %v3243, 16
  %v3539 = vrot.slane %v3537, 7
  %v3540 = vor.u32 %v3536, %v3539
  %v3541 = vsel %vm3253, %v3532, %v3540
  %v3542 = vrot.slane %v3540, 4
  %v3544 = vshrl.u32 %v3244, 16
  %v3546 = vrot.slane %v3544, 6
  %v3547 = vshll.u32 %v3244, 16
  %v3549 = vrot.slane %v3547, 7
  %v3550 = vor.u32 %v3546, %v3549
  %v3551 = vsel %vm3253, %v3542, %v3550
  %v3552 = vrot.slane %v3550, 4
  %v3554 = vshrl.u32 %v3245, 16
  %v3556 = vrot.slane %v3554, 6
  %v3557 = vshll.u32 %v3245, 16
  %v3559 = vrot.slane %v3557, 7
  %v3560 = vor.u32 %v3556, %v3559
  %v3561 = vsel %vm3253, %v3552, %v3560
  %v3562 = vrot.slane %v3560, 4
  %v3564 = vshrl.u32 %v3246, 16
  %v3566 = vrot.slane %v3564, 6
  %v3567 = vshll.u32 %v3246, 16
  %v3569 = vrot.slane %v3567, 7
  %v3570 = vor.u32 %v3566, %v3569
  %v3571 = vsel %vm3253, %v3562, %v3570
  %v3572 = vrot.slane %v3570, 4
  %v3574 = vshrl.u32 %v3247, 16
  %v3576 = vrot.slane %v3574, 6
  %v3577 = vshll.u32 %v3247, 16
  %v3579 = vrot.slane %v3577, 7
  %v3580 = vor.u32 %v3576, %v3579
  %v3581 = vsel %vm3253, %v3572, %v3580
  %v3582 = vrot.slane %v3580, 4
  %v3584 = vshrl.u32 %v3248, 16
  %v3586 = vrot.slane %v3584, 6
  %v3587 = vshll.u32 %v3248, 16
  %v3589 = vrot.slane %v3587, 7
  %v3590 = vor.u32 %v3586, %v3589
  %v3591 = vsel %vm3253, %v3582, %v3590
  %v3592 = vrot.slane %v3590, 4
  %v3594 = vshrl.u32 %v3249, 16
  %v3596 = vrot.slane %v3594, 6
  %v3597 = vshll.u32 %v3249, 16
  %v3599 = vrot.slane %v3597, 7
  %v3600 = vor.u32 %v3596, %v3599
  %v3601 = vsel %vm3253, %v3592, %v3600
  %v3602 = vrot.slane %v3600, 4
  %v3604 = vshrl.u32 %v3250, 16
  %v3606 = vrot.slane %v3604, 6
  %v3607 = vshll.u32 %v3250, 16
  %v3609 = vrot.slane %v3607, 7
  %v3610 = vor.u32 %v3606, %v3609
  %v3611 = vsel %vm3253, %v3602, %v3610
  %v3612 = vrot.slane %v3610, 4
  %vm3650 = vcmask 1043457
  %vm3651 = vsmask.f32 7942
  %vm3652 = vmand %vm3650, %vm3651
  %v3653 = vld [vmem:[#allocation2 + $0x8] sm:$0xe]
  %v3654 = vsel %vm3652, %v3261, %v3653
  %3655 = vst [vmem:[#allocation2 + $0x8] sm:$0xe] %v3654
  %3656 = vst [vmem:[#allocation2 + $0xc] sm:$0xf] %v3271
  %3657 = vst [vmem:[#allocation2 + $0x10] sm:$0xf] %v3281
  %3658 = vst [vmem:[#allocation2 + $0x14] sm:$0xf] %v3291
  %3659 = vst [vmem:[#allocation2 + $0x18] sm:$0xf] %v3301
  %3660 = vst [vmem:[#allocation2 + $0x1c] sm:$0xf] %v3311
  %3661 = vst [vmem:[#allocation2 + $0x20] sm:$0xf] %v3321
  %3662 = vst [vmem:[#allocation2 + $0x24] sm:$0xf] %v3331
  %3663 = vst [vmem:[#allocation2 + $0x28] sm:$0xf] %v3341
  %3664 = vst [vmem:[#allocation2 + $0x2c] sm:$0xf] %v3351
  %3665 = vst [vmem:[#allocation2 + $0x30] sm:$0xf] %v3361
  %3666 = vst [vmem:[#allocation2 + $0x34] sm:$0xf] %v3371
  %3667 = vst [vmem:[#allocation2 + $0x38] sm:$0xf] %v3381
  %3668 = vst [vmem:[#allocation2 + $0x3c] sm:$0xf] %v3391
  %3669 = vst [vmem:[#allocation2 + $0x40] sm:$0xf] %v3401
  %3670 = vst [vmem:[#allocation2 + $0x44] sm:$0xf] %v3411
  %3671 = vst [vmem:[#allocation2 + $0x48] sm:$0xf] %v3421
  %3672 = vst [vmem:[#allocation2 + $0x4c] sm:$0xf] %v3431
  %3673 = vst [vmem:[#allocation2 + $0x50] sm:$0xf] %v3441
  %3674 = vst [vmem:[#allocation2 + $0x54] sm:$0xf] %v3451
  %3675 = vst [vmem:[#allocation2 + $0x58] sm:$0xf] %v3461
  %3676 = vst [vmem:[#allocation2 + $0x5c] sm:$0xf] %v3471
  %3677 = vst [vmem:[#allocation2 + $0x60] sm:$0xf] %v3481
  %3678 = vst [vmem:[#allocation2 + $0x64] sm:$0xf] %v3491
  %3679 = vst [vmem:[#allocation2 + $0x68] sm:$0xf] %v3501
  %3680 = vst [vmem:[#allocation2 + $0x6c] sm:$0xf] %v3511
  %3681 = vst [vmem:[#allocation2 + $0x70] sm:$0xf] %v3521
  %3682 = vst [vmem:[#allocation2 + $0x74] sm:$0xf] %v3531
  %3683 = vst [vmem:[#allocation2 + $0x78] sm:$0xf] %v3541
  %3684 = vst [vmem:[#allocation2 + $0x7c] sm:$0xf] %v3551
  %3685 = vst [vmem:[#allocation2 + $0x80] sm:$0xf] %v3561
  %3686 = vst [vmem:[#allocation2 + $0x84] sm:$0xf] %v3571
  %3687 = vst [vmem:[#allocation2 + $0x88] sm:$0xf] %v3581
  %3688 = vst [vmem:[#allocation2 + $0x8c] sm:$0xf] %v3591
  %3689 = vst [vmem:[#allocation2 + $0x90] sm:$0xf] %v3601
  %3690 = vst [vmem:[#allocation2 + $0x94] sm:$0xf] %v3611
  %vm3691 = vcmask 1041408
  %vm3692 = vmand %vm3691, %vm3251
  %v3693 = vld [vmem:[#allocation2 + $0x98] sm:$0x3]
  %v3694 = vsel %vm3692, %v3612, %v3693
  %3695 = vst [vmem:[#allocation2 + $0x98] sm:$0x3] %v3694
  %v3696 = vld [vmem:[%s0 + $0x8] sm:$0xe]
  %v3697 = vld [vmem:[%s0 + $0xc] sm:$0xf]
  %v3698 = vld [vmem:[%s0 + $0x10] sm:$0xf]
  %v3699 = vld [vmem:[%s0 + $0x14] sm:$0xf]
  %v3700 = vld [vmem:[%s0 + $0x18] sm:$0xf]
  %v3701 = vld [vmem:[%s0 + $0x1c] sm:$0xf]
  %v3702 = vld [vmem:[%s0 + $0x20] sm:$0xf]
  %v3703 = vld [vmem:[%s0 + $0x24] sm:$0xf]
  %v3704 = vld [vmem:[%s0 + $0x28] sm:$0xf]
  %v3705 = vld [vmem:[%s0 + $0x2c] sm:$0xf]
  %v3706 = vld [vmem:[%s0 + $0x30] sm:$0xf]
  %v3707 = vld [vmem:[%s0 + $0x34] sm:$0xf]
  %v3708 = vld [vmem:[%s0 + $0x38] sm:$0xf]
  %v3709 = vld [vmem:[%s0 + $0x3c] sm:$0xf]
  %v3710 = vld [vmem:[%s0 + $0x40] sm:$0xf]
  %v3711 = vld [vmem:[%s0 + $0x44] sm:$0xf]
  %v3712 = vld [vmem:[%s0 + $0x48] sm:$0xf]
  %v3713 = vld [vmem:[%s0 + $0x4c] sm:$0xf]
  %v3714 = vld [vmem:[%s0 + $0x50] sm:$0xf]
  %v3715 = vld [vmem:[%s0 + $0x54] sm:$0xf]
  %v3716 = vld [vmem:[%s0 + $0x58] sm:$0xf]
  %v3717 = vld [vmem:[%s0 + $0x5c] sm:$0xf]
  %v3718 = vld [vmem:[%s0 + $0x60] sm:$0xf]
  %v3719 = vld [vmem:[%s0 + $0x64] sm:$0xf]
  %v3720 = vld [vmem:[%s0 + $0x68] sm:$0xf]
  %v3721 = vld [vmem:[%s0 + $0x6c] sm:$0xf]
  %v3722 = vld [vmem:[%s0 + $0x70] sm:$0xf]
  %v3723 = vld [vmem:[%s0 + $0x74] sm:$0xf]
  %v3724 = vld [vmem:[%s0 + $0x78] sm:$0xf]
  %v3725 = vld [vmem:[%s0 + $0x7c] sm:$0xf]
  %v3726 = vld [vmem:[%s0 + $0x80] sm:$0xf]
  %v3727 = vld [vmem:[%s0 + $0x84] sm:$0xf]
  %v3728 = vld [vmem:[%s0 + $0x88] sm:$0xf]
  %v3729 = vld [vmem:[%s0 + $0x8c] sm:$0xf]
  %v3730 = vld [vmem:[%s0 + $0x90] sm:$0xf]
  %v3731 = vld [vmem:[%s0 + $0x94] sm:$0xf]
  %v3732 = vld [vmem:[%s0 + $0x98] sm:$0x3]
  %v3733 = vld [vmem:[%s5] sm:$0xf]
  %v3734 = vld [vmem:[%s5 + $0x4] sm:$0xf]
  %v3735 = vld [vmem:[%s5 + $0x8] sm:$0xf]
  %v3736 = vld [vmem:[%s5 + $0xc] sm:$0xf]
  %v3737 = vld [vmem:[%s5 + $0x10] sm:$0xf]
  %v3738 = vld [vmem:[%s5 + $0x14] sm:$0xf]
  %v3739 = vld [vmem:[%s5 + $0x18] sm:$0xf]
  %v3740 = vld [vmem:[%s5 + $0x1c] sm:$0xf]
  %v3741 = vld [vmem:[%s5 + $0x20] sm:$0xf]
  %v3742 = vld [vmem:[%s5 + $0x24] sm:$0xf]
  %v3743 = vld [vmem:[%s5 + $0x28] sm:$0xf]
  %v3744 = vld [vmem:[%s5 + $0x2c] sm:$0xf]
  %v3745 = vld [vmem:[%s5 + $0x30] sm:$0xf]
  %v3746 = vld [vmem:[%s5 + $0x34] sm:$0xf]
  %v3747 = vld [vmem:[%s5 + $0x38] sm:$0xf]
  %v3748 = vld [vmem:[%s5 + $0x3c] sm:$0xf]
  %v3749 = vld [vmem:[%s6] sm:$0x1]
  %v3751 = vlaneseq
  %v3752 = vshrl.u32 %v3751, 7
  %v3753 = vsub.s32 0, %v3752
  %v3754 = vrot.slane %v3749, %v3753
  %v3793 = vunpack.c.l.b16 %v3696
  %v3794 = vunpack.c.l.b16 %v3697
  %v3795 = vunpack.c.l.b16 %v3698
  %v3796 = vunpack.c.l.b16 %v3699
  %v3797 = vunpack.c.l.b16 %v3700
  %v3798 = vunpack.c.l.b16 %v3701
  %v3799 = vunpack.c.l.b16 %v3702
  %v3800 = vunpack.c.l.b16 %v3703
  %v3801 = vunpack.c.l.b16 %v3704
  %v3802 = vunpack.c.l.b16 %v3705
  %v3803 = vunpack.c.l.b16 %v3706
  %v3804 = vunpack.c.l.b16 %v3707
  %v3805 = vunpack.c.l.b16 %v3708
  %v3806 = vunpack.c.l.b16 %v3709
  %v3807 = vunpack.c.l.b16 %v3710
  %v3808 = vunpack.c.l.b16 %v3711
  %v3809 = vunpack.c.l.b16 %v3712
  %v3810 = vunpack.c.l.b16 %v3713
  %v3811 = vunpack.c.l.b16 %v3714
  %v3812 = vunpack.c.l.b16 %v3715
  %v3813 = vunpack.c.l.b16 %v3716
  %v3814 = vunpack.c.l.b16 %v3717
  %v3815 = vunpack.c.l.b16 %v3718
  %v3816 = vunpack.c.l.b16 %v3719
  %v3817 = vunpack.c.l.b16 %v3720
  %v3818 = vunpack.c.l.b16 %v3721
  %v3819 = vunpack.c.l.b16 %v3722
  %v3820 = vunpack.c.l.b16 %v3723
  %v3821 = vunpack.c.l.b16 %v3724
  %v3822 = vunpack.c.l.b16 %v3725
  %v3823 = vunpack.c.l.b16 %v3726
  %v3824 = vunpack.c.l.b16 %v3727
  %v3825 = vunpack.c.l.b16 %v3728
  %v3826 = vunpack.c.l.b16 %v3729
  %v3827 = vunpack.c.l.b16 %v3730
  %v3828 = vunpack.c.l.b16 %v3731
  %v3829 = vunpack.c.l.b16 %v3732
  %v3830 = vpack.c.b16 %v3794, %v3793
  %v3831 = vpack.c.b16 %v3796, %v3795
  %v3832 = vpack.c.b16 %v3798, %v3797
  %v3833 = vpack.c.b16 %v3800, %v3799
  %v3834 = vpack.c.b16 %v3802, %v3801
  %v3835 = vpack.c.b16 %v3804, %v3803
  %v3836 = vpack.c.b16 %v3806, %v3805
  %v3837 = vpack.c.b16 %v3808, %v3807
  %v3838 = vpack.c.b16 %v3810, %v3809
  %v3839 = vpack.c.b16 %v3812, %v3811
  %v3840 = vpack.c.b16 %v3814, %v3813
  %v3841 = vpack.c.b16 %v3816, %v3815
  %v3842 = vpack.c.b16 %v3818, %v3817
  %v3843 = vpack.c.b16 %v3820, %v3819
  %v3844 = vpack.c.b16 %v3822, %v3821
  %v3845 = vpack.c.b16 %v3824, %v3823
  %v3846 = vpack.c.b16 %v3826, %v3825
  %v3847 = vpack.c.b16 %v3828, %v3827
  %v3848 = vpack.c.b16 %v3829, %v3829
  %v3850 = vshrl.u32 %v3830, 16
  %v3852 = vrot.slane %v3850, 1
  %v3853 = vshll.u32 %v3830, 16
  %v3855 = vrot.slane %v3853, 2
  %v3856 = vor.u32 %v3852, %v3855
  %v3858 = vshrl.u32 %v3831, 16
  %v3860 = vrot.slane %v3858, 1
  %v3861 = vshll.u32 %v3831, 16
  %v3863 = vrot.slane %v3861, 2
  %v3864 = vor.u32 %v3860, %v3863
  %v3865 = vsel %vm1244, %v3856, %v3864
  %v3867 = vshrl.u32 %v3832, 16
  %v3869 = vrot.slane %v3867, 1
  %v3870 = vshll.u32 %v3832, 16
  %v3872 = vrot.slane %v3870, 2
  %v3873 = vor.u32 %v3869, %v3872
  %v3874 = vsel %vm1244, %v3864, %v3873
  %v3876 = vshrl.u32 %v3833, 16
  %v3878 = vrot.slane %v3876, 1
  %v3879 = vshll.u32 %v3833, 16
  %v3881 = vrot.slane %v3879, 2
  %v3882 = vor.u32 %v3878, %v3881
  %v3883 = vsel %vm1244, %v3873, %v3882
  %v3885 = vshrl.u32 %v3834, 16
  %v3887 = vrot.slane %v3885, 1
  %v3888 = vshll.u32 %v3834, 16
  %v3890 = vrot.slane %v3888, 2
  %v3891 = vor.u32 %v3887, %v3890
  %v3892 = vsel %vm1244, %v3882, %v3891
  %v3894 = vshrl.u32 %v3835, 16
  %v3896 = vrot.slane %v3894, 1
  %v3897 = vshll.u32 %v3835, 16
  %v3899 = vrot.slane %v3897, 2
  %v3900 = vor.u32 %v3896, %v3899
  %v3901 = vsel %vm1244, %v3891, %v3900
  %v3903 = vshrl.u32 %v3836, 16
  %v3905 = vrot.slane %v3903, 1
  %v3906 = vshll.u32 %v3836, 16
  %v3908 = vrot.slane %v3906, 2
  %v3909 = vor.u32 %v3905, %v3908
  %v3910 = vsel %vm1244, %v3900, %v3909
  %v3912 = vshrl.u32 %v3837, 16
  %v3914 = vrot.slane %v3912, 1
  %v3915 = vshll.u32 %v3837, 16
  %v3917 = vrot.slane %v3915, 2
  %v3918 = vor.u32 %v3914, %v3917
  %v3919 = vsel %vm1244, %v3909, %v3918
  %v3921 = vshrl.u32 %v3838, 16
  %v3923 = vrot.slane %v3921, 1
  %v3924 = vshll.u32 %v3838, 16
  %v3926 = vrot.slane %v3924, 2
  %v3927 = vor.u32 %v3923, %v3926
  %v3928 = vsel %vm1244, %v3918, %v3927
  %v3930 = vshrl.u32 %v3839, 16
  %v3932 = vrot.slane %v3930, 1
  %v3933 = vshll.u32 %v3839, 16
  %v3935 = vrot.slane %v3933, 2
  %v3936 = vor.u32 %v3932, %v3935
  %v3937 = vsel %vm1244, %v3927, %v3936
  %v3939 = vshrl.u32 %v3840, 16
  %v3941 = vrot.slane %v3939, 1
  %v3942 = vshll.u32 %v3840, 16
  %v3944 = vrot.slane %v3942, 2
  %v3945 = vor.u32 %v3941, %v3944
  %v3946 = vsel %vm1244, %v3936, %v3945
  %v3948 = vshrl.u32 %v3841, 16
  %v3950 = vrot.slane %v3948, 1
  %v3951 = vshll.u32 %v3841, 16
  %v3953 = vrot.slane %v3951, 2
  %v3954 = vor.u32 %v3950, %v3953
  %v3955 = vsel %vm1244, %v3945, %v3954
  %v3957 = vshrl.u32 %v3842, 16
  %v3959 = vrot.slane %v3957, 1
  %v3960 = vshll.u32 %v3842, 16
  %v3962 = vrot.slane %v3960, 2
  %v3963 = vor.u32 %v3959, %v3962
  %v3964 = vsel %vm1244, %v3954, %v3963
  %v3966 = vshrl.u32 %v3843, 16
  %v3968 = vrot.slane %v3966, 1
  %v3969 = vshll.u32 %v3843, 16
  %v3971 = vrot.slane %v3969, 2
  %v3972 = vor.u32 %v3968, %v3971
  %v3973 = vsel %vm1244, %v3963, %v3972
  %v3975 = vshrl.u32 %v3844, 16
  %v3977 = vrot.slane %v3975, 1
  %v3978 = vshll.u32 %v3844, 16
  %v3980 = vrot.slane %v3978, 2
  %v3981 = vor.u32 %v3977, %v3980
  %v3982 = vsel %vm1244, %v3972, %v3981
  %v3984 = vshrl.u32 %v3845, 16
  %v3986 = vrot.slane %v3984, 1
  %v3987 = vshll.u32 %v3845, 16
  %v3989 = vrot.slane %v3987, 2
  %v3990 = vor.u32 %v3986, %v3989
  %v3991 = vsel %vm1244, %v3981, %v3990
  %v3993 = vshrl.u32 %v3846, 16
  %v3995 = vrot.slane %v3993, 1
  %v3996 = vshll.u32 %v3846, 16
  %v3998 = vrot.slane %v3996, 2
  %v3999 = vor.u32 %v3995, %v3998
  %v4000 = vsel %vm1244, %v3990, %v3999
  %v4002 = vshrl.u32 %v3847, 16
  %v4004 = vrot.slane %v4002, 1
  %v4005 = vshll.u32 %v3847, 16
  %v4007 = vrot.slane %v4005, 2
  %v4008 = vor.u32 %v4004, %v4007
  %v4009 = vsel %vm1244, %v3999, %v4008
  %v4011 = vshrl.u32 %v3848, 16
  %v4013 = vrot.slane %v4011, 1
  %v4014 = vshll.u32 %v3848, 16
  %v4016 = vrot.slane %v4014, 2
  %v4017 = vor.u32 %v4013, %v4016
  %v4018 = vsel %vm1244, %v4008, %v4017
  %v4053 = vunpack.c.l.b16 %v3733
  %v4054 = vunpack.c.l.b16 %v3734
  %v4055 = vunpack.c.l.b16 %v3735
  %v4056 = vunpack.c.l.b16 %v3736
  %v4057 = vunpack.c.l.b16 %v3737
  %v4058 = vunpack.c.l.b16 %v3738
  %v4059 = vunpack.c.l.b16 %v3739
  %v4060 = vunpack.c.l.b16 %v3740
  %v4061 = vunpack.c.l.b16 %v3741
  %v4062 = vunpack.c.l.b16 %v3742
  %v4063 = vunpack.c.l.b16 %v3743
  %v4064 = vunpack.c.l.b16 %v3744
  %v4065 = vunpack.c.l.b16 %v3745
  %v4066 = vunpack.c.l.b16 %v3746
  %v4067 = vunpack.c.l.b16 %v3747
  %v4068 = vunpack.c.l.b16 %v3748
  %v4069 = vpack.c.b16 %v4054, %v4053
  %v4070 = vpack.c.b16 %v4056, %v4055
  %v4071 = vpack.c.b16 %v4058, %v4057
  %v4072 = vpack.c.b16 %v4060, %v4059
  %v4073 = vpack.c.b16 %v4062, %v4061
  %v4074 = vpack.c.b16 %v4064, %v4063
  %v4075 = vpack.c.b16 %v4066, %v4065
  %v4076 = vpack.c.b16 %v4068, %v4067
  %4085 = vmatprep.subr.bf16.mxu0 0
  %4086 = vmatpush1.bf16.msra.mxu0 %v4069
  %4087 = vmatprep.subr.bf16.mxu0 0
  %4088 = vmatpush1.bf16.msra.mxu0 %v4070
  %4089 = vmatprep.subr.bf16.mxu0 0
  %4090 = vmatpush1.bf16.msra.mxu0 %v4071
  %4091 = vmatprep.subr.bf16.mxu0 0
  %4092 = vmatpush1.bf16.msra.mxu0 %v4072
  %4093 = vmatprep.subr.bf16.mxu0 0
  %4094 = vmatpush1.bf16.msra.mxu0 %v4073
  %4095 = vmatprep.subr.bf16.mxu0 0
  %4096 = vmatpush1.bf16.msra.mxu0 %v4074
  %4097 = vmatprep.subr.bf16.mxu0 0
  %4098 = vmatpush1.bf16.msra.mxu0 %v4075
  %4099 = vmatprep.subr.bf16.mxu0 0
  %4100 = vmatpush1.bf16.msra.mxu0 %v4076
  %4101 = vmatprep.subr.bf16.mxu0 0
  %4102 = vmatpush1.bf16.msra.mxu0 0
  %4103 = vmatprep.subr.bf16.mxu0 0
  %4104 = vmatpush1.bf16.msra.mxu0 0
  %4105 = vmatprep.subr.bf16.mxu0 0
  %4106 = vmatpush1.bf16.msra.mxu0 0
  %4107 = vmatprep.subr.bf16.mxu0 0
  %4108 = vmatpush1.bf16.msra.mxu0 0
  %4109 = vmatprep.subr.bf16.mxu0 0
  %4110 = vmatpush1.bf16.msra.mxu0 0
  %4111 = vmatprep.subr.bf16.mxu0 0
  %4112 = vmatpush1.bf16.msra.mxu0 0
  %4113 = vmatprep.subr.bf16.mxu0 0
  %4114 = vmatpush1.bf16.msra.mxu0 0
  %4115 = vmatprep.subr.bf16.mxu0 0
  %4116 = vmatpush1.bf16.msra.mxu0 0
  %4117 = vmatprep.mubr.bf16.mxu0 0
  %4118 = vmatmul.mubr.bf16.gmra.mrb[0].mxu0 %v3865
  %v4119 = vpop.f32.mrb[0].mxu0
  %v4120 = vadd.f32 %v3754, %v4119
  %v4121 = vpop.f32.mrb[0].mxu0
  %v4122 = vpop.f32.mrb[0].mxu0
  %v4123 = vadd.f32 %v3754, %v4122
  %v4124 = vpop.f32.mrb[0].mxu0
  %4125 = vmatprep.mubr.bf16.mxu0 0
  %4126 = vmatmul.mubr.bf16.gmra.mrb[0].mxu0 %v3874
  %v4127 = vpop.f32.mrb[0].mxu0
  %v4128 = vadd.f32 %v3754, %v4127
  %v4129 = vpop.f32.mrb[0].mxu0
  %v4130 = vpop.f32.mrb[0].mxu0
  %v4131 = vadd.f32 %v3754, %v4130
  %v4132 = vpop.f32.mrb[0].mxu0
  %4133 = vmatprep.mubr.bf16.mxu0 0
  %4134 = vmatmul.mubr.bf16.gmra.mrb[0].mxu0 %v3883
  %v4135 = vpop.f32.mrb[0].mxu0
  %v4136 = vadd.f32 %v3754, %v4135
  %v4137 = vpop.f32.mrb[0].mxu0
  %v4138 = vpop.f32.mrb[0].mxu0
  %v4139 = vadd.f32 %v3754, %v4138
  %v4140 = vpop.f32.mrb[0].mxu0
  %4141 = vmatprep.mubr.bf16.mxu0 0
  %4142 = vmatmul.mubr.bf16.gmra.mrb[0].mxu0 %v3892
  %v4143 = vpop.f32.mrb[0].mxu0
  %v4144 = vadd.f32 %v3754, %v4143
  %v4145 = vpop.f32.mrb[0].mxu0
  %v4146 = vpop.f32.mrb[0].mxu0
  %v4147 = vadd.f32 %v3754, %v4146
  %v4148 = vpop.f32.mrb[0].mxu0
  %4149 = vmatprep.mubr.bf16.mxu0 0
  %4150 = vmatmul.mubr.bf16.gmra.mrb[0].mxu0 %v3901
  %v4151 = vpop.f32.mrb[0].mxu0
  %v4152 = vadd.f32 %v3754, %v4151
  %v4153 = vpop.f32.mrb[0].mxu0
  %v4154 = vpop.f32.mrb[0].mxu0
  %v4155 = vadd.f32 %v3754, %v4154
  %v4156 = vpop.f32.mrb[0].mxu0
  %4157 = vmatprep.mubr.bf16.mxu0 0
  %4158 = vmatmul.mubr.bf16.gmra.mrb[0].mxu0 %v3910
  %v4159 = vpop.f32.mrb[0].mxu0
  %v4160 = vadd.f32 %v3754, %v4159
  %v4161 = vpop.f32.mrb[0].mxu0
  %v4162 = vpop.f32.mrb[0].mxu0
  %v4163 = vadd.f32 %v3754, %v4162
  %v4164 = vpop.f32.mrb[0].mxu0
  %4165 = vmatprep.mubr.bf16.mxu0 0
  %4166 = vmatmul.mubr.bf16.gmra.mrb[0].mxu0 %v3919
  %v4167 = vpop.f32.mrb[0].mxu0
  %v4168 = vadd.f32 %v3754, %v4167
  %v4169 = vpop.f32.mrb[0].mxu0
  %v4170 = vpop.f32.mrb[0].mxu0
  %v4171 = vadd.f32 %v3754, %v4170
  %v4172 = vpop.f32.mrb[0].mxu0
  %4173 = vmatprep.mubr.bf16.mxu0 0
  %4174 = vmatmul.mubr.bf16.gmra.mrb[0].mxu0 %v3928
  %v4175 = vpop.f32.mrb[0].mxu0
  %v4176 = vadd.f32 %v3754, %v4175
  %v4177 = vpop.f32.mrb[0].mxu0
  %v4178 = vpop.f32.mrb[0].mxu0
  %v4179 = vadd.f32 %v3754, %v4178
  %v4180 = vpop.f32.mrb[0].mxu0
  %4181 = vmatprep.mubr.bf16.mxu0 0
  %4182 = vmatmul.mubr.bf16.gmra.mrb[0].mxu0 %v3937
  %v4183 = vpop.f32.mrb[0].mxu0
  %v4184 = vadd.f32 %v3754, %v4183
  %v4185 = vpop.f32.mrb[0].mxu0
  %v4186 = vpop.f32.mrb[0].mxu0
  %v4187 = vadd.f32 %v3754, %v4186
  %v4188 = vpop.f32.mrb[0].mxu0
  %4189 = vmatprep.mubr.bf16.mxu0 0
  %4190 = vmatmul.mubr.bf16.gmra.mrb[0].mxu0 %v3946
  %v4191 = vpop.f32.mrb[0].mxu0
  %v4192 = vadd.f32 %v3754, %v4191
  %v4193 = vpop.f32.mrb[0].mxu0
  %v4194 = vpop.f32.mrb[0].mxu0
  %v4195 = vadd.f32 %v3754, %v4194
  %v4196 = vpop.f32.mrb[0].mxu0
  %4197 = vmatprep.mubr.bf16.mxu0 0
  %4198 = vmatmul.mubr.bf16.gmra.mrb[0].mxu0 %v3955
  %v4199 = vpop.f32.mrb[0].mxu0
  %v4200 = vadd.f32 %v3754, %v4199
  %v4201 = vpop.f32.mrb[0].mxu0
  %v4202 = vpop.f32.mrb[0].mxu0
  %v4203 = vadd.f32 %v3754, %v4202
  %v4204 = vpop.f32.mrb[0].mxu0
  %4205 = vmatprep.mubr.bf16.mxu0 0
  %4206 = vmatmul.mubr.bf16.gmra.mrb[0].mxu0 %v3964
  %v4207 = vpop.f32.mrb[0].mxu0
  %v4208 = vadd.f32 %v3754, %v4207
  %v4209 = vpop.f32.mrb[0].mxu0
  %v4210 = vpop.f32.mrb[0].mxu0
  %v4211 = vadd.f32 %v3754, %v4210
  %v4212 = vpop.f32.mrb[0].mxu0
  %4213 = vmatprep.mubr.bf16.mxu0 0
  %4214 = vmatmul.mubr.bf16.gmra.mrb[0].mxu0 %v3973
  %v4215 = vpop.f32.mrb[0].mxu0
  %v4216 = vadd.f32 %v3754, %v4215
  %v4217 = vpop.f32.mrb[0].mxu0
  %v4218 = vpop.f32.mrb[0].mxu0
  %v4219 = vadd.f32 %v3754, %v4218
  %v4220 = vpop.f32.mrb[0].mxu0
  %4221 = vmatprep.mubr.bf16.mxu0 0
  %4222 = vmatmul.mubr.bf16.gmra.mrb[0].mxu0 %v3982
  %v4223 = vpop.f32.mrb[0].mxu0
  %v4224 = vadd.f32 %v3754, %v4223
  %v4225 = vpop.f32.mrb[0].mxu0
  %v4226 = vpop.f32.mrb[0].mxu0
  %v4227 = vadd.f32 %v3754, %v4226
  %v4228 = vpop.f32.mrb[0].mxu0
  %4229 = vmatprep.mubr.bf16.mxu0 0
  %4230 = vmatmul.mubr.bf16.gmra.mrb[0].mxu0 %v3991
  %v4231 = vpop.f32.mrb[0].mxu0
  %v4232 = vadd.f32 %v3754, %v4231
  %v4233 = vpop.f32.mrb[0].mxu0
  %v4234 = vpop.f32.mrb[0].mxu0
  %v4235 = vadd.f32 %v3754, %v4234
  %v4236 = vpop.f32.mrb[0].mxu0
  %4237 = vmatprep.mubr.bf16.mxu0 0
  %4238 = vmatmul.mubr.bf16.gmra.mrb[0].mxu0 %v4000
  %v4239 = vpop.f32.mrb[0].mxu0
  %v4240 = vadd.f32 %v3754, %v4239
  %v4241 = vpop.f32.mrb[0].mxu0
  %v4242 = vpop.f32.mrb[0].mxu0
  %v4243 = vadd.f32 %v3754, %v4242
  %v4244 = vpop.f32.mrb[0].mxu0
  %4245 = vmatprep.mubr.bf16.mxu0 0
  %4246 = vmatmul.mubr.bf16.gmra.mrb[0].mxu0 %v4009
  %v4247 = vpop.f32.mrb[0].mxu0
  %v4248 = vadd.f32 %v3754, %v4247
  %v4249 = vpop.f32.mrb[0].mxu0
  %v4250 = vpop.f32.mrb[0].mxu0
  %v4251 = vadd.f32 %v3754, %v4250
  %v4252 = vpop.f32.mrb[0].mxu0
  %4253 = vmatprep.mubr.bf16.mxu0 0
  %4254 = vmatmul.mubr.bf16.gmra.mrb[0].mxu0 %v4018
  %v4255 = vpop.f32.mrb[0].mxu0
  %v4256 = vadd.f32 %v3754, %v4255
  %v4257 = vpop.f32.mrb[0].mxu0
  %v4258 = vpop.f32.mrb[0].mxu0
  %v4259 = vadd.f32 %v3754, %v4258
  %v4260 = vpop.f32.mrb[0].mxu0
  %4261 = vdwg.mxu0
  %v4262 = vld [vmem:[#allocation2] sm:$0xf]
  %v4263 = vld [vmem:[#allocation2 + $0x4] sm:$0xf]
  %v4264 = vld [vmem:[#allocation2 + $0x8] sm:$0xf]
  %v4265 = vld [vmem:[#allocation2 + $0xc] sm:$0xf]
  %v4266 = vld [vmem:[#allocation2 + $0x10] sm:$0xf]
  %v4267 = vld [vmem:[#allocation2 + $0x14] sm:$0xf]
  %v4268 = vld [vmem:[#allocation2 + $0x18] sm:$0xf]
  %v4269 = vld [vmem:[#allocation2 + $0x1c] sm:$0xf]
  %v4270 = vld [vmem:[#allocation2 + $0x20] sm:$0xf]
  %v4271 = vld [vmem:[#allocation2 + $0x24] sm:$0xf]
  %v4272 = vld [vmem:[#allocation2 + $0x28] sm:$0xf]
  %v4273 = vld [vmem:[#allocation2 + $0x2c] sm:$0xf]
  %v4274 = vld [vmem:[#allocation2 + $0x30] sm:$0xf]
  %v4275 = vld [vmem:[#allocation2 + $0x34] sm:$0xf]
  %v4276 = vld [vmem:[#allocation2 + $0x38] sm:$0xf]
  %v4277 = vld [vmem:[#allocation2 + $0x3c] sm:$0xf]
  %v4278 = vld [vmem:[#allocation2 + $0x40] sm:$0xf]
  %v4279 = vld [vmem:[#allocation2 + $0x44] sm:$0xf]
  %v4280 = vld [vmem:[#allocation2 + $0x48] sm:$0xf]
  %v4281 = vld [vmem:[#allocation2 + $0x4c] sm:$0xf]
  %v4282 = vld [vmem:[#allocation2 + $0x50] sm:$0xf]
  %v4283 = vld [vmem:[#allocation2 + $0x54] sm:$0xf]
  %v4284 = vld [vmem:[#allocation2 + $0x58] sm:$0xf]
  %v4285 = vld [vmem:[#allocation2 + $0x5c] sm:$0xf]
  %v4286 = vld [vmem:[#allocation2 + $0x60] sm:$0xf]
  %v4287 = vld [vmem:[#allocation2 + $0x64] sm:$0xf]
  %v4288 = vld [vmem:[#allocation2 + $0x68] sm:$0xf]
  %v4289 = vld [vmem:[#allocation2 + $0x6c] sm:$0xf]
  %v4290 = vld [vmem:[#allocation2 + $0x70] sm:$0xf]
  %v4291 = vld [vmem:[#allocation2 + $0x74] sm:$0xf]
  %v4292 = vld [vmem:[#allocation2 + $0x78] sm:$0xf]
  %v4293 = vld [vmem:[#allocation2 + $0x7c] sm:$0xf]
  %v4294 = vld [vmem:[#allocation2 + $0x80] sm:$0xf]
  %v4295 = vld [vmem:[#allocation2 + $0x84] sm:$0xf]
  %v4296 = vld [vmem:[#allocation2 + $0x88] sm:$0xf]
  %v4297 = vld [vmem:[#allocation2 + $0x8c] sm:$0xf]
  %v4298 = vld [vmem:[#allocation2 + $0x90] sm:$0x1]
  %v4299 = vld [vmem:[#allocation2] sm:$0xe]
  %v4300 = vld [vmem:[#allocation2 + $0x8] sm:$0xe]
  %v4301 = vld [vmem:[#allocation2 + $0x90] sm:$0xf]
  %v4302 = vld [vmem:[#allocation2 + $0x94] sm:$0xf]
  %v4303 = vld [vmem:[#allocation2 + $0x98] sm:$0x1]
  %v4304 = vld [vmem:[#allocation2 + $0x98] sm:$0x3]
  %v4305 = vld [vmem:[#allocation2 + $0x8] sm:$0xc]
  %v4306 = vld [vmem:[#allocation2 + $0x10] sm:$0xc]
  %v4307 = vld [vmem:[#allocation2 + $0x98] sm:$0xf]
  %v4308 = vld [vmem:[#allocation2 + $0x9c] sm:$0xf]
  %v4309 = vld [vmem:[#allocation2 + $0xa0] sm:$0x3]
  %v4310 = vld [vmem:[#allocation2 + $0xa0] sm:$0x7]
  %v4311 = vld [vmem:[#allocation2 + $0x10] sm:$0x8]
  %v4348 = vunpack.c.l.b16 %v4262
  %v4349 = vunpack.c.l.b16 %v4263
  %v4350 = vunpack.c.l.b16 %v4264
  %v4351 = vunpack.c.l.b16 %v4265
  %v4352 = vunpack.c.l.b16 %v4266
  %v4353 = vunpack.c.l.b16 %v4267
  %v4354 = vunpack.c.l.b16 %v4268
  %v4355 = vunpack.c.l.b16 %v4269
  %v4356 = vunpack.c.l.b16 %v4270
  %v4357 = vunpack.c.l.b16 %v4271
  %v4358 = vunpack.c.l.b16 %v4272
  %v4359 = vunpack.c.l.b16 %v4273
  %v4360 = vunpack.c.l.b16 %v4274
  %v4361 = vunpack.c.l.b16 %v4275
  %v4362 = vunpack.c.l.b16 %v4276
  %v4363 = vunpack.c.l.b16 %v4277
  %v4364 = vunpack.c.l.b16 %v4278
  %v4365 = vunpack.c.l.b16 %v4279
  %v4366 = vunpack.c.l.b16 %v4280
  %v4367 = vunpack.c.l.b16 %v4281
  %v4368 = vunpack.c.l.b16 %v4282
  %v4369 = vunpack.c.l.b16 %v4283
  %v4370 = vunpack.c.l.b16 %v4284
  %v4371 = vunpack.c.l.b16 %v4285
  %v4372 = vunpack.c.l.b16 %v4286
  %v4373 = vunpack.c.l.b16 %v4287
  %v4374 = vunpack.c.l.b16 %v4288
  %v4375 = vunpack.c.l.b16 %v4289
  %v4376 = vunpack.c.l.b16 %v4290
  %v4377 = vunpack.c.l.b16 %v4291
  %v4378 = vunpack.c.l.b16 %v4292
  %v4379 = vunpack.c.l.b16 %v4293
  %v4380 = vunpack.c.l.b16 %v4294
  %v4381 = vunpack.c.l.b16 %v4295
  %v4382 = vunpack.c.l.b16 %v4296
  %v4383 = vunpack.c.l.b16 %v4297
  %v4384 = vpack.c.b16 %v4349, %v4348
  %v4385 = vpack.c.b16 %v4351, %v4350
  %v4386 = vpack.c.b16 %v4353, %v4352
  %v4387 = vpack.c.b16 %v4355, %v4354
  %v4388 = vpack.c.b16 %v4357, %v4356
  %v4389 = vpack.c.b16 %v4359, %v4358
  %v4390 = vpack.c.b16 %v4361, %v4360
  %v4391 = vpack.c.b16 %v4363, %v4362
  %v4392 = vpack.c.b16 %v4365, %v4364
  %v4393 = vpack.c.b16 %v4367, %v4366
  %v4394 = vpack.c.b16 %v4369, %v4368
  %v4395 = vpack.c.b16 %v4371, %v4370
  %v4396 = vpack.c.b16 %v4373, %v4372
  %v4397 = vpack.c.b16 %v4375, %v4374
  %v4398 = vpack.c.b16 %v4377, %v4376
  %v4399 = vpack.c.b16 %v4379, %v4378
  %v4400 = vpack.c.b16 %v4381, %v4380
  %v4401 = vpack.c.b16 %v4383, %v4382
  %v4421 = vunpack.c.l.b16 %v4298
  %v4422 = vpack.c.b16 %v4421, %v4421
  %v4424 = vshrl.u32 %v4384, 16
  %v4426 = vshll.u32 %v4384, 16
  %v4428 = vrot.slane %v4426, 1
  %v4429 = vor.u32 %v4424, %v4428
  %v4431 = vshll.u32 %v4385, 16
  %v4433 = vrot.slane %v4431, 1
  %v4434 = vsel %vm995, %v4429, %v4433
  %v4435 = vshrl.u32 %v4385, 16
  %v4437 = vor.u32 %v4435, %v4433
  %v4439 = vshll.u32 %v4386, 16
  %v4441 = vrot.slane %v4439, 1
  %v4442 = vsel %vm995, %v4437, %v4441
  %v4443 = vshrl.u32 %v4386, 16
  %v4445 = vor.u32 %v4443, %v4441
  %v4447 = vshll.u32 %v4387, 16
  %v4449 = vrot.slane %v4447, 1
  %v4450 = vsel %vm995, %v4445, %v4449
  %v4451 = vshrl.u32 %v4387, 16
  %v4453 = vor.u32 %v4451, %v4449
  %v4455 = vshll.u32 %v4388, 16
  %v4457 = vrot.slane %v4455, 1
  %v4458 = vsel %vm995, %v4453, %v4457
  %v4459 = vshrl.u32 %v4388, 16
  %v4461 = vor.u32 %v4459, %v4457
  %v4463 = vshll.u32 %v4389, 16
  %v4465 = vrot.slane %v4463, 1
  %v4466 = vsel %vm995, %v4461, %v4465
  %v4467 = vshrl.u32 %v4389, 16
  %v4469 = vor.u32 %v4467, %v4465
  %v4471 = vshll.u32 %v4390, 16
  %v4473 = vrot.slane %v4471, 1
  %v4474 = vsel %vm995, %v4469, %v4473
  %v4475 = vshrl.u32 %v4390, 16
  %v4477 = vor.u32 %v4475, %v4473
  %v4479 = vshll.u32 %v4391, 16
  %v4481 = vrot.slane %v4479, 1
  %v4482 = vsel %vm995, %v4477, %v4481
  %v4483 = vshrl.u32 %v4391, 16
  %v4485 = vor.u32 %v4483, %v4481
  %v4487 = vshll.u32 %v4392, 16
  %v4489 = vrot.slane %v4487, 1
  %v4490 = vsel %vm995, %v4485, %v4489
  %v4491 = vshrl.u32 %v4392, 16
  %v4493 = vor.u32 %v4491, %v4489
  %v4495 = vshll.u32 %v4393, 16
  %v4497 = vrot.slane %v4495, 1
  %v4498 = vsel %vm995, %v4493, %v4497
  %v4499 = vshrl.u32 %v4393, 16
  %v4501 = vor.u32 %v4499, %v4497
  %v4503 = vshll.u32 %v4394, 16
  %v4505 = vrot.slane %v4503, 1
  %v4506 = vsel %vm995, %v4501, %v4505
  %v4507 = vshrl.u32 %v4394, 16
  %v4509 = vor.u32 %v4507, %v4505
  %v4511 = vshll.u32 %v4395, 16
  %v4513 = vrot.slane %v4511, 1
  %v4514 = vsel %vm995, %v4509, %v4513
  %v4515 = vshrl.u32 %v4395, 16
  %v4517 = vor.u32 %v4515, %v4513
  %v4519 = vshll.u32 %v4396, 16
  %v4521 = vrot.slane %v4519, 1
  %v4522 = vsel %vm995, %v4517, %v4521
  %v4523 = vshrl.u32 %v4396, 16
  %v4525 = vor.u32 %v4523, %v4521
  %v4527 = vshll.u32 %v4397, 16
  %v4529 = vrot.slane %v4527, 1
  %v4530 = vsel %vm995, %v4525, %v4529
  %v4531 = vshrl.u32 %v4397, 16
  %v4533 = vor.u32 %v4531, %v4529
  %v4535 = vshll.u32 %v4398, 16
  %v4537 = vrot.slane %v4535, 1
  %v4538 = vsel %vm995, %v4533, %v4537
  %v4539 = vshrl.u32 %v4398, 16
  %v4541 = vor.u32 %v4539, %v4537
  %v4543 = vshll.u32 %v4399, 16
  %v4545 = vrot.slane %v4543, 1
  %v4546 = vsel %vm995, %v4541, %v4545
  %v4547 = vshrl.u32 %v4399, 16
  %v4549 = vor.u32 %v4547, %v4545
  %v4551 = vshll.u32 %v4400, 16
  %v4553 = vrot.slane %v4551, 1
  %v4554 = vsel %vm995, %v4549, %v4553
  %v4555 = vshrl.u32 %v4400, 16
  %v4557 = vor.u32 %v4555, %v4553
  %v4559 = vshll.u32 %v4401, 16
  %v4561 = vrot.slane %v4559, 1
  %v4562 = vsel %vm995, %v4557, %v4561
  %v4563 = vshrl.u32 %v4401, 16
  %v4565 = vor.u32 %v4563, %v4561
  %v4567 = vshll.u32 %v4422, 16
  %v4569 = vrot.slane %v4567, 1
  %v4570 = vsel %vm995, %v4565, %v4569
  %v4590 = vunpack.c.l.b16 %v4299
  %v4591 = vpack.c.b16 %v4349, %v4590
  %v4592 = vrot.slane %v4591, 1
  %v4593 = vrot.slane %v4385, 1
  %v4594 = vsel %vm1165, %v4592, %v4593
  %v4595 = vrot.slane %v4386, 1
  %v4596 = vsel %vm1165, %v4593, %v4595
  %v4597 = vrot.slane %v4387, 1
  %v4598 = vsel %vm1165, %v4595, %v4597
  %v4599 = vrot.slane %v4388, 1
  %v4600 = vsel %vm1165, %v4597, %v4599
  %v4601 = vrot.slane %v4389, 1
  %v4602 = vsel %vm1165, %v4599, %v4601
  %v4603 = vrot.slane %v4390, 1
  %v4604 = vsel %vm1165, %v4601, %v4603
  %v4605 = vrot.slane %v4391, 1
  %v4606 = vsel %vm1165, %v4603, %v4605
  %v4607 = vrot.slane %v4392, 1
  %v4608 = vsel %vm1165, %v4605, %v4607
  %v4609 = vrot.slane %v4393, 1
  %v4610 = vsel %vm1165, %v4607, %v4609
  %v4611 = vrot.slane %v4394, 1
  %v4612 = vsel %vm1165, %v4609, %v4611
  %v4613 = vrot.slane %v4395, 1
  %v4614 = vsel %vm1165, %v4611, %v4613
  %v4615 = vrot.slane %v4396, 1
  %v4616 = vsel %vm1165, %v4613, %v4615
  %v4617 = vrot.slane %v4397, 1
  %v4618 = vsel %vm1165, %v4615, %v4617
  %v4619 = vrot.slane %v4398, 1
  %v4620 = vsel %vm1165, %v4617, %v4619
  %v4621 = vrot.slane %v4399, 1
  %v4622 = vsel %vm1165, %v4619, %v4621
  %v4623 = vrot.slane %v4400, 1
  %v4624 = vsel %vm1165, %v4621, %v4623
  %v4625 = vrot.slane %v4401, 1
  %v4626 = vsel %vm1165, %v4623, %v4625
  %v4627 = vrot.slane %v4422, 1
  %v4628 = vsel %vm1165, %v4625, %v4627
  %v4651 = vunpack.c.l.b16 %v4300
  %v4652 = vunpack.c.l.b16 %v4301
  %v4653 = vunpack.c.l.b16 %v4302
  %v4654 = vunpack.c.l.b16 %v4303
  %v4655 = vpack.c.b16 %v4351, %v4651
  %v4656 = vpack.c.b16 %v4653, %v4652
  %v4657 = vpack.c.b16 %v4654, %v4654
  %v4658 = vrot.slane %v4655, 1
  %v4659 = vsel %vm1165, %v4658, %v4595
  %v4660 = vrot.slane %v4656, 1
  %v4661 = vsel %vm1165, %v4625, %v4660
  %v4662 = vrot.slane %v4657, 1
  %v4663 = vsel %vm1165, %v4660, %v4662
  %v4668 = vunpack.c.l.b16 %v4304
  %v4669 = vpack.c.b16 %v4668, %v4668
  %v4671 = vshrl.u32 %v4655, 16
  %v4673 = vrot.slane %v4671, 1
  %v4674 = vshll.u32 %v4655, 16
  %v4676 = vrot.slane %v4674, 2
  %v4677 = vor.u32 %v4673, %v4676
  %v4678 = vrot.slane %v4443, 1
  %v4679 = vrot.slane %v4439, 2
  %v4680 = vor.u32 %v4678, %v4679
  %v4681 = vsel %vm1244, %v4677, %v4680
  %v4682 = vrot.slane %v4451, 1
  %v4683 = vrot.slane %v4447, 2
  %v4684 = vor.u32 %v4682, %v4683
  %v4685 = vsel %vm1244, %v4680, %v4684
  %v4686 = vrot.slane %v4459, 1
  %v4687 = vrot.slane %v4455, 2
  %v4688 = vor.u32 %v4686, %v4687
  %v4689 = vsel %vm1244, %v4684, %v4688
  %v4690 = vrot.slane %v4467, 1
  %v4691 = vrot.slane %v4463, 2
  %v4692 = vor.u32 %v4690, %v4691
  %v4693 = vsel %vm1244, %v4688, %v4692
  %v4694 = vrot.slane %v4475, 1
  %v4695 = vrot.slane %v4471, 2
  %v4696 = vor.u32 %v4694, %v4695
  %v4697 = vsel %vm1244, %v4692, %v4696
  %v4698 = vrot.slane %v4483, 1
  %v4699 = vrot.slane %v4479, 2
  %v4700 = vor.u32 %v4698, %v4699
  %v4701 = vsel %vm1244, %v4696, %v4700
  %v4702 = vrot.slane %v4491, 1
  %v4703 = vrot.slane %v4487, 2
  %v4704 = vor.u32 %v4702, %v4703
  %v4705 = vsel %vm1244, %v4700, %v4704
  %v4706 = vrot.slane %v4499, 1
  %v4707 = vrot.slane %v4495, 2
  %v4708 = vor.u32 %v4706, %v4707
  %v4709 = vsel %vm1244, %v4704, %v4708
  %v4710 = vrot.slane %v4507, 1
  %v4711 = vrot.slane %v4503, 2
  %v4712 = vor.u32 %v4710, %v4711
  %v4713 = vsel %vm1244, %v4708, %v4712
  %v4714 = vrot.slane %v4515, 1
  %v4715 = vrot.slane %v4511, 2
  %v4716 = vor.u32 %v4714, %v4715
  %v4717 = vsel %vm1244, %v4712, %v4716
  %v4718 = vrot.slane %v4523, 1
  %v4719 = vrot.slane %v4519, 2
  %v4720 = vor.u32 %v4718, %v4719
  %v4721 = vsel %vm1244, %v4716, %v4720
  %v4722 = vrot.slane %v4531, 1
  %v4723 = vrot.slane %v4527, 2
  %v4724 = vor.u32 %v4722, %v4723
  %v4725 = vsel %vm1244, %v4720, %v4724
  %v4726 = vrot.slane %v4539, 1
  %v4727 = vrot.slane %v4535, 2
  %v4728 = vor.u32 %v4726, %v4727
  %v4729 = vsel %vm1244, %v4724, %v4728
  %v4730 = vrot.slane %v4547, 1
  %v4731 = vrot.slane %v4543, 2
  %v4732 = vor.u32 %v4730, %v4731
  %v4733 = vsel %vm1244, %v4728, %v4732
  %v4734 = vrot.slane %v4555, 1
  %v4735 = vrot.slane %v4551, 2
  %v4736 = vor.u32 %v4734, %v4735
  %v4737 = vsel %vm1244, %v4732, %v4736
  %v4738 = vrot.slane %v4563, 1
  %v4739 = vrot.slane %v4559, 2
  %v4740 = vor.u32 %v4738, %v4739
  %v4741 = vsel %vm1244, %v4736, %v4740
  %v4743 = vshrl.u32 %v4656, 16
  %v4745 = vrot.slane %v4743, 1
  %v4746 = vshll.u32 %v4656, 16
  %v4748 = vrot.slane %v4746, 2
  %v4749 = vor.u32 %v4745, %v4748
  %v4750 = vsel %vm1244, %v4740, %v4749
  %v4752 = vshrl.u32 %v4669, 16
  %v4754 = vrot.slane %v4752, 1
  %v4755 = vshll.u32 %v4669, 16
  %v4757 = vrot.slane %v4755, 2
  %v4758 = vor.u32 %v4754, %v4757
  %v4759 = vsel %vm1244, %v4749, %v4758
  %v4779 = vunpack.c.l.b16 %v4305
  %v4780 = vpack.c.b16 %v4351, %v4779
  %v4781 = vrot.slane %v4780, 2
  %v4782 = vrot.slane %v4386, 2
  %v4783 = vsel %vm1356, %v4781, %v4782
  %v4784 = vrot.slane %v4387, 2
  %v4785 = vsel %vm1356, %v4782, %v4784
  %v4786 = vrot.slane %v4388, 2
  %v4787 = vsel %vm1356, %v4784, %v4786
  %v4788 = vrot.slane %v4389, 2
  %v4789 = vsel %vm1356, %v4786, %v4788
  %v4790 = vrot.slane %v4390, 2
  %v4791 = vsel %vm1356, %v4788, %v4790
  %v4792 = vrot.slane %v4391, 2
  %v4793 = vsel %vm1356, %v4790, %v4792
  %v4794 = vrot.slane %v4392, 2
  %v4795 = vsel %vm1356, %v4792, %v4794
  %v4796 = vrot.slane %v4393, 2
  %v4797 = vsel %vm1356, %v4794, %v4796
  %v4798 = vrot.slane %v4394, 2
  %v4799 = vsel %vm1356, %v4796, %v4798
  %v4800 = vrot.slane %v4395, 2
  %v4801 = vsel %vm1356, %v4798, %v4800
  %v4802 = vrot.slane %v4396, 2
  %v4803 = vsel %vm1356, %v4800, %v4802
  %v4804 = vrot.slane %v4397, 2
  %v4805 = vsel %vm1356, %v4802, %v4804
  %v4806 = vrot.slane %v4398, 2
  %v4807 = vsel %vm1356, %v4804, %v4806
  %v4808 = vrot.slane %v4399, 2
  %v4809 = vsel %vm1356, %v4806, %v4808
  %v4810 = vrot.slane %v4400, 2
  %v4811 = vsel %vm1356, %v4808, %v4810
  %v4812 = vrot.slane %v4401, 2
  %v4813 = vsel %vm1356, %v4810, %v4812
  %v4814 = vrot.slane %v4656, 2
  %v4815 = vsel %vm1356, %v4812, %v4814
  %v4816 = vrot.slane %v4669, 2
  %v4817 = vsel %vm1356, %v4814, %v4816
  %v4840 = vunpack.c.l.b16 %v4306
  %v4841 = vunpack.c.l.b16 %v4307
  %v4842 = vunpack.c.l.b16 %v4308
  %v4843 = vunpack.c.l.b16 %v4309
  %v4844 = vpack.c.b16 %v4353, %v4840
  %v4845 = vpack.c.b16 %v4842, %v4841
  %v4846 = vpack.c.b16 %v4843, %v4843
  %v4847 = vrot.slane %v4844, 2
  %v4848 = vsel %vm1356, %v4847, %v4784
  %v4849 = vrot.slane %v4845, 2
  %v4850 = vsel %vm1356, %v4814, %v4849
  %v4851 = vrot.slane %v4846, 2
  %v4852 = vsel %vm1356, %v4849, %v4851
  %v4857 = vunpack.c.l.b16 %v4310
  %v4858 = vpack.c.b16 %v4857, %v4857
  %v4860 = vshrl.u32 %v4844, 16
  %v4862 = vrot.slane %v4860, 2
  %v4863 = vshll.u32 %v4844, 16
  %v4865 = vrot.slane %v4863, 3
  %v4866 = vor.u32 %v4862, %v4865
  %v4867 = vrot.slane %v4451, 2
  %v4868 = vrot.slane %v4447, 3
  %v4869 = vor.u32 %v4867, %v4868
  %v4870 = vsel %vm1435, %v4866, %v4869
  %v4871 = vrot.slane %v4459, 2
  %v4872 = vrot.slane %v4455, 3
  %v4873 = vor.u32 %v4871, %v4872
  %v4874 = vsel %vm1435, %v4869, %v4873
  %v4875 = vrot.slane %v4467, 2
  %v4876 = vrot.slane %v4463, 3
  %v4877 = vor.u32 %v4875, %v4876
  %v4878 = vsel %vm1435, %v4873, %v4877
  %v4879 = vrot.slane %v4475, 2
  %v4880 = vrot.slane %v4471, 3
  %v4881 = vor.u32 %v4879, %v4880
  %v4882 = vsel %vm1435, %v4877, %v4881
  %v4883 = vrot.slane %v4483, 2
  %v4884 = vrot.slane %v4479, 3
  %v4885 = vor.u32 %v4883, %v4884
  %v4886 = vsel %vm1435, %v4881, %v4885
  %v4887 = vrot.slane %v4491, 2
  %v4888 = vrot.slane %v4487, 3
  %v4889 = vor.u32 %v4887, %v4888
  %v4890 = vsel %vm1435, %v4885, %v4889
  %v4891 = vrot.slane %v4499, 2
  %v4892 = vrot.slane %v4495, 3
  %v4893 = vor.u32 %v4891, %v4892
  %v4894 = vsel %vm1435, %v4889, %v4893
  %v4895 = vrot.slane %v4507, 2
  %v4896 = vrot.slane %v4503, 3
  %v4897 = vor.u32 %v4895, %v4896
  %v4898 = vsel %vm1435, %v4893, %v4897
  %v4899 = vrot.slane %v4515, 2
  %v4900 = vrot.slane %v4511, 3
  %v4901 = vor.u32 %v4899, %v4900
  %v4902 = vsel %vm1435, %v4897, %v4901
  %v4903 = vrot.slane %v4523, 2
  %v4904 = vrot.slane %v4519, 3
  %v4905 = vor.u32 %v4903, %v4904
  %v4906 = vsel %vm1435, %v4901, %v4905
  %v4907 = vrot.slane %v4531, 2
  %v4908 = vrot.slane %v4527, 3
  %v4909 = vor.u32 %v4907, %v4908
  %v4910 = vsel %vm1435, %v4905, %v4909
  %v4911 = vrot.slane %v4539, 2
  %v4912 = vrot.slane %v4535, 3
  %v4913 = vor.u32 %v4911, %v4912
  %v4914 = vsel %vm1435, %v4909, %v4913
  %v4915 = vrot.slane %v4547, 2
  %v4916 = vrot.slane %v4543, 3
  %v4917 = vor.u32 %v4915, %v4916
  %v4918 = vsel %vm1435, %v4913, %v4917
  %v4919 = vrot.slane %v4555, 2
  %v4920 = vrot.slane %v4551, 3
  %v4921 = vor.u32 %v4919, %v4920
  %v4922 = vsel %vm1435, %v4917, %v4921
  %v4923 = vrot.slane %v4563, 2
  %v4924 = vrot.slane %v4559, 3
  %v4925 = vor.u32 %v4923, %v4924
  %v4926 = vsel %vm1435, %v4921, %v4925
  %v4927 = vrot.slane %v4743, 2
  %v4928 = vrot.slane %v4746, 3
  %v4929 = vor.u32 %v4927, %v4928
  %v4930 = vsel %vm1435, %v4925, %v4929
  %v4932 = vshrl.u32 %v4845, 16
  %v4934 = vrot.slane %v4932, 2
  %v4935 = vshll.u32 %v4845, 16
  %v4937 = vrot.slane %v4935, 3
  %v4938 = vor.u32 %v4934, %v4937
  %v4939 = vsel %vm1435, %v4929, %v4938
  %v4941 = vshrl.u32 %v4858, 16
  %v4943 = vrot.slane %v4941, 2
  %v4944 = vshll.u32 %v4858, 16
  %v4946 = vrot.slane %v4944, 3
  %v4947 = vor.u32 %v4943, %v4946
  %v4948 = vsel %vm1435, %v4938, %v4947
  %v4968 = vunpack.c.l.b16 %v4311
  %v4969 = vpack.c.b16 %v4353, %v4968
  %v4970 = vrot.slane %v4969, 3
  %v4971 = vrot.slane %v4387, 3
  %v4972 = vsel %vm1547, %v4970, %v4971
  %v4973 = vrot.slane %v4388, 3
  %v4974 = vsel %vm1547, %v4971, %v4973
  %v4975 = vrot.slane %v4389, 3
  %v4976 = vsel %vm1547, %v4973, %v4975
  %v4977 = vrot.slane %v4390, 3
  %v4978 = vsel %vm1547, %v4975, %v4977
  %v4979 = vrot.slane %v4391, 3
  %v4980 = vsel %vm1547, %v4977, %v4979
  %v4981 = vrot.slane %v4392, 3
  %v4982 = vsel %vm1547, %v4979, %v4981
  %v4983 = vrot.slane %v4393, 3
  %v4984 = vsel %vm1547, %v4981, %v4983
  %v4985 = vrot.slane %v4394, 3
  %v4986 = vsel %vm1547, %v4983, %v4985
  %v4987 = vrot.slane %v4395, 3
  %v4988 = vsel %vm1547, %v4985, %v4987
  %v4989 = vrot.slane %v4396, 3
  %v4990 = vsel %vm1547, %v4987, %v4989
  %v4991 = vrot.slane %v4397, 3
  %v4992 = vsel %vm1547, %v4989, %v4991
  %v4993 = vrot.slane %v4398, 3
  %v4994 = vsel %vm1547, %v4991, %v4993
  %v4995 = vrot.slane %v4399, 3
  %v4996 = vsel %vm1547, %v4993, %v4995
  %v4997 = vrot.slane %v4400, 3
  %v4998 = vsel %vm1547, %v4995, %v4997
  %v4999 = vrot.slane %v4401, 3
  %v5000 = vsel %vm1547, %v4997, %v4999
  %v5001 = vrot.slane %v4656, 3
  %v5002 = vsel %vm1547, %v4999, %v5001
  %v5003 = vrot.slane %v4845, 3
  %v5004 = vsel %vm1547, %v5001, %v5003
  %v5005 = vrot.slane %v4858, 3
  %v5006 = vsel %vm1547, %v5003, %v5005
  %v5025 = vld [vmem:[%s3] sm:$0xf]
  %v5026 = vld [vmem:[%s3 + $0x4] sm:$0xf]
  %v5027 = vld [vmem:[%s3 + $0x8] sm:$0xf]
  %v5028 = vld [vmem:[%s3 + $0xc] sm:$0xf]
  %v5029 = vld [vmem:[%s3 + $0x10] sm:$0xf]
  %v5030 = vld [vmem:[%s3 + $0x14] sm:$0xf]
  %v5031 = vld [vmem:[%s3 + $0x18] sm:$0xf]
  %v5032 = vld [vmem:[%s3 + $0x1c] sm:$0xf]
  %v5033 = vld [vmem:[%s3 + $0x20] sm:$0xf]
  %v5034 = vld [vmem:[%s3 + $0x24] sm:$0xf]
  %v5035 = vld [vmem:[%s3 + $0x28] sm:$0xf]
  %v5036 = vld [vmem:[%s3 + $0x2c] sm:$0xf]
  %v5037 = vld [vmem:[%s3 + $0x30] sm:$0xf]
  %v5038 = vld [vmem:[%s3 + $0x34] sm:$0xf]
  %v5039 = vld [vmem:[%s3 + $0x38] sm:$0xf]
  %v5040 = vld [vmem:[%s3 + $0x3c] sm:$0xf]
  %v5041 = vld [vmem:[%s3 + $0x40] sm:$0xf]
  %v5042 = vld [vmem:[%s3 + $0x44] sm:$0xf]
  %v5043 = vld [vmem:[%s3 + $0x48] sm:$0xf]
  %v5044 = vld [vmem:[%s3 + $0x4c] sm:$0xf]
  %v5045 = vld [vmem:[%s3 + $0x50] sm:$0xf]
  %v5046 = vld [vmem:[%s3 + $0x54] sm:$0xf]
  %v5047 = vld [vmem:[%s3 + $0x58] sm:$0xf]
  %v5048 = vld [vmem:[%s3 + $0x5c] sm:$0xf]
  %v5049 = vld [vmem:[%s3 + $0x60] sm:$0xf]
  %v5050 = vld [vmem:[%s3 + $0x64] sm:$0xf]
  %v5051 = vld [vmem:[%s3 + $0x68] sm:$0xf]
  %v5052 = vld [vmem:[%s3 + $0x6c] sm:$0xf]
  %v5053 = vld [vmem:[%s3 + $0x70] sm:$0xf]
  %v5054 = vld [vmem:[%s3 + $0x74] sm:$0xf]
  %v5055 = vld [vmem:[%s3 + $0x78] sm:$0xf]
  %v5056 = vld [vmem:[%s3 + $0x7c] sm:$0xf]
  %v5057 = vld [vmem:[%s3 + $0x80] sm:$0xf]
  %v5058 = vld [vmem:[%s3 + $0x84] sm:$0xf]
  %v5059 = vld [vmem:[%s3 + $0x88] sm:$0xf]
  %v5060 = vld [vmem:[%s3 + $0x8c] sm:$0xf]
  %v5061 = vld [vmem:[%s3 + $0x90] sm:$0xf]
  %v5062 = vld [vmem:[%s3 + $0x94] sm:$0xf]
  %v5063 = vld [vmem:[%s3 + $0x98] sm:$0xf]
  %v5064 = vld [vmem:[%s3 + $0x9c] sm:$0xf]
  %v5065 = vld [vmem:[%s3 + $0xa0] sm:$0xf]
  %v5066 = vld [vmem:[%s3 + $0xa4] sm:$0xf]
  %v5067 = vld [vmem:[%s3 + $0xa8] sm:$0xf]
  %v5068 = vld [vmem:[%s3 + $0xac] sm:$0xf]
  %v5069 = vld [vmem:[%s3 + $0xb0] sm:$0xf]
  %v5070 = vld [vmem:[%s3 + $0xb4] sm:$0xf]
  %v5071 = vld [vmem:[%s3 + $0xb8] sm:$0xf]
  %v5072 = vld [vmem:[%s3 + $0xbc] sm:$0xf]
  %v5073 = vld [vmem:[%s3 + $0xc0] sm:$0xf]
  %v5074 = vld [vmem:[%s3 + $0xc4] sm:$0xf]
  %v5075 = vld [vmem:[%s3 + $0xc8] sm:$0xf]
  %v5076 = vld [vmem:[%s3 + $0xcc] sm:$0xf]
  %v5077 = vld [vmem:[%s3 + $0xd0] sm:$0xf]
  %v5078 = vld [vmem:[%s3 + $0xd4] sm:$0xf]
  %v5079 = vld [vmem:[%s3 + $0xd8] sm:$0xf]
  %v5080 = vld [vmem:[%s3 + $0xdc] sm:$0xf]
  %v5081 = vld [vmem:[%s3 + $0xe0] sm:$0xf]
  %v5082 = vld [vmem:[%s3 + $0xe4] sm:$0xf]
  %v5083 = vld [vmem:[%s3 + $0xe8] sm:$0xf]
  %v5084 = vld [vmem:[%s3 + $0xec] sm:$0xf]
  %v5085 = vld [vmem:[%s3 + $0xf0] sm:$0xf]
  %v5086 = vld [vmem:[%s3 + $0xf4] sm:$0xf]
  %v5087 = vld [vmem:[%s3 + $0xf8] sm:$0xf]
  %v5088 = vld [vmem:[%s3 + $0xfc] sm:$0xf]
  %v5089 = vld [vmem:[%s3 + $0x100] sm:$0xf]
  %v5090 = vld [vmem:[%s3 + $0x104] sm:$0xf]
  %v5091 = vld [vmem:[%s3 + $0x108] sm:$0xf]
  %v5092 = vld [vmem:[%s3 + $0x10c] sm:$0xf]
  %v5093 = vld [vmem:[%s3 + $0x110] sm:$0xf]
  %v5094 = vld [vmem:[%s3 + $0x114] sm:$0xf]
  %v5095 = vld [vmem:[%s3 + $0x118] sm:$0xf]
  %v5096 = vld [vmem:[%s3 + $0x11c] sm:$0xf]
  %v5097 = vld [vmem:[%s3 + $0x120] sm:$0xf]
  %v5098 = vld [vmem:[%s3 + $0x124] sm:$0xf]
  %v5099 = vld [vmem:[%s3 + $0x128] sm:$0xf]
  %v5100 = vld [vmem:[%s3 + $0x12c] sm:$0xf]
  %v5101 = vld [vmem:[%s3 + $0x130] sm:$0xf]
  %v5102 = vld [vmem:[%s3 + $0x134] sm:$0xf]
  %v5103 = vld [vmem:[%s3 + $0x138] sm:$0xf]
  %v5104 = vld [vmem:[%s3 + $0x13c] sm:$0xf]
  %v5105 = vld [vmem:[%s3 + $0x140] sm:$0xf]
  %v5106 = vld [vmem:[%s3 + $0x144] sm:$0xf]
  %v5107 = vld [vmem:[%s3 + $0x148] sm:$0xf]
  %v5108 = vld [vmem:[%s3 + $0x14c] sm:$0xf]
  %v5109 = vld [vmem:[%s3 + $0x150] sm:$0xf]
  %v5110 = vld [vmem:[%s3 + $0x154] sm:$0xf]
  %v5111 = vld [vmem:[%s3 + $0x158] sm:$0xf]
  %v5112 = vld [vmem:[%s3 + $0x15c] sm:$0xf]
  %v5113 = vld [vmem:[%s3 + $0x160] sm:$0xf]
  %v5114 = vld [vmem:[%s3 + $0x164] sm:$0xf]
  %v5115 = vld [vmem:[%s3 + $0x168] sm:$0xf]
  %v5116 = vld [vmem:[%s3 + $0x16c] sm:$0xf]
  %v5117 = vld [vmem:[%s3 + $0x170] sm:$0xf]
  %v5118 = vld [vmem:[%s3 + $0x174] sm:$0xf]
  %v5119 = vld [vmem:[%s3 + $0x178] sm:$0xf]
  %v5120 = vld [vmem:[%s3 + $0x17c] sm:$0xf]
  %v5121 = vld [vmem:[%s3 + $0x180] sm:$0xf]
  %v5122 = vld [vmem:[%s3 + $0x184] sm:$0xf]
  %v5123 = vld [vmem:[%s3 + $0x188] sm:$0xf]
  %v5124 = vld [vmem:[%s3 + $0x18c] sm:$0xf]
  %v5125 = vld [vmem:[%s3 + $0x190] sm:$0xf]
  %v5126 = vld [vmem:[%s3 + $0x194] sm:$0xf]
  %v5127 = vld [vmem:[%s3 + $0x198] sm:$0xf]
  %v5128 = vld [vmem:[%s3 + $0x19c] sm:$0xf]
  %v5129 = vld [vmem:[%s3 + $0x1a0] sm:$0xf]
  %v5130 = vld [vmem:[%s3 + $0x1a4] sm:$0xf]
  %v5131 = vld [vmem:[%s3 + $0x1a8] sm:$0xf]
  %v5132 = vld [vmem:[%s3 + $0x1ac] sm:$0xf]
  %v5133 = vld [vmem:[%s3 + $0x1b0] sm:$0xf]
  %v5134 = vld [vmem:[%s3 + $0x1b4] sm:$0xf]
  %v5135 = vld [vmem:[%s3 + $0x1b8] sm:$0xf]
  %v5136 = vld [vmem:[%s3 + $0x1bc] sm:$0xf]
  %v5137 = vld [vmem:[%s3 + $0x1c0] sm:$0xf]
  %v5138 = vld [vmem:[%s3 + $0x1c4] sm:$0xf]
  %v5139 = vld [vmem:[%s3 + $0x1c8] sm:$0xf]
  %v5140 = vld [vmem:[%s3 + $0x1cc] sm:$0xf]
  %v5141 = vld [vmem:[%s3 + $0x1d0] sm:$0xf]
  %v5142 = vld [vmem:[%s3 + $0x1d4] sm:$0xf]
  %v5143 = vld [vmem:[%s3 + $0x1d8] sm:$0xf]
  %v5144 = vld [vmem:[%s3 + $0x1dc] sm:$0xf]
  %v5145 = vld [vmem:[%s3 + $0x1e0] sm:$0xf]
  %v5146 = vld [vmem:[%s3 + $0x1e4] sm:$0xf]
  %v5147 = vld [vmem:[%s3 + $0x1e8] sm:$0xf]
  %v5148 = vld [vmem:[%s3 + $0x1ec] sm:$0xf]
  %v5149 = vld [vmem:[%s3 + $0x1f0] sm:$0xf]
  %v5150 = vld [vmem:[%s3 + $0x1f4] sm:$0xf]
  %v5151 = vld [vmem:[%s3 + $0x1f8] sm:$0xf]
  %v5152 = vld [vmem:[%s3 + $0x1fc] sm:$0xf]
  %v5153 = vld [vmem:[%s3 + $0x200] sm:$0xf]
  %v5154 = vld [vmem:[%s3 + $0x204] sm:$0xf]
  %v5155 = vld [vmem:[%s3 + $0x208] sm:$0xf]
  %v5156 = vld [vmem:[%s3 + $0x20c] sm:$0xf]
  %v5157 = vld [vmem:[%s3 + $0x210] sm:$0xf]
  %v5158 = vld [vmem:[%s3 + $0x214] sm:$0xf]
  %v5159 = vld [vmem:[%s3 + $0x218] sm:$0xf]
  %v5160 = vld [vmem:[%s3 + $0x21c] sm:$0xf]
  %v5161 = vld [vmem:[%s3 + $0x220] sm:$0xf]
  %v5162 = vld [vmem:[%s3 + $0x224] sm:$0xf]
  %v5163 = vld [vmem:[%s3 + $0x228] sm:$0xf]
  %v5164 = vld [vmem:[%s3 + $0x22c] sm:$0xf]
  %v5165 = vld [vmem:[%s3 + $0x230] sm:$0xf]
  %v5166 = vld [vmem:[%s3 + $0x234] sm:$0xf]
  %v5167 = vld [vmem:[%s3 + $0x238] sm:$0xf]
  %v5168 = vld [vmem:[%s3 + $0x23c] sm:$0xf]
  %v5169 = vld [vmem:[%s4] sm:$0x1]
  %v5171 = vlaneseq
  %v5172 = vshrl.u32 %v5171, 7
  %v5173 = vsub.s32 0, %v5172
  %v5174 = vrot.slane %v5169, %v5173
  %v5320 = vunpack.c.l.b16 %v5025
  %v5321 = vunpack.c.l.b16 %v5026
  %v5322 = vunpack.c.l.b16 %v5027
  %v5323 = vunpack.c.l.b16 %v5028
  %v5324 = vunpack.c.l.b16 %v5029
  %v5325 = vunpack.c.l.b16 %v5030
  %v5326 = vunpack.c.l.b16 %v5031
  %v5327 = vunpack.c.l.b16 %v5032
  %v5328 = vunpack.c.l.b16 %v5033
  %v5329 = vunpack.c.l.b16 %v5034
  %v5330 = vunpack.c.l.b16 %v5035
  %v5331 = vunpack.c.l.b16 %v5036
  %v5332 = vunpack.c.l.b16 %v5037
  %v5333 = vunpack.c.l.b16 %v5038
  %v5334 = vunpack.c.l.b16 %v5039
  %v5335 = vunpack.c.l.b16 %v5040
  %v5336 = vunpack.c.l.b16 %v5041
  %v5337 = vunpack.c.l.b16 %v5042
  %v5338 = vunpack.c.l.b16 %v5043
  %v5339 = vunpack.c.l.b16 %v5044
  %v5340 = vunpack.c.l.b16 %v5045
  %v5341 = vunpack.c.l.b16 %v5046
  %v5342 = vunpack.c.l.b16 %v5047
  %v5343 = vunpack.c.l.b16 %v5048
  %v5344 = vunpack.c.l.b16 %v5049
  %v5345 = vunpack.c.l.b16 %v5050
  %v5346 = vunpack.c.l.b16 %v5051
  %v5347 = vunpack.c.l.b16 %v5052
  %v5348 = vunpack.c.l.b16 %v5053
  %v5349 = vunpack.c.l.b16 %v5054
  %v5350 = vunpack.c.l.b16 %v5055
  %v5351 = vunpack.c.l.b16 %v5056
  %v5352 = vunpack.c.l.b16 %v5057
  %v5353 = vunpack.c.l.b16 %v5058
  %v5354 = vunpack.c.l.b16 %v5059
  %v5355 = vunpack.c.l.b16 %v5060
  %v5356 = vunpack.c.l.b16 %v5061
  %v5357 = vunpack.c.l.b16 %v5062
  %v5358 = vunpack.c.l.b16 %v5063
  %v5359 = vunpack.c.l.b16 %v5064
  %v5360 = vunpack.c.l.b16 %v5065
  %v5361 = vunpack.c.l.b16 %v5066
  %v5362 = vunpack.c.l.b16 %v5067
  %v5363 = vunpack.c.l.b16 %v5068
  %v5364 = vunpack.c.l.b16 %v5069
  %v5365 = vunpack.c.l.b16 %v5070
  %v5366 = vunpack.c.l.b16 %v5071
  %v5367 = vunpack.c.l.b16 %v5072
  %v5368 = vunpack.c.l.b16 %v5073
  %v5369 = vunpack.c.l.b16 %v5074
  %v5370 = vunpack.c.l.b16 %v5075
  %v5371 = vunpack.c.l.b16 %v5076
  %v5372 = vunpack.c.l.b16 %v5077
  %v5373 = vunpack.c.l.b16 %v5078
  %v5374 = vunpack.c.l.b16 %v5079
  %v5375 = vunpack.c.l.b16 %v5080
  %v5376 = vunpack.c.l.b16 %v5081
  %v5377 = vunpack.c.l.b16 %v5082
  %v5378 = vunpack.c.l.b16 %v5083
  %v5379 = vunpack.c.l.b16 %v5084
  %v5380 = vunpack.c.l.b16 %v5085
  %v5381 = vunpack.c.l.b16 %v5086
  %v5382 = vunpack.c.l.b16 %v5087
  %v5383 = vunpack.c.l.b16 %v5088
  %v5384 = vunpack.c.l.b16 %v5089
  %v5385 = vunpack.c.l.b16 %v5090
  %v5386 = vunpack.c.l.b16 %v5091
  %v5387 = vunpack.c.l.b16 %v5092
  %v5388 = vunpack.c.l.b16 %v5093
  %v5389 = vunpack.c.l.b16 %v5094
  %v5390 = vunpack.c.l.b16 %v5095
  %v5391 = vunpack.c.l.b16 %v5096
  %v5392 = vunpack.c.l.b16 %v5097
  %v5393 = vunpack.c.l.b16 %v5098
  %v5394 = vunpack.c.l.b16 %v5099
  %v5395 = vunpack.c.l.b16 %v5100
  %v5396 = vunpack.c.l.b16 %v5101
  %v5397 = vunpack.c.l.b16 %v5102
  %v5398 = vunpack.c.l.b16 %v5103
  %v5399 = vunpack.c.l.b16 %v5104
  %v5400 = vunpack.c.l.b16 %v5105
  %v5401 = vunpack.c.l.b16 %v5106
  %v5402 = vunpack.c.l.b16 %v5107
  %v5403 = vunpack.c.l.b16 %v5108
  %v5404 = vunpack.c.l.b16 %v5109
  %v5405 = vunpack.c.l.b16 %v5110
  %v5406 = vunpack.c.l.b16 %v5111
  %v5407 = vunpack.c.l.b16 %v5112
  %v5408 = vunpack.c.l.b16 %v5113
  %v5409 = vunpack.c.l.b16 %v5114
  %v5410 = vunpack.c.l.b16 %v5115
  %v5411 = vunpack.c.l.b16 %v5116
  %v5412 = vunpack.c.l.b16 %v5117
  %v5413 = vunpack.c.l.b16 %v5118
  %v5414 = vunpack.c.l.b16 %v5119
  %v5415 = vunpack.c.l.b16 %v5120
  %v5416 = vunpack.c.l.b16 %v5121
  %v5417 = vunpack.c.l.b16 %v5122
  %v5418 = vunpack.c.l.b16 %v5123
  %v5419 = vunpack.c.l.b16 %v5124
  %v5420 = vunpack.c.l.b16 %v5125
  %v5421 = vunpack.c.l.b16 %v5126
  %v5422 = vunpack.c.l.b16 %v5127
  %v5423 = vunpack.c.l.b16 %v5128
  %v5424 = vunpack.c.l.b16 %v5129
  %v5425 = vunpack.c.l.b16 %v5130
  %v5426 = vunpack.c.l.b16 %v5131
  %v5427 = vunpack.c.l.b16 %v5132
  %v5428 = vunpack.c.l.b16 %v5133
  %v5429 = vunpack.c.l.b16 %v5134
  %v5430 = vunpack.c.l.b16 %v5135
  %v5431 = vunpack.c.l.b16 %v5136
  %v5432 = vunpack.c.l.b16 %v5137
  %v5433 = vunpack.c.l.b16 %v5138
  %v5434 = vunpack.c.l.b16 %v5139
  %v5435 = vunpack.c.l.b16 %v5140
  %v5436 = vunpack.c.l.b16 %v5141
  %v5437 = vunpack.c.l.b16 %v5142
  %v5438 = vunpack.c.l.b16 %v5143
  %v5439 = vunpack.c.l.b16 %v5144
  %v5440 = vunpack.c.l.b16 %v5145
  %v5441 = vunpack.c.l.b16 %v5146
  %v5442 = vunpack.c.l.b16 %v5147
  %v5443 = vunpack.c.l.b16 %v5148
  %v5444 = vunpack.c.l.b16 %v5149
  %v5445 = vunpack.c.l.b16 %v5150
  %v5446 = vunpack.c.l.b16 %v5151
  %v5447 = vunpack.c.l.b16 %v5152
  %v5448 = vunpack.c.l.b16 %v5153
  %v5449 = vunpack.c.l.b16 %v5154
  %v5450 = vunpack.c.l.b16 %v5155
  %v5451 = vunpack.c.l.b16 %v5156
  %v5452 = vunpack.c.l.b16 %v5157
  %v5453 = vunpack.c.l.b16 %v5158
  %v5454 = vunpack.c.l.b16 %v5159
  %v5455 = vunpack.c.l.b16 %v5160
  %v5456 = vunpack.c.l.b16 %v5161
  %v5457 = vunpack.c.l.b16 %v5162
  %v5458 = vunpack.c.l.b16 %v5163
  %v5459 = vunpack.c.l.b16 %v5164
  %v5460 = vunpack.c.l.b16 %v5165
  %v5461 = vunpack.c.l.b16 %v5166
  %v5462 = vunpack.c.l.b16 %v5167
  %v5463 = vunpack.c.l.b16 %v5168
  %v5464 = vpack.c.b16 %v5321, %v5320
  %v5465 = vpack.c.b16 %v5323, %v5322
  %v5466 = vpack.c.b16 %v5325, %v5324
  %v5467 = vpack.c.b16 %v5327, %v5326
  %v5468 = vpack.c.b16 %v5329, %v5328
  %v5469 = vpack.c.b16 %v5331, %v5330
  %v5470 = vpack.c.b16 %v5333, %v5332
  %v5471 = vpack.c.b16 %v5335, %v5334
  %v5472 = vpack.c.b16 %v5337, %v5336
  %v5473 = vpack.c.b16 %v5339, %v5338
  %v5474 = vpack.c.b16 %v5341, %v5340
  %v5475 = vpack.c.b16 %v5343, %v5342
  %v5476 = vpack.c.b16 %v5345, %v5344
  %v5477 = vpack.c.b16 %v5347, %v5346
  %v5478 = vpack.c.b16 %v5349, %v5348
  %v5479 = vpack.c.b16 %v5351, %v5350
  %v5480 = vpack.c.b16 %v5353, %v5352
  %v5481 = vpack.c.b16 %v5355, %v5354
  %v5482 = vpack.c.b16 %v5357, %v5356
  %v5483 = vpack.c.b16 %v5359, %v5358
  %v5484 = vpack.c.b16 %v5361, %v5360
  %v5485 = vpack.c.b16 %v5363, %v5362
  %v5486 = vpack.c.b16 %v5365, %v5364
  %v5487 = vpack.c.b16 %v5367, %v5366
  %v5488 = vpack.c.b16 %v5369, %v5368
  %v5489 = vpack.c.b16 %v5371, %v5370
  %v5490 = vpack.c.b16 %v5373, %v5372
  %v5491 = vpack.c.b16 %v5375, %v5374
  %v5492 = vpack.c.b16 %v5377, %v5376
  %v5493 = vpack.c.b16 %v5379, %v5378
  %v5494 = vpack.c.b16 %v5381, %v5380
  %v5495 = vpack.c.b16 %v5383, %v5382
  %v5496 = vpack.c.b16 %v5385, %v5384
  %v5497 = vpack.c.b16 %v5387, %v5386
  %v5498 = vpack.c.b16 %v5389, %v5388
  %v5499 = vpack.c.b16 %v5391, %v5390
  %v5500 = vpack.c.b16 %v5393, %v5392
  %v5501 = vpack.c.b16 %v5395, %v5394
  %v5502 = vpack.c.b16 %v5397, %v5396
  %v5503 = vpack.c.b16 %v5399, %v5398
  %v5504 = vpack.c.b16 %v5401, %v5400
  %v5505 = vpack.c.b16 %v5403, %v5402
  %v5506 = vpack.c.b16 %v5405, %v5404
  %v5507 = vpack.c.b16 %v5407, %v5406
  %v5508 = vpack.c.b16 %v5409, %v5408
  %v5509 = vpack.c.b16 %v5411, %v5410
  %v5510 = vpack.c.b16 %v5413, %v5412
  %v5511 = vpack.c.b16 %v5415, %v5414
  %v5512 = vpack.c.b16 %v5417, %v5416
  %v5513 = vpack.c.b16 %v5419, %v5418
  %v5514 = vpack.c.b16 %v5421, %v5420
  %v5515 = vpack.c.b16 %v5423, %v5422
  %v5516 = vpack.c.b16 %v5425, %v5424
  %v5517 = vpack.c.b16 %v5427, %v5426
  %v5518 = vpack.c.b16 %v5429, %v5428
  %v5519 = vpack.c.b16 %v5431, %v5430
  %v5520 = vpack.c.b16 %v5433, %v5432
  %v5521 = vpack.c.b16 %v5435, %v5434
  %v5522 = vpack.c.b16 %v5437, %v5436
  %v5523 = vpack.c.b16 %v5439, %v5438
  %v5524 = vpack.c.b16 %v5441, %v5440
  %v5525 = vpack.c.b16 %v5443, %v5442
  %v5526 = vpack.c.b16 %v5445, %v5444
  %v5527 = vpack.c.b16 %v5447, %v5446
  %v5528 = vpack.c.b16 %v5449, %v5448
  %v5529 = vpack.c.b16 %v5451, %v5450
  %v5530 = vpack.c.b16 %v5453, %v5452
  %v5531 = vpack.c.b16 %v5455, %v5454
  %v5532 = vpack.c.b16 %v5457, %v5456
  %v5533 = vpack.c.b16 %v5459, %v5458
  %v5534 = vpack.c.b16 %v5461, %v5460
  %v5535 = vpack.c.b16 %v5463, %v5462
  %5608 = vmatprep.subr.bf16.mxu0 0
  %5609 = vmatpush1.bf16.msra.mxu0 %v5464
  %5610 = vmatprep.subr.bf16.mxu0 0
  %5611 = vmatpush1.bf16.msra.mxu0 %v5465
  %5612 = vmatprep.subr.bf16.mxu0 0
  %5613 = vmatpush1.bf16.msra.mxu0 %v5466
  %5614 = vmatprep.subr.bf16.mxu0 0
  %5615 = vmatpush1.bf16.msra.mxu0 %v5467
  %5616 = vmatprep.subr.bf16.mxu0 0
  %5617 = vmatpush1.bf16.msra.mxu0 %v5468
  %5618 = vmatprep.subr.bf16.mxu0 0
  %5619 = vmatpush1.bf16.msra.mxu0 %v5469
  %5620 = vmatprep.subr.bf16.mxu0 0
  %5621 = vmatpush1.bf16.msra.mxu0 %v5470
  %5622 = vmatprep.subr.bf16.mxu0 0
  %5623 = vmatpush1.bf16.msra.mxu0 %v5471
  %5624 = vmatprep.subr.bf16.mxu0 0
  %5625 = vmatpush1.bf16.msra.mxu0 %v5472
  %5626 = vmatprep.subr.bf16.mxu0 0
  %5627 = vmatpush1.bf16.msra.mxu0 %v5473
  %5628 = vmatprep.subr.bf16.mxu0 0
  %5629 = vmatpush1.bf16.msra.mxu0 %v5474
  %5630 = vmatprep.subr.bf16.mxu0 0
  %5631 = vmatpush1.bf16.msra.mxu0 %v5475
  %5632 = vmatprep.subr.bf16.mxu0 0
  %5633 = vmatpush1.bf16.msra.mxu0 %v5476
  %5634 = vmatprep.subr.bf16.mxu0 0
  %5635 = vmatpush1.bf16.msra.mxu0 %v5477
  %5636 = vmatprep.subr.bf16.mxu0 0
  %5637 = vmatpush1.bf16.msra.mxu0 %v5478
  %5638 = vmatprep.subr.bf16.mxu0 0
  %5639 = vmatpush1.bf16.msra.mxu0 %v5479
  %5640 = vmatprep.mubr.bf16.mxu0 %v4434
  %5641 = vmatmul.mubr.bf16.gmra.mrb[0].mxu0 %v4384
  %v5642 = vpop.f32.mrb[0].mxu0
  %v5643 = vadd.f32 %v5174, %v5642
  %v5644 = vpop.f32.mrb[0].mxu0
  %v5645 = vpop.f32.mrb[0].mxu0
  %v5646 = vadd.f32 %v5174, %v5645
  %v5647 = vpop.f32.mrb[0].mxu0
  %5648 = vmatprep.mubr.bf16.mxu0 %v4442
  %5649 = vmatmul.mubr.bf16.gmra.mrb[0].mxu0 %v4385
  %v5650 = vpop.f32.mrb[0].mxu0
  %v5651 = vadd.f32 %v5174, %v5650
  %v5652 = vpop.f32.mrb[0].mxu0
  %v5653 = vpop.f32.mrb[0].mxu0
  %v5654 = vadd.f32 %v5174, %v5653
  %v5655 = vpop.f32.mrb[0].mxu0
  %5656 = vmatprep.mubr.bf16.mxu0 %v4450
  %5657 = vmatmul.mubr.bf16.gmra.mrb[0].mxu0 %v4386
  %v5658 = vpop.f32.mrb[0].mxu0
  %v5659 = vadd.f32 %v5174, %v5658
  %v5660 = vpop.f32.mrb[0].mxu0
  %v5661 = vpop.f32.mrb[0].mxu0
  %v5662 = vadd.f32 %v5174, %v5661
  %v5663 = vpop.f32.mrb[0].mxu0
  %5664 = vmatprep.mubr.bf16.mxu0 %v4458
  %5665 = vmatmul.mubr.bf16.gmra.mrb[0].mxu0 %v4387
  %v5666 = vpop.f32.mrb[0].mxu0
  %v5667 = vadd.f32 %v5174, %v5666
  %v5668 = vpop.f32.mrb[0].mxu0
  %v5669 = vpop.f32.mrb[0].mxu0
  %v5670 = vadd.f32 %v5174, %v5669
  %v5671 = vpop.f32.mrb[0].mxu0
  %5672 = vmatprep.mubr.bf16.mxu0 %v4466
  %5673 = vmatmul.mubr.bf16.gmra.mrb[0].mxu0 %v4388
  %v5674 = vpop.f32.mrb[0].mxu0
  %v5675 = vadd.f32 %v5174, %v5674
  %v5676 = vpop.f32.mrb[0].mxu0
  %v5677 = vpop.f32.mrb[0].mxu0
  %v5678 = vadd.f32 %v5174, %v5677
  %v5679 = vpop.f32.mrb[0].mxu0
  %5680 = vmatprep.mubr.bf16.mxu0 %v4474
  %5681 = vmatmul.mubr.bf16.gmra.mrb[0].mxu0 %v4389
  %v5682 = vpop.f32.mrb[0].mxu0
  %v5683 = vadd.f32 %v5174, %v5682
  %v5684 = vpop.f32.mrb[0].mxu0
  %v5685 = vpop.f32.mrb[0].mxu0
  %v5686 = vadd.f32 %v5174, %v5685
  %v5687 = vpop.f32.mrb[0].mxu0
  %5688 = vmatprep.mubr.bf16.mxu0 %v4482
  %5689 = vmatmul.mubr.bf16.gmra.mrb[0].mxu0 %v4390
  %v5690 = vpop.f32.mrb[0].mxu0
  %v5691 = vadd.f32 %v5174, %v5690
  %v5692 = vpop.f32.mrb[0].mxu0
  %v5693 = vpop.f32.mrb[0].mxu0
  %v5694 = vadd.f32 %v5174, %v5693
  %v5695 = vpop.f32.mrb[0].mxu0
  %5696 = vmatprep.mubr.bf16.mxu0 %v4490
  %5697 = vmatmul.mubr.bf16.gmra.mrb[0].mxu0 %v4391
  %v5698 = vpop.f32.mrb[0].mxu0
  %v5699 = vadd.f32 %v5174, %v5698
  %v5700 = vpop.f32.mrb[0].mxu0
  %v5701 = vpop.f32.mrb[0].mxu0
  %v5702 = vadd.f32 %v5174, %v5701
  %v5703 = vpop.f32.mrb[0].mxu0
  %5704 = vmatprep.mubr.bf16.mxu0 %v4498
  %5705 = vmatmul.mubr.bf16.gmra.mrb[0].mxu0 %v4392
  %v5706 = vpop.f32.mrb[0].mxu0
  %v5707 = vadd.f32 %v5174, %v5706
  %v5708 = vpop.f32.mrb[0].mxu0
  %v5709 = vpop.f32.mrb[0].mxu0
  %v5710 = vadd.f32 %v5174, %v5709
  %v5711 = vpop.f32.mrb[0].mxu0
  %5712 = vmatprep.mubr.bf16.mxu0 %v4506
  %5713 = vmatmul.mubr.bf16.gmra.mrb[0].mxu0 %v4393
  %v5714 = vpop.f32.mrb[0].mxu0
  %v5715 = vadd.f32 %v5174, %v5714
  %v5716 = vpop.f32.mrb[0].mxu0
  %v5717 = vpop.f32.mrb[0].mxu0
  %v5718 = vadd.f32 %v5174, %v5717
  %v5719 = vpop.f32.mrb[0].mxu0
  %5720 = vmatprep.mubr.bf16.mxu0 %v4514
  %5721 = vmatmul.mubr.bf16.gmra.mrb[0].mxu0 %v4394
  %v5722 = vpop.f32.mrb[0].mxu0
  %v5723 = vadd.f32 %v5174, %v5722
  %v5724 = vpop.f32.mrb[0].mxu0
  %v5725 = vpop.f32.mrb[0].mxu0
  %v5726 = vadd.f32 %v5174, %v5725
  %v5727 = vpop.f32.mrb[0].mxu0
  %5728 = vmatprep.mubr.bf16.mxu0 %v4522
  %5729 = vmatmul.mubr.bf16.gmra.mrb[0].mxu0 %v4395
  %v5730 = vpop.f32.mrb[0].mxu0
  %v5731 = vadd.f32 %v5174, %v5730
  %v5732 = vpop.f32.mrb[0].mxu0
  %v5733 = vpop.f32.mrb[0].mxu0
  %v5734 = vadd.f32 %v5174, %v5733
  %v5735 = vpop.f32.mrb[0].mxu0
  %5736 = vmatprep.mubr.bf16.mxu0 %v4530
  %5737 = vmatmul.mubr.bf16.gmra.mrb[0].mxu0 %v4396
  %v5738 = vpop.f32.mrb[0].mxu0
  %v5739 = vadd.f32 %v5174, %v5738
  %v5740 = vpop.f32.mrb[0].mxu0
  %v5741 = vpop.f32.mrb[0].mxu0
  %v5742 = vadd.f32 %v5174, %v5741
  %v5743 = vpop.f32.mrb[0].mxu0
  %5744 = vmatprep.mubr.bf16.mxu0 %v4538
  %5745 = vmatmul.mubr.bf16.gmra.mrb[0].mxu0 %v4397
  %v5746 = vpop.f32.mrb[0].mxu0
  %v5747 = vadd.f32 %v5174, %v5746
  %v5748 = vpop.f32.mrb[0].mxu0
  %v5749 = vpop.f32.mrb[0].mxu0
  %v5750 = vadd.f32 %v5174, %v5749
  %v5751 = vpop.f32.mrb[0].mxu0
  %5752 = vmatprep.mubr.bf16.mxu0 %v4546
  %5753 = vmatmul.mubr.bf16.gmra.mrb[0].mxu0 %v4398
  %v5754 = vpop.f32.mrb[0].mxu0
  %v5755 = vadd.f32 %v5174, %v5754
  %v5756 = vpop.f32.mrb[0].mxu0
  %v5757 = vpop.f32.mrb[0].mxu0
  %v5758 = vadd.f32 %v5174, %v5757
  %v5759 = vpop.f32.mrb[0].mxu0
  %5760 = vmatprep.mubr.bf16.mxu0 %v4554
  %5761 = vmatmul.mubr.bf16.gmra.mrb[0].mxu0 %v4399
  %v5762 = vpop.f32.mrb[0].mxu0
  %v5763 = vadd.f32 %v5174, %v5762
  %v5764 = vpop.f32.mrb[0].mxu0
  %v5765 = vpop.f32.mrb[0].mxu0
  %v5766 = vadd.f32 %v5174, %v5765
  %v5767 = vpop.f32.mrb[0].mxu0
  %5768 = vmatprep.mubr.bf16.mxu0 %v4562
  %5769 = vmatmul.mubr.bf16.gmra.mrb[0].mxu0 %v4400
  %v5770 = vpop.f32.mrb[0].mxu0
  %v5771 = vadd.f32 %v5174, %v5770
  %v5772 = vpop.f32.mrb[0].mxu0
  %v5773 = vpop.f32.mrb[0].mxu0
  %v5774 = vadd.f32 %v5174, %v5773
  %v5775 = vpop.f32.mrb[0].mxu0
  %5776 = vmatprep.mubr.bf16.mxu0 %v4570
  %5777 = vmatmul.mubr.bf16.gmra.mrb[0].mxu0 %v4401
  %v5778 = vpop.f32.mrb[0].mxu0
  %v5779 = vadd.f32 %v5174, %v5778
  %v5780 = vpop.f32.mrb[0].mxu0
  %v5781 = vpop.f32.mrb[0].mxu0
  %v5782 = vadd.f32 %v5174, %v5781
  %v5783 = vpop.f32.mrb[0].mxu0
  %5784 = vdwg.mxu0
  %5785 = vmatprep.subr.bf16.mxu0 0
  %5786 = vmatpush1.bf16.msra.mxu0 %v5480
  %5787 = vmatprep.subr.bf16.mxu0 0
  %5788 = vmatpush1.bf16.msra.mxu0 %v5481
  %5789 = vmatprep.subr.bf16.mxu0 0
  %5790 = vmatpush1.bf16.msra.mxu0 %v5482
  %5791 = vmatprep.subr.bf16.mxu0 0
  %5792 = vmatpush1.bf16.msra.mxu0 %v5483
  %5793 = vmatprep.subr.bf16.mxu0 0
  %5794 = vmatpush1.bf16.msra.mxu0 %v5484
  %5795 = vmatprep.subr.bf16.mxu0 0
  %5796 = vmatpush1.bf16.msra.mxu0 %v5485
  %5797 = vmatprep.subr.bf16.mxu0 0
  %5798 = vmatpush1.bf16.msra.mxu0 %v5486
  %5799 = vmatprep.subr.bf16.mxu0 0
  %5800 = vmatpush1.bf16.msra.mxu0 %v5487
  %5801 = vmatprep.subr.bf16.mxu0 0
  %5802 = vmatpush1.bf16.msra.mxu0 %v5488
  %5803 = vmatprep.subr.bf16.mxu0 0
  %5804 = vmatpush1.bf16.msra.mxu0 %v5489
  %5805 = vmatprep.subr.bf16.mxu0 0
  %5806 = vmatpush1.bf16.msra.mxu0 %v5490
  %5807 = vmatprep.subr.bf16.mxu0 0
  %5808 = vmatpush1.bf16.msra.mxu0 %v5491
  %5809 = vmatprep.subr.bf16.mxu0 0
  %5810 = vmatpush1.bf16.msra.mxu0 %v5492
  %5811 = vmatprep.subr.bf16.mxu0 0
  %5812 = vmatpush1.bf16.msra.mxu0 %v5493
  %5813 = vmatprep.subr.bf16.mxu0 0
  %5814 = vmatpush1.bf16.msra.mxu0 %v5494
  %5815 = vmatprep.subr.bf16.mxu0 0
  %5816 = vmatpush1.bf16.msra.mxu0 %v5495
  %5817 = vmatprep.mubr.bf16.mxu0 %v4659
  %5818 = vmatmul.mubr.bf16.gmra.mrb[0].mxu0 %v4594
  %v5819 = vpop.f32.mrb[0].mxu0
  %v5820 = vadd.f32 %v5643, %v5819
  %v5821 = vpop.f32.mrb[0].mxu0
  %v5822 = vpop.f32.mrb[0].mxu0
  %v5823 = vadd.f32 %v5646, %v5822
  %v5824 = vpop.f32.mrb[0].mxu0
  %5825 = vmatprep.mubr.bf16.mxu0 %v4598
  %5826 = vmatmul.mubr.bf16.gmra.mrb[0].mxu0 %v4596
  %v5827 = vpop.f32.mrb[0].mxu0
  %v5828 = vadd.f32 %v5651, %v5827
  %v5829 = vpop.f32.mrb[0].mxu0
  %v5830 = vpop.f32.mrb[0].mxu0
  %v5831 = vadd.f32 %v5654, %v5830
  %v5832 = vpop.f32.mrb[0].mxu0
  %5833 = vmatprep.mubr.bf16.mxu0 %v4600
  %5834 = vmatmul.mubr.bf16.gmra.mrb[0].mxu0 %v4598
  %v5835 = vpop.f32.mrb[0].mxu0
  %v5836 = vadd.f32 %v5659, %v5835
  %v5837 = vpop.f32.mrb[0].mxu0
  %v5838 = vpop.f32.mrb[0].mxu0
  %v5839 = vadd.f32 %v5662, %v5838
  %v5840 = vpop.f32.mrb[0].mxu0
  %5841 = vmatprep.mubr.bf16.mxu0 %v4602
  %5842 = vmatmul.mubr.bf16.gmra.mrb[0].mxu0 %v4600
  %v5843 = vpop.f32.mrb[0].mxu0
  %v5844 = vadd.f32 %v5667, %v5843
  %v5845 = vpop.f32.mrb[0].mxu0
  %v5846 = vpop.f32.mrb[0].mxu0
  %v5847 = vadd.f32 %v5670, %v5846
  %v5848 = vpop.f32.mrb[0].mxu0
  %5849 = vmatprep.mubr.bf16.mxu0 %v4604
  %5850 = vmatmul.mubr.bf16.gmra.mrb[0].mxu0 %v4602
  %v5851 = vpop.f32.mrb[0].mxu0
  %v5852 = vadd.f32 %v5675, %v5851
  %v5853 = vpop.f32.mrb[0].mxu0
  %v5854 = vpop.f32.mrb[0].mxu0
  %v5855 = vadd.f32 %v5678, %v5854
  %v5856 = vpop.f32.mrb[0].mxu0
  %5857 = vmatprep.mubr.bf16.mxu0 %v4606
  %5858 = vmatmul.mubr.bf16.gmra.mrb[0].mxu0 %v4604
  %v5859 = vpop.f32.mrb[0].mxu0
  %v5860 = vadd.f32 %v5683, %v5859
  %v5861 = vpop.f32.mrb[0].mxu0
  %v5862 = vpop.f32.mrb[0].mxu0
  %v5863 = vadd.f32 %v5686, %v5862
  %v5864 = vpop.f32.mrb[0].mxu0
  %5865 = vmatprep.mubr.bf16.mxu0 %v4608
  %5866 = vmatmul.mubr.bf16.gmra.mrb[0].mxu0 %v4606
  %v5867 = vpop.f32.mrb[0].mxu0
  %v5868 = vadd.f32 %v5691, %v5867
  %v5869 = vpop.f32.mrb[0].mxu0
  %v5870 = vpop.f32.mrb[0].mxu0
  %v5871 = vadd.f32 %v5694, %v5870
  %v5872 = vpop.f32.mrb[0].mxu0
  %5873 = vmatprep.mubr.bf16.mxu0 %v4610
  %5874 = vmatmul.mubr.bf16.gmra.mrb[0].mxu0 %v4608
  %v5875 = vpop.f32.mrb[0].mxu0
  %v5876 = vadd.f32 %v5699, %v5875
  %v5877 = vpop.f32.mrb[0].mxu0
  %v5878 = vpop.f32.mrb[0].mxu0
  %v5879 = vadd.f32 %v5702, %v5878
  %v5880 = vpop.f32.mrb[0].mxu0
  %5881 = vmatprep.mubr.bf16.mxu0 %v4612
  %5882 = vmatmul.mubr.bf16.gmra.mrb[0].mxu0 %v4610
  %v5883 = vpop.f32.mrb[0].mxu0
  %v5884 = vadd.f32 %v5707, %v5883
  %v5885 = vpop.f32.mrb[0].mxu0
  %v5886 = vpop.f32.mrb[0].mxu0
  %v5887 = vadd.f32 %v5710, %v5886
  %v5888 = vpop.f32.mrb[0].mxu0
  %5889 = vmatprep.mubr.bf16.mxu0 %v4614
  %5890 = vmatmul.mubr.bf16.gmra.mrb[0].mxu0 %v4612
  %v5891 = vpop.f32.mrb[0].mxu0
  %v5892 = vadd.f32 %v5715, %v5891
  %v5893 = vpop.f32.mrb[0].mxu0
  %v5894 = vpop.f32.mrb[0].mxu0
  %v5895 = vadd.f32 %v5718, %v5894
  %v5896 = vpop.f32.mrb[0].mxu0
  %5897 = vmatprep.mubr.bf16.mxu0 %v4616
  %5898 = vmatmul.mubr.bf16.gmra.mrb[0].mxu0 %v4614
  %v5899 = vpop.f32.mrb[0].mxu0
  %v5900 = vadd.f32 %v5723, %v5899
  %v5901 = vpop.f32.mrb[0].mxu0
  %v5902 = vpop.f32.mrb[0].mxu0
  %v5903 = vadd.f32 %v5726, %v5902
  %v5904 = vpop.f32.mrb[0].mxu0
  %5905 = vmatprep.mubr.bf16.mxu0 %v4618
  %5906 = vmatmul.mubr.bf16.gmra.mrb[0].mxu0 %v4616
  %v5907 = vpop.f32.mrb[0].mxu0
  %v5908 = vadd.f32 %v5731, %v5907
  %v5909 = vpop.f32.mrb[0].mxu0
  %v5910 = vpop.f32.mrb[0].mxu0
  %v5911 = vadd.f32 %v5734, %v5910
  %v5912 = vpop.f32.mrb[0].mxu0
  %5913 = vmatprep.mubr.bf16.mxu0 %v4620
  %5914 = vmatmul.mubr.bf16.gmra.mrb[0].mxu0 %v4618
  %v5915 = vpop.f32.mrb[0].mxu0
  %v5916 = vadd.f32 %v5739, %v5915
  %v5917 = vpop.f32.mrb[0].mxu0
  %v5918 = vpop.f32.mrb[0].mxu0
  %v5919 = vadd.f32 %v5742, %v5918
  %v5920 = vpop.f32.mrb[0].mxu0
  %5921 = vmatprep.mubr.bf16.mxu0 %v4622
  %5922 = vmatmul.mubr.bf16.gmra.mrb[0].mxu0 %v4620
  %v5923 = vpop.f32.mrb[0].mxu0
  %v5924 = vadd.f32 %v5747, %v5923
  %v5925 = vpop.f32.mrb[0].mxu0
  %v5926 = vpop.f32.mrb[0].mxu0
  %v5927 = vadd.f32 %v5750, %v5926
  %v5928 = vpop.f32.mrb[0].mxu0
  %5929 = vmatprep.mubr.bf16.mxu0 %v4624
  %5930 = vmatmul.mubr.bf16.gmra.mrb[0].mxu0 %v4622
  %v5931 = vpop.f32.mrb[0].mxu0
  %v5932 = vadd.f32 %v5755, %v5931
  %v5933 = vpop.f32.mrb[0].mxu0
  %v5934 = vpop.f32.mrb[0].mxu0
  %v5935 = vadd.f32 %v5758, %v5934
  %v5936 = vpop.f32.mrb[0].mxu0
  %5937 = vmatprep.mubr.bf16.mxu0 %v4626
  %5938 = vmatmul.mubr.bf16.gmra.mrb[0].mxu0 %v4624
  %v5939 = vpop.f32.mrb[0].mxu0
  %v5940 = vadd.f32 %v5763, %v5939
  %v5941 = vpop.f32.mrb[0].mxu0
  %v5942 = vpop.f32.mrb[0].mxu0
  %v5943 = vadd.f32 %v5766, %v5942
  %v5944 = vpop.f32.mrb[0].mxu0
  %5945 = vmatprep.mubr.bf16.mxu0 %v4661
  %5946 = vmatmul.mubr.bf16.gmra.mrb[0].mxu0 %v4626
  %v5947 = vpop.f32.mrb[0].mxu0
  %v5948 = vadd.f32 %v5771, %v5947
  %v5949 = vpop.f32.mrb[0].mxu0
  %v5950 = vpop.f32.mrb[0].mxu0
  %v5951 = vadd.f32 %v5774, %v5950
  %v5952 = vpop.f32.mrb[0].mxu0
  %5953 = vmatprep.mubr.bf16.mxu0 %v4663
  %5954 = vmatmul.mubr.bf16.gmra.mrb[0].mxu0 %v4628
  %v5955 = vpop.f32.mrb[0].mxu0
  %v5956 = vadd.f32 %v5779, %v5955
  %v5957 = vpop.f32.mrb[0].mxu0
  %v5958 = vpop.f32.mrb[0].mxu0
  %v5959 = vadd.f32 %v5782, %v5958
  %v5960 = vpop.f32.mrb[0].mxu0
  %5961 = vdwg.mxu0
  %5962 = vmatprep.subr.bf16.mxu0 0
  %5963 = vmatpush1.bf16.msra.mxu0 %v5496
  %5964 = vmatprep.subr.bf16.mxu0 0
  %5965 = vmatpush1.bf16.msra.mxu0 %v5497
  %5966 = vmatprep.subr.bf16.mxu0 0
  %5967 = vmatpush1.bf16.msra.mxu0 %v5498
  %5968 = vmatprep.subr.bf16.mxu0 0
  %5969 = vmatpush1.bf16.msra.mxu0 %v5499
  %5970 = vmatprep.subr.bf16.mxu0 0
  %5971 = vmatpush1.bf16.msra.mxu0 %v5500
  %5972 = vmatprep.subr.bf16.mxu0 0
  %5973 = vmatpush1.bf16.msra.mxu0 %v5501
  %5974 = vmatprep.subr.bf16.mxu0 0
  %5975 = vmatpush1.bf16.msra.mxu0 %v5502
  %5976 = vmatprep.subr.bf16.mxu0 0
  %5977 = vmatpush1.bf16.msra.mxu0 %v5503
  %5978 = vmatprep.subr.bf16.mxu0 0
  %5979 = vmatpush1.bf16.msra.mxu0 %v5504
  %5980 = vmatprep.subr.bf16.mxu0 0
  %5981 = vmatpush1.bf16.msra.mxu0 %v5505
  %5982 = vmatprep.subr.bf16.mxu0 0
  %5983 = vmatpush1.bf16.msra.mxu0 %v5506
  %5984 = vmatprep.subr.bf16.mxu0 0
  %5985 = vmatpush1.bf16.msra.mxu0 %v5507
  %5986 = vmatprep.subr.bf16.mxu0 0
  %5987 = vmatpush1.bf16.msra.mxu0 %v5508
  %5988 = vmatprep.subr.bf16.mxu0 0
  %5989 = vmatpush1.bf16.msra.mxu0 %v5509
  %5990 = vmatprep.subr.bf16.mxu0 0
  %5991 = vmatpush1.bf16.msra.mxu0 %v5510
  %5992 = vmatprep.subr.bf16.mxu0 0
  %5993 = vmatpush1.bf16.msra.mxu0 %v5511
  %5994 = vmatprep.mubr.bf16.mxu0 %v4783
  %5995 = vmatmul.mubr.bf16.gmra.mrb[0].mxu0 %v4681
  %v5996 = vpop.f32.mrb[0].mxu0
  %v5997 = vadd.f32 %v5820, %v5996
  %v5998 = vpop.f32.mrb[0].mxu0
  %v5999 = vpop.f32.mrb[0].mxu0
  %v6000 = vadd.f32 %v5823, %v5999
  %v6001 = vpop.f32.mrb[0].mxu0
  %6002 = vmatprep.mubr.bf16.mxu0 %v4785
  %6003 = vmatmul.mubr.bf16.gmra.mrb[0].mxu0 %v4685
  %v6004 = vpop.f32.mrb[0].mxu0
  %v6005 = vadd.f32 %v5828, %v6004
  %v6006 = vpop.f32.mrb[0].mxu0
  %v6007 = vpop.f32.mrb[0].mxu0
  %v6008 = vadd.f32 %v5831, %v6007
  %v6009 = vpop.f32.mrb[0].mxu0
  %6010 = vmatprep.mubr.bf16.mxu0 %v4787
  %6011 = vmatmul.mubr.bf16.gmra.mrb[0].mxu0 %v4689
  %v6012 = vpop.f32.mrb[0].mxu0
  %v6013 = vadd.f32 %v5836, %v6012
  %v6014 = vpop.f32.mrb[0].mxu0
  %v6015 = vpop.f32.mrb[0].mxu0
  %v6016 = vadd.f32 %v5839, %v6015
  %v6017 = vpop.f32.mrb[0].mxu0
  %6018 = vmatprep.mubr.bf16.mxu0 %v4789
  %6019 = vmatmul.mubr.bf16.gmra.mrb[0].mxu0 %v4693
  %v6020 = vpop.f32.mrb[0].mxu0
  %v6021 = vadd.f32 %v5844, %v6020
  %v6022 = vpop.f32.mrb[0].mxu0
  %v6023 = vpop.f32.mrb[0].mxu0
  %v6024 = vadd.f32 %v5847, %v6023
  %v6025 = vpop.f32.mrb[0].mxu0
  %6026 = vmatprep.mubr.bf16.mxu0 %v4791
  %6027 = vmatmul.mubr.bf16.gmra.mrb[0].mxu0 %v4697
  %v6028 = vpop.f32.mrb[0].mxu0
  %v6029 = vadd.f32 %v5852, %v6028
  %v6030 = vpop.f32.mrb[0].mxu0
  %v6031 = vpop.f32.mrb[0].mxu0
  %v6032 = vadd.f32 %v5855, %v6031
  %v6033 = vpop.f32.mrb[0].mxu0
  %6034 = vmatprep.mubr.bf16.mxu0 %v4793
  %6035 = vmatmul.mubr.bf16.gmra.mrb[0].mxu0 %v4701
  %v6036 = vpop.f32.mrb[0].mxu0
  %v6037 = vadd.f32 %v5860, %v6036
  %v6038 = vpop.f32.mrb[0].mxu0
  %v6039 = vpop.f32.mrb[0].mxu0
  %v6040 = vadd.f32 %v5863, %v6039
  %v6041 = vpop.f32.mrb[0].mxu0
  %6042 = vmatprep.mubr.bf16.mxu0 %v4795
  %6043 = vmatmul.mubr.bf16.gmra.mrb[0].mxu0 %v4705
  %v6044 = vpop.f32.mrb[0].mxu0
  %v6045 = vadd.f32 %v5868, %v6044
  %v6046 = vpop.f32.mrb[0].mxu0
  %v6047 = vpop.f32.mrb[0].mxu0
  %v6048 = vadd.f32 %v5871, %v6047
  %v6049 = vpop.f32.mrb[0].mxu0
  %6050 = vmatprep.mubr.bf16.mxu0 %v4797
  %6051 = vmatmul.mubr.bf16.gmra.mrb[0].mxu0 %v4709
  %v6052 = vpop.f32.mrb[0].mxu0
  %v6053 = vadd.f32 %v5876, %v6052
  %v6054 = vpop.f32.mrb[0].mxu0
  %v6055 = vpop.f32.mrb[0].mxu0
  %v6056 = vadd.f32 %v5879, %v6055
  %v6057 = vpop.f32.mrb[0].mxu0
  %6058 = vmatprep.mubr.bf16.mxu0 %v4799
  %6059 = vmatmul.mubr.bf16.gmra.mrb[0].mxu0 %v4713
  %v6060 = vpop.f32.mrb[0].mxu0
  %v6061 = vadd.f32 %v5884, %v6060
  %v6062 = vpop.f32.mrb[0].mxu0
  %v6063 = vpop.f32.mrb[0].mxu0
  %v6064 = vadd.f32 %v5887, %v6063
  %v6065 = vpop.f32.mrb[0].mxu0
  %6066 = vmatprep.mubr.bf16.mxu0 %v4801
  %6067 = vmatmul.mubr.bf16.gmra.mrb[0].mxu0 %v4717
  %v6068 = vpop.f32.mrb[0].mxu0
  %v6069 = vadd.f32 %v5892, %v6068
  %v6070 = vpop.f32.mrb[0].mxu0
  %v6071 = vpop.f32.mrb[0].mxu0
  %v6072 = vadd.f32 %v5895, %v6071
  %v6073 = vpop.f32.mrb[0].mxu0
  %6074 = vmatprep.mubr.bf16.mxu0 %v4803
  %6075 = vmatmul.mubr.bf16.gmra.mrb[0].mxu0 %v4721
  %v6076 = vpop.f32.mrb[0].mxu0
  %v6077 = vadd.f32 %v5900, %v6076
  %v6078 = vpop.f32.mrb[0].mxu0
  %v6079 = vpop.f32.mrb[0].mxu0
  %v6080 = vadd.f32 %v5903, %v6079
  %v6081 = vpop.f32.mrb[0].mxu0
  %6082 = vmatprep.mubr.bf16.mxu0 %v4805
  %6083 = vmatmul.mubr.bf16.gmra.mrb[0].mxu0 %v4725
  %v6084 = vpop.f32.mrb[0].mxu0
  %v6085 = vadd.f32 %v5908, %v6084
  %v6086 = vpop.f32.mrb[0].mxu0
  %v6087 = vpop.f32.mrb[0].mxu0
  %v6088 = vadd.f32 %v5911, %v6087
  %v6089 = vpop.f32.mrb[0].mxu0
  %6090 = vmatprep.mubr.bf16.mxu0 %v4807
  %6091 = vmatmul.mubr.bf16.gmra.mrb[0].mxu0 %v4729
  %v6092 = vpop.f32.mrb[0].mxu0
  %v6093 = vadd.f32 %v5916, %v6092
  %v6094 = vpop.f32.mrb[0].mxu0
  %v6095 = vpop.f32.mrb[0].mxu0
  %v6096 = vadd.f32 %v5919, %v6095
  %v6097 = vpop.f32.mrb[0].mxu0
  %6098 = vmatprep.mubr.bf16.mxu0 %v4809
  %6099 = vmatmul.mubr.bf16.gmra.mrb[0].mxu0 %v4733
  %v6100 = vpop.f32.mrb[0].mxu0
  %v6101 = vadd.f32 %v5924, %v6100
  %v6102 = vpop.f32.mrb[0].mxu0
  %v6103 = vpop.f32.mrb[0].mxu0
  %v6104 = vadd.f32 %v5927, %v6103
  %v6105 = vpop.f32.mrb[0].mxu0
  %6106 = vmatprep.mubr.bf16.mxu0 %v4811
  %6107 = vmatmul.mubr.bf16.gmra.mrb[0].mxu0 %v4737
  %v6108 = vpop.f32.mrb[0].mxu0
  %v6109 = vadd.f32 %v5932, %v6108
  %v6110 = vpop.f32.mrb[0].mxu0
  %v6111 = vpop.f32.mrb[0].mxu0
  %v6112 = vadd.f32 %v5935, %v6111
  %v6113 = vpop.f32.mrb[0].mxu0
  %6114 = vmatprep.mubr.bf16.mxu0 %v4813
  %6115 = vmatmul.mubr.bf16.gmra.mrb[0].mxu0 %v4741
  %v6116 = vpop.f32.mrb[0].mxu0
  %v6117 = vadd.f32 %v5940, %v6116
  %v6118 = vpop.f32.mrb[0].mxu0
  %v6119 = vpop.f32.mrb[0].mxu0
  %v6120 = vadd.f32 %v5943, %v6119
  %v6121 = vpop.f32.mrb[0].mxu0
  %6122 = vmatprep.mubr.bf16.mxu0 %v4815
  %6123 = vmatmul.mubr.bf16.gmra.mrb[0].mxu0 %v4750
  %v6124 = vpop.f32.mrb[0].mxu0
  %v6125 = vadd.f32 %v5948, %v6124
  %v6126 = vpop.f32.mrb[0].mxu0
  %v6127 = vpop.f32.mrb[0].mxu0
  %v6128 = vadd.f32 %v5951, %v6127
  %v6129 = vpop.f32.mrb[0].mxu0
  %6130 = vmatprep.mubr.bf16.mxu0 %v4817
  %6131 = vmatmul.mubr.bf16.gmra.mrb[0].mxu0 %v4759
  %v6132 = vpop.f32.mrb[0].mxu0
  %v6133 = vadd.f32 %v5956, %v6132
  %v6134 = vpop.f32.mrb[0].mxu0
  %v6135 = vpop.f32.mrb[0].mxu0
  %v6136 = vadd.f32 %v5959, %v6135
  %v6137 = vpop.f32.mrb[0].mxu0
  %6138 = vdwg.mxu0
  %6139 = vmatprep.subr.bf16.mxu0 0
  %6140 = vmatpush1.bf16.msra.mxu0 %v5512
  %6141 = vmatprep.subr.bf16.mxu0 0
  %6142 = vmatpush1.bf16.msra.mxu0 %v5513
  %6143 = vmatprep.subr.bf16.mxu0 0
  %6144 = vmatpush1.bf16.msra.mxu0 %v5514
  %6145 = vmatprep.subr.bf16.mxu0 0
  %6146 = vmatpush1.bf16.msra.mxu0 %v5515
  %6147 = vmatprep.subr.bf16.mxu0 0
  %6148 = vmatpush1.bf16.msra.mxu0 %v5516
  %6149 = vmatprep.subr.bf16.mxu0 0
  %6150 = vmatpush1.bf16.msra.mxu0 %v5517
  %6151 = vmatprep.subr.bf16.mxu0 0
  %6152 = vmatpush1.bf16.msra.mxu0 %v5518
  %6153 = vmatprep.subr.bf16.mxu0 0
  %6154 = vmatpush1.bf16.msra.mxu0 %v5519
  %6155 = vmatprep.subr.bf16.mxu0 0
  %6156 = vmatpush1.bf16.msra.mxu0 %v5520
  %6157 = vmatprep.subr.bf16.mxu0 0
  %6158 = vmatpush1.bf16.msra.mxu0 %v5521
  %6159 = vmatprep.subr.bf16.mxu0 0
  %6160 = vmatpush1.bf16.msra.mxu0 %v5522
  %6161 = vmatprep.subr.bf16.mxu0 0
  %6162 = vmatpush1.bf16.msra.mxu0 %v5523
  %6163 = vmatprep.subr.bf16.mxu0 0
  %6164 = vmatpush1.bf16.msra.mxu0 %v5524
  %6165 = vmatprep.subr.bf16.mxu0 0
  %6166 = vmatpush1.bf16.msra.mxu0 %v5525
  %6167 = vmatprep.subr.bf16.mxu0 0
  %6168 = vmatpush1.bf16.msra.mxu0 %v5526
  %6169 = vmatprep.subr.bf16.mxu0 0
  %6170 = vmatpush1.bf16.msra.mxu0 %v5527
  %6171 = vmatprep.mubr.bf16.mxu0 %v4870
  %6172 = vmatmul.mubr.bf16.gmra.mrb[0].mxu0 %v4848
  %v6173 = vpop.f32.mrb[0].mxu0
  %v6174 = vadd.f32 %v5997, %v6173
  %v6175 = vpop.f32.mrb[0].mxu0
  %v6176 = vpop.f32.mrb[0].mxu0
  %v6177 = vadd.f32 %v6000, %v6176
  %v6178 = vpop.f32.mrb[0].mxu0
  %6179 = vmatprep.mubr.bf16.mxu0 %v4874
  %6180 = vmatmul.mubr.bf16.gmra.mrb[0].mxu0 %v4787
  %v6181 = vpop.f32.mrb[0].mxu0
  %v6182 = vadd.f32 %v6005, %v6181
  %v6183 = vpop.f32.mrb[0].mxu0
  %v6184 = vpop.f32.mrb[0].mxu0
  %v6185 = vadd.f32 %v6008, %v6184
  %v6186 = vpop.f32.mrb[0].mxu0
  %6187 = vmatprep.mubr.bf16.mxu0 %v4878
  %6188 = vmatmul.mubr.bf16.gmra.mrb[0].mxu0 %v4789
  %v6189 = vpop.f32.mrb[0].mxu0
  %v6190 = vadd.f32 %v6013, %v6189
  %v6191 = vpop.f32.mrb[0].mxu0
  %v6192 = vpop.f32.mrb[0].mxu0
  %v6193 = vadd.f32 %v6016, %v6192
  %v6194 = vpop.f32.mrb[0].mxu0
  %6195 = vmatprep.mubr.bf16.mxu0 %v4882
  %6196 = vmatmul.mubr.bf16.gmra.mrb[0].mxu0 %v4791
  %v6197 = vpop.f32.mrb[0].mxu0
  %v6198 = vadd.f32 %v6021, %v6197
  %v6199 = vpop.f32.mrb[0].mxu0
  %v6200 = vpop.f32.mrb[0].mxu0
  %v6201 = vadd.f32 %v6024, %v6200
  %v6202 = vpop.f32.mrb[0].mxu0
  %6203 = vmatprep.mubr.bf16.mxu0 %v4886
  %6204 = vmatmul.mubr.bf16.gmra.mrb[0].mxu0 %v4793
  %v6205 = vpop.f32.mrb[0].mxu0
  %v6206 = vadd.f32 %v6029, %v6205
  %v6207 = vpop.f32.mrb[0].mxu0
  %v6208 = vpop.f32.mrb[0].mxu0
  %v6209 = vadd.f32 %v6032, %v6208
  %v6210 = vpop.f32.mrb[0].mxu0
  %6211 = vmatprep.mubr.bf16.mxu0 %v4890
  %6212 = vmatmul.mubr.bf16.gmra.mrb[0].mxu0 %v4795
  %v6213 = vpop.f32.mrb[0].mxu0
  %v6214 = vadd.f32 %v6037, %v6213
  %v6215 = vpop.f32.mrb[0].mxu0
  %v6216 = vpop.f32.mrb[0].mxu0
  %v6217 = vadd.f32 %v6040, %v6216
  %v6218 = vpop.f32.mrb[0].mxu0
  %6219 = vmatprep.mubr.bf16.mxu0 %v4894
  %6220 = vmatmul.mubr.bf16.gmra.mrb[0].mxu0 %v4797
  %v6221 = vpop.f32.mrb[0].mxu0
  %v6222 = vadd.f32 %v6045, %v6221
  %v6223 = vpop.f32.mrb[0].mxu0
  %v6224 = vpop.f32.mrb[0].mxu0
  %v6225 = vadd.f32 %v6048, %v6224
  %v6226 = vpop.f32.mrb[0].mxu0
  %6227 = vmatprep.mubr.bf16.mxu0 %v4898
  %6228 = vmatmul.mubr.bf16.gmra.mrb[0].mxu0 %v4799
  %v6229 = vpop.f32.mrb[0].mxu0
  %v6230 = vadd.f32 %v6053, %v6229
  %v6231 = vpop.f32.mrb[0].mxu0
  %v6232 = vpop.f32.mrb[0].mxu0
  %v6233 = vadd.f32 %v6056, %v6232
  %v6234 = vpop.f32.mrb[0].mxu0
  %6235 = vmatprep.mubr.bf16.mxu0 %v4902
  %6236 = vmatmul.mubr.bf16.gmra.mrb[0].mxu0 %v4801
  %v6237 = vpop.f32.mrb[0].mxu0
  %v6238 = vadd.f32 %v6061, %v6237
  %v6239 = vpop.f32.mrb[0].mxu0
  %v6240 = vpop.f32.mrb[0].mxu0
  %v6241 = vadd.f32 %v6064, %v6240
  %v6242 = vpop.f32.mrb[0].mxu0
  %6243 = vmatprep.mubr.bf16.mxu0 %v4906
  %6244 = vmatmul.mubr.bf16.gmra.mrb[0].mxu0 %v4803
  %v6245 = vpop.f32.mrb[0].mxu0
  %v6246 = vadd.f32 %v6069, %v6245
  %v6247 = vpop.f32.mrb[0].mxu0
  %v6248 = vpop.f32.mrb[0].mxu0
  %v6249 = vadd.f32 %v6072, %v6248
  %v6250 = vpop.f32.mrb[0].mxu0
  %6251 = vmatprep.mubr.bf16.mxu0 %v4910
  %6252 = vmatmul.mubr.bf16.gmra.mrb[0].mxu0 %v4805
  %v6253 = vpop.f32.mrb[0].mxu0
  %v6254 = vadd.f32 %v6077, %v6253
  %v6255 = vpop.f32.mrb[0].mxu0
  %v6256 = vpop.f32.mrb[0].mxu0
  %v6257 = vadd.f32 %v6080, %v6256
  %v6258 = vpop.f32.mrb[0].mxu0
  %6259 = vmatprep.mubr.bf16.mxu0 %v4914
  %6260 = vmatmul.mubr.bf16.gmra.mrb[0].mxu0 %v4807
  %v6261 = vpop.f32.mrb[0].mxu0
  %v6262 = vadd.f32 %v6085, %v6261
  %v6263 = vpop.f32.mrb[0].mxu0
  %v6264 = vpop.f32.mrb[0].mxu0
  %v6265 = vadd.f32 %v6088, %v6264
  %v6266 = vpop.f32.mrb[0].mxu0
  %6267 = vmatprep.mubr.bf16.mxu0 %v4918
  %6268 = vmatmul.mubr.bf16.gmra.mrb[0].mxu0 %v4809
  %v6269 = vpop.f32.mrb[0].mxu0
  %v6270 = vadd.f32 %v6093, %v6269
  %v6271 = vpop.f32.mrb[0].mxu0
  %v6272 = vpop.f32.mrb[0].mxu0
  %v6273 = vadd.f32 %v6096, %v6272
  %v6274 = vpop.f32.mrb[0].mxu0
  %6275 = vmatprep.mubr.bf16.mxu0 %v4922
  %6276 = vmatmul.mubr.bf16.gmra.mrb[0].mxu0 %v4811
  %v6277 = vpop.f32.mrb[0].mxu0
  %v6278 = vadd.f32 %v6101, %v6277
  %v6279 = vpop.f32.mrb[0].mxu0
  %v6280 = vpop.f32.mrb[0].mxu0
  %v6281 = vadd.f32 %v6104, %v6280
  %v6282 = vpop.f32.mrb[0].mxu0
  %6283 = vmatprep.mubr.bf16.mxu0 %v4926
  %6284 = vmatmul.mubr.bf16.gmra.mrb[0].mxu0 %v4813
  %v6285 = vpop.f32.mrb[0].mxu0
  %v6286 = vadd.f32 %v6109, %v6285
  %v6287 = vpop.f32.mrb[0].mxu0
  %v6288 = vpop.f32.mrb[0].mxu0
  %v6289 = vadd.f32 %v6112, %v6288
  %v6290 = vpop.f32.mrb[0].mxu0
  %6291 = vmatprep.mubr.bf16.mxu0 %v4930
  %6292 = vmatmul.mubr.bf16.gmra.mrb[0].mxu0 %v4815
  %v6293 = vpop.f32.mrb[0].mxu0
  %v6294 = vadd.f32 %v6117, %v6293
  %v6295 = vpop.f32.mrb[0].mxu0
  %v6296 = vpop.f32.mrb[0].mxu0
  %v6297 = vadd.f32 %v6120, %v6296
  %v6298 = vpop.f32.mrb[0].mxu0
  %6299 = vmatprep.mubr.bf16.mxu0 %v4939
  %6300 = vmatmul.mubr.bf16.gmra.mrb[0].mxu0 %v4850
  %v6301 = vpop.f32.mrb[0].mxu0
  %v6302 = vadd.f32 %v6125, %v6301
  %v6303 = vpop.f32.mrb[0].mxu0
  %v6304 = vpop.f32.mrb[0].mxu0
  %v6305 = vadd.f32 %v6128, %v6304
  %v6306 = vpop.f32.mrb[0].mxu0
  %6307 = vmatprep.mubr.bf16.mxu0 %v4948
  %6308 = vmatmul.mubr.bf16.gmra.mrb[0].mxu0 %v4852
  %v6309 = vpop.f32.mrb[0].mxu0
  %v6310 = vadd.f32 %v6133, %v6309
  %v6311 = vpop.f32.mrb[0].mxu0
  %v6312 = vpop.f32.mrb[0].mxu0
  %v6313 = vadd.f32 %v6136, %v6312
  %v6314 = vpop.f32.mrb[0].mxu0
  %6315 = vdwg.mxu0
  %6316 = vmatprep.subr.bf16.mxu0 0
  %6317 = vmatpush1.bf16.msra.mxu0 %v5528
  %6318 = vmatprep.subr.bf16.mxu0 0
  %6319 = vmatpush1.bf16.msra.mxu0 %v5529
  %6320 = vmatprep.subr.bf16.mxu0 0
  %6321 = vmatpush1.bf16.msra.mxu0 %v5530
  %6322 = vmatprep.subr.bf16.mxu0 0
  %6323 = vmatpush1.bf16.msra.mxu0 %v5531
  %6324 = vmatprep.subr.bf16.mxu0 0
  %6325 = vmatpush1.bf16.msra.mxu0 %v5532
  %6326 = vmatprep.subr.bf16.mxu0 0
  %6327 = vmatpush1.bf16.msra.mxu0 %v5533
  %6328 = vmatprep.subr.bf16.mxu0 0
  %6329 = vmatpush1.bf16.msra.mxu0 %v5534
  %6330 = vmatprep.subr.bf16.mxu0 0
  %6331 = vmatpush1.bf16.msra.mxu0 %v5535
  %6332 = vmatprep.subr.bf16.mxu0 0
  %6333 = vmatpush1.bf16.msra.mxu0 0
  %6334 = vmatprep.subr.bf16.mxu0 0
  %6335 = vmatpush1.bf16.msra.mxu0 0
  %6336 = vmatprep.subr.bf16.mxu0 0
  %6337 = vmatpush1.bf16.msra.mxu0 0
  %6338 = vmatprep.subr.bf16.mxu0 0
  %6339 = vmatpush1.bf16.msra.mxu0 0
  %6340 = vmatprep.subr.bf16.mxu0 0
  %6341 = vmatpush1.bf16.msra.mxu0 0
  %6342 = vmatprep.subr.bf16.mxu0 0
  %6343 = vmatpush1.bf16.msra.mxu0 0
  %6344 = vmatprep.subr.bf16.mxu0 0
  %6345 = vmatpush1.bf16.msra.mxu0 0
  %6346 = vmatprep.subr.bf16.mxu0 0
  %6347 = vmatpush1.bf16.msra.mxu0 0
  %6348 = vmatprep.mubr.bf16.mxu0 0
  %6349 = vmatmul.mubr.bf16.gmra.mrb[0].mxu0 %v4972
  %v6350 = vpop.f32.mrb[0].mxu0
  %v6351 = vadd.f32 %v6174, %v6350
  %v6352 = vpop.f32.mrb[0].mxu0
  %v6353 = vpop.f32.mrb[0].mxu0
  %v6354 = vadd.f32 %v6177, %v6353
  %v6355 = vpop.f32.mrb[0].mxu0
  %6356 = vmatprep.mubr.bf16.mxu0 0
  %6357 = vmatmul.mubr.bf16.gmra.mrb[0].mxu0 %v4974
  %v6358 = vpop.f32.mrb[0].mxu0
  %v6359 = vadd.f32 %v6182, %v6358
  %v6360 = vpop.f32.mrb[0].mxu0
  %v6361 = vpop.f32.mrb[0].mxu0
  %v6362 = vadd.f32 %v6185, %v6361
  %v6363 = vpop.f32.mrb[0].mxu0
  %6364 = vmatprep.mubr.bf16.mxu0 0
  %6365 = vmatmul.mubr.bf16.gmra.mrb[0].mxu0 %v4976
  %v6366 = vpop.f32.mrb[0].mxu0
  %v6367 = vadd.f32 %v6190, %v6366
  %v6368 = vpop.f32.mrb[0].mxu0
  %v6369 = vpop.f32.mrb[0].mxu0
  %v6370 = vadd.f32 %v6193, %v6369
  %v6371 = vpop.f32.mrb[0].mxu0
  %6372 = vmatprep.mubr.bf16.mxu0 0
  %6373 = vmatmul.mubr.bf16.gmra.mrb[0].mxu0 %v4978
  %v6374 = vpop.f32.mrb[0].mxu0
  %v6375 = vadd.f32 %v6198, %v6374
  %v6376 = vpop.f32.mrb[0].mxu0
  %v6377 = vpop.f32.mrb[0].mxu0
  %v6378 = vadd.f32 %v6201, %v6377
  %v6379 = vpop.f32.mrb[0].mxu0
  %6380 = vmatprep.mubr.bf16.mxu0 0
  %6381 = vmatmul.mubr.bf16.gmra.mrb[0].mxu0 %v4980
  %v6382 = vpop.f32.mrb[0].mxu0
  %v6383 = vadd.f32 %v6206, %v6382
  %v6384 = vpop.f32.mrb[0].mxu0
  %v6385 = vpop.f32.mrb[0].mxu0
  %v6386 = vadd.f32 %v6209, %v6385
  %v6387 = vpop.f32.mrb[0].mxu0
  %6388 = vmatprep.mubr.bf16.mxu0 0
  %6389 = vmatmul.mubr.bf16.gmra.mrb[0].mxu0 %v4982
  %v6390 = vpop.f32.mrb[0].mxu0
  %v6391 = vadd.f32 %v6214, %v6390
  %v6392 = vpop.f32.mrb[0].mxu0
  %v6393 = vpop.f32.mrb[0].mxu0
  %v6394 = vadd.f32 %v6217, %v6393
  %v6395 = vpop.f32.mrb[0].mxu0
  %6396 = vmatprep.mubr.bf16.mxu0 0
  %6397 = vmatmul.mubr.bf16.gmra.mrb[0].mxu0 %v4984
  %v6398 = vpop.f32.mrb[0].mxu0
  %v6399 = vadd.f32 %v6222, %v6398
  %v6400 = vpop.f32.mrb[0].mxu0
  %v6401 = vpop.f32.mrb[0].mxu0
  %v6402 = vadd.f32 %v6225, %v6401
  %v6403 = vpop.f32.mrb[0].mxu0
  %6404 = vmatprep.mubr.bf16.mxu0 0
  %6405 = vmatmul.mubr.bf16.gmra.mrb[0].mxu0 %v4986
  %v6406 = vpop.f32.mrb[0].mxu0
  %v6407 = vadd.f32 %v6230, %v6406
  %v6408 = vpop.f32.mrb[0].mxu0
  %v6409 = vpop.f32.mrb[0].mxu0
  %v6410 = vadd.f32 %v6233, %v6409
  %v6411 = vpop.f32.mrb[0].mxu0
  %6412 = vmatprep.mubr.bf16.mxu0 0
  %6413 = vmatmul.mubr.bf16.gmra.mrb[0].mxu0 %v4988
  %v6414 = vpop.f32.mrb[0].mxu0
  %v6415 = vadd.f32 %v6238, %v6414
  %v6416 = vpop.f32.mrb[0].mxu0
  %v6417 = vpop.f32.mrb[0].mxu0
  %v6418 = vadd.f32 %v6241, %v6417
  %v6419 = vpop.f32.mrb[0].mxu0
  %6420 = vmatprep.mubr.bf16.mxu0 0
  %6421 = vmatmul.mubr.bf16.gmra.mrb[0].mxu0 %v4990
  %v6422 = vpop.f32.mrb[0].mxu0
  %v6423 = vadd.f32 %v6246, %v6422
  %v6424 = vpop.f32.mrb[0].mxu0
  %v6425 = vpop.f32.mrb[0].mxu0
  %v6426 = vadd.f32 %v6249, %v6425
  %v6427 = vpop.f32.mrb[0].mxu0
  %6428 = vmatprep.mubr.bf16.mxu0 0
  %6429 = vmatmul.mubr.bf16.gmra.mrb[0].mxu0 %v4992
  %v6430 = vpop.f32.mrb[0].mxu0
  %v6431 = vadd.f32 %v6254, %v6430
  %v6432 = vpop.f32.mrb[0].mxu0
  %v6433 = vpop.f32.mrb[0].mxu0
  %v6434 = vadd.f32 %v6257, %v6433
  %v6435 = vpop.f32.mrb[0].mxu0
  %6436 = vmatprep.mubr.bf16.mxu0 0
  %6437 = vmatmul.mubr.bf16.gmra.mrb[0].mxu0 %v4994
  %v6438 = vpop.f32.mrb[0].mxu0
  %v6439 = vadd.f32 %v6262, %v6438
  %v6440 = vpop.f32.mrb[0].mxu0
  %v6441 = vpop.f32.mrb[0].mxu0
  %v6442 = vadd.f32 %v6265, %v6441
  %v6443 = vpop.f32.mrb[0].mxu0
  %6444 = vmatprep.mubr.bf16.mxu0 0
  %6445 = vmatmul.mubr.bf16.gmra.mrb[0].mxu0 %v4996
  %v6446 = vpop.f32.mrb[0].mxu0
  %v6447 = vadd.f32 %v6270, %v6446
  %v6448 = vpop.f32.mrb[0].mxu0
  %v6449 = vpop.f32.mrb[0].mxu0
  %v6450 = vadd.f32 %v6273, %v6449
  %v6451 = vpop.f32.mrb[0].mxu0
  %6452 = vmatprep.mubr.bf16.mxu0 0
  %6453 = vmatmul.mubr.bf16.gmra.mrb[0].mxu0 %v4998
  %v6454 = vpop.f32.mrb[0].mxu0
  %v6455 = vadd.f32 %v6278, %v6454
  %v6456 = vpop.f32.mrb[0].mxu0
  %v6457 = vpop.f32.mrb[0].mxu0
  %v6458 = vadd.f32 %v6281, %v6457
  %v6459 = vpop.f32.mrb[0].mxu0
  %6460 = vmatprep.mubr.bf16.mxu0 0
  %6461 = vmatmul.mubr.bf16.gmra.mrb[0].mxu0 %v5000
  %v6462 = vpop.f32.mrb[0].mxu0
  %v6463 = vadd.f32 %v6286, %v6462
  %v6464 = vpop.f32.mrb[0].mxu0
  %v6465 = vpop.f32.mrb[0].mxu0
  %v6466 = vadd.f32 %v6289, %v6465
  %v6467 = vpop.f32.mrb[0].mxu0
  %6468 = vmatprep.mubr.bf16.mxu0 0
  %6469 = vmatmul.mubr.bf16.gmra.mrb[0].mxu0 %v5002
  %v6470 = vpop.f32.mrb[0].mxu0
  %v6471 = vadd.f32 %v6294, %v6470
  %v6472 = vpop.f32.mrb[0].mxu0
  %v6473 = vpop.f32.mrb[0].mxu0
  %v6474 = vadd.f32 %v6297, %v6473
  %v6475 = vpop.f32.mrb[0].mxu0
  %6476 = vmatprep.mubr.bf16.mxu0 0
  %6477 = vmatmul.mubr.bf16.gmra.mrb[0].mxu0 %v5004
  %v6478 = vpop.f32.mrb[0].mxu0
  %v6479 = vadd.f32 %v6302, %v6478
  %v6480 = vpop.f32.mrb[0].mxu0
  %v6481 = vpop.f32.mrb[0].mxu0
  %v6482 = vadd.f32 %v6305, %v6481
  %v6483 = vpop.f32.mrb[0].mxu0
  %6484 = vmatprep.mubr.bf16.mxu0 0
  %6485 = vmatmul.mubr.bf16.gmra.mrb[0].mxu0 %v5006
  %v6486 = vpop.f32.mrb[0].mxu0
  %v6487 = vadd.f32 %v6310, %v6486
  %v6488 = vpop.f32.mrb[0].mxu0
  %v6489 = vpop.f32.mrb[0].mxu0
  %v6490 = vadd.f32 %v6313, %v6489
  %v6491 = vpop.f32.mrb[0].mxu0
  %6492 = vdwg.mxu0
  %v6493 = vadd.f32 %v6351, %v4120
  %v6494 = vadd.f32 %v6354, %v4123
  %v6495 = vadd.f32 %v6359, %v4128
  %v6496 = vadd.f32 %v6362, %v4131
  %v6497 = vadd.f32 %v6367, %v4136
  %v6498 = vadd.f32 %v6370, %v4139
  %v6499 = vadd.f32 %v6375, %v4144
  %v6500 = vadd.f32 %v6378, %v4147
  %v6501 = vadd.f32 %v6383, %v4152
  %v6502 = vadd.f32 %v6386, %v4155
  %v6503 = vadd.f32 %v6391, %v4160
  %v6504 = vadd.f32 %v6394, %v4163
  %v6505 = vadd.f32 %v6399, %v4168
  %v6506 = vadd.f32 %v6402, %v4171
  %v6507 = vadd.f32 %v6407, %v4176
  %v6508 = vadd.f32 %v6410, %v4179
  %v6509 = vadd.f32 %v6415, %v4184
  %v6510 = vadd.f32 %v6418, %v4187
  %v6511 = vadd.f32 %v6423, %v4192
  %v6512 = vadd.f32 %v6426, %v4195
  %v6513 = vadd.f32 %v6431, %v4200
  %v6514 = vadd.f32 %v6434, %v4203
  %v6515 = vadd.f32 %v6439, %v4208
  %v6516 = vadd.f32 %v6442, %v4211
  %v6517 = vadd.f32 %v6447, %v4216
  %v6518 = vadd.f32 %v6450, %v4219
  %v6519 = vadd.f32 %v6455, %v4224
  %v6520 = vadd.f32 %v6458, %v4227
  %v6521 = vadd.f32 %v6463, %v4232
  %v6522 = vadd.f32 %v6466, %v4235
  %v6523 = vadd.f32 %v6471, %v4240
  %v6524 = vadd.f32 %v6474, %v4243
  %v6525 = vadd.f32 %v6479, %v4248
  %v6526 = vadd.f32 %v6482, %v4251
  %v6527 = vadd.f32 %v6487, %v4256
  %v6528 = vadd.f32 %v6490, %v4259
  %v6529 = vmax.f32 %v6493, 0.0
  %v6530 = vmax.f32 %v6494, 0.0
  %v6531 = vmax.f32 %v6495, 0.0
  %v6532 = vmax.f32 %v6496, 0.0
  %v6533 = vmax.f32 %v6497, 0.0
  %v6534 = vmax.f32 %v6498, 0.0
  %v6535 = vmax.f32 %v6499, 0.0
  %v6536 = vmax.f32 %v6500, 0.0
  %v6537 = vmax.f32 %v6501, 0.0
  %v6538 = vmax.f32 %v6502, 0.0
  %v6539 = vmax.f32 %v6503, 0.0
  %v6540 = vmax.f32 %v6504, 0.0
  %v6541 = vmax.f32 %v6505, 0.0
  %v6542 = vmax.f32 %v6506, 0.0
  %v6543 = vmax.f32 %v6507, 0.0
  %v6544 = vmax.f32 %v6508, 0.0
  %v6545 = vmax.f32 %v6509, 0.0
  %v6546 = vmax.f32 %v6510, 0.0
  %v6547 = vmax.f32 %v6511, 0.0
  %v6548 = vmax.f32 %v6512, 0.0
  %v6549 = vmax.f32 %v6513, 0.0
  %v6550 = vmax.f32 %v6514, 0.0
  %v6551 = vmax.f32 %v6515, 0.0
  %v6552 = vmax.f32 %v6516, 0.0
  %v6553 = vmax.f32 %v6517, 0.0
  %v6554 = vmax.f32 %v6518, 0.0
  %v6555 = vmax.f32 %v6519, 0.0
  %v6556 = vmax.f32 %v6520, 0.0
  %v6557 = vmax.f32 %v6521, 0.0
  %v6558 = vmax.f32 %v6522, 0.0
  %v6559 = vmax.f32 %v6523, 0.0
  %v6560 = vmax.f32 %v6524, 0.0
  %v6561 = vmax.f32 %v6525, 0.0
  %v6562 = vmax.f32 %v6526, 0.0
  %v6563 = vmax.f32 %v6527, 0.0
  %v6564 = vmax.f32 %v6528, 0.0
  %6565 = vst [vmem:[%s7] sm:$0xff] %v6529
  %6566 = vst [vmem:[%s7 + $0x8] sm:$0xff] %v6530
  %6567 = vst [vmem:[%s7 + $0x10] sm:$0xff] %v6531
  %6568 = vst [vmem:[%s7 + $0x18] sm:$0xff] %v6532
  %6569 = vst [vmem:[%s7 + $0x20] sm:$0xff] %v6533
  %6570 = vst [vmem:[%s7 + $0x28] sm:$0xff] %v6534
  %6571 = vst [vmem:[%s7 + $0x30] sm:$0xff] %v6535
  %6572 = vst [vmem:[%s7 + $0x38] sm:$0xff] %v6536
  %6573 = vst [vmem:[%s7 + $0x40] sm:$0xff] %v6537
  %6574 = vst [vmem:[%s7 + $0x48] sm:$0xff] %v6538
  %6575 = vst [vmem:[%s7 + $0x50] sm:$0xff] %v6539
  %6576 = vst [vmem:[%s7 + $0x58] sm:$0xff] %v6540
  %6577 = vst [vmem:[%s7 + $0x60] sm:$0xff] %v6541
  %6578 = vst [vmem:[%s7 + $0x68] sm:$0xff] %v6542
  %6579 = vst [vmem:[%s7 + $0x70] sm:$0xff] %v6543
  %6580 = vst [vmem:[%s7 + $0x78] sm:$0xff] %v6544
  %6581 = vst [vmem:[%s7 + $0x80] sm:$0xff] %v6545
  %6582 = vst [vmem:[%s7 + $0x88] sm:$0xff] %v6546
  %6583 = vst [vmem:[%s7 + $0x90] sm:$0xff] %v6547
  %6584 = vst [vmem:[%s7 + $0x98] sm:$0xff] %v6548
  %6585 = vst [vmem:[%s7 + $0xa0] sm:$0xff] %v6549
  %6586 = vst [vmem:[%s7 + $0xa8] sm:$0xff] %v6550
  %6587 = vst [vmem:[%s7 + $0xb0] sm:$0xff] %v6551
  %6588 = vst [vmem:[%s7 + $0xb8] sm:$0xff] %v6552
  %6589 = vst [vmem:[%s7 + $0xc0] sm:$0xff] %v6553
  %6590 = vst [vmem:[%s7 + $0xc8] sm:$0xff] %v6554
  %6591 = vst [vmem:[%s7 + $0xd0] sm:$0xff] %v6555
  %6592 = vst [vmem:[%s7 + $0xd8] sm:$0xff] %v6556
  %6593 = vst [vmem:[%s7 + $0xe0] sm:$0xff] %v6557
  %6594 = vst [vmem:[%s7 + $0xe8] sm:$0xff] %v6558
  %6595 = vst [vmem:[%s7 + $0xf0] sm:$0xff] %v6559
  %6596 = vst [vmem:[%s7 + $0xf8] sm:$0xff] %v6560
  %6597 = vst [vmem:[%s7 + $0x100] sm:$0xff] %v6561
  %6598 = vst [vmem:[%s7 + $0x108] sm:$0xff] %v6562
  %6599 = vst [vmem:[%s7 + $0x110] sm:$0xff] %v6563
  %6600 = vst [vmem:[%s7 + $0x118] sm:$0xff] %v6564
  %v6601 = vld [vmem:[%s0 + $0xb4] sm:$0xf]
  %v6602 = vld [vmem:[%s0 + $0xb8] sm:$0xf]
  %v6603 = vld [vmem:[%s0 + $0xbc] sm:$0xf]
  %v6604 = vld [vmem:[%s0 + $0xc0] sm:$0xf]
  %v6605 = vld [vmem:[%s0 + $0xc4] sm:$0xf]
  %v6606 = vld [vmem:[%s0 + $0xc8] sm:$0xf]
  %v6607 = vld [vmem:[%s0 + $0xcc] sm:$0xf]
  %v6608 = vld [vmem:[%s0 + $0xd0] sm:$0xf]
  %v6609 = vld [vmem:[%s0 + $0xd4] sm:$0xf]
  %v6610 = vld [vmem:[%s0 + $0xd8] sm:$0xf]
  %v6611 = vld [vmem:[%s0 + $0xdc] sm:$0xf]
  %v6612 = vld [vmem:[%s0 + $0xe0] sm:$0xf]
  %v6613 = vld [vmem:[%s0 + $0xe4] sm:$0xf]
  %v6614 = vld [vmem:[%s0 + $0xe8] sm:$0xf]
  %v6615 = vld [vmem:[%s0 + $0xec] sm:$0xf]
  %v6616 = vld [vmem:[%s0 + $0xf0] sm:$0xf]
  %v6617 = vld [vmem:[%s0 + $0xf4] sm:$0xf]
  %v6618 = vld [vmem:[%s0 + $0xf8] sm:$0xf]
  %v6619 = vld [vmem:[%s0 + $0xfc] sm:$0xf]
  %v6620 = vld [vmem:[%s0 + $0x100] sm:$0xf]
  %v6621 = vld [vmem:[%s0 + $0x104] sm:$0xf]
  %v6622 = vld [vmem:[%s0 + $0x108] sm:$0xf]
  %v6623 = vld [vmem:[%s0 + $0x10c] sm:$0xf]
  %v6624 = vld [vmem:[%s0 + $0x110] sm:$0xf]
  %v6625 = vld [vmem:[%s0 + $0x114] sm:$0xf]
  %v6626 = vld [vmem:[%s0 + $0x118] sm:$0xf]
  %v6627 = vld [vmem:[%s0 + $0x11c] sm:$0xf]
  %v6628 = vld [vmem:[%s0 + $0x120] sm:$0xf]
  %v6629 = vld [vmem:[%s0 + $0x124] sm:$0xf]
  %v6630 = vld [vmem:[%s0 + $0x128] sm:$0xf]
  %v6631 = vld [vmem:[%s0 + $0x12c] sm:$0xf]
  %v6632 = vld [vmem:[%s0 + $0x130] sm:$0xf]
  %v6633 = vld [vmem:[%s0 + $0x134] sm:$0xf]
  %v6634 = vld [vmem:[%s0 + $0x138] sm:$0xf]
  %v6635 = vld [vmem:[%s0 + $0x13c] sm:$0xf]
  %v6636 = vld [vmem:[%s0 + $0x140] sm:$0xf]
  %v6637 = vld [vmem:[%s0 + $0x144] sm:$0x1]
  %v6638 = vld [vmem:[%s0 + $0xb4] sm:$0xe]
  %v6639 = vld [vmem:[%s0 + $0xbc] sm:$0xe]
  %v6640 = vld [vmem:[%s0 + $0x144] sm:$0xf]
  %v6641 = vld [vmem:[%s0 + $0x148] sm:$0xf]
  %v6642 = vld [vmem:[%s0 + $0x14c] sm:$0x1]
  %v6643 = vld [vmem:[%s0 + $0x14c] sm:$0x3]
  %v6644 = vld [vmem:[%s0 + $0xbc] sm:$0xc]
  %v6645 = vld [vmem:[%s0 + $0xc4] sm:$0xc]
  %v6646 = vld [vmem:[%s0 + $0x14c] sm:$0xf]
  %v6647 = vld [vmem:[%s0 + $0x150] sm:$0xf]
  %v6648 = vld [vmem:[%s0 + $0x154] sm:$0x3]
  %v6649 = vld [vmem:[%s0 + $0x154] sm:$0x7]
  %v6650 = vld [vmem:[%s0 + $0xc4] sm:$0x8]
  %v6687 = vunpack.c.l.b16 %v6601
  %v6688 = vunpack.c.l.b16 %v6602
  %v6689 = vunpack.c.l.b16 %v6603
  %v6690 = vunpack.c.l.b16 %v6604
  %v6691 = vunpack.c.l.b16 %v6605
  %v6692 = vunpack.c.l.b16 %v6606
  %v6693 = vunpack.c.l.b16 %v6607
  %v6694 = vunpack.c.l.b16 %v6608
  %v6695 = vunpack.c.l.b16 %v6609
  %v6696 = vunpack.c.l.b16 %v6610
  %v6697 = vunpack.c.l.b16 %v6611
  %v6698 = vunpack.c.l.b16 %v6612
  %v6699 = vunpack.c.l.b16 %v6613
  %v6700 = vunpack.c.l.b16 %v6614
  %v6701 = vunpack.c.l.b16 %v6615
  %v6702 = vunpack.c.l.b16 %v6616
  %v6703 = vunpack.c.l.b16 %v6617
  %v6704 = vunpack.c.l.b16 %v6618
  %v6705 = vunpack.c.l.b16 %v6619
  %v6706 = vunpack.c.l.b16 %v6620
  %v6707 = vunpack.c.l.b16 %v6621
  %v6708 = vunpack.c.l.b16 %v6622
  %v6709 = vunpack.c.l.b16 %v6623
  %v6710 = vunpack.c.l.b16 %v6624
  %v6711 = vunpack.c.l.b16 %v6625
  %v6712 = vunpack.c.l.b16 %v6626
  %v6713 = vunpack.c.l.b16 %v6627
  %v6714 = vunpack.c.l.b16 %v6628
  %v6715 = vunpack.c.l.b16 %v6629
  %v6716 = vunpack.c.l.b16 %v6630
  %v6717 = vunpack.c.l.b16 %v6631
  %v6718 = vunpack.c.l.b16 %v6632
  %v6719 = vunpack.c.l.b16 %v6633
  %v6720 = vunpack.c.l.b16 %v6634
  %v6721 = vunpack.c.l.b16 %v6635
  %v6722 = vunpack.c.l.b16 %v6636
  %v6723 = vpack.c.b16 %v6688, %v6687
  %v6724 = vpack.c.b16 %v6690, %v6689
  %v6725 = vpack.c.b16 %v6692, %v6691
  %v6726 = vpack.c.b16 %v6694, %v6693
  %v6727 = vpack.c.b16 %v6696, %v6695
  %v6728 = vpack.c.b16 %v6698, %v6697
  %v6729 = vpack.c.b16 %v6700, %v6699
  %v6730 = vpack.c.b16 %v6702, %v6701
  %v6731 = vpack.c.b16 %v6704, %v6703
  %v6732 = vpack.c.b16 %v6706, %v6705
  %v6733 = vpack.c.b16 %v6708, %v6707
  %v6734 = vpack.c.b16 %v6710, %v6709
  %v6735 = vpack.c.b16 %v6712, %v6711
  %v6736 = vpack.c.b16 %v6714, %v6713
  %v6737 = vpack.c.b16 %v6716, %v6715
  %v6738 = vpack.c.b16 %v6718, %v6717
  %v6739 = vpack.c.b16 %v6720, %v6719
  %v6740 = vpack.c.b16 %v6722, %v6721
  %v6760 = vunpack.c.l.b16 %v6637
  %v6761 = vpack.c.b16 %v6760, %v6760
  %v6763 = vshrl.u32 %v6723, 16
  %v6765 = vshll.u32 %v6723, 16
  %v6767 = vrot.slane %v6765, 1
  %v6768 = vor.u32 %v6763, %v6767
  %v6770 = vshll.u32 %v6724, 16
  %v6772 = vrot.slane %v6770, 1
  %v6773 = vsel %vm995, %v6768, %v6772
  %v6774 = vshrl.u32 %v6724, 16
  %v6776 = vor.u32 %v6774, %v6772
  %v6778 = vshll.u32 %v6725, 16
  %v6780 = vrot.slane %v6778, 1
  %v6781 = vsel %vm995, %v6776, %v6780
  %v6782 = vshrl.u32 %v6725, 16
  %v6784 = vor.u32 %v6782, %v6780
  %v6786 = vshll.u32 %v6726, 16
  %v6788 = vrot.slane %v6786, 1
  %v6789 = vsel %vm995, %v6784, %v6788
  %v6790 = vshrl.u32 %v6726, 16
  %v6792 = vor.u32 %v6790, %v6788
  %v6794 = vshll.u32 %v6727, 16
  %v6796 = vrot.slane %v6794, 1
  %v6797 = vsel %vm995, %v6792, %v6796
  %v6798 = vshrl.u32 %v6727, 16
  %v6800 = vor.u32 %v6798, %v6796
  %v6802 = vshll.u32 %v6728, 16
  %v6804 = vrot.slane %v6802, 1
  %v6805 = vsel %vm995, %v6800, %v6804
  %v6806 = vshrl.u32 %v6728, 16
  %v6808 = vor.u32 %v6806, %v6804
  %v6810 = vshll.u32 %v6729, 16
  %v6812 = vrot.slane %v6810, 1
  %v6813 = vsel %vm995, %v6808, %v6812
  %v6814 = vshrl.u32 %v6729, 16
  %v6816 = vor.u32 %v6814, %v6812
  %v6818 = vshll.u32 %v6730, 16
  %v6820 = vrot.slane %v6818, 1
  %v6821 = vsel %vm995, %v6816, %v6820
  %v6822 = vshrl.u32 %v6730, 16
  %v6824 = vor.u32 %v6822, %v6820
  %v6826 = vshll.u32 %v6731, 16
  %v6828 = vrot.slane %v6826, 1
  %v6829 = vsel %vm995, %v6824, %v6828
  %v6830 = vshrl.u32 %v6731, 16
  %v6832 = vor.u32 %v6830, %v6828
  %v6834 = vshll.u32 %v6732, 16
  %v6836 = vrot.slane %v6834, 1
  %v6837 = vsel %vm995, %v6832, %v6836
  %v6838 = vshrl.u32 %v6732, 16
  %v6840 = vor.u32 %v6838, %v6836
  %v6842 = vshll.u32 %v6733, 16
  %v6844 = vrot.slane %v6842, 1
  %v6845 = vsel %vm995, %v6840, %v6844
  %v6846 = vshrl.u32 %v6733, 16
  %v6848 = vor.u32 %v6846, %v6844
  %v6850 = vshll.u32 %v6734, 16
  %v6852 = vrot.slane %v6850, 1
  %v6853 = vsel %vm995, %v6848, %v6852
  %v6854 = vshrl.u32 %v6734, 16
  %v6856 = vor.u32 %v6854, %v6852
  %v6858 = vshll.u32 %v6735, 16
  %v6860 = vrot.slane %v6858, 1
  %v6861 = vsel %vm995, %v6856, %v6860
  %v6862 = vshrl.u32 %v6735, 16
  %v6864 = vor.u32 %v6862, %v6860
  %v6866 = vshll.u32 %v6736, 16
  %v6868 = vrot.slane %v6866, 1
  %v6869 = vsel %vm995, %v6864, %v6868
  %v6870 = vshrl.u32 %v6736, 16
  %v6872 = vor.u32 %v6870, %v6868
  %v6874 = vshll.u32 %v6737, 16
  %v6876 = vrot.slane %v6874, 1
  %v6877 = vsel %vm995, %v6872, %v6876
  %v6878 = vshrl.u32 %v6737, 16
  %v6880 = vor.u32 %v6878, %v6876
  %v6882 = vshll.u32 %v6738, 16
  %v6884 = vrot.slane %v6882, 1
  %v6885 = vsel %vm995, %v6880, %v6884
  %v6886 = vshrl.u32 %v6738, 16
  %v6888 = vor.u32 %v6886, %v6884
  %v6890 = vshll.u32 %v6739, 16
  %v6892 = vrot.slane %v6890, 1
  %v6893 = vsel %vm995, %v6888, %v6892
  %v6894 = vshrl.u32 %v6739, 16
  %v6896 = vor.u32 %v6894, %v6892
  %v6898 = vshll.u32 %v6740, 16
  %v6900 = vrot.slane %v6898, 1
  %v6901 = vsel %vm995, %v6896, %v6900
  %v6902 = vshrl.u32 %v6740, 16
  %v6904 = vor.u32 %v6902, %v6900
  %v6906 = vshll.u32 %v6761, 16
  %v6908 = vrot.slane %v6906, 1
  %v6909 = vsel %vm995, %v6904, %v6908
  %v6929 = vunpack.c.l.b16 %v6638
  %v6930 = vpack.c.b16 %v6688, %v6929
  %v6931 = vrot.slane %v6930, 1
  %v6932 = vrot.slane %v6724, 1
  %v6933 = vsel %vm1165, %v6931, %v6932
  %v6934 = vrot.slane %v6725, 1
  %v6935 = vsel %vm1165, %v6932, %v6934
  %v6936 = vrot.slane %v6726, 1
  %v6937 = vsel %vm1165, %v6934, %v6936
  %v6938 = vrot.slane %v6727, 1
  %v6939 = vsel %vm1165, %v6936, %v6938
  %v6940 = vrot.slane %v6728, 1
  %v6941 = vsel %vm1165, %v6938, %v6940
  %v6942 = vrot.slane %v6729, 1
  %v6943 = vsel %vm1165, %v6940, %v6942
  %v6944 = vrot.slane %v6730, 1
  %v6945 = vsel %vm1165, %v6942, %v6944
  %v6946 = vrot.slane %v6731, 1
  %v6947 = vsel %vm1165, %v6944, %v6946
  %v6948 = vrot.slane %v6732, 1
  %v6949 = vsel %vm1165, %v6946, %v6948
  %v6950 = vrot.slane %v6733, 1
  %v6951 = vsel %vm1165, %v6948, %v6950
  %v6952 = vrot.slane %v6734, 1
  %v6953 = vsel %vm1165, %v6950, %v6952
  %v6954 = vrot.slane %v6735, 1
  %v6955 = vsel %vm1165, %v6952, %v6954
  %v6956 = vrot.slane %v6736, 1
  %v6957 = vsel %vm1165, %v6954, %v6956
  %v6958 = vrot.slane %v6737, 1
  %v6959 = vsel %vm1165, %v6956, %v6958
  %v6960 = vrot.slane %v6738, 1
  %v6961 = vsel %vm1165, %v6958, %v6960
  %v6962 = vrot.slane %v6739, 1
  %v6963 = vsel %vm1165, %v6960, %v6962
  %v6964 = vrot.slane %v6740, 1
  %v6965 = vsel %vm1165, %v6962, %v6964
  %v6966 = vrot.slane %v6761, 1
  %v6967 = vsel %vm1165, %v6964, %v6966
  %v6990 = vunpack.c.l.b16 %v6639
  %v6991 = vunpack.c.l.b16 %v6640
  %v6992 = vunpack.c.l.b16 %v6641
  %v6993 = vunpack.c.l.b16 %v6642
  %v6994 = vpack.c.b16 %v6690, %v6990
  %v6995 = vpack.c.b16 %v6992, %v6991
  %v6996 = vpack.c.b16 %v6993, %v6993
  %v6997 = vrot.slane %v6994, 1
  %v6998 = vsel %vm1165, %v6997, %v6934
  %v6999 = vrot.slane %v6995, 1
  %v7000 = vsel %vm1165, %v6964, %v6999
  %v7001 = vrot.slane %v6996, 1
  %v7002 = vsel %vm1165, %v6999, %v7001
  %v7007 = vunpack.c.l.b16 %v6643
  %v7008 = vpack.c.b16 %v7007, %v7007
  %v7010 = vshrl.u32 %v6994, 16
  %v7012 = vrot.slane %v7010, 1
  %v7013 = vshll.u32 %v6994, 16
  %v7015 = vrot.slane %v7013, 2
  %v7016 = vor.u32 %v7012, %v7015
  %v7017 = vrot.slane %v6782, 1
  %v7018 = vrot.slane %v6778, 2
  %v7019 = vor.u32 %v7017, %v7018
  %v7020 = vsel %vm1244, %v7016, %v7019
  %v7021 = vrot.slane %v6790, 1
  %v7022 = vrot.slane %v6786, 2
  %v7023 = vor.u32 %v7021, %v7022
  %v7024 = vsel %vm1244, %v7019, %v7023
  %v7025 = vrot.slane %v6798, 1
  %v7026 = vrot.slane %v6794, 2
  %v7027 = vor.u32 %v7025, %v7026
  %v7028 = vsel %vm1244, %v7023, %v7027
  %v7029 = vrot.slane %v6806, 1
  %v7030 = vrot.slane %v6802, 2
  %v7031 = vor.u32 %v7029, %v7030
  %v7032 = vsel %vm1244, %v7027, %v7031
  %v7033 = vrot.slane %v6814, 1
  %v7034 = vrot.slane %v6810, 2
  %v7035 = vor.u32 %v7033, %v7034
  %v7036 = vsel %vm1244, %v7031, %v7035
  %v7037 = vrot.slane %v6822, 1
  %v7038 = vrot.slane %v6818, 2
  %v7039 = vor.u32 %v7037, %v7038
  %v7040 = vsel %vm1244, %v7035, %v7039
  %v7041 = vrot.slane %v6830, 1
  %v7042 = vrot.slane %v6826, 2
  %v7043 = vor.u32 %v7041, %v7042
  %v7044 = vsel %vm1244, %v7039, %v7043
  %v7045 = vrot.slane %v6838, 1
  %v7046 = vrot.slane %v6834, 2
  %v7047 = vor.u32 %v7045, %v7046
  %v7048 = vsel %vm1244, %v7043, %v7047
  %v7049 = vrot.slane %v6846, 1
  %v7050 = vrot.slane %v6842, 2
  %v7051 = vor.u32 %v7049, %v7050
  %v7052 = vsel %vm1244, %v7047, %v7051
  %v7053 = vrot.slane %v6854, 1
  %v7054 = vrot.slane %v6850, 2
  %v7055 = vor.u32 %v7053, %v7054
  %v7056 = vsel %vm1244, %v7051, %v7055
  %v7057 = vrot.slane %v6862, 1
  %v7058 = vrot.slane %v6858, 2
  %v7059 = vor.u32 %v7057, %v7058
  %v7060 = vsel %vm1244, %v7055, %v7059
  %v7061 = vrot.slane %v6870, 1
  %v7062 = vrot.slane %v6866, 2
  %v7063 = vor.u32 %v7061, %v7062
  %v7064 = vsel %vm1244, %v7059, %v7063
  %v7065 = vrot.slane %v6878, 1
  %v7066 = vrot.slane %v6874, 2
  %v7067 = vor.u32 %v7065, %v7066
  %v7068 = vsel %vm1244, %v7063, %v7067
  %v7069 = vrot.slane %v6886, 1
  %v7070 = vrot.slane %v6882, 2
  %v7071 = vor.u32 %v7069, %v7070
  %v7072 = vsel %vm1244, %v7067, %v7071
  %v7073 = vrot.slane %v6894, 1
  %v7074 = vrot.slane %v6890, 2
  %v7075 = vor.u32 %v7073, %v7074
  %v7076 = vsel %vm1244, %v7071, %v7075
  %v7077 = vrot.slane %v6902, 1
  %v7078 = vrot.slane %v6898, 2
  %v7079 = vor.u32 %v7077, %v7078
  %v7080 = vsel %vm1244, %v7075, %v7079
  %v7082 = vshrl.u32 %v6995, 16
  %v7084 = vrot.slane %v7082, 1
  %v7085 = vshll.u32 %v6995, 16
  %v7087 = vrot.slane %v7085, 2
  %v7088 = vor.u32 %v7084, %v7087
  %v7089 = vsel %vm1244, %v7079, %v7088
  %v7091 = vshrl.u32 %v7008, 16
  %v7093 = vrot.slane %v7091, 1
  %v7094 = vshll.u32 %v7008, 16
  %v7096 = vrot.slane %v7094, 2
  %v7097 = vor.u32 %v7093, %v7096
  %v7098 = vsel %vm1244, %v7088, %v7097
  %v7118 = vunpack.c.l.b16 %v6644
  %v7119 = vpack.c.b16 %v6690, %v7118
  %v7120 = vrot.slane %v7119, 2
  %v7121 = vrot.slane %v6725, 2
  %v7122 = vsel %vm1356, %v7120, %v7121
  %v7123 = vrot.slane %v6726, 2
  %v7124 = vsel %vm1356, %v7121, %v7123
  %v7125 = vrot.slane %v6727, 2
  %v7126 = vsel %vm1356, %v7123, %v7125
  %v7127 = vrot.slane %v6728, 2
  %v7128 = vsel %vm1356, %v7125, %v7127
  %v7129 = vrot.slane %v6729, 2
  %v7130 = vsel %vm1356, %v7127, %v7129
  %v7131 = vrot.slane %v6730, 2
  %v7132 = vsel %vm1356, %v7129, %v7131
  %v7133 = vrot.slane %v6731, 2
  %v7134 = vsel %vm1356, %v7131, %v7133
  %v7135 = vrot.slane %v6732, 2
  %v7136 = vsel %vm1356, %v7133, %v7135
  %v7137 = vrot.slane %v6733, 2
  %v7138 = vsel %vm1356, %v7135, %v7137
  %v7139 = vrot.slane %v6734, 2
  %v7140 = vsel %vm1356, %v7137, %v7139
  %v7141 = vrot.slane %v6735, 2
  %v7142 = vsel %vm1356, %v7139, %v7141
  %v7143 = vrot.slane %v6736, 2
  %v7144 = vsel %vm1356, %v7141, %v7143
  %v7145 = vrot.slane %v6737, 2
  %v7146 = vsel %vm1356, %v7143, %v7145
  %v7147 = vrot.slane %v6738, 2
  %v7148 = vsel %vm1356, %v7145, %v7147
  %v7149 = vrot.slane %v6739, 2
  %v7150 = vsel %vm1356, %v7147, %v7149
  %v7151 = vrot.slane %v6740, 2
  %v7152 = vsel %vm1356, %v7149, %v7151
  %v7153 = vrot.slane %v6995, 2
  %v7154 = vsel %vm1356, %v7151, %v7153
  %v7155 = vrot.slane %v7008, 2
  %v7156 = vsel %vm1356, %v7153, %v7155
  %v7179 = vunpack.c.l.b16 %v6645
  %v7180 = vunpack.c.l.b16 %v6646
  %v7181 = vunpack.c.l.b16 %v6647
  %v7182 = vunpack.c.l.b16 %v6648
  %v7183 = vpack.c.b16 %v6692, %v7179
  %v7184 = vpack.c.b16 %v7181, %v7180
  %v7185 = vpack.c.b16 %v7182, %v7182
  %v7186 = vrot.slane %v7183, 2
  %v7187 = vsel %vm1356, %v7186, %v7123
  %v7188 = vrot.slane %v7184, 2
  %v7189 = vsel %vm1356, %v7153, %v7188
  %v7190 = vrot.slane %v7185, 2
  %v7191 = vsel %vm1356, %v7188, %v7190
  %v7196 = vunpack.c.l.b16 %v6649
  %v7197 = vpack.c.b16 %v7196, %v7196
  %v7199 = vshrl.u32 %v7183, 16
  %v7201 = vrot.slane %v7199, 2
  %v7202 = vshll.u32 %v7183, 16
  %v7204 = vrot.slane %v7202, 3
  %v7205 = vor.u32 %v7201, %v7204
  %v7206 = vrot.slane %v6790, 2
  %v7207 = vrot.slane %v6786, 3
  %v7208 = vor.u32 %v7206, %v7207
  %v7209 = vsel %vm1435, %v7205, %v7208
  %v7210 = vrot.slane %v6798, 2
  %v7211 = vrot.slane %v6794, 3
  %v7212 = vor.u32 %v7210, %v7211
  %v7213 = vsel %vm1435, %v7208, %v7212
  %v7214 = vrot.slane %v6806, 2
  %v7215 = vrot.slane %v6802, 3
  %v7216 = vor.u32 %v7214, %v7215
  %v7217 = vsel %vm1435, %v7212, %v7216
  %v7218 = vrot.slane %v6814, 2
  %v7219 = vrot.slane %v6810, 3
  %v7220 = vor.u32 %v7218, %v7219
  %v7221 = vsel %vm1435, %v7216, %v7220
  %v7222 = vrot.slane %v6822, 2
  %v7223 = vrot.slane %v6818, 3
  %v7224 = vor.u32 %v7222, %v7223
  %v7225 = vsel %vm1435, %v7220, %v7224
  %v7226 = vrot.slane %v6830, 2
  %v7227 = vrot.slane %v6826, 3
  %v7228 = vor.u32 %v7226, %v7227
  %v7229 = vsel %vm1435, %v7224, %v7228
  %v7230 = vrot.slane %v6838, 2
  %v7231 = vrot.slane %v6834, 3
  %v7232 = vor.u32 %v7230, %v7231
  %v7233 = vsel %vm1435, %v7228, %v7232
  %v7234 = vrot.slane %v6846, 2
  %v7235 = vrot.slane %v6842, 3
  %v7236 = vor.u32 %v7234, %v7235
  %v7237 = vsel %vm1435, %v7232, %v7236
  %v7238 = vrot.slane %v6854, 2
  %v7239 = vrot.slane %v6850, 3
  %v7240 = vor.u32 %v7238, %v7239
  %v7241 = vsel %vm1435, %v7236, %v7240
  %v7242 = vrot.slane %v6862, 2
  %v7243 = vrot.slane %v6858, 3
  %v7244 = vor.u32 %v7242, %v7243
  %v7245 = vsel %vm1435, %v7240, %v7244
  %v7246 = vrot.slane %v6870, 2
  %v7247 = vrot.slane %v6866, 3
  %v7248 = vor.u32 %v7246, %v7247
  %v7249 = vsel %vm1435, %v7244, %v7248
  %v7250 = vrot.slane %v6878, 2
  %v7251 = vrot.slane %v6874, 3
  %v7252 = vor.u32 %v7250, %v7251
  %v7253 = vsel %vm1435, %v7248, %v7252
  %v7254 = vrot.slane %v6886, 2
  %v7255 = vrot.slane %v6882, 3
  %v7256 = vor.u32 %v7254, %v7255
  %v7257 = vsel %vm1435, %v7252, %v7256
  %v7258 = vrot.slane %v6894, 2
  %v7259 = vrot.slane %v6890, 3
  %v7260 = vor.u32 %v7258, %v7259
  %v7261 = vsel %vm1435, %v7256, %v7260
  %v7262 = vrot.slane %v6902, 2
  %v7263 = vrot.slane %v6898, 3
  %v7264 = vor.u32 %v7262, %v7263
  %v7265 = vsel %vm1435, %v7260, %v7264
  %v7266 = vrot.slane %v7082, 2
  %v7267 = vrot.slane %v7085, 3
  %v7268 = vor.u32 %v7266, %v7267
  %v7269 = vsel %vm1435, %v7264, %v7268
  %v7271 = vshrl.u32 %v7184, 16
  %v7273 = vrot.slane %v7271, 2
  %v7274 = vshll.u32 %v7184, 16
  %v7276 = vrot.slane %v7274, 3
  %v7277 = vor.u32 %v7273, %v7276
  %v7278 = vsel %vm1435, %v7268, %v7277
  %v7280 = vshrl.u32 %v7197, 16
  %v7282 = vrot.slane %v7280, 2
  %v7283 = vshll.u32 %v7197, 16
  %v7285 = vrot.slane %v7283, 3
  %v7286 = vor.u32 %v7282, %v7285
  %v7287 = vsel %vm1435, %v7277, %v7286
  %v7307 = vunpack.c.l.b16 %v6650
  %v7308 = vpack.c.b16 %v6692, %v7307
  %v7309 = vrot.slane %v7308, 3
  %v7310 = vrot.slane %v6726, 3
  %v7311 = vsel %vm1547, %v7309, %v7310
  %v7312 = vrot.slane %v6727, 3
  %v7313 = vsel %vm1547, %v7310, %v7312
  %v7314 = vrot.slane %v6728, 3
  %v7315 = vsel %vm1547, %v7312, %v7314
  %v7316 = vrot.slane %v6729, 3
  %v7317 = vsel %vm1547, %v7314, %v7316
  %v7318 = vrot.slane %v6730, 3
  %v7319 = vsel %vm1547, %v7316, %v7318
  %v7320 = vrot.slane %v6731, 3
  %v7321 = vsel %vm1547, %v7318, %v7320
  %v7322 = vrot.slane %v6732, 3
  %v7323 = vsel %vm1547, %v7320, %v7322
  %v7324 = vrot.slane %v6733, 3
  %v7325 = vsel %vm1547, %v7322, %v7324
  %v7326 = vrot.slane %v6734, 3
  %v7327 = vsel %vm1547, %v7324, %v7326
  %v7328 = vrot.slane %v6735, 3
  %v7329 = vsel %vm1547, %v7326, %v7328
  %v7330 = vrot.slane %v6736, 3
  %v7331 = vsel %vm1547, %v7328, %v7330
  %v7332 = vrot.slane %v6737, 3
  %v7333 = vsel %vm1547, %v7330, %v7332
  %v7334 = vrot.slane %v6738, 3
  %v7335 = vsel %vm1547, %v7332, %v7334
  %v7336 = vrot.slane %v6739, 3
  %v7337 = vsel %vm1547, %v7334, %v7336
  %v7338 = vrot.slane %v6740, 3
  %v7339 = vsel %vm1547, %v7336, %v7338
  %v7340 = vrot.slane %v6995, 3
  %v7341 = vsel %vm1547, %v7338, %v7340
  %v7342 = vrot.slane %v7184, 3
  %v7343 = vsel %vm1547, %v7340, %v7342
  %v7344 = vrot.slane %v7197, 3
  %v7345 = vsel %vm1547, %v7342, %v7344
  %v7364 = vld [vmem:[%s1] sm:$0xf]
  %v7365 = vld [vmem:[%s1 + $0x4] sm:$0xf]
  %v7366 = vld [vmem:[%s1 + $0x8] sm:$0xf]
  %v7367 = vld [vmem:[%s1 + $0xc] sm:$0xf]
  %v7368 = vld [vmem:[%s1 + $0x10] sm:$0xf]
  %v7369 = vld [vmem:[%s1 + $0x14] sm:$0xf]
  %v7370 = vld [vmem:[%s1 + $0x18] sm:$0xf]
  %v7371 = vld [vmem:[%s1 + $0x1c] sm:$0xf]
  %v7372 = vld [vmem:[%s1 + $0x20] sm:$0xf]
  %v7373 = vld [vmem:[%s1 + $0x24] sm:$0xf]
  %v7374 = vld [vmem:[%s1 + $0x28] sm:$0xf]
  %v7375 = vld [vmem:[%s1 + $0x2c] sm:$0xf]
  %v7376 = vld [vmem:[%s1 + $0x30] sm:$0xf]
  %v7377 = vld [vmem:[%s1 + $0x34] sm:$0xf]
  %v7378 = vld [vmem:[%s1 + $0x38] sm:$0xf]
  %v7379 = vld [vmem:[%s1 + $0x3c] sm:$0xf]
  %v7380 = vld [vmem:[%s1 + $0x40] sm:$0xf]
  %v7381 = vld [vmem:[%s1 + $0x44] sm:$0xf]
  %v7382 = vld [vmem:[%s1 + $0x48] sm:$0xf]
  %v7383 = vld [vmem:[%s1 + $0x4c] sm:$0xf]
  %v7384 = vld [vmem:[%s1 + $0x50] sm:$0xf]
  %v7385 = vld [vmem:[%s1 + $0x54] sm:$0xf]
  %v7386 = vld [vmem:[%s1 + $0x58] sm:$0xf]
  %v7387 = vld [vmem:[%s1 + $0x5c] sm:$0xf]
  %v7388 = vld [vmem:[%s1 + $0x60] sm:$0xf]
  %v7389 = vld [vmem:[%s1 + $0x64] sm:$0xf]
  %v7390 = vld [vmem:[%s1 + $0x68] sm:$0xf]
  %v7391 = vld [vmem:[%s1 + $0x6c] sm:$0xf]
  %v7392 = vld [vmem:[%s1 + $0x70] sm:$0xf]
  %v7393 = vld [vmem:[%s1 + $0x74] sm:$0xf]
  %v7394 = vld [vmem:[%s1 + $0x78] sm:$0xf]
  %v7395 = vld [vmem:[%s1 + $0x7c] sm:$0xf]
  %v7396 = vld [vmem:[%s1 + $0x80] sm:$0xf]
  %v7397 = vld [vmem:[%s1 + $0x84] sm:$0xf]
  %v7398 = vld [vmem:[%s1 + $0x88] sm:$0xf]
  %v7399 = vld [vmem:[%s1 + $0x8c] sm:$0xf]
  %v7400 = vld [vmem:[%s1 + $0x90] sm:$0xf]
  %v7401 = vld [vmem:[%s1 + $0x94] sm:$0xf]
  %v7402 = vld [vmem:[%s1 + $0x98] sm:$0xf]
  %v7403 = vld [vmem:[%s1 + $0x9c] sm:$0xf]
  %v7404 = vld [vmem:[%s1 + $0xa0] sm:$0xf]
  %v7405 = vld [vmem:[%s1 + $0xa4] sm:$0xf]
  %v7406 = vld [vmem:[%s1 + $0xa8] sm:$0xf]
  %v7407 = vld [vmem:[%s1 + $0xac] sm:$0xf]
  %v7408 = vld [vmem:[%s1 + $0xb0] sm:$0xf]
  %v7409 = vld [vmem:[%s1 + $0xb4] sm:$0xf]
  %v7410 = vld [vmem:[%s1 + $0xb8] sm:$0xf]
  %v7411 = vld [vmem:[%s1 + $0xbc] sm:$0xf]
  %v7412 = vld [vmem:[%s1 + $0xc0] sm:$0xf]
  %v7413 = vld [vmem:[%s1 + $0xc4] sm:$0xf]
  %v7414 = vld [vmem:[%s1 + $0xc8] sm:$0xf]
  %v7415 = vld [vmem:[%s1 + $0xcc] sm:$0xf]
  %v7416 = vld [vmem:[%s1 + $0xd0] sm:$0xf]
  %v7417 = vld [vmem:[%s1 + $0xd4] sm:$0xf]
  %v7418 = vld [vmem:[%s1 + $0xd8] sm:$0xf]
  %v7419 = vld [vmem:[%s1 + $0xdc] sm:$0xf]
  %v7420 = vld [vmem:[%s1 + $0xe0] sm:$0xf]
  %v7421 = vld [vmem:[%s1 + $0xe4] sm:$0xf]
  %v7422 = vld [vmem:[%s1 + $0xe8] sm:$0xf]
  %v7423 = vld [vmem:[%s1 + $0xec] sm:$0xf]
  %v7424 = vld [vmem:[%s1 + $0xf0] sm:$0xf]
  %v7425 = vld [vmem:[%s1 + $0xf4] sm:$0xf]
  %v7426 = vld [vmem:[%s1 + $0xf8] sm:$0xf]
  %v7427 = vld [vmem:[%s1 + $0xfc] sm:$0xf]
  %v7428 = vld [vmem:[%s1 + $0x100] sm:$0xf]
  %v7429 = vld [vmem:[%s1 + $0x104] sm:$0xf]
  %v7430 = vld [vmem:[%s1 + $0x108] sm:$0xf]
  %v7431 = vld [vmem:[%s1 + $0x10c] sm:$0xf]
  %v7432 = vld [vmem:[%s1 + $0x110] sm:$0xf]
  %v7433 = vld [vmem:[%s1 + $0x114] sm:$0xf]
  %v7434 = vld [vmem:[%s1 + $0x118] sm:$0xf]
  %v7435 = vld [vmem:[%s1 + $0x11c] sm:$0xf]
  %v7436 = vld [vmem:[%s1 + $0x120] sm:$0xf]
  %v7437 = vld [vmem:[%s1 + $0x124] sm:$0xf]
  %v7438 = vld [vmem:[%s1 + $0x128] sm:$0xf]
  %v7439 = vld [vmem:[%s1 + $0x12c] sm:$0xf]
  %v7440 = vld [vmem:[%s1 + $0x130] sm:$0xf]
  %v7441 = vld [vmem:[%s1 + $0x134] sm:$0xf]
  %v7442 = vld [vmem:[%s1 + $0x138] sm:$0xf]
  %v7443 = vld [vmem:[%s1 + $0x13c] sm:$0xf]
  %v7444 = vld [vmem:[%s1 + $0x140] sm:$0xf]
  %v7445 = vld [vmem:[%s1 + $0x144] sm:$0xf]
  %v7446 = vld [vmem:[%s1 + $0x148] sm:$0xf]
  %v7447 = vld [vmem:[%s1 + $0x14c] sm:$0xf]
  %v7448 = vld [vmem:[%s1 + $0x150] sm:$0xf]
  %v7449 = vld [vmem:[%s1 + $0x154] sm:$0xf]
  %v7450 = vld [vmem:[%s1 + $0x158] sm:$0xf]
  %v7451 = vld [vmem:[%s1 + $0x15c] sm:$0xf]
  %v7452 = vld [vmem:[%s1 + $0x160] sm:$0xf]
  %v7453 = vld [vmem:[%s1 + $0x164] sm:$0xf]
  %v7454 = vld [vmem:[%s1 + $0x168] sm:$0xf]
  %v7455 = vld [vmem:[%s1 + $0x16c] sm:$0xf]
  %v7456 = vld [vmem:[%s1 + $0x170] sm:$0xf]
  %v7457 = vld [vmem:[%s1 + $0x174] sm:$0xf]
  %v7458 = vld [vmem:[%s1 + $0x178] sm:$0xf]
  %v7459 = vld [vmem:[%s1 + $0x17c] sm:$0xf]
  %v7460 = vld [vmem:[%s1 + $0x180] sm:$0xf]
  %v7461 = vld [vmem:[%s1 + $0x184] sm:$0xf]
  %v7462 = vld [vmem:[%s1 + $0x188] sm:$0xf]
  %v7463 = vld [vmem:[%s1 + $0x18c] sm:$0xf]
  %v7464 = vld [vmem:[%s1 + $0x190] sm:$0xf]
  %v7465 = vld [vmem:[%s1 + $0x194] sm:$0xf]
  %v7466 = vld [vmem:[%s1 + $0x198] sm:$0xf]
  %v7467 = vld [vmem:[%s1 + $0x19c] sm:$0xf]
  %v7468 = vld [vmem:[%s1 + $0x1a0] sm:$0xf]
  %v7469 = vld [vmem:[%s1 + $0x1a4] sm:$0xf]
  %v7470 = vld [vmem:[%s1 + $0x1a8] sm:$0xf]
  %v7471 = vld [vmem:[%s1 + $0x1ac] sm:$0xf]
  %v7472 = vld [vmem:[%s1 + $0x1b0] sm:$0xf]
  %v7473 = vld [vmem:[%s1 + $0x1b4] sm:$0xf]
  %v7474 = vld [vmem:[%s1 + $0x1b8] sm:$0xf]
  %v7475 = vld [vmem:[%s1 + $0x1bc] sm:$0xf]
  %v7476 = vld [vmem:[%s1 + $0x1c0] sm:$0xf]
  %v7477 = vld [vmem:[%s1 + $0x1c4] sm:$0xf]
  %v7478 = vld [vmem:[%s1 + $0x1c8] sm:$0xf]
  %v7479 = vld [vmem:[%s1 + $0x1cc] sm:$0xf]
  %v7480 = vld [vmem:[%s1 + $0x1d0] sm:$0xf]
  %v7481 = vld [vmem:[%s1 + $0x1d4] sm:$0xf]
  %v7482 = vld [vmem:[%s1 + $0x1d8] sm:$0xf]
  %v7483 = vld [vmem:[%s1 + $0x1dc] sm:$0xf]
  %v7484 = vld [vmem:[%s1 + $0x1e0] sm:$0xf]
  %v7485 = vld [vmem:[%s1 + $0x1e4] sm:$0xf]
  %v7486 = vld [vmem:[%s1 + $0x1e8] sm:$0xf]
  %v7487 = vld [vmem:[%s1 + $0x1ec] sm:$0xf]
  %v7488 = vld [vmem:[%s1 + $0x1f0] sm:$0xf]
  %v7489 = vld [vmem:[%s1 + $0x1f4] sm:$0xf]
  %v7490 = vld [vmem:[%s1 + $0x1f8] sm:$0xf]
  %v7491 = vld [vmem:[%s1 + $0x1fc] sm:$0xf]
  %v7492 = vld [vmem:[%s1 + $0x200] sm:$0xf]
  %v7493 = vld [vmem:[%s1 + $0x204] sm:$0xf]
  %v7494 = vld [vmem:[%s1 + $0x208] sm:$0xf]
  %v7495 = vld [vmem:[%s1 + $0x20c] sm:$0xf]
  %v7496 = vld [vmem:[%s1 + $0x210] sm:$0xf]
  %v7497 = vld [vmem:[%s1 + $0x214] sm:$0xf]
  %v7498 = vld [vmem:[%s1 + $0x218] sm:$0xf]
  %v7499 = vld [vmem:[%s1 + $0x21c] sm:$0xf]
  %v7500 = vld [vmem:[%s1 + $0x220] sm:$0xf]
  %v7501 = vld [vmem:[%s1 + $0x224] sm:$0xf]
  %v7502 = vld [vmem:[%s1 + $0x228] sm:$0xf]
  %v7503 = vld [vmem:[%s1 + $0x22c] sm:$0xf]
  %v7504 = vld [vmem:[%s1 + $0x230] sm:$0xf]
  %v7505 = vld [vmem:[%s1 + $0x234] sm:$0xf]
  %v7506 = vld [vmem:[%s1 + $0x238] sm:$0xf]
  %v7507 = vld [vmem:[%s1 + $0x23c] sm:$0xf]
  %v7508 = vld [vmem:[%s2] sm:$0x1]
  %v7510 = vlaneseq
  %v7511 = vshrl.u32 %v7510, 7
  %v7512 = vsub.s32 0, %v7511
  %v7513 = vrot.slane %v7508, %v7512
  %v7659 = vunpack.c.l.b16 %v7364
  %v7660 = vunpack.c.l.b16 %v7365
  %v7661 = vunpack.c.l.b16 %v7366
  %v7662 = vunpack.c.l.b16 %v7367
  %v7663 = vunpack.c.l.b16 %v7368
  %v7664 = vunpack.c.l.b16 %v7369
  %v7665 = vunpack.c.l.b16 %v7370
  %v7666 = vunpack.c.l.b16 %v7371
  %v7667 = vunpack.c.l.b16 %v7372
  %v7668 = vunpack.c.l.b16 %v7373
  %v7669 = vunpack.c.l.b16 %v7374
  %v7670 = vunpack.c.l.b16 %v7375
  %v7671 = vunpack.c.l.b16 %v7376
  %v7672 = vunpack.c.l.b16 %v7377
  %v7673 = vunpack.c.l.b16 %v7378
  %v7674 = vunpack.c.l.b16 %v7379
  %v7675 = vunpack.c.l.b16 %v7380
  %v7676 = vunpack.c.l.b16 %v7381
  %v7677 = vunpack.c.l.b16 %v7382
  %v7678 = vunpack.c.l.b16 %v7383
  %v7679 = vunpack.c.l.b16 %v7384
  %v7680 = vunpack.c.l.b16 %v7385
  %v7681 = vunpack.c.l.b16 %v7386
  %v7682 = vunpack.c.l.b16 %v7387
  %v7683 = vunpack.c.l.b16 %v7388
  %v7684 = vunpack.c.l.b16 %v7389
  %v7685 = vunpack.c.l.b16 %v7390
  %v7686 = vunpack.c.l.b16 %v7391
  %v7687 = vunpack.c.l.b16 %v7392
  %v7688 = vunpack.c.l.b16 %v7393
  %v7689 = vunpack.c.l.b16 %v7394
  %v7690 = vunpack.c.l.b16 %v7395
  %v7691 = vunpack.c.l.b16 %v7396
  %v7692 = vunpack.c.l.b16 %v7397
  %v7693 = vunpack.c.l.b16 %v7398
  %v7694 = vunpack.c.l.b16 %v7399
  %v7695 = vunpack.c.l.b16 %v7400
  %v7696 = vunpack.c.l.b16 %v7401
  %v7697 = vunpack.c.l.b16 %v7402
  %v7698 = vunpack.c.l.b16 %v7403
  %v7699 = vunpack.c.l.b16 %v7404
  %v7700 = vunpack.c.l.b16 %v7405
  %v7701 = vunpack.c.l.b16 %v7406
  %v7702 = vunpack.c.l.b16 %v7407
  %v7703 = vunpack.c.l.b16 %v7408
  %v7704 = vunpack.c.l.b16 %v7409
  %v7705 = vunpack.c.l.b16 %v7410
  %v7706 = vunpack.c.l.b16 %v7411
  %v7707 = vunpack.c.l.b16 %v7412
  %v7708 = vunpack.c.l.b16 %v7413
  %v7709 = vunpack.c.l.b16 %v7414
  %v7710 = vunpack.c.l.b16 %v7415
  %v7711 = vunpack.c.l.b16 %v7416
  %v7712 = vunpack.c.l.b16 %v7417
  %v7713 = vunpack.c.l.b16 %v7418
  %v7714 = vunpack.c.l.b16 %v7419
  %v7715 = vunpack.c.l.b16 %v7420
  %v7716 = vunpack.c.l.b16 %v7421
  %v7717 = vunpack.c.l.b16 %v7422
  %v7718 = vunpack.c.l.b16 %v7423
  %v7719 = vunpack.c.l.b16 %v7424
  %v7720 = vunpack.c.l.b16 %v7425
  %v7721 = vunpack.c.l.b16 %v7426
  %v7722 = vunpack.c.l.b16 %v7427
  %v7723 = vunpack.c.l.b16 %v7428
  %v7724 = vunpack.c.l.b16 %v7429
  %v7725 = vunpack.c.l.b16 %v7430
  %v7726 = vunpack.c.l.b16 %v7431
  %v7727 = vunpack.c.l.b16 %v7432
  %v7728 = vunpack.c.l.b16 %v7433
  %v7729 = vunpack.c.l.b16 %v7434
  %v7730 = vunpack.c.l.b16 %v7435
  %v7731 = vunpack.c.l.b16 %v7436
  %v7732 = vunpack.c.l.b16 %v7437
  %v7733 = vunpack.c.l.b16 %v7438
  %v7734 = vunpack.c.l.b16 %v7439
  %v7735 = vunpack.c.l.b16 %v7440
  %v7736 = vunpack.c.l.b16 %v7441
  %v7737 = vunpack.c.l.b16 %v7442
  %v7738 = vunpack.c.l.b16 %v7443
  %v7739 = vunpack.c.l.b16 %v7444
  %v7740 = vunpack.c.l.b16 %v7445
  %v7741 = vunpack.c.l.b16 %v7446
  %v7742 = vunpack.c.l.b16 %v7447
  %v7743 = vunpack.c.l.b16 %v7448
  %v7744 = vunpack.c.l.b16 %v7449
  %v7745 = vunpack.c.l.b16 %v7450
  %v7746 = vunpack.c.l.b16 %v7451
  %v7747 = vunpack.c.l.b16 %v7452
  %v7748 = vunpack.c.l.b16 %v7453
  %v7749 = vunpack.c.l.b16 %v7454
  %v7750 = vunpack.c.l.b16 %v7455
  %v7751 = vunpack.c.l.b16 %v7456
  %v7752 = vunpack.c.l.b16 %v7457
  %v7753 = vunpack.c.l.b16 %v7458
  %v7754 = vunpack.c.l.b16 %v7459
  %v7755 = vunpack.c.l.b16 %v7460
  %v7756 = vunpack.c.l.b16 %v7461
  %v7757 = vunpack.c.l.b16 %v7462
  %v7758 = vunpack.c.l.b16 %v7463
  %v7759 = vunpack.c.l.b16 %v7464
  %v7760 = vunpack.c.l.b16 %v7465
  %v7761 = vunpack.c.l.b16 %v7466
  %v7762 = vunpack.c.l.b16 %v7467
  %v7763 = vunpack.c.l.b16 %v7468
  %v7764 = vunpack.c.l.b16 %v7469
  %v7765 = vunpack.c.l.b16 %v7470
  %v7766 = vunpack.c.l.b16 %v7471
  %v7767 = vunpack.c.l.b16 %v7472
  %v7768 = vunpack.c.l.b16 %v7473
  %v7769 = vunpack.c.l.b16 %v7474
  %v7770 = vunpack.c.l.b16 %v7475
  %v7771 = vunpack.c.l.b16 %v7476
  %v7772 = vunpack.c.l.b16 %v7477
  %v7773 = vunpack.c.l.b16 %v7478
  %v7774 = vunpack.c.l.b16 %v7479
  %v7775 = vunpack.c.l.b16 %v7480
  %v7776 = vunpack.c.l.b16 %v7481
  %v7777 = vunpack.c.l.b16 %v7482
  %v7778 = vunpack.c.l.b16 %v7483
  %v7779 = vunpack.c.l.b16 %v7484
  %v7780 = vunpack.c.l.b16 %v7485
  %v7781 = vunpack.c.l.b16 %v7486
  %v7782 = vunpack.c.l.b16 %v7487
  %v7783 = vunpack.c.l.b16 %v7488
  %v7784 = vunpack.c.l.b16 %v7489
  %v7785 = vunpack.c.l.b16 %v7490
  %v7786 = vunpack.c.l.b16 %v7491
  %v7787 = vunpack.c.l.b16 %v7492
  %v7788 = vunpack.c.l.b16 %v7493
  %v7789 = vunpack.c.l.b16 %v7494
  %v7790 = vunpack.c.l.b16 %v7495
  %v7791 = vunpack.c.l.b16 %v7496
  %v7792 = vunpack.c.l.b16 %v7497
  %v7793 = vunpack.c.l.b16 %v7498
  %v7794 = vunpack.c.l.b16 %v7499
  %v7795 = vunpack.c.l.b16 %v7500
  %v7796 = vunpack.c.l.b16 %v7501
  %v7797 = vunpack.c.l.b16 %v7502
  %v7798 = vunpack.c.l.b16 %v7503
  %v7799 = vunpack.c.l.b16 %v7504
  %v7800 = vunpack.c.l.b16 %v7505
  %v7801 = vunpack.c.l.b16 %v7506
  %v7802 = vunpack.c.l.b16 %v7507
  %v7803 = vpack.c.b16 %v7660, %v7659
  %v7804 = vpack.c.b16 %v7662, %v7661
  %v7805 = vpack.c.b16 %v7664, %v7663
  %v7806 = vpack.c.b16 %v7666, %v7665
  %v7807 = vpack.c.b16 %v7668, %v7667
  %v7808 = vpack.c.b16 %v7670, %v7669
  %v7809 = vpack.c.b16 %v7672, %v7671
  %v7810 = vpack.c.b16 %v7674, %v7673
  %v7811 = vpack.c.b16 %v7676, %v7675
  %v7812 = vpack.c.b16 %v7678, %v7677
  %v7813 = vpack.c.b16 %v7680, %v7679
  %v7814 = vpack.c.b16 %v7682, %v7681
  %v7815 = vpack.c.b16 %v7684, %v7683
  %v7816 = vpack.c.b16 %v7686, %v7685
  %v7817 = vpack.c.b16 %v7688, %v7687
  %v7818 = vpack.c.b16 %v7690, %v7689
  %v7819 = vpack.c.b16 %v7692, %v7691
  %v7820 = vpack.c.b16 %v7694, %v7693
  %v7821 = vpack.c.b16 %v7696, %v7695
  %v7822 = vpack.c.b16 %v7698, %v7697
  %v7823 = vpack.c.b16 %v7700, %v7699
  %v7824 = vpack.c.b16 %v7702, %v7701
  %v7825 = vpack.c.b16 %v7704, %v7703
  %v7826 = vpack.c.b16 %v7706, %v7705
  %v7827 = vpack.c.b16 %v7708, %v7707
  %v7828 = vpack.c.b16 %v7710, %v7709
  %v7829 = vpack.c.b16 %v7712, %v7711
  %v7830 = vpack.c.b16 %v7714, %v7713
  %v7831 = vpack.c.b16 %v7716, %v7715
  %v7832 = vpack.c.b16 %v7718, %v7717
  %v7833 = vpack.c.b16 %v7720, %v7719
  %v7834 = vpack.c.b16 %v7722, %v7721
  %v7835 = vpack.c.b16 %v7724, %v7723
  %v7836 = vpack.c.b16 %v7726, %v7725
  %v7837 = vpack.c.b16 %v7728, %v7727
  %v7838 = vpack.c.b16 %v7730, %v7729
  %v7839 = vpack.c.b16 %v7732, %v7731
  %v7840 = vpack.c.b16 %v7734, %v7733
  %v7841 = vpack.c.b16 %v7736, %v7735
  %v7842 = vpack.c.b16 %v7738, %v7737
  %v7843 = vpack.c.b16 %v7740, %v7739
  %v7844 = vpack.c.b16 %v7742, %v7741
  %v7845 = vpack.c.b16 %v7744, %v7743
  %v7846 = vpack.c.b16 %v7746, %v7745
  %v7847 = vpack.c.b16 %v7748, %v7747
  %v7848 = vpack.c.b16 %v7750, %v7749
  %v7849 = vpack.c.b16 %v7752, %v7751
  %v7850 = vpack.c.b16 %v7754, %v7753
  %v7851 = vpack.c.b16 %v7756, %v7755
  %v7852 = vpack.c.b16 %v7758, %v7757
  %v7853 = vpack.c.b16 %v7760, %v7759
  %v7854 = vpack.c.b16 %v7762, %v7761
  %v7855 = vpack.c.b16 %v7764, %v7763
  %v7856 = vpack.c.b16 %v7766, %v7765
  %v7857 = vpack.c.b16 %v7768, %v7767
  %v7858 = vpack.c.b16 %v7770, %v7769
  %v7859 = vpack.c.b16 %v7772, %v7771
  %v7860 = vpack.c.b16 %v7774, %v7773
  %v7861 = vpack.c.b16 %v7776, %v7775
  %v7862 = vpack.c.b16 %v7778, %v7777
  %v7863 = vpack.c.b16 %v7780, %v7779
  %v7864 = vpack.c.b16 %v7782, %v7781
  %v7865 = vpack.c.b16 %v7784, %v7783
  %v7866 = vpack.c.b16 %v7786, %v7785
  %v7867 = vpack.c.b16 %v7788, %v7787
  %v7868 = vpack.c.b16 %v7790, %v7789
  %v7869 = vpack.c.b16 %v7792, %v7791
  %v7870 = vpack.c.b16 %v7794, %v7793
  %v7871 = vpack.c.b16 %v7796, %v7795
  %v7872 = vpack.c.b16 %v7798, %v7797
  %v7873 = vpack.c.b16 %v7800, %v7799
  %v7874 = vpack.c.b16 %v7802, %v7801
  %7947 = vmatprep.subr.bf16.mxu0 0
  %7948 = vmatpush1.bf16.msra.mxu0 %v7803
  %7949 = vmatprep.subr.bf16.mxu0 0
  %7950 = vmatpush1.bf16.msra.mxu0 %v7804
  %7951 = vmatprep.subr.bf16.mxu0 0
  %7952 = vmatpush1.bf16.msra.mxu0 %v7805
  %7953 = vmatprep.subr.bf16.mxu0 0
  %7954 = vmatpush1.bf16.msra.mxu0 %v7806
  %7955 = vmatprep.subr.bf16.mxu0 0
  %7956 = vmatpush1.bf16.msra.mxu0 %v7807
  %7957 = vmatprep.subr.bf16.mxu0 0
  %7958 = vmatpush1.bf16.msra.mxu0 %v7808
  %7959 = vmatprep.subr.bf16.mxu0 0
  %7960 = vmatpush1.bf16.msra.mxu0 %v7809
  %7961 = vmatprep.subr.bf16.mxu0 0
  %7962 = vmatpush1.bf16.msra.mxu0 %v7810
  %7963 = vmatprep.subr.bf16.mxu0 0
  %7964 = vmatpush1.bf16.msra.mxu0 %v7811
  %7965 = vmatprep.subr.bf16.mxu0 0
  %7966 = vmatpush1.bf16.msra.mxu0 %v7812
  %7967 = vmatprep.subr.bf16.mxu0 0
  %7968 = vmatpush1.bf16.msra.mxu0 %v7813
  %7969 = vmatprep.subr.bf16.mxu0 0
  %7970 = vmatpush1.bf16.msra.mxu0 %v7814
  %7971 = vmatprep.subr.bf16.mxu0 0
  %7972 = vmatpush1.bf16.msra.mxu0 %v7815
  %7973 = vmatprep.subr.bf16.mxu0 0
  %7974 = vmatpush1.bf16.msra.mxu0 %v7816
  %7975 = vmatprep.subr.bf16.mxu0 0
  %7976 = vmatpush1.bf16.msra.mxu0 %v7817
  %7977 = vmatprep.subr.bf16.mxu0 0
  %7978 = vmatpush1.bf16.msra.mxu0 %v7818
  %7979 = vmatprep.mubr.bf16.mxu0 %v6773
  %7980 = vmatmul.mubr.bf16.gmra.mrb[0].mxu0 %v6723
  %v7981 = vpop.f32.mrb[0].mxu0
  %v7982 = vadd.f32 %v7513, %v7981
  %v7983 = vpop.f32.mrb[0].mxu0
  %v7984 = vpop.f32.mrb[0].mxu0
  %v7985 = vadd.f32 %v7513, %v7984
  %v7986 = vpop.f32.mrb[0].mxu0
  %7987 = vmatprep.mubr.bf16.mxu0 %v6781
  %7988 = vmatmul.mubr.bf16.gmra.mrb[0].mxu0 %v6724
  %v7989 = vpop.f32.mrb[0].mxu0
  %v7990 = vadd.f32 %v7513, %v7989
  %v7991 = vpop.f32.mrb[0].mxu0
  %v7992 = vpop.f32.mrb[0].mxu0
  %v7993 = vadd.f32 %v7513, %v7992
  %v7994 = vpop.f32.mrb[0].mxu0
  %7995 = vmatprep.mubr.bf16.mxu0 %v6789
  %7996 = vmatmul.mubr.bf16.gmra.mrb[0].mxu0 %v6725
  %v7997 = vpop.f32.mrb[0].mxu0
  %v7998 = vadd.f32 %v7513, %v7997
  %v7999 = vpop.f32.mrb[0].mxu0
  %v8000 = vpop.f32.mrb[0].mxu0
  %v8001 = vadd.f32 %v7513, %v8000
  %v8002 = vpop.f32.mrb[0].mxu0
  %8003 = vmatprep.mubr.bf16.mxu0 %v6797
  %8004 = vmatmul.mubr.bf16.gmra.mrb[0].mxu0 %v6726
  %v8005 = vpop.f32.mrb[0].mxu0
  %v8006 = vadd.f32 %v7513, %v8005
  %v8007 = vpop.f32.mrb[0].mxu0
  %v8008 = vpop.f32.mrb[0].mxu0
  %v8009 = vadd.f32 %v7513, %v8008
  %v8010 = vpop.f32.mrb[0].mxu0
  %8011 = vmatprep.mubr.bf16.mxu0 %v6805
  %8012 = vmatmul.mubr.bf16.gmra.mrb[0].mxu0 %v6727
  %v8013 = vpop.f32.mrb[0].mxu0
  %v8014 = vadd.f32 %v7513, %v8013
  %v8015 = vpop.f32.mrb[0].mxu0
  %v8016 = vpop.f32.mrb[0].mxu0
  %v8017 = vadd.f32 %v7513, %v8016
  %v8018 = vpop.f32.mrb[0].mxu0
  %8019 = vmatprep.mubr.bf16.mxu0 %v6813
  %8020 = vmatmul.mubr.bf16.gmra.mrb[0].mxu0 %v6728
  %v8021 = vpop.f32.mrb[0].mxu0
  %v8022 = vadd.f32 %v7513, %v8021
  %v8023 = vpop.f32.mrb[0].mxu0
  %v8024 = vpop.f32.mrb[0].mxu0
  %v8025 = vadd.f32 %v7513, %v8024
  %v8026 = vpop.f32.mrb[0].mxu0
  %8027 = vmatprep.mubr.bf16.mxu0 %v6821
  %8028 = vmatmul.mubr.bf16.gmra.mrb[0].mxu0 %v6729
  %v8029 = vpop.f32.mrb[0].mxu0
  %v8030 = vadd.f32 %v7513, %v8029
  %v8031 = vpop.f32.mrb[0].mxu0
  %v8032 = vpop.f32.mrb[0].mxu0
  %v8033 = vadd.f32 %v7513, %v8032
  %v8034 = vpop.f32.mrb[0].mxu0
  %8035 = vmatprep.mubr.bf16.mxu0 %v6829
  %8036 = vmatmul.mubr.bf16.gmra.mrb[0].mxu0 %v6730
  %v8037 = vpop.f32.mrb[0].mxu0
  %v8038 = vadd.f32 %v7513, %v8037
  %v8039 = vpop.f32.mrb[0].mxu0
  %v8040 = vpop.f32.mrb[0].mxu0
  %v8041 = vadd.f32 %v7513, %v8040
  %v8042 = vpop.f32.mrb[0].mxu0
  %8043 = vmatprep.mubr.bf16.mxu0 %v6837
  %8044 = vmatmul.mubr.bf16.gmra.mrb[0].mxu0 %v6731
  %v8045 = vpop.f32.mrb[0].mxu0
  %v8046 = vadd.f32 %v7513, %v8045
  %v8047 = vpop.f32.mrb[0].mxu0
  %v8048 = vpop.f32.mrb[0].mxu0
  %v8049 = vadd.f32 %v7513, %v8048
  %v8050 = vpop.f32.mrb[0].mxu0
  %8051 = vmatprep.mubr.bf16.mxu0 %v6845
  %8052 = vmatmul.mubr.bf16.gmra.mrb[0].mxu0 %v6732
  %v8053 = vpop.f32.mrb[0].mxu0
  %v8054 = vadd.f32 %v7513, %v8053
  %v8055 = vpop.f32.mrb[0].mxu0
  %v8056 = vpop.f32.mrb[0].mxu0
  %v8057 = vadd.f32 %v7513, %v8056
  %v8058 = vpop.f32.mrb[0].mxu0
  %8059 = vmatprep.mubr.bf16.mxu0 %v6853
  %8060 = vmatmul.mubr.bf16.gmra.mrb[0].mxu0 %v6733
  %v8061 = vpop.f32.mrb[0].mxu0
  %v8062 = vadd.f32 %v7513, %v8061
  %v8063 = vpop.f32.mrb[0].mxu0
  %v8064 = vpop.f32.mrb[0].mxu0
  %v8065 = vadd.f32 %v7513, %v8064
  %v8066 = vpop.f32.mrb[0].mxu0
  %8067 = vmatprep.mubr.bf16.mxu0 %v6861
  %8068 = vmatmul.mubr.bf16.gmra.mrb[0].mxu0 %v6734
  %v8069 = vpop.f32.mrb[0].mxu0
  %v8070 = vadd.f32 %v7513, %v8069
  %v8071 = vpop.f32.mrb[0].mxu0
  %v8072 = vpop.f32.mrb[0].mxu0
  %v8073 = vadd.f32 %v7513, %v8072
  %v8074 = vpop.f32.mrb[0].mxu0
  %8075 = vmatprep.mubr.bf16.mxu0 %v6869
  %8076 = vmatmul.mubr.bf16.gmra.mrb[0].mxu0 %v6735
  %v8077 = vpop.f32.mrb[0].mxu0
  %v8078 = vadd.f32 %v7513, %v8077
  %v8079 = vpop.f32.mrb[0].mxu0
  %v8080 = vpop.f32.mrb[0].mxu0
  %v8081 = vadd.f32 %v7513, %v8080
  %v8082 = vpop.f32.mrb[0].mxu0
  %8083 = vmatprep.mubr.bf16.mxu0 %v6877
  %8084 = vmatmul.mubr.bf16.gmra.mrb[0].mxu0 %v6736
  %v8085 = vpop.f32.mrb[0].mxu0
  %v8086 = vadd.f32 %v7513, %v8085
  %v8087 = vpop.f32.mrb[0].mxu0
  %v8088 = vpop.f32.mrb[0].mxu0
  %v8089 = vadd.f32 %v7513, %v8088
  %v8090 = vpop.f32.mrb[0].mxu0
  %8091 = vmatprep.mubr.bf16.mxu0 %v6885
  %8092 = vmatmul.mubr.bf16.gmra.mrb[0].mxu0 %v6737
  %v8093 = vpop.f32.mrb[0].mxu0
  %v8094 = vadd.f32 %v7513, %v8093
  %v8095 = vpop.f32.mrb[0].mxu0
  %v8096 = vpop.f32.mrb[0].mxu0
  %v8097 = vadd.f32 %v7513, %v8096
  %v8098 = vpop.f32.mrb[0].mxu0
  %8099 = vmatprep.mubr.bf16.mxu0 %v6893
  %8100 = vmatmul.mubr.bf16.gmra.mrb[0].mxu0 %v6738
  %v8101 = vpop.f32.mrb[0].mxu0
  %v8102 = vadd.f32 %v7513, %v8101
  %v8103 = vpop.f32.mrb[0].mxu0
  %v8104 = vpop.f32.mrb[0].mxu0
  %v8105 = vadd.f32 %v7513, %v8104
  %v8106 = vpop.f32.mrb[0].mxu0
  %8107 = vmatprep.mubr.bf16.mxu0 %v6901
  %8108 = vmatmul.mubr.bf16.gmra.mrb[0].mxu0 %v6739
  %v8109 = vpop.f32.mrb[0].mxu0
  %v8110 = vadd.f32 %v7513, %v8109
  %v8111 = vpop.f32.mrb[0].mxu0
  %v8112 = vpop.f32.mrb[0].mxu0
  %v8113 = vadd.f32 %v7513, %v8112
  %v8114 = vpop.f32.mrb[0].mxu0
  %8115 = vmatprep.mubr.bf16.mxu0 %v6909
  %8116 = vmatmul.mubr.bf16.gmra.mrb[0].mxu0 %v6740
  %v8117 = vpop.f32.mrb[0].mxu0
  %v8118 = vadd.f32 %v7513, %v8117
  %v8119 = vpop.f32.mrb[0].mxu0
  %v8120 = vpop.f32.mrb[0].mxu0
  %v8121 = vadd.f32 %v7513, %v8120
  %v8122 = vpop.f32.mrb[0].mxu0
  %8123 = vdwg.mxu0
  %8124 = vmatprep.subr.bf16.mxu0 0
  %8125 = vmatpush1.bf16.msra.mxu0 %v7819
  %8126 = vmatprep.subr.bf16.mxu0 0
  %8127 = vmatpush1.bf16.msra.mxu0 %v7820
  %8128 = vmatprep.subr.bf16.mxu0 0
  %8129 = vmatpush1.bf16.msra.mxu0 %v7821
  %8130 = vmatprep.subr.bf16.mxu0 0
  %8131 = vmatpush1.bf16.msra.mxu0 %v7822
  %8132 = vmatprep.subr.bf16.mxu0 0
  %8133 = vmatpush1.bf16.msra.mxu0 %v7823
  %8134 = vmatprep.subr.bf16.mxu0 0
  %8135 = vmatpush1.bf16.msra.mxu0 %v7824
  %8136 = vmatprep.subr.bf16.mxu0 0
  %8137 = vmatpush1.bf16.msra.mxu0 %v7825
  %8138 = vmatprep.subr.bf16.mxu0 0
  %8139 = vmatpush1.bf16.msra.mxu0 %v7826
  %8140 = vmatprep.subr.bf16.mxu0 0
  %8141 = vmatpush1.bf16.msra.mxu0 %v7827
  %8142 = vmatprep.subr.bf16.mxu0 0
  %8143 = vmatpush1.bf16.msra.mxu0 %v7828
  %8144 = vmatprep.subr.bf16.mxu0 0
  %8145 = vmatpush1.bf16.msra.mxu0 %v7829
  %8146 = vmatprep.subr.bf16.mxu0 0
  %8147 = vmatpush1.bf16.msra.mxu0 %v7830
  %8148 = vmatprep.subr.bf16.mxu0 0
  %8149 = vmatpush1.bf16.msra.mxu0 %v7831
  %8150 = vmatprep.subr.bf16.mxu0 0
  %8151 = vmatpush1.bf16.msra.mxu0 %v7832
  %8152 = vmatprep.subr.bf16.mxu0 0
  %8153 = vmatpush1.bf16.msra.mxu0 %v7833
  %8154 = vmatprep.subr.bf16.mxu0 0
  %8155 = vmatpush1.bf16.msra.mxu0 %v7834
  %8156 = vmatprep.mubr.bf16.mxu0 %v6998
  %8157 = vmatmul.mubr.bf16.gmra.mrb[0].mxu0 %v6933
  %v8158 = vpop.f32.mrb[0].mxu0
  %v8159 = vadd.f32 %v7982, %v8158
  %v8160 = vpop.f32.mrb[0].mxu0
  %v8161 = vpop.f32.mrb[0].mxu0
  %v8162 = vadd.f32 %v7985, %v8161
  %v8163 = vpop.f32.mrb[0].mxu0
  %8164 = vmatprep.mubr.bf16.mxu0 %v6937
  %8165 = vmatmul.mubr.bf16.gmra.mrb[0].mxu0 %v6935
  %v8166 = vpop.f32.mrb[0].mxu0
  %v8167 = vadd.f32 %v7990, %v8166
  %v8168 = vpop.f32.mrb[0].mxu0
  %v8169 = vpop.f32.mrb[0].mxu0
  %v8170 = vadd.f32 %v7993, %v8169
  %v8171 = vpop.f32.mrb[0].mxu0
  %8172 = vmatprep.mubr.bf16.mxu0 %v6939
  %8173 = vmatmul.mubr.bf16.gmra.mrb[0].mxu0 %v6937
  %v8174 = vpop.f32.mrb[0].mxu0
  %v8175 = vadd.f32 %v7998, %v8174
  %v8176 = vpop.f32.mrb[0].mxu0
  %v8177 = vpop.f32.mrb[0].mxu0
  %v8178 = vadd.f32 %v8001, %v8177
  %v8179 = vpop.f32.mrb[0].mxu0
  %8180 = vmatprep.mubr.bf16.mxu0 %v6941
  %8181 = vmatmul.mubr.bf16.gmra.mrb[0].mxu0 %v6939
  %v8182 = vpop.f32.mrb[0].mxu0
  %v8183 = vadd.f32 %v8006, %v8182
  %v8184 = vpop.f32.mrb[0].mxu0
  %v8185 = vpop.f32.mrb[0].mxu0
  %v8186 = vadd.f32 %v8009, %v8185
  %v8187 = vpop.f32.mrb[0].mxu0
  %8188 = vmatprep.mubr.bf16.mxu0 %v6943
  %8189 = vmatmul.mubr.bf16.gmra.mrb[0].mxu0 %v6941
  %v8190 = vpop.f32.mrb[0].mxu0
  %v8191 = vadd.f32 %v8014, %v8190
  %v8192 = vpop.f32.mrb[0].mxu0
  %v8193 = vpop.f32.mrb[0].mxu0
  %v8194 = vadd.f32 %v8017, %v8193
  %v8195 = vpop.f32.mrb[0].mxu0
  %8196 = vmatprep.mubr.bf16.mxu0 %v6945
  %8197 = vmatmul.mubr.bf16.gmra.mrb[0].mxu0 %v6943
  %v8198 = vpop.f32.mrb[0].mxu0
  %v8199 = vadd.f32 %v8022, %v8198
  %v8200 = vpop.f32.mrb[0].mxu0
  %v8201 = vpop.f32.mrb[0].mxu0
  %v8202 = vadd.f32 %v8025, %v8201
  %v8203 = vpop.f32.mrb[0].mxu0
  %8204 = vmatprep.mubr.bf16.mxu0 %v6947
  %8205 = vmatmul.mubr.bf16.gmra.mrb[0].mxu0 %v6945
  %v8206 = vpop.f32.mrb[0].mxu0
  %v8207 = vadd.f32 %v8030, %v8206
  %v8208 = vpop.f32.mrb[0].mxu0
  %v8209 = vpop.f32.mrb[0].mxu0
  %v8210 = vadd.f32 %v8033, %v8209
  %v8211 = vpop.f32.mrb[0].mxu0
  %8212 = vmatprep.mubr.bf16.mxu0 %v6949
  %8213 = vmatmul.mubr.bf16.gmra.mrb[0].mxu0 %v6947
  %v8214 = vpop.f32.mrb[0].mxu0
  %v8215 = vadd.f32 %v8038, %v8214
  %v8216 = vpop.f32.mrb[0].mxu0
  %v8217 = vpop.f32.mrb[0].mxu0
  %v8218 = vadd.f32 %v8041, %v8217
  %v8219 = vpop.f32.mrb[0].mxu0
  %8220 = vmatprep.mubr.bf16.mxu0 %v6951
  %8221 = vmatmul.mubr.bf16.gmra.mrb[0].mxu0 %v6949
  %v8222 = vpop.f32.mrb[0].mxu0
  %v8223 = vadd.f32 %v8046, %v8222
  %v8224 = vpop.f32.mrb[0].mxu0
  %v8225 = vpop.f32.mrb[0].mxu0
  %v8226 = vadd.f32 %v8049, %v8225
  %v8227 = vpop.f32.mrb[0].mxu0
  %8228 = vmatprep.mubr.bf16.mxu0 %v6953
  %8229 = vmatmul.mubr.bf16.gmra.mrb[0].mxu0 %v6951
  %v8230 = vpop.f32.mrb[0].mxu0
  %v8231 = vadd.f32 %v8054, %v8230
  %v8232 = vpop.f32.mrb[0].mxu0
  %v8233 = vpop.f32.mrb[0].mxu0
  %v8234 = vadd.f32 %v8057, %v8233
  %v8235 = vpop.f32.mrb[0].mxu0
  %8236 = vmatprep.mubr.bf16.mxu0 %v6955
  %8237 = vmatmul.mubr.bf16.gmra.mrb[0].mxu0 %v6953
  %v8238 = vpop.f32.mrb[0].mxu0
  %v8239 = vadd.f32 %v8062, %v8238
  %v8240 = vpop.f32.mrb[0].mxu0
  %v8241 = vpop.f32.mrb[0].mxu0
  %v8242 = vadd.f32 %v8065, %v8241
  %v8243 = vpop.f32.mrb[0].mxu0
  %8244 = vmatprep.mubr.bf16.mxu0 %v6957
  %8245 = vmatmul.mubr.bf16.gmra.mrb[0].mxu0 %v6955
  %v8246 = vpop.f32.mrb[0].mxu0
  %v8247 = vadd.f32 %v8070, %v8246
  %v8248 = vpop.f32.mrb[0].mxu0
  %v8249 = vpop.f32.mrb[0].mxu0
  %v8250 = vadd.f32 %v8073, %v8249
  %v8251 = vpop.f32.mrb[0].mxu0
  %8252 = vmatprep.mubr.bf16.mxu0 %v6959
  %8253 = vmatmul.mubr.bf16.gmra.mrb[0].mxu0 %v6957
  %v8254 = vpop.f32.mrb[0].mxu0
  %v8255 = vadd.f32 %v8078, %v8254
  %v8256 = vpop.f32.mrb[0].mxu0
  %v8257 = vpop.f32.mrb[0].mxu0
  %v8258 = vadd.f32 %v8081, %v8257
  %v8259 = vpop.f32.mrb[0].mxu0
  %8260 = vmatprep.mubr.bf16.mxu0 %v6961
  %8261 = vmatmul.mubr.bf16.gmra.mrb[0].mxu0 %v6959
  %v8262 = vpop.f32.mrb[0].mxu0
  %v8263 = vadd.f32 %v8086, %v8262
  %v8264 = vpop.f32.mrb[0].mxu0
  %v8265 = vpop.f32.mrb[0].mxu0
  %v8266 = vadd.f32 %v8089, %v8265
  %v8267 = vpop.f32.mrb[0].mxu0
  %8268 = vmatprep.mubr.bf16.mxu0 %v6963
  %8269 = vmatmul.mubr.bf16.gmra.mrb[0].mxu0 %v6961
  %v8270 = vpop.f32.mrb[0].mxu0
  %v8271 = vadd.f32 %v8094, %v8270
  %v8272 = vpop.f32.mrb[0].mxu0
  %v8273 = vpop.f32.mrb[0].mxu0
  %v8274 = vadd.f32 %v8097, %v8273
  %v8275 = vpop.f32.mrb[0].mxu0
  %8276 = vmatprep.mubr.bf16.mxu0 %v6965
  %8277 = vmatmul.mubr.bf16.gmra.mrb[0].mxu0 %v6963
  %v8278 = vpop.f32.mrb[0].mxu0
  %v8279 = vadd.f32 %v8102, %v8278
  %v8280 = vpop.f32.mrb[0].mxu0
  %v8281 = vpop.f32.mrb[0].mxu0
  %v8282 = vadd.f32 %v8105, %v8281
  %v8283 = vpop.f32.mrb[0].mxu0
  %8284 = vmatprep.mubr.bf16.mxu0 %v7000
  %8285 = vmatmul.mubr.bf16.gmra.mrb[0].mxu0 %v6965
  %v8286 = vpop.f32.mrb[0].mxu0
  %v8287 = vadd.f32 %v8110, %v8286
  %v8288 = vpop.f32.mrb[0].mxu0
  %v8289 = vpop.f32.mrb[0].mxu0
  %v8290 = vadd.f32 %v8113, %v8289
  %v8291 = vpop.f32.mrb[0].mxu0
  %8292 = vmatprep.mubr.bf16.mxu0 %v7002
  %8293 = vmatmul.mubr.bf16.gmra.mrb[0].mxu0 %v6967
  %v8294 = vpop.f32.mrb[0].mxu0
  %v8295 = vadd.f32 %v8118, %v8294
  %v8296 = vpop.f32.mrb[0].mxu0
  %v8297 = vpop.f32.mrb[0].mxu0
  %v8298 = vadd.f32 %v8121, %v8297
  %v8299 = vpop.f32.mrb[0].mxu0
  %8300 = vdwg.mxu0
  %8301 = vmatprep.subr.bf16.mxu0 0
  %8302 = vmatpush1.bf16.msra.mxu0 %v7835
  %8303 = vmatprep.subr.bf16.mxu0 0
  %8304 = vmatpush1.bf16.msra.mxu0 %v7836
  %8305 = vmatprep.subr.bf16.mxu0 0
  %8306 = vmatpush1.bf16.msra.mxu0 %v7837
  %8307 = vmatprep.subr.bf16.mxu0 0
  %8308 = vmatpush1.bf16.msra.mxu0 %v7838
  %8309 = vmatprep.subr.bf16.mxu0 0
  %8310 = vmatpush1.bf16.msra.mxu0 %v7839
  %8311 = vmatprep.subr.bf16.mxu0 0
  %8312 = vmatpush1.bf16.msra.mxu0 %v7840
  %8313 = vmatprep.subr.bf16.mxu0 0
  %8314 = vmatpush1.bf16.msra.mxu0 %v7841
  %8315 = vmatprep.subr.bf16.mxu0 0
  %8316 = vmatpush1.bf16.msra.mxu0 %v7842
  %8317 = vmatprep.subr.bf16.mxu0 0
  %8318 = vmatpush1.bf16.msra.mxu0 %v7843
  %8319 = vmatprep.subr.bf16.mxu0 0
  %8320 = vmatpush1.bf16.msra.mxu0 %v7844
  %8321 = vmatprep.subr.bf16.mxu0 0
  %8322 = vmatpush1.bf16.msra.mxu0 %v7845
  %8323 = vmatprep.subr.bf16.mxu0 0
  %8324 = vmatpush1.bf16.msra.mxu0 %v7846
  %8325 = vmatprep.subr.bf16.mxu0 0
  %8326 = vmatpush1.bf16.msra.mxu0 %v7847
  %8327 = vmatprep.subr.bf16.mxu0 0
  %8328 = vmatpush1.bf16.msra.mxu0 %v7848
  %8329 = vmatprep.subr.bf16.mxu0 0
  %8330 = vmatpush1.bf16.msra.mxu0 %v7849
  %8331 = vmatprep.subr.bf16.mxu0 0
  %8332 = vmatpush1.bf16.msra.mxu0 %v7850
  %8333 = vmatprep.mubr.bf16.mxu0 %v7122
  %8334 = vmatmul.mubr.bf16.gmra.mrb[0].mxu0 %v7020
  %v8335 = vpop.f32.mrb[0].mxu0
  %v8336 = vadd.f32 %v8159, %v8335
  %v8337 = vpop.f32.mrb[0].mxu0
  %v8338 = vpop.f32.mrb[0].mxu0
  %v8339 = vadd.f32 %v8162, %v8338
  %v8340 = vpop.f32.mrb[0].mxu0
  %8341 = vmatprep.mubr.bf16.mxu0 %v7124
  %8342 = vmatmul.mubr.bf16.gmra.mrb[0].mxu0 %v7024
  %v8343 = vpop.f32.mrb[0].mxu0
  %v8344 = vadd.f32 %v8167, %v8343
  %v8345 = vpop.f32.mrb[0].mxu0
  %v8346 = vpop.f32.mrb[0].mxu0
  %v8347 = vadd.f32 %v8170, %v8346
  %v8348 = vpop.f32.mrb[0].mxu0
  %8349 = vmatprep.mubr.bf16.mxu0 %v7126
  %8350 = vmatmul.mubr.bf16.gmra.mrb[0].mxu0 %v7028
  %v8351 = vpop.f32.mrb[0].mxu0
  %v8352 = vadd.f32 %v8175, %v8351
  %v8353 = vpop.f32.mrb[0].mxu0
  %v8354 = vpop.f32.mrb[0].mxu0
  %v8355 = vadd.f32 %v8178, %v8354
  %v8356 = vpop.f32.mrb[0].mxu0
  %8357 = vmatprep.mubr.bf16.mxu0 %v7128
  %8358 = vmatmul.mubr.bf16.gmra.mrb[0].mxu0 %v7032
  %v8359 = vpop.f32.mrb[0].mxu0
  %v8360 = vadd.f32 %v8183, %v8359
  %v8361 = vpop.f32.mrb[0].mxu0
  %v8362 = vpop.f32.mrb[0].mxu0
  %v8363 = vadd.f32 %v8186, %v8362
  %v8364 = vpop.f32.mrb[0].mxu0
  %8365 = vmatprep.mubr.bf16.mxu0 %v7130
  %8366 = vmatmul.mubr.bf16.gmra.mrb[0].mxu0 %v7036
  %v8367 = vpop.f32.mrb[0].mxu0
  %v8368 = vadd.f32 %v8191, %v8367
  %v8369 = vpop.f32.mrb[0].mxu0
  %v8370 = vpop.f32.mrb[0].mxu0
  %v8371 = vadd.f32 %v8194, %v8370
  %v8372 = vpop.f32.mrb[0].mxu0
  %8373 = vmatprep.mubr.bf16.mxu0 %v7132
  %8374 = vmatmul.mubr.bf16.gmra.mrb[0].mxu0 %v7040
  %v8375 = vpop.f32.mrb[0].mxu0
  %v8376 = vadd.f32 %v8199, %v8375
  %v8377 = vpop.f32.mrb[0].mxu0
  %v8378 = vpop.f32.mrb[0].mxu0
  %v8379 = vadd.f32 %v8202, %v8378
  %v8380 = vpop.f32.mrb[0].mxu0
  %8381 = vmatprep.mubr.bf16.mxu0 %v7134
  %8382 = vmatmul.mubr.bf16.gmra.mrb[0].mxu0 %v7044
  %v8383 = vpop.f32.mrb[0].mxu0
  %v8384 = vadd.f32 %v8207, %v8383
  %v8385 = vpop.f32.mrb[0].mxu0
  %v8386 = vpop.f32.mrb[0].mxu0
  %v8387 = vadd.f32 %v8210, %v8386
  %v8388 = vpop.f32.mrb[0].mxu0
  %8389 = vmatprep.mubr.bf16.mxu0 %v7136
  %8390 = vmatmul.mubr.bf16.gmra.mrb[0].mxu0 %v7048
  %v8391 = vpop.f32.mrb[0].mxu0
  %v8392 = vadd.f32 %v8215, %v8391
  %v8393 = vpop.f32.mrb[0].mxu0
  %v8394 = vpop.f32.mrb[0].mxu0
  %v8395 = vadd.f32 %v8218, %v8394
  %v8396 = vpop.f32.mrb[0].mxu0
  %8397 = vmatprep.mubr.bf16.mxu0 %v7138
  %8398 = vmatmul.mubr.bf16.gmra.mrb[0].mxu0 %v7052
  %v8399 = vpop.f32.mrb[0].mxu0
  %v8400 = vadd.f32 %v8223, %v8399
  %v8401 = vpop.f32.mrb[0].mxu0
  %v8402 = vpop.f32.mrb[0].mxu0
  %v8403 = vadd.f32 %v8226, %v8402
  %v8404 = vpop.f32.mrb[0].mxu0
  %8405 = vmatprep.mubr.bf16.mxu0 %v7140
  %8406 = vmatmul.mubr.bf16.gmra.mrb[0].mxu0 %v7056
  %v8407 = vpop.f32.mrb[0].mxu0
  %v8408 = vadd.f32 %v8231, %v8407
  %v8409 = vpop.f32.mrb[0].mxu0
  %v8410 = vpop.f32.mrb[0].mxu0
  %v8411 = vadd.f32 %v8234, %v8410
  %v8412 = vpop.f32.mrb[0].mxu0
  %8413 = vmatprep.mubr.bf16.mxu0 %v7142
  %8414 = vmatmul.mubr.bf16.gmra.mrb[0].mxu0 %v7060
  %v8415 = vpop.f32.mrb[0].mxu0
  %v8416 = vadd.f32 %v8239, %v8415
  %v8417 = vpop.f32.mrb[0].mxu0
  %v8418 = vpop.f32.mrb[0].mxu0
  %v8419 = vadd.f32 %v8242, %v8418
  %v8420 = vpop.f32.mrb[0].mxu0
  %8421 = vmatprep.mubr.bf16.mxu0 %v7144
  %8422 = vmatmul.mubr.bf16.gmra.mrb[0].mxu0 %v7064
  %v8423 = vpop.f32.mrb[0].mxu0
  %v8424 = vadd.f32 %v8247, %v8423
  %v8425 = vpop.f32.mrb[0].mxu0
  %v8426 = vpop.f32.mrb[0].mxu0
  %v8427 = vadd.f32 %v8250, %v8426
  %v8428 = vpop.f32.mrb[0].mxu0
  %8429 = vmatprep.mubr.bf16.mxu0 %v7146
  %8430 = vmatmul.mubr.bf16.gmra.mrb[0].mxu0 %v7068
  %v8431 = vpop.f32.mrb[0].mxu0
  %v8432 = vadd.f32 %v8255, %v8431
  %v8433 = vpop.f32.mrb[0].mxu0
  %v8434 = vpop.f32.mrb[0].mxu0
  %v8435 = vadd.f32 %v8258, %v8434
  %v8436 = vpop.f32.mrb[0].mxu0
  %8437 = vmatprep.mubr.bf16.mxu0 %v7148
  %8438 = vmatmul.mubr.bf16.gmra.mrb[0].mxu0 %v7072
  %v8439 = vpop.f32.mrb[0].mxu0
  %v8440 = vadd.f32 %v8263, %v8439
  %v8441 = vpop.f32.mrb[0].mxu0
  %v8442 = vpop.f32.mrb[0].mxu0
  %v8443 = vadd.f32 %v8266, %v8442
  %v8444 = vpop.f32.mrb[0].mxu0
  %8445 = vmatprep.mubr.bf16.mxu0 %v7150
  %8446 = vmatmul.mubr.bf16.gmra.mrb[0].mxu0 %v7076
  %v8447 = vpop.f32.mrb[0].mxu0
  %v8448 = vadd.f32 %v8271, %v8447
  %v8449 = vpop.f32.mrb[0].mxu0
  %v8450 = vpop.f32.mrb[0].mxu0
  %v8451 = vadd.f32 %v8274, %v8450
  %v8452 = vpop.f32.mrb[0].mxu0
  %8453 = vmatprep.mubr.bf16.mxu0 %v7152
  %8454 = vmatmul.mubr.bf16.gmra.mrb[0].mxu0 %v7080
  %v8455 = vpop.f32.mrb[0].mxu0
  %v8456 = vadd.f32 %v8279, %v8455
  %v8457 = vpop.f32.mrb[0].mxu0
  %v8458 = vpop.f32.mrb[0].mxu0
  %v8459 = vadd.f32 %v8282, %v8458
  %v8460 = vpop.f32.mrb[0].mxu0
  %8461 = vmatprep.mubr.bf16.mxu0 %v7154
  %8462 = vmatmul.mubr.bf16.gmra.mrb[0].mxu0 %v7089
  %v8463 = vpop.f32.mrb[0].mxu0
  %v8464 = vadd.f32 %v8287, %v8463
  %v8465 = vpop.f32.mrb[0].mxu0
  %v8466 = vpop.f32.mrb[0].mxu0
  %v8467 = vadd.f32 %v8290, %v8466
  %v8468 = vpop.f32.mrb[0].mxu0
  %8469 = vmatprep.mubr.bf16.mxu0 %v7156
  %8470 = vmatmul.mubr.bf16.gmra.mrb[0].mxu0 %v7098
  %v8471 = vpop.f32.mrb[0].mxu0
  %v8472 = vadd.f32 %v8295, %v8471
  %v8473 = vpop.f32.mrb[0].mxu0
  %v8474 = vpop.f32.mrb[0].mxu0
  %v8475 = vadd.f32 %v8298, %v8474
  %v8476 = vpop.f32.mrb[0].mxu0
  %8477 = vdwg.mxu0
  %8478 = vmatprep.subr.bf16.mxu0 0
  %8479 = vmatpush1.bf16.msra.mxu0 %v7851
  %8480 = vmatprep.subr.bf16.mxu0 0
  %8481 = vmatpush1.bf16.msra.mxu0 %v7852
  %8482 = vmatprep.subr.bf16.mxu0 0
  %8483 = vmatpush1.bf16.msra.mxu0 %v7853
  %8484 = vmatprep.subr.bf16.mxu0 0
  %8485 = vmatpush1.bf16.msra.mxu0 %v7854
  %8486 = vmatprep.subr.bf16.mxu0 0
  %8487 = vmatpush1.bf16.msra.mxu0 %v7855
  %8488 = vmatprep.subr.bf16.mxu0 0
  %8489 = vmatpush1.bf16.msra.mxu0 %v7856
  %8490 = vmatprep.subr.bf16.mxu0 0
  %8491 = vmatpush1.bf16.msra.mxu0 %v7857
  %8492 = vmatprep.subr.bf16.mxu0 0
  %8493 = vmatpush1.bf16.msra.mxu0 %v7858
  %8494 = vmatprep.subr.bf16.mxu0 0
  %8495 = vmatpush1.bf16.msra.mxu0 %v7859
  %8496 = vmatprep.subr.bf16.mxu0 0
  %8497 = vmatpush1.bf16.msra.mxu0 %v7860
  %8498 = vmatprep.subr.bf16.mxu0 0
  %8499 = vmatpush1.bf16.msra.mxu0 %v7861
  %8500 = vmatprep.subr.bf16.mxu0 0
  %8501 = vmatpush1.bf16.msra.mxu0 %v7862
  %8502 = vmatprep.subr.bf16.mxu0 0
  %8503 = vmatpush1.bf16.msra.mxu0 %v7863
  %8504 = vmatprep.subr.bf16.mxu0 0
  %8505 = vmatpush1.bf16.msra.mxu0 %v7864
  %8506 = vmatprep.subr.bf16.mxu0 0
  %8507 = vmatpush1.bf16.msra.mxu0 %v7865
  %8508 = vmatprep.subr.bf16.mxu0 0
  %8509 = vmatpush1.bf16.msra.mxu0 %v7866
  %8510 = vmatprep.mubr.bf16.mxu0 %v7209
  %8511 = vmatmul.mubr.bf16.gmra.mrb[0].mxu0 %v7187
  %v8512 = vpop.f32.mrb[0].mxu0
  %v8513 = vadd.f32 %v8336, %v8512
  %v8514 = vpop.f32.mrb[0].mxu0
  %v8515 = vpop.f32.mrb[0].mxu0
  %v8516 = vadd.f32 %v8339, %v8515
  %v8517 = vpop.f32.mrb[0].mxu0
  %8518 = vmatprep.mubr.bf16.mxu0 %v7213
  %8519 = vmatmul.mubr.bf16.gmra.mrb[0].mxu0 %v7126
  %v8520 = vpop.f32.mrb[0].mxu0
  %v8521 = vadd.f32 %v8344, %v8520
  %v8522 = vpop.f32.mrb[0].mxu0
  %v8523 = vpop.f32.mrb[0].mxu0
  %v8524 = vadd.f32 %v8347, %v8523
  %v8525 = vpop.f32.mrb[0].mxu0
  %8526 = vmatprep.mubr.bf16.mxu0 %v7217
  %8527 = vmatmul.mubr.bf16.gmra.mrb[0].mxu0 %v7128
  %v8528 = vpop.f32.mrb[0].mxu0
  %v8529 = vadd.f32 %v8352, %v8528
  %v8530 = vpop.f32.mrb[0].mxu0
  %v8531 = vpop.f32.mrb[0].mxu0
  %v8532 = vadd.f32 %v8355, %v8531
  %v8533 = vpop.f32.mrb[0].mxu0
  %8534 = vmatprep.mubr.bf16.mxu0 %v7221
  %8535 = vmatmul.mubr.bf16.gmra.mrb[0].mxu0 %v7130
  %v8536 = vpop.f32.mrb[0].mxu0
  %v8537 = vadd.f32 %v8360, %v8536
  %v8538 = vpop.f32.mrb[0].mxu0
  %v8539 = vpop.f32.mrb[0].mxu0
  %v8540 = vadd.f32 %v8363, %v8539
  %v8541 = vpop.f32.mrb[0].mxu0
  %8542 = vmatprep.mubr.bf16.mxu0 %v7225
  %8543 = vmatmul.mubr.bf16.gmra.mrb[0].mxu0 %v7132
  %v8544 = vpop.f32.mrb[0].mxu0
  %v8545 = vadd.f32 %v8368, %v8544
  %v8546 = vpop.f32.mrb[0].mxu0
  %v8547 = vpop.f32.mrb[0].mxu0
  %v8548 = vadd.f32 %v8371, %v8547
  %v8549 = vpop.f32.mrb[0].mxu0
  %8550 = vmatprep.mubr.bf16.mxu0 %v7229
  %8551 = vmatmul.mubr.bf16.gmra.mrb[0].mxu0 %v7134
  %v8552 = vpop.f32.mrb[0].mxu0
  %v8553 = vadd.f32 %v8376, %v8552
  %v8554 = vpop.f32.mrb[0].mxu0
  %v8555 = vpop.f32.mrb[0].mxu0
  %v8556 = vadd.f32 %v8379, %v8555
  %v8557 = vpop.f32.mrb[0].mxu0
  %8558 = vmatprep.mubr.bf16.mxu0 %v7233
  %8559 = vmatmul.mubr.bf16.gmra.mrb[0].mxu0 %v7136
  %v8560 = vpop.f32.mrb[0].mxu0
  %v8561 = vadd.f32 %v8384, %v8560
  %v8562 = vpop.f32.mrb[0].mxu0
  %v8563 = vpop.f32.mrb[0].mxu0
  %v8564 = vadd.f32 %v8387, %v8563
  %v8565 = vpop.f32.mrb[0].mxu0
  %8566 = vmatprep.mubr.bf16.mxu0 %v7237
  %8567 = vmatmul.mubr.bf16.gmra.mrb[0].mxu0 %v7138
  %v8568 = vpop.f32.mrb[0].mxu0
  %v8569 = vadd.f32 %v8392, %v8568
  %v8570 = vpop.f32.mrb[0].mxu0
  %v8571 = vpop.f32.mrb[0].mxu0
  %v8572 = vadd.f32 %v8395, %v8571
  %v8573 = vpop.f32.mrb[0].mxu0
  %8574 = vmatprep.mubr.bf16.mxu0 %v7241
  %8575 = vmatmul.mubr.bf16.gmra.mrb[0].mxu0 %v7140
  %v8576 = vpop.f32.mrb[0].mxu0
  %v8577 = vadd.f32 %v8400, %v8576
  %v8578 = vpop.f32.mrb[0].mxu0
  %v8579 = vpop.f32.mrb[0].mxu0
  %v8580 = vadd.f32 %v8403, %v8579
  %v8581 = vpop.f32.mrb[0].mxu0
  %8582 = vmatprep.mubr.bf16.mxu0 %v7245
  %8583 = vmatmul.mubr.bf16.gmra.mrb[0].mxu0 %v7142
  %v8584 = vpop.f32.mrb[0].mxu0
  %v8585 = vadd.f32 %v8408, %v8584
  %v8586 = vpop.f32.mrb[0].mxu0
  %v8587 = vpop.f32.mrb[0].mxu0
  %v8588 = vadd.f32 %v8411, %v8587
  %v8589 = vpop.f32.mrb[0].mxu0
  %8590 = vmatprep.mubr.bf16.mxu0 %v7249
  %8591 = vmatmul.mubr.bf16.gmra.mrb[0].mxu0 %v7144
  %v8592 = vpop.f32.mrb[0].mxu0
  %v8593 = vadd.f32 %v8416, %v8592
  %v8594 = vpop.f32.mrb[0].mxu0
  %v8595 = vpop.f32.mrb[0].mxu0
  %v8596 = vadd.f32 %v8419, %v8595
  %v8597 = vpop.f32.mrb[0].mxu0
  %8598 = vmatprep.mubr.bf16.mxu0 %v7253
  %8599 = vmatmul.mubr.bf16.gmra.mrb[0].mxu0 %v7146
  %v8600 = vpop.f32.mrb[0].mxu0
  %v8601 = vadd.f32 %v8424, %v8600
  %v8602 = vpop.f32.mrb[0].mxu0
  %v8603 = vpop.f32.mrb[0].mxu0
  %v8604 = vadd.f32 %v8427, %v8603
  %v8605 = vpop.f32.mrb[0].mxu0
  %8606 = vmatprep.mubr.bf16.mxu0 %v7257
  %8607 = vmatmul.mubr.bf16.gmra.mrb[0].mxu0 %v7148
  %v8608 = vpop.f32.mrb[0].mxu0
  %v8609 = vadd.f32 %v8432, %v8608
  %v8610 = vpop.f32.mrb[0].mxu0
  %v8611 = vpop.f32.mrb[0].mxu0
  %v8612 = vadd.f32 %v8435, %v8611
  %v8613 = vpop.f32.mrb[0].mxu0
  %8614 = vmatprep.mubr.bf16.mxu0 %v7261
  %8615 = vmatmul.mubr.bf16.gmra.mrb[0].mxu0 %v7150
  %v8616 = vpop.f32.mrb[0].mxu0
  %v8617 = vadd.f32 %v8440, %v8616
  %v8618 = vpop.f32.mrb[0].mxu0
  %v8619 = vpop.f32.mrb[0].mxu0
  %v8620 = vadd.f32 %v8443, %v8619
  %v8621 = vpop.f32.mrb[0].mxu0
  %8622 = vmatprep.mubr.bf16.mxu0 %v7265
  %8623 = vmatmul.mubr.bf16.gmra.mrb[0].mxu0 %v7152
  %v8624 = vpop.f32.mrb[0].mxu0
  %v8625 = vadd.f32 %v8448, %v8624
  %v8626 = vpop.f32.mrb[0].mxu0
  %v8627 = vpop.f32.mrb[0].mxu0
  %v8628 = vadd.f32 %v8451, %v8627
  %v8629 = vpop.f32.mrb[0].mxu0
  %8630 = vmatprep.mubr.bf16.mxu0 %v7269
  %8631 = vmatmul.mubr.bf16.gmra.mrb[0].mxu0 %v7154
  %v8632 = vpop.f32.mrb[0].mxu0
  %v8633 = vadd.f32 %v8456, %v8632
  %v8634 = vpop.f32.mrb[0].mxu0
  %v8635 = vpop.f32.mrb[0].mxu0
  %v8636 = vadd.f32 %v8459, %v8635
  %v8637 = vpop.f32.mrb[0].mxu0
  %8638 = vmatprep.mubr.bf16.mxu0 %v7278
  %8639 = vmatmul.mubr.bf16.gmra.mrb[0].mxu0 %v7189
  %v8640 = vpop.f32.mrb[0].mxu0
  %v8641 = vadd.f32 %v8464, %v8640
  %v8642 = vpop.f32.mrb[0].mxu0
  %v8643 = vpop.f32.mrb[0].mxu0
  %v8644 = vadd.f32 %v8467, %v8643
  %v8645 = vpop.f32.mrb[0].mxu0
  %8646 = vmatprep.mubr.bf16.mxu0 %v7287
  %8647 = vmatmul.mubr.bf16.gmra.mrb[0].mxu0 %v7191
  %v8648 = vpop.f32.mrb[0].mxu0
  %v8649 = vadd.f32 %v8472, %v8648
  %v8650 = vpop.f32.mrb[0].mxu0
  %v8651 = vpop.f32.mrb[0].mxu0
  %v8652 = vadd.f32 %v8475, %v8651
  %v8653 = vpop.f32.mrb[0].mxu0
  %8654 = vdwg.mxu0
  %8655 = vmatprep.subr.bf16.mxu0 0
  %8656 = vmatpush1.bf16.msra.mxu0 %v7867
  %8657 = vmatprep.subr.bf16.mxu0 0
  %8658 = vmatpush1.bf16.msra.mxu0 %v7868
  %8659 = vmatprep.subr.bf16.mxu0 0
  %8660 = vmatpush1.bf16.msra.mxu0 %v7869
  %8661 = vmatprep.subr.bf16.mxu0 0
  %8662 = vmatpush1.bf16.msra.mxu0 %v7870
  %8663 = vmatprep.subr.bf16.mxu0 0
  %8664 = vmatpush1.bf16.msra.mxu0 %v7871
  %8665 = vmatprep.subr.bf16.mxu0 0
  %8666 = vmatpush1.bf16.msra.mxu0 %v7872
  %8667 = vmatprep.subr.bf16.mxu0 0
  %8668 = vmatpush1.bf16.msra.mxu0 %v7873
  %8669 = vmatprep.subr.bf16.mxu0 0
  %8670 = vmatpush1.bf16.msra.mxu0 %v7874
  %8671 = vmatprep.subr.bf16.mxu0 0
  %8672 = vmatpush1.bf16.msra.mxu0 0
  %8673 = vmatprep.subr.bf16.mxu0 0
  %8674 = vmatpush1.bf16.msra.mxu0 0
  %8675 = vmatprep.subr.bf16.mxu0 0
  %8676 = vmatpush1.bf16.msra.mxu0 0
  %8677 = vmatprep.subr.bf16.mxu0 0
  %8678 = vmatpush1.bf16.msra.mxu0 0
  %8679 = vmatprep.subr.bf16.mxu0 0
  %8680 = vmatpush1.bf16.msra.mxu0 0
  %8681 = vmatprep.subr.bf16.mxu0 0
  %8682 = vmatpush1.bf16.msra.mxu0 0
  %8683 = vmatprep.subr.bf16.mxu0 0
  %8684 = vmatpush1.bf16.msra.mxu0 0
  %8685 = vmatprep.subr.bf16.mxu0 0
  %8686 = vmatpush1.bf16.msra.mxu0 0
  %8687 = vmatprep.mubr.bf16.mxu0 0
  %8688 = vmatmul.mubr.bf16.gmra.mrb[0].mxu0 %v7311
  %v8689 = vpop.f32.mrb[0].mxu0
  %v8690 = vadd.f32 %v8513, %v8689
  %v8691 = vpop.f32.mrb[0].mxu0
  %v8692 = vpop.f32.mrb[0].mxu0
  %v8693 = vadd.f32 %v8516, %v8692
  %v8694 = vpop.f32.mrb[0].mxu0
  %8695 = vmatprep.mubr.bf16.mxu0 0
  %8696 = vmatmul.mubr.bf16.gmra.mrb[0].mxu0 %v7313
  %v8697 = vpop.f32.mrb[0].mxu0
  %v8698 = vadd.f32 %v8521, %v8697
  %v8699 = vpop.f32.mrb[0].mxu0
  %v8700 = vpop.f32.mrb[0].mxu0
  %v8701 = vadd.f32 %v8524, %v8700
  %v8702 = vpop.f32.mrb[0].mxu0
  %8703 = vmatprep.mubr.bf16.mxu0 0
  %8704 = vmatmul.mubr.bf16.gmra.mrb[0].mxu0 %v7315
  %v8705 = vpop.f32.mrb[0].mxu0
  %v8706 = vadd.f32 %v8529, %v8705
  %v8707 = vpop.f32.mrb[0].mxu0
  %v8708 = vpop.f32.mrb[0].mxu0
  %v8709 = vadd.f32 %v8532, %v8708
  %v8710 = vpop.f32.mrb[0].mxu0
  %8711 = vmatprep.mubr.bf16.mxu0 0
  %8712 = vmatmul.mubr.bf16.gmra.mrb[0].mxu0 %v7317
  %v8713 = vpop.f32.mrb[0].mxu0
  %v8714 = vadd.f32 %v8537, %v8713
  %v8715 = vpop.f32.mrb[0].mxu0
  %v8716 = vpop.f32.mrb[0].mxu0
  %v8717 = vadd.f32 %v8540, %v8716
  %v8718 = vpop.f32.mrb[0].mxu0
  %8719 = vmatprep.mubr.bf16.mxu0 0
  %8720 = vmatmul.mubr.bf16.gmra.mrb[0].mxu0 %v7319
  %v8721 = vpop.f32.mrb[0].mxu0
  %v8722 = vadd.f32 %v8545, %v8721
  %v8723 = vpop.f32.mrb[0].mxu0
  %v8724 = vpop.f32.mrb[0].mxu0
  %v8725 = vadd.f32 %v8548, %v8724
  %v8726 = vpop.f32.mrb[0].mxu0
  %8727 = vmatprep.mubr.bf16.mxu0 0
  %8728 = vmatmul.mubr.bf16.gmra.mrb[0].mxu0 %v7321
  %v8729 = vpop.f32.mrb[0].mxu0
  %v8730 = vadd.f32 %v8553, %v8729
  %v8731 = vpop.f32.mrb[0].mxu0
  %v8732 = vpop.f32.mrb[0].mxu0
  %v8733 = vadd.f32 %v8556, %v8732
  %v8734 = vpop.f32.mrb[0].mxu0
  %8735 = vmatprep.mubr.bf16.mxu0 0
  %8736 = vmatmul.mubr.bf16.gmra.mrb[0].mxu0 %v7323
  %v8737 = vpop.f32.mrb[0].mxu0
  %v8738 = vadd.f32 %v8561, %v8737
  %v8739 = vpop.f32.mrb[0].mxu0
  %v8740 = vpop.f32.mrb[0].mxu0
  %v8741 = vadd.f32 %v8564, %v8740
  %v8742 = vpop.f32.mrb[0].mxu0
  %8743 = vmatprep.mubr.bf16.mxu0 0
  %8744 = vmatmul.mubr.bf16.gmra.mrb[0].mxu0 %v7325
  %v8745 = vpop.f32.mrb[0].mxu0
  %v8746 = vadd.f32 %v8569, %v8745
  %v8747 = vpop.f32.mrb[0].mxu0
  %v8748 = vpop.f32.mrb[0].mxu0
  %v8749 = vadd.f32 %v8572, %v8748
  %v8750 = vpop.f32.mrb[0].mxu0
  %8751 = vmatprep.mubr.bf16.mxu0 0
  %8752 = vmatmul.mubr.bf16.gmra.mrb[0].mxu0 %v7327
  %v8753 = vpop.f32.mrb[0].mxu0
  %v8754 = vadd.f32 %v8577, %v8753
  %v8755 = vpop.f32.mrb[0].mxu0
  %v8756 = vpop.f32.mrb[0].mxu0
  %v8757 = vadd.f32 %v8580, %v8756
  %v8758 = vpop.f32.mrb[0].mxu0
  %8759 = vmatprep.mubr.bf16.mxu0 0
  %8760 = vmatmul.mubr.bf16.gmra.mrb[0].mxu0 %v7329
  %v8761 = vpop.f32.mrb[0].mxu0
  %v8762 = vadd.f32 %v8585, %v8761
  %v8763 = vpop.f32.mrb[0].mxu0
  %v8764 = vpop.f32.mrb[0].mxu0
  %v8765 = vadd.f32 %v8588, %v8764
  %v8766 = vpop.f32.mrb[0].mxu0
  %8767 = vmatprep.mubr.bf16.mxu0 0
  %8768 = vmatmul.mubr.bf16.gmra.mrb[0].mxu0 %v7331
  %v8769 = vpop.f32.mrb[0].mxu0
  %v8770 = vadd.f32 %v8593, %v8769
  %v8771 = vpop.f32.mrb[0].mxu0
  %v8772 = vpop.f32.mrb[0].mxu0
  %v8773 = vadd.f32 %v8596, %v8772
  %v8774 = vpop.f32.mrb[0].mxu0
  %8775 = vmatprep.mubr.bf16.mxu0 0
  %8776 = vmatmul.mubr.bf16.gmra.mrb[0].mxu0 %v7333
  %v8777 = vpop.f32.mrb[0].mxu0
  %v8778 = vadd.f32 %v8601, %v8777
  %v8779 = vpop.f32.mrb[0].mxu0
  %v8780 = vpop.f32.mrb[0].mxu0
  %v8781 = vadd.f32 %v8604, %v8780
  %v8782 = vpop.f32.mrb[0].mxu0
  %8783 = vmatprep.mubr.bf16.mxu0 0
  %8784 = vmatmul.mubr.bf16.gmra.mrb[0].mxu0 %v7335
  %v8785 = vpop.f32.mrb[0].mxu0
  %v8786 = vadd.f32 %v8609, %v8785
  %v8787 = vpop.f32.mrb[0].mxu0
  %v8788 = vpop.f32.mrb[0].mxu0
  %v8789 = vadd.f32 %v8612, %v8788
  %v8790 = vpop.f32.mrb[0].mxu0
  %8791 = vmatprep.mubr.bf16.mxu0 0
  %8792 = vmatmul.mubr.bf16.gmra.mrb[0].mxu0 %v7337
  %v8793 = vpop.f32.mrb[0].mxu0
  %v8794 = vadd.f32 %v8617, %v8793
  %v8795 = vpop.f32.mrb[0].mxu0
  %v8796 = vpop.f32.mrb[0].mxu0
  %v8797 = vadd.f32 %v8620, %v8796
  %v8798 = vpop.f32.mrb[0].mxu0
  %8799 = vmatprep.mubr.bf16.mxu0 0
  %8800 = vmatmul.mubr.bf16.gmra.mrb[0].mxu0 %v7339
  %v8801 = vpop.f32.mrb[0].mxu0
  %v8802 = vadd.f32 %v8625, %v8801
  %v8803 = vpop.f32.mrb[0].mxu0
  %v8804 = vpop.f32.mrb[0].mxu0
  %v8805 = vadd.f32 %v8628, %v8804
  %v8806 = vpop.f32.mrb[0].mxu0
  %8807 = vmatprep.mubr.bf16.mxu0 0
  %8808 = vmatmul.mubr.bf16.gmra.mrb[0].mxu0 %v7341
  %v8809 = vpop.f32.mrb[0].mxu0
  %v8810 = vadd.f32 %v8633, %v8809
  %v8811 = vpop.f32.mrb[0].mxu0
  %v8812 = vpop.f32.mrb[0].mxu0
  %v8813 = vadd.f32 %v8636, %v8812
  %v8814 = vpop.f32.mrb[0].mxu0
  %8815 = vmatprep.mubr.bf16.mxu0 0
  %8816 = vmatmul.mubr.bf16.gmra.mrb[0].mxu0 %v7343
  %v8817 = vpop.f32.mrb[0].mxu0
  %v8818 = vadd.f32 %v8641, %v8817
  %v8819 = vpop.f32.mrb[0].mxu0
  %v8820 = vpop.f32.mrb[0].mxu0
  %v8821 = vadd.f32 %v8644, %v8820
  %v8822 = vpop.f32.mrb[0].mxu0
  %8823 = vmatprep.mubr.bf16.mxu0 0
  %8824 = vmatmul.mubr.bf16.gmra.mrb[0].mxu0 %v7345
  %v8825 = vpop.f32.mrb[0].mxu0
  %v8826 = vadd.f32 %v8649, %v8825
  %v8827 = vpop.f32.mrb[0].mxu0
  %v8828 = vpop.f32.mrb[0].mxu0
  %v8829 = vadd.f32 %v8652, %v8828
  %v8830 = vpop.f32.mrb[0].mxu0
  %8831 = vdwg.mxu0
  %v8832 = vmax.f32 %v8690, 0.0
  %v8833 = vmax.f32 %v8693, 0.0
  %v8834 = vmax.f32 %v8698, 0.0
  %v8835 = vmax.f32 %v8701, 0.0
  %v8836 = vmax.f32 %v8706, 0.0
  %v8837 = vmax.f32 %v8709, 0.0
  %v8838 = vmax.f32 %v8714, 0.0
  %v8839 = vmax.f32 %v8717, 0.0
  %v8840 = vmax.f32 %v8722, 0.0
  %v8841 = vmax.f32 %v8725, 0.0
  %v8842 = vmax.f32 %v8730, 0.0
  %v8843 = vmax.f32 %v8733, 0.0
  %v8844 = vmax.f32 %v8738, 0.0
  %v8845 = vmax.f32 %v8741, 0.0
  %v8846 = vmax.f32 %v8746, 0.0
  %v8847 = vmax.f32 %v8749, 0.0
  %v8848 = vmax.f32 %v8754, 0.0
  %v8849 = vmax.f32 %v8757, 0.0
  %v8850 = vmax.f32 %v8762, 0.0
  %v8851 = vmax.f32 %v8765, 0.0
  %v8852 = vmax.f32 %v8770, 0.0
  %v8853 = vmax.f32 %v8773, 0.0
  %v8854 = vmax.f32 %v8778, 0.0
  %v8855 = vmax.f32 %v8781, 0.0
  %v8856 = vmax.f32 %v8786, 0.0
  %v8857 = vmax.f32 %v8789, 0.0
  %v8858 = vmax.f32 %v8794, 0.0
  %v8859 = vmax.f32 %v8797, 0.0
  %v8860 = vmax.f32 %v8802, 0.0
  %v8861 = vmax.f32 %v8805, 0.0
  %v8862 = vmax.f32 %v8810, 0.0
  %v8863 = vmax.f32 %v8813, 0.0
  %v8864 = vmax.f32 %v8818, 0.0
  %v8865 = vmax.f32 %v8821, 0.0
  %v8866 = vmax.f32 %v8826, 0.0
  %v8867 = vmax.f32 %v8829, 0.0
  %v8868 = vmul.f32 %v8832, %v798
  %v8869 = vmul.f32 %v8833, %v799
  %v8870 = vmul.f32 %v8834, %v800
  %v8871 = vmul.f32 %v8835, %v801
  %v8872 = vmul.f32 %v8836, %v802
  %v8873 = vmul.f32 %v8837, %v803
  %v8874 = vmul.f32 %v8838, %v804
  %v8875 = vmul.f32 %v8839, %v805
  %v8876 = vmul.f32 %v8840, %v806
  %v8877 = vmul.f32 %v8841, %v807
  %v8878 = vmul.f32 %v8842, %v808
  %v8879 = vmul.f32 %v8843, %v809
  %v8880 = vmul.f32 %v8844, %v810
  %v8881 = vmul.f32 %v8845, %v811
  %v8882 = vmul.f32 %v8846, %v812
  %v8883 = vmul.f32 %v8847, %v813
  %v8884 = vmul.f32 %v8848, %v814
  %v8885 = vmul.f32 %v8849, %v815
  %v8886 = vmul.f32 %v8850, %v816
  %v8887 = vmul.f32 %v8851, %v817
  %v8888 = vmul.f32 %v8852, %v818
  %v8889 = vmul.f32 %v8853, %v819
  %v8890 = vmul.f32 %v8854, %v820
  %v8891 = vmul.f32 %v8855, %v821
  %v8892 = vmul.f32 %v8856, %v822
  %v8893 = vmul.f32 %v8857, %v823
  %v8894 = vmul.f32 %v8858, %v824
  %v8895 = vmul.f32 %v8859, %v825
  %v8896 = vmul.f32 %v8860, %v826
  %v8897 = vmul.f32 %v8861, %v827
  %v8898 = vmul.f32 %v8862, %v828
  %v8899 = vmul.f32 %v8863, %v829
  %v8900 = vmul.f32 %v8864, %v830
  %v8901 = vmul.f32 %v8865, %v831
  %v8902 = vmul.f32 %v8866, %v832
  %v8903 = vmul.f32 %v8867, %v833
  %v8904 = vpack.c.bf16 %v8869, %v8868
  %v8905 = vpack.c.bf16 %v8871, %v8870
  %v8906 = vpack.c.bf16 %v8873, %v8872
  %v8907 = vpack.c.bf16 %v8875, %v8874
  %v8908 = vpack.c.bf16 %v8877, %v8876
  %v8909 = vpack.c.bf16 %v8879, %v8878
  %v8910 = vpack.c.bf16 %v8881, %v8880
  %v8911 = vpack.c.bf16 %v8883, %v8882
  %v8912 = vpack.c.bf16 %v8885, %v8884
  %v8913 = vpack.c.bf16 %v8887, %v8886
  %v8914 = vpack.c.bf16 %v8889, %v8888
  %v8915 = vpack.c.bf16 %v8891, %v8890
  %v8916 = vpack.c.bf16 %v8893, %v8892
  %v8917 = vpack.c.bf16 %v8895, %v8894
  %v8918 = vpack.c.bf16 %v8897, %v8896
  %v8919 = vpack.c.bf16 %v8899, %v8898
  %v8920 = vpack.c.bf16 %v8901, %v8900
  %v8921 = vpack.c.bf16 %v8903, %v8902
  %v8940 = vunpack.c.l.b16 %v8904
  %v8941 = vunpack.c.h.b16 %v8904
  %v8942 = vunpack.c.l.b16 %v8905
  %v8943 = vunpack.c.h.b16 %v8905
  %v8944 = vunpack.c.l.b16 %v8906
  %v8945 = vunpack.c.h.b16 %v8906
  %v8946 = vunpack.c.l.b16 %v8907
  %v8947 = vunpack.c.h.b16 %v8907
  %v8948 = vunpack.c.l.b16 %v8908
  %v8949 = vunpack.c.h.b16 %v8908
  %v8950 = vunpack.c.l.b16 %v8909
  %v8951 = vunpack.c.h.b16 %v8909
  %v8952 = vunpack.c.l.b16 %v8910
  %v8953 = vunpack.c.h.b16 %v8910
  %v8954 = vunpack.c.l.b16 %v8911
  %v8955 = vunpack.c.h.b16 %v8911
  %v8956 = vunpack.c.l.b16 %v8912
  %v8957 = vunpack.c.h.b16 %v8912
  %v8958 = vunpack.c.l.b16 %v8913
  %v8959 = vunpack.c.h.b16 %v8913
  %v8960 = vunpack.c.l.b16 %v8914
  %v8961 = vunpack.c.h.b16 %v8914
  %v8962 = vunpack.c.l.b16 %v8915
  %v8963 = vunpack.c.h.b16 %v8915
  %v8964 = vunpack.c.l.b16 %v8916
  %v8965 = vunpack.c.h.b16 %v8916
  %v8966 = vunpack.c.l.b16 %v8917
  %v8967 = vunpack.c.h.b16 %v8917
  %v8968 = vunpack.c.l.b16 %v8918
  %v8969 = vunpack.c.h.b16 %v8918
  %v8970 = vunpack.c.l.b16 %v8919
  %v8971 = vunpack.c.h.b16 %v8919
  %v8972 = vunpack.c.l.b16 %v8920
  %v8973 = vunpack.c.h.b16 %v8920
  %v8974 = vunpack.c.l.b16 %v8921
  %v8975 = vunpack.c.h.b16 %v8921
  %v8976 = vpack.c.b16 %v8940, %v8940
  %v8977 = vpack.c.b16 %v8941, %v8941
  %v8978 = vpack.c.b16 %v8942, %v8942
  %v8979 = vpack.c.b16 %v8943, %v8943
  %v8980 = vpack.c.b16 %v8944, %v8944
  %v8981 = vpack.c.b16 %v8945, %v8945
  %v8982 = vpack.c.b16 %v8946, %v8946
  %v8983 = vpack.c.b16 %v8947, %v8947
  %v8984 = vpack.c.b16 %v8948, %v8948
  %v8985 = vpack.c.b16 %v8949, %v8949
  %v8986 = vpack.c.b16 %v8950, %v8950
  %v8987 = vpack.c.b16 %v8951, %v8951
  %v8988 = vpack.c.b16 %v8952, %v8952
  %v8989 = vpack.c.b16 %v8953, %v8953
  %v8990 = vpack.c.b16 %v8954, %v8954
  %v8991 = vpack.c.b16 %v8955, %v8955
  %v8992 = vpack.c.b16 %v8956, %v8956
  %v8993 = vpack.c.b16 %v8957, %v8957
  %v8994 = vpack.c.b16 %v8958, %v8958
  %v8995 = vpack.c.b16 %v8959, %v8959
  %v8996 = vpack.c.b16 %v8960, %v8960
  %v8997 = vpack.c.b16 %v8961, %v8961
  %v8998 = vpack.c.b16 %v8962, %v8962
  %v8999 = vpack.c.b16 %v8963, %v8963
  %v9000 = vpack.c.b16 %v8964, %v8964
  %v9001 = vpack.c.b16 %v8965, %v8965
  %v9002 = vpack.c.b16 %v8966, %v8966
  %v9003 = vpack.c.b16 %v8967, %v8967
  %v9004 = vpack.c.b16 %v8968, %v8968
  %v9005 = vpack.c.b16 %v8969, %v8969
  %v9006 = vpack.c.b16 %v8970, %v8970
  %v9007 = vpack.c.b16 %v8971, %v8971
  %v9008 = vpack.c.b16 %v8972, %v8972
  %v9009 = vpack.c.b16 %v8973, %v8973
  %v9010 = vpack.c.b16 %v8974, %v8974
  %v9011 = vpack.c.b16 %v8975, %v8975
  %vm9012 = vsmask.f32 256
  %vm9013 = vsmask.f32 4368
  %vm9014 = vmor %vm9012, %vm9013
  %v9016 = vshrl.u32 %v8976, 16
  %v9018 = vrot.slane %v9016, 7
  %v9019 = vshll.u32 %v8976, 16
  %v9021 = vor.u32 %v9018, %v9019
  %v9022 = vrot.slane %v9018, 4
  %v9024 = vshrl.u32 %v8977, 16
  %v9026 = vrot.slane %v9024, 7
  %v9027 = vshll.u32 %v8977, 16
  %v9029 = vor.u32 %v9026, %v9027
  %v9030 = vsel %vm9014, %v9022, %v9029
  %v9031 = vrot.slane %v9026, 4
  %v9033 = vshrl.u32 %v8978, 16
  %v9035 = vrot.slane %v9033, 7
  %v9036 = vshll.u32 %v8978, 16
  %v9038 = vor.u32 %v9035, %v9036
  %v9039 = vsel %vm9014, %v9031, %v9038
  %v9040 = vrot.slane %v9035, 4
  %v9042 = vshrl.u32 %v8979, 16
  %v9044 = vrot.slane %v9042, 7
  %v9045 = vshll.u32 %v8979, 16
  %v9047 = vor.u32 %v9044, %v9045
  %v9048 = vsel %vm9014, %v9040, %v9047
  %v9049 = vrot.slane %v9044, 4
  %v9051 = vshrl.u32 %v8980, 16
  %v9053 = vrot.slane %v9051, 7
  %v9054 = vshll.u32 %v8980, 16
  %v9056 = vor.u32 %v9053, %v9054
  %v9057 = vsel %vm9014, %v9049, %v9056
  %v9058 = vrot.slane %v9053, 4
  %v9060 = vshrl.u32 %v8981, 16
  %v9062 = vrot.slane %v9060, 7
  %v9063 = vshll.u32 %v8981, 16
  %v9065 = vor.u32 %v9062, %v9063
  %v9066 = vsel %vm9014, %v9058, %v9065
  %v9067 = vrot.slane %v9062, 4
  %v9069 = vshrl.u32 %v8982, 16
  %v9071 = vrot.slane %v9069, 7
  %v9072 = vshll.u32 %v8982, 16
  %v9074 = vor.u32 %v9071, %v9072
  %v9075 = vsel %vm9014, %v9067, %v9074
  %v9076 = vrot.slane %v9071, 4
  %v9078 = vshrl.u32 %v8983, 16
  %v9080 = vrot.slane %v9078, 7
  %v9081 = vshll.u32 %v8983, 16
  %v9083 = vor.u32 %v9080, %v9081
  %v9084 = vsel %vm9014, %v9076, %v9083
  %v9085 = vrot.slane %v9080, 4
  %v9087 = vshrl.u32 %v8984, 16
  %v9089 = vrot.slane %v9087, 7
  %v9090 = vshll.u32 %v8984, 16
  %v9092 = vor.u32 %v9089, %v9090
  %v9093 = vsel %vm9014, %v9085, %v9092
  %v9094 = vrot.slane %v9089, 4
  %v9096 = vshrl.u32 %v8985, 16
  %v9098 = vrot.slane %v9096, 7
  %v9099 = vshll.u32 %v8985, 16
  %v9101 = vor.u32 %v9098, %v9099
  %v9102 = vsel %vm9014, %v9094, %v9101
  %v9103 = vrot.slane %v9098, 4
  %v9105 = vshrl.u32 %v8986, 16
  %v9107 = vrot.slane %v9105, 7
  %v9108 = vshll.u32 %v8986, 16
  %v9110 = vor.u32 %v9107, %v9108
  %v9111 = vsel %vm9014, %v9103, %v9110
  %v9112 = vrot.slane %v9107, 4
  %v9114 = vshrl.u32 %v8987, 16
  %v9116 = vrot.slane %v9114, 7
  %v9117 = vshll.u32 %v8987, 16
  %v9119 = vor.u32 %v9116, %v9117
  %v9120 = vsel %vm9014, %v9112, %v9119
  %v9121 = vrot.slane %v9116, 4
  %v9123 = vshrl.u32 %v8988, 16
  %v9125 = vrot.slane %v9123, 7
  %v9126 = vshll.u32 %v8988, 16
  %v9128 = vor.u32 %v9125, %v9126
  %v9129 = vsel %vm9014, %v9121, %v9128
  %v9130 = vrot.slane %v9125, 4
  %v9132 = vshrl.u32 %v8989, 16
  %v9134 = vrot.slane %v9132, 7
  %v9135 = vshll.u32 %v8989, 16
  %v9137 = vor.u32 %v9134, %v9135
  %v9138 = vsel %vm9014, %v9130, %v9137
  %v9139 = vrot.slane %v9134, 4
  %v9141 = vshrl.u32 %v8990, 16
  %v9143 = vrot.slane %v9141, 7
  %v9144 = vshll.u32 %v8990, 16
  %v9146 = vor.u32 %v9143, %v9144
  %v9147 = vsel %vm9014, %v9139, %v9146
  %v9148 = vrot.slane %v9143, 4
  %v9150 = vshrl.u32 %v8991, 16
  %v9152 = vrot.slane %v9150, 7
  %v9153 = vshll.u32 %v8991, 16
  %v9155 = vor.u32 %v9152, %v9153
  %v9156 = vsel %vm9014, %v9148, %v9155
  %v9157 = vrot.slane %v9152, 4
  %v9159 = vshrl.u32 %v8992, 16
  %v9161 = vrot.slane %v9159, 7
  %v9162 = vshll.u32 %v8992, 16
  %v9164 = vor.u32 %v9161, %v9162
  %v9165 = vsel %vm9014, %v9157, %v9164
  %v9166 = vrot.slane %v9161, 4
  %v9168 = vshrl.u32 %v8993, 16
  %v9170 = vrot.slane %v9168, 7
  %v9171 = vshll.u32 %v8993, 16
  %v9173 = vor.u32 %v9170, %v9171
  %v9174 = vsel %vm9014, %v9166, %v9173
  %v9175 = vrot.slane %v9170, 4
  %v9177 = vshrl.u32 %v8994, 16
  %v9179 = vrot.slane %v9177, 7
  %v9180 = vshll.u32 %v8994, 16
  %v9182 = vor.u32 %v9179, %v9180
  %v9183 = vsel %vm9014, %v9175, %v9182
  %v9184 = vrot.slane %v9179, 4
  %v9186 = vshrl.u32 %v8995, 16
  %v9188 = vrot.slane %v9186, 7
  %v9189 = vshll.u32 %v8995, 16
  %v9191 = vor.u32 %v9188, %v9189
  %v9192 = vsel %vm9014, %v9184, %v9191
  %v9193 = vrot.slane %v9188, 4
  %v9195 = vshrl.u32 %v8996, 16
  %v9197 = vrot.slane %v9195, 7
  %v9198 = vshll.u32 %v8996, 16
  %v9200 = vor.u32 %v9197, %v9198
  %v9201 = vsel %vm9014, %v9193, %v9200
  %v9202 = vrot.slane %v9197, 4
  %v9204 = vshrl.u32 %v8997, 16
  %v9206 = vrot.slane %v9204, 7
  %v9207 = vshll.u32 %v8997, 16
  %v9209 = vor.u32 %v9206, %v9207
  %v9210 = vsel %vm9014, %v9202, %v9209
  %v9211 = vrot.slane %v9206, 4
  %v9213 = vshrl.u32 %v8998, 16
  %v9215 = vrot.slane %v9213, 7
  %v9216 = vshll.u32 %v8998, 16
  %v9218 = vor.u32 %v9215, %v9216
  %v9219 = vsel %vm9014, %v9211, %v9218
  %v9220 = vrot.slane %v9215, 4
  %v9222 = vshrl.u32 %v8999, 16
  %v9224 = vrot.slane %v9222, 7
  %v9225 = vshll.u32 %v8999, 16
  %v9227 = vor.u32 %v9224, %v9225
  %v9228 = vsel %vm9014, %v9220, %v9227
  %v9229 = vrot.slane %v9224, 4
  %v9231 = vshrl.u32 %v9000, 16
  %v9233 = vrot.slane %v9231, 7
  %v9234 = vshll.u32 %v9000, 16
  %v9236 = vor.u32 %v9233, %v9234
  %v9237 = vsel %vm9014, %v9229, %v9236
  %v9238 = vrot.slane %v9233, 4
  %v9240 = vshrl.u32 %v9001, 16
  %v9242 = vrot.slane %v9240, 7
  %v9243 = vshll.u32 %v9001, 16
  %v9245 = vor.u32 %v9242, %v9243
  %v9246 = vsel %vm9014, %v9238, %v9245
  %v9247 = vrot.slane %v9242, 4
  %v9249 = vshrl.u32 %v9002, 16
  %v9251 = vrot.slane %v9249, 7
  %v9252 = vshll.u32 %v9002, 16
  %v9254 = vor.u32 %v9251, %v9252
  %v9255 = vsel %vm9014, %v9247, %v9254
  %v9256 = vrot.slane %v9251, 4
  %v9258 = vshrl.u32 %v9003, 16
  %v9260 = vrot.slane %v9258, 7
  %v9261 = vshll.u32 %v9003, 16
  %v9263 = vor.u32 %v9260, %v9261
  %v9264 = vsel %vm9014, %v9256, %v9263
  %v9265 = vrot.slane %v9260, 4
  %v9267 = vshrl.u32 %v9004, 16
  %v9269 = vrot.slane %v9267, 7
  %v9270 = vshll.u32 %v9004, 16
  %v9272 = vor.u32 %v9269, %v9270
  %v9273 = vsel %vm9014, %v9265, %v9272
  %v9274 = vrot.slane %v9269, 4
  %v9276 = vshrl.u32 %v9005, 16
  %v9278 = vrot.slane %v9276, 7
  %v9279 = vshll.u32 %v9005, 16
  %v9281 = vor.u32 %v9278, %v9279
  %v9282 = vsel %vm9014, %v9274, %v9281
  %v9283 = vrot.slane %v9278, 4
  %v9285 = vshrl.u32 %v9006, 16
  %v9287 = vrot.slane %v9285, 7
  %v9288 = vshll.u32 %v9006, 16
  %v9290 = vor.u32 %v9287, %v9288
  %v9291 = vsel %vm9014, %v9283, %v9290
  %v9292 = vrot.slane %v9287, 4
  %v9294 = vshrl.u32 %v9007, 16
  %v9296 = vrot.slane %v9294, 7
  %v9297 = vshll.u32 %v9007, 16
  %v9299 = vor.u32 %v9296, %v9297
  %v9300 = vsel %vm9014, %v9292, %v9299
  %v9301 = vrot.slane %v9296, 4
  %v9303 = vshrl.u32 %v9008, 16
  %v9305 = vrot.slane %v9303, 7
  %v9306 = vshll.u32 %v9008, 16
  %v9308 = vor.u32 %v9305, %v9306
  %v9309 = vsel %vm9014, %v9301, %v9308
  %v9310 = vrot.slane %v9305, 4
  %v9312 = vshrl.u32 %v9009, 16
  %v9314 = vrot.slane %v9312, 7
  %v9315 = vshll.u32 %v9009, 16
  %v9317 = vor.u32 %v9314, %v9315
  %v9318 = vsel %vm9014, %v9310, %v9317
  %v9319 = vrot.slane %v9314, 4
  %v9321 = vshrl.u32 %v9010, 16
  %v9323 = vrot.slane %v9321, 7
  %v9324 = vshll.u32 %v9010, 16
  %v9326 = vor.u32 %v9323, %v9324
  %v9327 = vsel %vm9014, %v9319, %v9326
  %v9328 = vrot.slane %v9323, 4
  %v9330 = vshrl.u32 %v9011, 16
  %v9332 = vrot.slane %v9330, 7
  %v9333 = vshll.u32 %v9011, 16
  %v9335 = vor.u32 %v9332, %v9333
  %v9336 = vsel %vm9014, %v9328, %v9335
  %v9337 = vrot.slane %v9332, 4
  %vm9375 = vcmask 1043456
  %vm9376 = vsmask.f32 7938
  %vm9377 = vmand %vm9375, %vm9376
  %v9378 = vld [vmem:[#allocation2 + $0xb4] sm:$0xf]
  %v9379 = vsel %vm9377, %v9021, %v9378
  %9380 = vst [vmem:[#allocation2 + $0xb4] sm:$0xf] %v9379
  %9381 = vst [vmem:[#allocation2 + $0xb8] sm:$0xf] %v9030
  %9382 = vst [vmem:[#allocation2 + $0xbc] sm:$0xf] %v9039
  %9383 = vst [vmem:[#allocation2 + $0xc0] sm:$0xf] %v9048
  %9384 = vst [vmem:[#allocation2 + $0xc4] sm:$0xf] %v9057
  %9385 = vst [vmem:[#allocation2 + $0xc8] sm:$0xf] %v9066
  %9386 = vst [vmem:[#allocation2 + $0xcc] sm:$0xf] %v9075
  %9387 = vst [vmem:[#allocation2 + $0xd0] sm:$0xf] %v9084
  %9388 = vst [vmem:[#allocation2 + $0xd4] sm:$0xf] %v9093
  %9389 = vst [vmem:[#allocation2 + $0xd8] sm:$0xf] %v9102
  %9390 = vst [vmem:[#allocation2 + $0xdc] sm:$0xf] %v9111
  %9391 = vst [vmem:[#allocation2 + $0xe0] sm:$0xf] %v9120
  %9392 = vst [vmem:[#allocation2 + $0xe4] sm:$0xf] %v9129
  %9393 = vst [vmem:[#allocation2 + $0xe8] sm:$0xf] %v9138
  %9394 = vst [vmem:[#allocation2 + $0xec] sm:$0xf] %v9147
  %9395 = vst [vmem:[#allocation2 + $0xf0] sm:$0xf] %v9156
  %9396 = vst [vmem:[#allocation2 + $0xf4] sm:$0xf] %v9165
  %9397 = vst [vmem:[#allocation2 + $0xf8] sm:$0xf] %v9174
  %9398 = vst [vmem:[#allocation2 + $0xfc] sm:$0xf] %v9183
  %9399 = vst [vmem:[#allocation2 + $0x100] sm:$0xf] %v9192
  %9400 = vst [vmem:[#allocation2 + $0x104] sm:$0xf] %v9201
  %9401 = vst [vmem:[#allocation2 + $0x108] sm:$0xf] %v9210
  %9402 = vst [vmem:[#allocation2 + $0x10c] sm:$0xf] %v9219
  %9403 = vst [vmem:[#allocation2 + $0x110] sm:$0xf] %v9228
  %9404 = vst [vmem:[#allocation2 + $0x114] sm:$0xf] %v9237
  %9405 = vst [vmem:[#allocation2 + $0x118] sm:$0xf] %v9246
  %9406 = vst [vmem:[#allocation2 + $0x11c] sm:$0xf] %v9255
  %9407 = vst [vmem:[#allocation2 + $0x120] sm:$0xf] %v9264
  %9408 = vst [vmem:[#allocation2 + $0x124] sm:$0xf] %v9273
  %9409 = vst [vmem:[#allocation2 + $0x128] sm:$0xf] %v9282
  %9410 = vst [vmem:[#allocation2 + $0x12c] sm:$0xf] %v9291
  %9411 = vst [vmem:[#allocation2 + $0x130] sm:$0xf] %v9300
  %9412 = vst [vmem:[#allocation2 + $0x134] sm:$0xf] %v9309
  %9413 = vst [vmem:[#allocation2 + $0x138] sm:$0xf] %v9318
  %9414 = vst [vmem:[#allocation2 + $0x13c] sm:$0xf] %v9327
  %9415 = vst [vmem:[#allocation2 + $0x140] sm:$0xf] %v9336
  %vm9416 = vcmask 1040384
  %vm9417 = vmand %vm9416, %vm9012
  %v9418 = vld [vmem:[#allocation2 + $0x144] sm:$0x1]
  %v9419 = vsel %vm9417, %v9337, %v9418
  %9420 = vst [vmem:[#allocation2 + $0x144] sm:$0x1] %v9419
  %v9421 = vld [vmem:[%s0 + $0xbc] sm:$0xe]
  %v9422 = vld [vmem:[%s0 + $0xc0] sm:$0xf]
  %v9423 = vld [vmem:[%s0 + $0xc4] sm:$0xf]
  %v9424 = vld [vmem:[%s0 + $0xc8] sm:$0xf]
  %v9425 = vld [vmem:[%s0 + $0xcc] sm:$0xf]
  %v9426 = vld [vmem:[%s0 + $0xd0] sm:$0xf]
  %v9427 = vld [vmem:[%s0 + $0xd4] sm:$0xf]
  %v9428 = vld [vmem:[%s0 + $0xd8] sm:$0xf]
  %v9429 = vld [vmem:[%s0 + $0xdc] sm:$0xf]
  %v9430 = vld [vmem:[%s0 + $0xe0] sm:$0xf]
  %v9431 = vld [vmem:[%s0 + $0xe4] sm:$0xf]
  %v9432 = vld [vmem:[%s0 + $0xe8] sm:$0xf]
  %v9433 = vld [vmem:[%s0 + $0xec] sm:$0xf]
  %v9434 = vld [vmem:[%s0 + $0xf0] sm:$0xf]
  %v9435 = vld [vmem:[%s0 + $0xf4] sm:$0xf]
  %v9436 = vld [vmem:[%s0 + $0xf8] sm:$0xf]
  %v9437 = vld [vmem:[%s0 + $0xfc] sm:$0xf]
  %v9438 = vld [vmem:[%s0 + $0x100] sm:$0xf]
  %v9439 = vld [vmem:[%s0 + $0x104] sm:$0xf]
  %v9440 = vld [vmem:[%s0 + $0x108] sm:$0xf]
  %v9441 = vld [vmem:[%s0 + $0x10c] sm:$0xf]
  %v9442 = vld [vmem:[%s0 + $0x110] sm:$0xf]
  %v9443 = vld [vmem:[%s0 + $0x114] sm:$0xf]
  %v9444 = vld [vmem:[%s0 + $0x118] sm:$0xf]
  %v9445 = vld [vmem:[%s0 + $0x11c] sm:$0xf]
  %v9446 = vld [vmem:[%s0 + $0x120] sm:$0xf]
  %v9447 = vld [vmem:[%s0 + $0x124] sm:$0xf]
  %v9448 = vld [vmem:[%s0 + $0x128] sm:$0xf]
  %v9449 = vld [vmem:[%s0 + $0x12c] sm:$0xf]
  %v9450 = vld [vmem:[%s0 + $0x130] sm:$0xf]
  %v9451 = vld [vmem:[%s0 + $0x134] sm:$0xf]
  %v9452 = vld [vmem:[%s0 + $0x138] sm:$0xf]
  %v9453 = vld [vmem:[%s0 + $0x13c] sm:$0xf]
  %v9454 = vld [vmem:[%s0 + $0x140] sm:$0xf]
  %v9455 = vld [vmem:[%s0 + $0x144] sm:$0xf]
  %v9456 = vld [vmem:[%s0 + $0x148] sm:$0xf]
  %v9457 = vld [vmem:[%s0 + $0x14c] sm:$0x3]
  %v9458 = vld [vmem:[%s5] sm:$0xf]
  %v9459 = vld [vmem:[%s5 + $0x4] sm:$0xf]
  %v9460 = vld [vmem:[%s5 + $0x8] sm:$0xf]
  %v9461 = vld [vmem:[%s5 + $0xc] sm:$0xf]
  %v9462 = vld [vmem:[%s5 + $0x10] sm:$0xf]
  %v9463 = vld [vmem:[%s5 + $0x14] sm:$0xf]
  %v9464 = vld [vmem:[%s5 + $0x18] sm:$0xf]
  %v9465 = vld [vmem:[%s5 + $0x1c] sm:$0xf]
  %v9466 = vld [vmem:[%s5 + $0x20] sm:$0xf]
  %v9467 = vld [vmem:[%s5 + $0x24] sm:$0xf]
  %v9468 = vld [vmem:[%s5 + $0x28] sm:$0xf]
  %v9469 = vld [vmem:[%s5 + $0x2c] sm:$0xf]
  %v9470 = vld [vmem:[%s5 + $0x30] sm:$0xf]
  %v9471 = vld [vmem:[%s5 + $0x34] sm:$0xf]
  %v9472 = vld [vmem:[%s5 + $0x38] sm:$0xf]
  %v9473 = vld [vmem:[%s5 + $0x3c] sm:$0xf]
  %v9474 = vld [vmem:[%s6] sm:$0x1]
  %v9476 = vlaneseq
  %v9477 = vshrl.u32 %v9476, 7
  %v9478 = vsub.s32 0, %v9477
  %v9479 = vrot.slane %v9474, %v9478
  %v9518 = vunpack.c.l.b16 %v9421
  %v9519 = vunpack.c.l.b16 %v9422
  %v9520 = vunpack.c.l.b16 %v9423
  %v9521 = vunpack.c.l.b16 %v9424
  %v9522 = vunpack.c.l.b16 %v9425
  %v9523 = vunpack.c.l.b16 %v9426
  %v9524 = vunpack.c.l.b16 %v9427
  %v9525 = vunpack.c.l.b16 %v9428
  %v9526 = vunpack.c.l.b16 %v9429
  %v9527 = vunpack.c.l.b16 %v9430
  %v9528 = vunpack.c.l.b16 %v9431
  %v9529 = vunpack.c.l.b16 %v9432
  %v9530 = vunpack.c.l.b16 %v9433
  %v9531 = vunpack.c.l.b16 %v9434
  %v9532 = vunpack.c.l.b16 %v9435
  %v9533 = vunpack.c.l.b16 %v9436
  %v9534 = vunpack.c.l.b16 %v9437
  %v9535 = vunpack.c.l.b16 %v9438
  %v9536 = vunpack.c.l.b16 %v9439
  %v9537 = vunpack.c.l.b16 %v9440
  %v9538 = vunpack.c.l.b16 %v9441
  %v9539 = vunpack.c.l.b16 %v9442
  %v9540 = vunpack.c.l.b16 %v9443
  %v9541 = vunpack.c.l.b16 %v9444
  %v9542 = vunpack.c.l.b16 %v9445
  %v9543 = vunpack.c.l.b16 %v9446
  %v9544 = vunpack.c.l.b16 %v9447
  %v9545 = vunpack.c.l.b16 %v9448
  %v9546 = vunpack.c.l.b16 %v9449
  %v9547 = vunpack.c.l.b16 %v9450
  %v9548 = vunpack.c.l.b16 %v9451
  %v9549 = vunpack.c.l.b16 %v9452
  %v9550 = vunpack.c.l.b16 %v9453
  %v9551 = vunpack.c.l.b16 %v9454
  %v9552 = vunpack.c.l.b16 %v9455
  %v9553 = vunpack.c.l.b16 %v9456
  %v9554 = vunpack.c.l.b16 %v9457
  %v9555 = vpack.c.b16 %v9519, %v9518
  %v9556 = vpack.c.b16 %v9521, %v9520
  %v9557 = vpack.c.b16 %v9523, %v9522
  %v9558 = vpack.c.b16 %v9525, %v9524
  %v9559 = vpack.c.b16 %v9527, %v9526
  %v9560 = vpack.c.b16 %v9529, %v9528
  %v9561 = vpack.c.b16 %v9531, %v9530
  %v9562 = vpack.c.b16 %v9533, %v9532
  %v9563 = vpack.c.b16 %v9535, %v9534
  %v9564 = vpack.c.b16 %v9537, %v9536
  %v9565 = vpack.c.b16 %v9539, %v9538
  %v9566 = vpack.c.b16 %v9541, %v9540
  %v9567 = vpack.c.b16 %v9543, %v9542
  %v9568 = vpack.c.b16 %v9545, %v9544
  %v9569 = vpack.c.b16 %v9547, %v9546
  %v9570 = vpack.c.b16 %v9549, %v9548
  %v9571 = vpack.c.b16 %v9551, %v9550
  %v9572 = vpack.c.b16 %v9553, %v9552
  %v9573 = vpack.c.b16 %v9554, %v9554
  %v9575 = vshrl.u32 %v9555, 16
  %v9577 = vrot.slane %v9575, 1
  %v9578 = vshll.u32 %v9555, 16
  %v9580 = vrot.slane %v9578, 2
  %v9581 = vor.u32 %v9577, %v9580
  %v9583 = vshrl.u32 %v9556, 16
  %v9585 = vrot.slane %v9583, 1
  %v9586 = vshll.u32 %v9556, 16
  %v9588 = vrot.slane %v9586, 2
  %v9589 = vor.u32 %v9585, %v9588
  %v9590 = vsel %vm1244, %v9581, %v9589
  %v9592 = vshrl.u32 %v9557, 16
  %v9594 = vrot.slane %v9592, 1
  %v9595 = vshll.u32 %v9557, 16
  %v9597 = vrot.slane %v9595, 2
  %v9598 = vor.u32 %v9594, %v9597
  %v9599 = vsel %vm1244, %v9589, %v9598
  %v9601 = vshrl.u32 %v9558, 16
  %v9603 = vrot.slane %v9601, 1
  %v9604 = vshll.u32 %v9558, 16
  %v9606 = vrot.slane %v9604, 2
  %v9607 = vor.u32 %v9603, %v9606
  %v9608 = vsel %vm1244, %v9598, %v9607
  %v9610 = vshrl.u32 %v9559, 16
  %v9612 = vrot.slane %v9610, 1
  %v9613 = vshll.u32 %v9559, 16
  %v9615 = vrot.slane %v9613, 2
  %v9616 = vor.u32 %v9612, %v9615
  %v9617 = vsel %vm1244, %v9607, %v9616
  %v9619 = vshrl.u32 %v9560, 16
  %v9621 = vrot.slane %v9619, 1
  %v9622 = vshll.u32 %v9560, 16
  %v9624 = vrot.slane %v9622, 2
  %v9625 = vor.u32 %v9621, %v9624
  %v9626 = vsel %vm1244, %v9616, %v9625
  %v9628 = vshrl.u32 %v9561, 16
  %v9630 = vrot.slane %v9628, 1
  %v9631 = vshll.u32 %v9561, 16
  %v9633 = vrot.slane %v9631, 2
  %v9634 = vor.u32 %v9630, %v9633
  %v9635 = vsel %vm1244, %v9625, %v9634
  %v9637 = vshrl.u32 %v9562, 16
  %v9639 = vrot.slane %v9637, 1
  %v9640 = vshll.u32 %v9562, 16
  %v9642 = vrot.slane %v9640, 2
  %v9643 = vor.u32 %v9639, %v9642
  %v9644 = vsel %vm1244, %v9634, %v9643
  %v9646 = vshrl.u32 %v9563, 16
  %v9648 = vrot.slane %v9646, 1
  %v9649 = vshll.u32 %v9563, 16
  %v9651 = vrot.slane %v9649, 2
  %v9652 = vor.u32 %v9648, %v9651
  %v9653 = vsel %vm1244, %v9643, %v9652
  %v9655 = vshrl.u32 %v9564, 16
  %v9657 = vrot.slane %v9655, 1
  %v9658 = vshll.u32 %v9564, 16
  %v9660 = vrot.slane %v9658, 2
  %v9661 = vor.u32 %v9657, %v9660
  %v9662 = vsel %vm1244, %v9652, %v9661
  %v9664 = vshrl.u32 %v9565, 16
  %v9666 = vrot.slane %v9664, 1
  %v9667 = vshll.u32 %v9565, 16
  %v9669 = vrot.slane %v9667, 2
  %v9670 = vor.u32 %v9666, %v9669
  %v9671 = vsel %vm1244, %v9661, %v9670
  %v9673 = vshrl.u32 %v9566, 16
  %v9675 = vrot.slane %v9673, 1
  %v9676 = vshll.u32 %v9566, 16
  %v9678 = vrot.slane %v9676, 2
  %v9679 = vor.u32 %v9675, %v9678
  %v9680 = vsel %vm1244, %v9670, %v9679
  %v9682 = vshrl.u32 %v9567, 16
  %v9684 = vrot.slane %v9682, 1
  %v9685 = vshll.u32 %v9567, 16
  %v9687 = vrot.slane %v9685, 2
  %v9688 = vor.u32 %v9684, %v9687
  %v9689 = vsel %vm1244, %v9679, %v9688
  %v9691 = vshrl.u32 %v9568, 16
  %v9693 = vrot.slane %v9691, 1
  %v9694 = vshll.u32 %v9568, 16
  %v9696 = vrot.slane %v9694, 2
  %v9697 = vor.u32 %v9693, %v9696
  %v9698 = vsel %vm1244, %v9688, %v9697
  %v9700 = vshrl.u32 %v9569, 16
  %v9702 = vrot.slane %v9700, 1
  %v9703 = vshll.u32 %v9569, 16
  %v9705 = vrot.slane %v9703, 2
  %v9706 = vor.u32 %v9702, %v9705
  %v9707 = vsel %vm1244, %v9697, %v9706
  %v9709 = vshrl.u32 %v9570, 16
  %v9711 = vrot.slane %v9709, 1
  %v9712 = vshll.u32 %v9570, 16
  %v9714 = vrot.slane %v9712, 2
  %v9715 = vor.u32 %v9711, %v9714
  %v9716 = vsel %vm1244, %v9706, %v9715
  %v9718 = vshrl.u32 %v9571, 16
  %v9720 = vrot.slane %v9718, 1
  %v9721 = vshll.u32 %v9571, 16
  %v9723 = vrot.slane %v9721, 2
  %v9724 = vor.u32 %v9720, %v9723
  %v9725 = vsel %vm1244, %v9715, %v9724
  %v9727 = vshrl.u32 %v9572, 16
  %v9729 = vrot.slane %v9727, 1
  %v9730 = vshll.u32 %v9572, 16
  %v9732 = vrot.slane %v9730, 2
  %v9733 = vor.u32 %v9729, %v9732
  %v9734 = vsel %vm1244, %v9724, %v9733
  %v9736 = vshrl.u32 %v9573, 16
  %v9738 = vrot.slane %v9736, 1
  %v9739 = vshll.u32 %v9573, 16
  %v9741 = vrot.slane %v9739, 2
  %v9742 = vor.u32 %v9738, %v9741
  %v9743 = vsel %vm1244, %v9733, %v9742
  %v9778 = vunpack.c.l.b16 %v9458
  %v9779 = vunpack.c.l.b16 %v9459
  %v9780 = vunpack.c.l.b16 %v9460
  %v9781 = vunpack.c.l.b16 %v9461
  %v9782 = vunpack.c.l.b16 %v9462
  %v9783 = vunpack.c.l.b16 %v9463
  %v9784 = vunpack.c.l.b16 %v9464
  %v9785 = vunpack.c.l.b16 %v9465
  %v9786 = vunpack.c.l.b16 %v9466
  %v9787 = vunpack.c.l.b16 %v9467
  %v9788 = vunpack.c.l.b16 %v9468
  %v9789 = vunpack.c.l.b16 %v9469
  %v9790 = vunpack.c.l.b16 %v9470
  %v9791 = vunpack.c.l.b16 %v9471
  %v9792 = vunpack.c.l.b16 %v9472
  %v9793 = vunpack.c.l.b16 %v9473
  %v9794 = vpack.c.b16 %v9779, %v9778
  %v9795 = vpack.c.b16 %v9781, %v9780
  %v9796 = vpack.c.b16 %v9783, %v9782
  %v9797 = vpack.c.b16 %v9785, %v9784
  %v9798 = vpack.c.b16 %v9787, %v9786
  %v9799 = vpack.c.b16 %v9789, %v9788
  %v9800 = vpack.c.b16 %v9791, %v9790
  %v9801 = vpack.c.b16 %v9793, %v9792
  %9810 = vmatprep.subr.bf16.mxu0 0
  %9811 = vmatpush1.bf16.msra.mxu0 %v9794
  %9812 = vmatprep.subr.bf16.mxu0 0
  %9813 = vmatpush1.bf16.msra.mxu0 %v9795
  %9814 = vmatprep.subr.bf16.mxu0 0
  %9815 = vmatpush1.bf16.msra.mxu0 %v9796
  %9816 = vmatprep.subr.bf16.mxu0 0
  %9817 = vmatpush1.bf16.msra.mxu0 %v9797
  %9818 = vmatprep.subr.bf16.mxu0 0
  %9819 = vmatpush1.bf16.msra.mxu0 %v9798
  %9820 = vmatprep.subr.bf16.mxu0 0
  %9821 = vmatpush1.bf16.msra.mxu0 %v9799
  %9822 = vmatprep.subr.bf16.mxu0 0
  %9823 = vmatpush1.bf16.msra.mxu0 %v9800
  %9824 = vmatprep.subr.bf16.mxu0 0
  %9825 = vmatpush1.bf16.msra.mxu0 %v9801
  %9826 = vmatprep.subr.bf16.mxu0 0
  %9827 = vmatpush1.bf16.msra.mxu0 0
  %9828 = vmatprep.subr.bf16.mxu0 0
  %9829 = vmatpush1.bf16.msra.mxu0 0
  %9830 = vmatprep.subr.bf16.mxu0 0
  %9831 = vmatpush1.bf16.msra.mxu0 0
  %9832 = vmatprep.subr.bf16.mxu0 0
  %9833 = vmatpush1.bf16.msra.mxu0 0
  %9834 = vmatprep.subr.bf16.mxu0 0
  %9835 = vmatpush1.bf16.msra.mxu0 0
  %9836 = vmatprep.subr.bf16.mxu0 0
  %9837 = vmatpush1.bf16.msra.mxu0 0
  %9838 = vmatprep.subr.bf16.mxu0 0
  %9839 = vmatpush1.bf16.msra.mxu0 0
  %9840 = vmatprep.subr.bf16.mxu0 0
  %9841 = vmatpush1.bf16.msra.mxu0 0
  %9842 = vmatprep.mubr.bf16.mxu0 0
  %9843 = vmatmul.mubr.bf16.gmra.mrb[0].mxu0 %v9590
  %v9844 = vpop.f32.mrb[0].mxu0
  %v9845 = vadd.f32 %v9479, %v9844
  %v9846 = vpop.f32.mrb[0].mxu0
  %v9847 = vpop.f32.mrb[0].mxu0
  %v9848 = vadd.f32 %v9479, %v9847
  %v9849 = vpop.f32.mrb[0].mxu0
  %9850 = vmatprep.mubr.bf16.mxu0 0
  %9851 = vmatmul.mubr.bf16.gmra.mrb[0].mxu0 %v9599
  %v9852 = vpop.f32.mrb[0].mxu0
  %v9853 = vadd.f32 %v9479, %v9852
  %v9854 = vpop.f32.mrb[0].mxu0
  %v9855 = vpop.f32.mrb[0].mxu0
  %v9856 = vadd.f32 %v9479, %v9855
  %v9857 = vpop.f32.mrb[0].mxu0
  %9858 = vmatprep.mubr.bf16.mxu0 0
  %9859 = vmatmul.mubr.bf16.gmra.mrb[0].mxu0 %v9608
  %v9860 = vpop.f32.mrb[0].mxu0
  %v9861 = vadd.f32 %v9479, %v9860
  %v9862 = vpop.f32.mrb[0].mxu0
  %v9863 = vpop.f32.mrb[0].mxu0
  %v9864 = vadd.f32 %v9479, %v9863
  %v9865 = vpop.f32.mrb[0].mxu0
  %9866 = vmatprep.mubr.bf16.mxu0 0
  %9867 = vmatmul.mubr.bf16.gmra.mrb[0].mxu0 %v9617
  %v9868 = vpop.f32.mrb[0].mxu0
  %v9869 = vadd.f32 %v9479, %v9868
  %v9870 = vpop.f32.mrb[0].mxu0
  %v9871 = vpop.f32.mrb[0].mxu0
  %v9872 = vadd.f32 %v9479, %v9871
  %v9873 = vpop.f32.mrb[0].mxu0
  %9874 = vmatprep.mubr.bf16.mxu0 0
  %9875 = vmatmul.mubr.bf16.gmra.mrb[0].mxu0 %v9626
  %v9876 = vpop.f32.mrb[0].mxu0
  %v9877 = vadd.f32 %v9479, %v9876
  %v9878 = vpop.f32.mrb[0].mxu0
  %v9879 = vpop.f32.mrb[0].mxu0
  %v9880 = vadd.f32 %v9479, %v9879
  %v9881 = vpop.f32.mrb[0].mxu0
  %9882 = vmatprep.mubr.bf16.mxu0 0
  %9883 = vmatmul.mubr.bf16.gmra.mrb[0].mxu0 %v9635
  %v9884 = vpop.f32.mrb[0].mxu0
  %v9885 = vadd.f32 %v9479, %v9884
  %v9886 = vpop.f32.mrb[0].mxu0
  %v9887 = vpop.f32.mrb[0].mxu0
  %v9888 = vadd.f32 %v9479, %v9887
  %v9889 = vpop.f32.mrb[0].mxu0
  %9890 = vmatprep.mubr.bf16.mxu0 0
  %9891 = vmatmul.mubr.bf16.gmra.mrb[0].mxu0 %v9644
  %v9892 = vpop.f32.mrb[0].mxu0
  %v9893 = vadd.f32 %v9479, %v9892
  %v9894 = vpop.f32.mrb[0].mxu0
  %v9895 = vpop.f32.mrb[0].mxu0
  %v9896 = vadd.f32 %v9479, %v9895
  %v9897 = vpop.f32.mrb[0].mxu0
  %9898 = vmatprep.mubr.bf16.mxu0 0
  %9899 = vmatmul.mubr.bf16.gmra.mrb[0].mxu0 %v9653
  %v9900 = vpop.f32.mrb[0].mxu0
  %v9901 = vadd.f32 %v9479, %v9900
  %v9902 = vpop.f32.mrb[0].mxu0
  %v9903 = vpop.f32.mrb[0].mxu0
  %v9904 = vadd.f32 %v9479, %v9903
  %v9905 = vpop.f32.mrb[0].mxu0
  %9906 = vmatprep.mubr.bf16.mxu0 0
  %9907 = vmatmul.mubr.bf16.gmra.mrb[0].mxu0 %v9662
  %v9908 = vpop.f32.mrb[0].mxu0
  %v9909 = vadd.f32 %v9479, %v9908
  %v9910 = vpop.f32.mrb[0].mxu0
  %v9911 = vpop.f32.mrb[0].mxu0
  %v9912 = vadd.f32 %v9479, %v9911
  %v9913 = vpop.f32.mrb[0].mxu0
  %9914 = vmatprep.mubr.bf16.mxu0 0
  %9915 = vmatmul.mubr.bf16.gmra.mrb[0].mxu0 %v9671
  %v9916 = vpop.f32.mrb[0].mxu0
  %v9917 = vadd.f32 %v9479, %v9916
  %v9918 = vpop.f32.mrb[0].mxu0
  %v9919 = vpop.f32.mrb[0].mxu0
  %v9920 = vadd.f32 %v9479, %v9919
  %v9921 = vpop.f32.mrb[0].mxu0
  %9922 = vmatprep.mubr.bf16.mxu0 0
  %9923 = vmatmul.mubr.bf16.gmra.mrb[0].mxu0 %v9680
  %v9924 = vpop.f32.mrb[0].mxu0
  %v9925 = vadd.f32 %v9479, %v9924
  %v9926 = vpop.f32.mrb[0].mxu0
  %v9927 = vpop.f32.mrb[0].mxu0
  %v9928 = vadd.f32 %v9479, %v9927
  %v9929 = vpop.f32.mrb[0].mxu0
  %9930 = vmatprep.mubr.bf16.mxu0 0
  %9931 = vmatmul.mubr.bf16.gmra.mrb[0].mxu0 %v9689
  %v9932 = vpop.f32.mrb[0].mxu0
  %v9933 = vadd.f32 %v9479, %v9932
  %v9934 = vpop.f32.mrb[0].mxu0
  %v9935 = vpop.f32.mrb[0].mxu0
  %v9936 = vadd.f32 %v9479, %v9935
  %v9937 = vpop.f32.mrb[0].mxu0
  %9938 = vmatprep.mubr.bf16.mxu0 0
  %9939 = vmatmul.mubr.bf16.gmra.mrb[0].mxu0 %v9698
  %v9940 = vpop.f32.mrb[0].mxu0
  %v9941 = vadd.f32 %v9479, %v9940
  %v9942 = vpop.f32.mrb[0].mxu0
  %v9943 = vpop.f32.mrb[0].mxu0
  %v9944 = vadd.f32 %v9479, %v9943
  %v9945 = vpop.f32.mrb[0].mxu0
  %9946 = vmatprep.mubr.bf16.mxu0 0
  %9947 = vmatmul.mubr.bf16.gmra.mrb[0].mxu0 %v9707
  %v9948 = vpop.f32.mrb[0].mxu0
  %v9949 = vadd.f32 %v9479, %v9948
  %v9950 = vpop.f32.mrb[0].mxu0
  %v9951 = vpop.f32.mrb[0].mxu0
  %v9952 = vadd.f32 %v9479, %v9951
  %v9953 = vpop.f32.mrb[0].mxu0
  %9954 = vmatprep.mubr.bf16.mxu0 0
  %9955 = vmatmul.mubr.bf16.gmra.mrb[0].mxu0 %v9716
  %v9956 = vpop.f32.mrb[0].mxu0
  %v9957 = vadd.f32 %v9479, %v9956
  %v9958 = vpop.f32.mrb[0].mxu0
  %v9959 = vpop.f32.mrb[0].mxu0
  %v9960 = vadd.f32 %v9479, %v9959
  %v9961 = vpop.f32.mrb[0].mxu0
  %9962 = vmatprep.mubr.bf16.mxu0 0
  %9963 = vmatmul.mubr.bf16.gmra.mrb[0].mxu0 %v9725
  %v9964 = vpop.f32.mrb[0].mxu0
  %v9965 = vadd.f32 %v9479, %v9964
  %v9966 = vpop.f32.mrb[0].mxu0
  %v9967 = vpop.f32.mrb[0].mxu0
  %v9968 = vadd.f32 %v9479, %v9967
  %v9969 = vpop.f32.mrb[0].mxu0
  %9970 = vmatprep.mubr.bf16.mxu0 0
  %9971 = vmatmul.mubr.bf16.gmra.mrb[0].mxu0 %v9734
  %v9972 = vpop.f32.mrb[0].mxu0
  %v9973 = vadd.f32 %v9479, %v9972
  %v9974 = vpop.f32.mrb[0].mxu0
  %v9975 = vpop.f32.mrb[0].mxu0
  %v9976 = vadd.f32 %v9479, %v9975
  %v9977 = vpop.f32.mrb[0].mxu0
  %9978 = vmatprep.mubr.bf16.mxu0 0
  %9979 = vmatmul.mubr.bf16.gmra.mrb[0].mxu0 %v9743
  %v9980 = vpop.f32.mrb[0].mxu0
  %v9981 = vadd.f32 %v9479, %v9980
  %v9982 = vpop.f32.mrb[0].mxu0
  %v9983 = vpop.f32.mrb[0].mxu0
  %v9984 = vadd.f32 %v9479, %v9983
  %v9985 = vpop.f32.mrb[0].mxu0
  %9986 = vdwg.mxu0
  %v9987 = vld [vmem:[#allocation2 + $0xa8] sm:$0x8]
  %v9988 = vld [vmem:[#allocation2 + $0xac] sm:$0xf]
  %v9989 = vld [vmem:[#allocation2 + $0xb0] sm:$0xf]
  %v9990 = vld [vmem:[#allocation2 + $0xb4] sm:$0xf]
  %v9991 = vld [vmem:[#allocation2 + $0xb8] sm:$0xf]
  %v9992 = vld [vmem:[#allocation2 + $0xbc] sm:$0xf]
  %v9993 = vld [vmem:[#allocation2 + $0xc0] sm:$0xf]
  %v9994 = vld [vmem:[#allocation2 + $0xc4] sm:$0xf]
  %v9995 = vld [vmem:[#allocation2 + $0xc8] sm:$0xf]
  %v9996 = vld [vmem:[#allocation2 + $0xcc] sm:$0xf]
  %v9997 = vld [vmem:[#allocation2 + $0xd0] sm:$0xf]
  %v9998 = vld [vmem:[#allocation2 + $0xd4] sm:$0xf]
  %v9999 = vld [vmem:[#allocation2 + $0xd8] sm:$0xf]
  %v10000 = vld [vmem:[#allocation2 + $0xdc] sm:$0xf]
  %v10001 = vld [vmem:[#allocation2 + $0xe0] sm:$0xf]
  %v10002 = vld [vmem:[#allocation2 + $0xe4] sm:$0xf]
  %v10003 = vld [vmem:[#allocation2 + $0xe8] sm:$0xf]
  %v10004 = vld [vmem:[#allocation2 + $0xec] sm:$0xf]
  %v10005 = vld [vmem:[#allocation2 + $0xf0] sm:$0xf]
  %v10006 = vld [vmem:[#allocation2 + $0xf4] sm:$0xf]
  %v10007 = vld [vmem:[#allocation2 + $0xf8] sm:$0xf]
  %v10008 = vld [vmem:[#allocation2 + $0xfc] sm:$0xf]
  %v10009 = vld [vmem:[#allocation2 + $0x100] sm:$0xf]
  %v10010 = vld [vmem:[#allocation2 + $0x104] sm:$0xf]
  %v10011 = vld [vmem:[#allocation2 + $0x108] sm:$0xf]
  %v10012 = vld [vmem:[#allocation2 + $0x10c] sm:$0xf]
  %v10013 = vld [vmem:[#allocation2 + $0x110] sm:$0xf]
  %v10014 = vld [vmem:[#allocation2 + $0x114] sm:$0xf]
  %v10015 = vld [vmem:[#allocation2 + $0x118] sm:$0xf]
  %v10016 = vld [vmem:[#allocation2 + $0x11c] sm:$0xf]
  %v10017 = vld [vmem:[#allocation2 + $0x120] sm:$0xf]
  %v10018 = vld [vmem:[#allocation2 + $0x124] sm:$0xf]
  %v10019 = vld [vmem:[#allocation2 + $0x128] sm:$0xf]
  %v10020 = vld [vmem:[#allocation2 + $0x12c] sm:$0xf]
  %v10021 = vld [vmem:[#allocation2 + $0x130] sm:$0xf]
  %v10022 = vld [vmem:[#allocation2 + $0x134] sm:$0xf]
  %v10023 = vld [vmem:[#allocation2 + $0x138] sm:$0x7]
  %v10024 = vld [vmem:[#allocation2 + $0x138] sm:$0xf]
  %v10025 = vld [vmem:[#allocation2 + $0x13c] sm:$0xf]
  %v10026 = vld [vmem:[#allocation2 + $0x140] sm:$0xf]
  %v10027 = vld [vmem:[#allocation2 + $0x144] sm:$0x1]
  %v10028 = vld [vmem:[#allocation2 + $0xb4] sm:$0xe]
  %v10029 = vld [vmem:[#allocation2 + $0xbc] sm:$0xe]
  %v10030 = vld [vmem:[#allocation2 + $0x144] sm:$0xf]
  %v10031 = vld [vmem:[#allocation2 + $0x148] sm:$0xf]
  %v10032 = vld [vmem:[#allocation2 + $0x14c] sm:$0x1]
  %v10033 = vld [vmem:[#allocation2 + $0x14c] sm:$0x3]
  %v10034 = vld [vmem:[#allocation2 + $0xbc] sm:$0xc]
  %v10072 = vunpack.c.l.b16 %v9987
  %v10073 = vunpack.c.l.b16 %v9988
  %v10074 = vunpack.c.l.b16 %v9989
  %v10075 = vunpack.c.l.b16 %v9990
  %v10076 = vunpack.c.l.b16 %v9991
  %v10077 = vunpack.c.l.b16 %v9992
  %v10078 = vunpack.c.l.b16 %v9993
  %v10079 = vunpack.c.l.b16 %v9994
  %v10080 = vunpack.c.l.b16 %v9995
  %v10081 = vunpack.c.l.b16 %v9996
  %v10082 = vunpack.c.l.b16 %v9997
  %v10083 = vunpack.c.l.b16 %v9998
  %v10084 = vunpack.c.l.b16 %v9999
  %v10085 = vunpack.c.l.b16 %v10000
  %v10086 = vunpack.c.l.b16 %v10001
  %v10087 = vunpack.c.l.b16 %v10002
  %v10088 = vunpack.c.l.b16 %v10003
  %v10089 = vunpack.c.l.b16 %v10004
  %v10090 = vunpack.c.l.b16 %v10005
  %v10091 = vunpack.c.l.b16 %v10006
  %v10092 = vunpack.c.l.b16 %v10007
  %v10093 = vunpack.c.l.b16 %v10008
  %v10094 = vunpack.c.l.b16 %v10009
  %v10095 = vunpack.c.l.b16 %v10010
  %v10096 = vunpack.c.l.b16 %v10011
  %v10097 = vunpack.c.l.b16 %v10012
  %v10098 = vunpack.c.l.b16 %v10013
  %v10099 = vunpack.c.l.b16 %v10014
  %v10100 = vunpack.c.l.b16 %v10015
  %v10101 = vunpack.c.l.b16 %v10016
  %v10102 = vunpack.c.l.b16 %v10017
  %v10103 = vunpack.c.l.b16 %v10018
  %v10104 = vunpack.c.l.b16 %v10019
  %v10105 = vunpack.c.l.b16 %v10020
  %v10106 = vunpack.c.l.b16 %v10021
  %v10107 = vunpack.c.l.b16 %v10022
  %v10108 = vunpack.c.l.b16 %v10023
  %v10109 = vpack.c.b16 %v10073, %v10072
  %v10110 = vpack.c.b16 %v10075, %v10074
  %v10111 = vpack.c.b16 %v10077, %v10076
  %v10112 = vpack.c.b16 %v10079, %v10078
  %v10113 = vpack.c.b16 %v10081, %v10080
  %v10114 = vpack.c.b16 %v10083, %v10082
  %v10115 = vpack.c.b16 %v10085, %v10084
  %v10116 = vpack.c.b16 %v10087, %v10086
  %v10117 = vpack.c.b16 %v10089, %v10088
  %v10118 = vpack.c.b16 %v10091, %v10090
  %v10119 = vpack.c.b16 %v10093, %v10092
  %v10120 = vpack.c.b16 %v10095, %v10094
  %v10121 = vpack.c.b16 %v10097, %v10096
  %v10122 = vpack.c.b16 %v10099, %v10098
  %v10123 = vpack.c.b16 %v10101, %v10100
  %v10124 = vpack.c.b16 %v10103, %v10102
  %v10125 = vpack.c.b16 %v10105, %v10104
  %v10126 = vpack.c.b16 %v10107, %v10106
  %v10127 = vpack.c.b16 %v10108, %v10108
  %v10129 = vunpack.c.l.b16 %v10024
  %v10130 = vpack.c.b16 %v10129, %v10129
  %v10132 = vshrl.u32 %v10109, 16
  %v10134 = vshll.u32 %v10109, 16
  %v10136 = vrot.slane %v10134, 1
  %v10137 = vor.u32 %v10132, %v10136
  %v10139 = vshll.u32 %v10110, 16
  %v10141 = vrot.slane %v10139, 1
  %v10142 = vsel %vm995, %v10137, %v10141
  %v10143 = vshrl.u32 %v10110, 16
  %v10145 = vor.u32 %v10143, %v10141
  %v10147 = vshll.u32 %v10111, 16
  %v10149 = vrot.slane %v10147, 1
  %v10150 = vsel %vm995, %v10145, %v10149
  %v10151 = vshrl.u32 %v10111, 16
  %v10153 = vor.u32 %v10151, %v10149
  %v10155 = vshll.u32 %v10112, 16
  %v10157 = vrot.slane %v10155, 1
  %v10158 = vsel %vm995, %v10153, %v10157
  %v10159 = vshrl.u32 %v10112, 16
  %v10161 = vor.u32 %v10159, %v10157
  %v10163 = vshll.u32 %v10113, 16
  %v10165 = vrot.slane %v10163, 1
  %v10166 = vsel %vm995, %v10161, %v10165
  %v10167 = vshrl.u32 %v10113, 16
  %v10169 = vor.u32 %v10167, %v10165
  %v10171 = vshll.u32 %v10114, 16
  %v10173 = vrot.slane %v10171, 1
  %v10174 = vsel %vm995, %v10169, %v10173
  %v10175 = vshrl.u32 %v10114, 16
  %v10177 = vor.u32 %v10175, %v10173
  %v10179 = vshll.u32 %v10115, 16
  %v10181 = vrot.slane %v10179, 1
  %v10182 = vsel %vm995, %v10177, %v10181
  %v10183 = vshrl.u32 %v10115, 16
  %v10185 = vor.u32 %v10183, %v10181
  %v10187 = vshll.u32 %v10116, 16
  %v10189 = vrot.slane %v10187, 1
  %v10190 = vsel %vm995, %v10185, %v10189
  %v10191 = vshrl.u32 %v10116, 16
  %v10193 = vor.u32 %v10191, %v10189
  %v10195 = vshll.u32 %v10117, 16
  %v10197 = vrot.slane %v10195, 1
  %v10198 = vsel %vm995, %v10193, %v10197
  %v10199 = vshrl.u32 %v10117, 16
  %v10201 = vor.u32 %v10199, %v10197
  %v10203 = vshll.u32 %v10118, 16
  %v10205 = vrot.slane %v10203, 1
  %v10206 = vsel %vm995, %v10201, %v10205
  %v10207 = vshrl.u32 %v10118, 16
  %v10209 = vor.u32 %v10207, %v10205
  %v10211 = vshll.u32 %v10119, 16
  %v10213 = vrot.slane %v10211, 1
  %v10214 = vsel %vm995, %v10209, %v10213
  %v10215 = vshrl.u32 %v10119, 16
  %v10217 = vor.u32 %v10215, %v10213
  %v10219 = vshll.u32 %v10120, 16
  %v10221 = vrot.slane %v10219, 1
  %v10222 = vsel %vm995, %v10217, %v10221
  %v10223 = vshrl.u32 %v10120, 16
  %v10225 = vor.u32 %v10223, %v10221
  %v10227 = vshll.u32 %v10121, 16
  %v10229 = vrot.slane %v10227, 1
  %v10230 = vsel %vm995, %v10225, %v10229
  %v10231 = vshrl.u32 %v10121, 16
  %v10233 = vor.u32 %v10231, %v10229
  %v10235 = vshll.u32 %v10122, 16
  %v10237 = vrot.slane %v10235, 1
  %v10238 = vsel %vm995, %v10233, %v10237
  %v10239 = vshrl.u32 %v10122, 16
  %v10241 = vor.u32 %v10239, %v10237
  %v10243 = vshll.u32 %v10123, 16
  %v10245 = vrot.slane %v10243, 1
  %v10246 = vsel %vm995, %v10241, %v10245
  %v10247 = vshrl.u32 %v10123, 16
  %v10249 = vor.u32 %v10247, %v10245
  %v10251 = vshll.u32 %v10124, 16
  %v10253 = vrot.slane %v10251, 1
  %v10254 = vsel %vm995, %v10249, %v10253
  %v10255 = vshrl.u32 %v10124, 16
  %v10257 = vor.u32 %v10255, %v10253
  %v10259 = vshll.u32 %v10125, 16
  %v10261 = vrot.slane %v10259, 1
  %v10262 = vsel %vm995, %v10257, %v10261
  %v10263 = vshrl.u32 %v10125, 16
  %v10265 = vor.u32 %v10263, %v10261
  %v10267 = vshll.u32 %v10126, 16
  %v10269 = vrot.slane %v10267, 1
  %v10270 = vsel %vm995, %v10265, %v10269
  %v10271 = vshrl.u32 %v10126, 16
  %v10273 = vor.u32 %v10271, %v10269
  %v10275 = vshll.u32 %v10130, 16
  %v10277 = vrot.slane %v10275, 1
  %v10278 = vsel %vm995, %v10273, %v10277
  %v10279 = vshrl.u32 %v10130, 16
  %v10281 = vor.u32 %v10279, %v10277
  %v10282 = vpack.c.b16 %v10074, %v10073
  %v10283 = vpack.c.b16 %v10076, %v10075
  %v10284 = vpack.c.b16 %v10078, %v10077
  %v10285 = vpack.c.b16 %v10080, %v10079
  %v10286 = vpack.c.b16 %v10082, %v10081
  %v10287 = vpack.c.b16 %v10084, %v10083
  %v10288 = vpack.c.b16 %v10086, %v10085
  %v10289 = vpack.c.b16 %v10088, %v10087
  %v10290 = vpack.c.b16 %v10090, %v10089
  %v10291 = vpack.c.b16 %v10092, %v10091
  %v10292 = vpack.c.b16 %v10094, %v10093
  %v10293 = vpack.c.b16 %v10096, %v10095
  %v10294 = vpack.c.b16 %v10098, %v10097
  %v10295 = vpack.c.b16 %v10100, %v10099
  %v10296 = vpack.c.b16 %v10102, %v10101
  %v10297 = vpack.c.b16 %v10104, %v10103
  %v10298 = vpack.c.b16 %v10106, %v10105
  %v10299 = vpack.c.b16 %v10129, %v10107
  %vm10300 = vcmask 1042432
  %v10301 = vrot.slane %v10282, 5
  %v10302 = vrot.slane %v10283, 5
  %v10303 = vsel %vm10300, %v10301, %v10302
  %v10304 = vrot.slane %v10284, 5
  %v10305 = vsel %vm10300, %v10302, %v10304
  %v10306 = vrot.slane %v10285, 5
  %v10307 = vsel %vm10300, %v10304, %v10306
  %v10308 = vrot.slane %v10286, 5
  %v10309 = vsel %vm10300, %v10306, %v10308
  %v10310 = vrot.slane %v10287, 5
  %v10311 = vsel %vm10300, %v10308, %v10310
  %v10312 = vrot.slane %v10288, 5
  %v10313 = vsel %vm10300, %v10310, %v10312
  %v10314 = vrot.slane %v10289, 5
  %v10315 = vsel %vm10300, %v10312, %v10314
  %v10316 = vrot.slane %v10290, 5
  %v10317 = vsel %vm10300, %v10314, %v10316
  %v10318 = vrot.slane %v10291, 5
  %v10319 = vsel %vm10300, %v10316, %v10318
  %v10320 = vrot.slane %v10292, 5
  %v10321 = vsel %vm10300, %v10318, %v10320
  %v10322 = vrot.slane %v10293, 5
  %v10323 = vsel %vm10300, %v10320, %v10322
  %v10324 = vrot.slane %v10294, 5
  %v10325 = vsel %vm10300, %v10322, %v10324
  %v10326 = vrot.slane %v10295, 5
  %v10327 = vsel %vm10300, %v10324, %v10326
  %v10328 = vrot.slane %v10296, 5
  %v10329 = vsel %vm10300, %v10326, %v10328
  %v10330 = vrot.slane %v10297, 5
  %v10331 = vsel %vm10300, %v10328, %v10330
  %v10332 = vrot.slane %v10298, 5
  %v10333 = vsel %vm10300, %v10330, %v10332
  %v10334 = vrot.slane %v10299, 5
  %v10335 = vsel %vm10300, %v10332, %v10334
  %v10338 = vunpack.c.l.b16 %v10025
  %v10339 = vunpack.c.l.b16 %v10026
  %v10340 = vpack.c.b16 %v10339, %v10338
  %v10341 = vrot.slane %v10340, 5
  %v10342 = vsel %vm10300, %v10334, %v10341
  %v10344 = vunpack.c.l.b16 %v10027
  %v10345 = vpack.c.b16 %v10344, %v10344
  %vm10346 = vsmask.f32 2304
  %v10348 = vshrl.u32 %v10283, 16
  %v10350 = vrot.slane %v10348, 5
  %v10351 = vshll.u32 %v10283, 16
  %v10353 = vrot.slane %v10351, 6
  %v10354 = vor.u32 %v10350, %v10353
  %v10356 = vshrl.u32 %v10284, 16
  %v10358 = vrot.slane %v10356, 5
  %v10359 = vshll.u32 %v10284, 16
  %v10361 = vrot.slane %v10359, 6
  %v10362 = vor.u32 %v10358, %v10361
  %v10363 = vsel %vm10346, %v10354, %v10362
  %v10365 = vshrl.u32 %v10285, 16
  %v10367 = vrot.slane %v10365, 5
  %v10368 = vshll.u32 %v10285, 16
  %v10370 = vrot.slane %v10368, 6
  %v10371 = vor.u32 %v10367, %v10370
  %v10372 = vsel %vm10346, %v10362, %v10371
  %v10374 = vshrl.u32 %v10286, 16
  %v10376 = vrot.slane %v10374, 5
  %v10377 = vshll.u32 %v10286, 16
  %v10379 = vrot.slane %v10377, 6
  %v10380 = vor.u32 %v10376, %v10379
  %v10381 = vsel %vm10346, %v10371, %v10380
  %v10383 = vshrl.u32 %v10287, 16
  %v10385 = vrot.slane %v10383, 5
  %v10386 = vshll.u32 %v10287, 16
  %v10388 = vrot.slane %v10386, 6
  %v10389 = vor.u32 %v10385, %v10388
  %v10390 = vsel %vm10346, %v10380, %v10389
  %v10392 = vshrl.u32 %v10288, 16
  %v10394 = vrot.slane %v10392, 5
  %v10395 = vshll.u32 %v10288, 16
  %v10397 = vrot.slane %v10395, 6
  %v10398 = vor.u32 %v10394, %v10397
  %v10399 = vsel %vm10346, %v10389, %v10398
  %v10401 = vshrl.u32 %v10289, 16
  %v10403 = vrot.slane %v10401, 5
  %v10404 = vshll.u32 %v10289, 16
  %v10406 = vrot.slane %v10404, 6
  %v10407 = vor.u32 %v10403, %v10406
  %v10408 = vsel %vm10346, %v10398, %v10407
  %v10410 = vshrl.u32 %v10290, 16
  %v10412 = vrot.slane %v10410, 5
  %v10413 = vshll.u32 %v10290, 16
  %v10415 = vrot.slane %v10413, 6
  %v10416 = vor.u32 %v10412, %v10415
  %v10417 = vsel %vm10346, %v10407, %v10416
  %v10419 = vshrl.u32 %v10291, 16
  %v10421 = vrot.slane %v10419, 5
  %v10422 = vshll.u32 %v10291, 16
  %v10424 = vrot.slane %v10422, 6
  %v10425 = vor.u32 %v10421, %v10424
  %v10426 = vsel %vm10346, %v10416, %v10425
  %v10428 = vshrl.u32 %v10292, 16
  %v10430 = vrot.slane %v10428, 5
  %v10431 = vshll.u32 %v10292, 16
  %v10433 = vrot.slane %v10431, 6
  %v10434 = vor.u32 %v10430, %v10433
  %v10435 = vsel %vm10346, %v10425, %v10434
  %v10437 = vshrl.u32 %v10293, 16
  %v10439 = vrot.slane %v10437, 5
  %v10440 = vshll.u32 %v10293, 16
  %v10442 = vrot.slane %v10440, 6
  %v10443 = vor.u32 %v10439, %v10442
  %v10444 = vsel %vm10346, %v10434, %v10443
  %v10446 = vshrl.u32 %v10294, 16
  %v10448 = vrot.slane %v10446, 5
  %v10449 = vshll.u32 %v10294, 16
  %v10451 = vrot.slane %v10449, 6
  %v10452 = vor.u32 %v10448, %v10451
  %v10453 = vsel %vm10346, %v10443, %v10452
  %v10455 = vshrl.u32 %v10295, 16
  %v10457 = vrot.slane %v10455, 5
  %v10458 = vshll.u32 %v10295, 16
  %v10460 = vrot.slane %v10458, 6
  %v10461 = vor.u32 %v10457, %v10460
  %v10462 = vsel %vm10346, %v10452, %v10461
  %v10464 = vshrl.u32 %v10296, 16
  %v10466 = vrot.slane %v10464, 5
  %v10467 = vshll.u32 %v10296, 16
  %v10469 = vrot.slane %v10467, 6
  %v10470 = vor.u32 %v10466, %v10469
  %v10471 = vsel %vm10346, %v10461, %v10470
  %v10473 = vshrl.u32 %v10297, 16
  %v10475 = vrot.slane %v10473, 5
  %v10476 = vshll.u32 %v10297, 16
  %v10478 = vrot.slane %v10476, 6
  %v10479 = vor.u32 %v10475, %v10478
  %v10480 = vsel %vm10346, %v10470, %v10479
  %v10482 = vshrl.u32 %v10298, 16
  %v10484 = vrot.slane %v10482, 5
  %v10485 = vshll.u32 %v10298, 16
  %v10487 = vrot.slane %v10485, 6
  %v10488 = vor.u32 %v10484, %v10487
  %v10489 = vsel %vm10346, %v10479, %v10488
  %v10491 = vshrl.u32 %v10299, 16
  %v10493 = vrot.slane %v10491, 5
  %v10494 = vshll.u32 %v10299, 16
  %v10496 = vrot.slane %v10494, 6
  %v10497 = vor.u32 %v10493, %v10496
  %v10498 = vsel %vm10346, %v10488, %v10497
  %v10500 = vshrl.u32 %v10340, 16
  %v10502 = vrot.slane %v10500, 5
  %v10503 = vshll.u32 %v10340, 16
  %v10505 = vrot.slane %v10503, 6
  %v10506 = vor.u32 %v10502, %v10505
  %v10507 = vsel %vm10346, %v10497, %v10506
  %v10509 = vshll.u32 %v10345, 16
  %v10511 = vrot.slane %v10509, 6
  %v10512 = vsel %vm10346, %v10506, %v10511
  %v10514 = vunpack.c.l.b16 %v10028
  %v10515 = vpack.c.b16 %v10076, %v10514
  %v10516 = vrot.slane %v10515, 6
  %v10517 = vrot.slane %v10284, 6
  %v10518 = vsel %vm3691, %v10516, %v10517
  %v10519 = vrot.slane %v10285, 6
  %v10520 = vsel %vm3691, %v10517, %v10519
  %v10521 = vrot.slane %v10286, 6
  %v10522 = vsel %vm3691, %v10519, %v10521
  %v10523 = vrot.slane %v10287, 6
  %v10524 = vsel %vm3691, %v10521, %v10523
  %v10525 = vrot.slane %v10288, 6
  %v10526 = vsel %vm3691, %v10523, %v10525
  %v10527 = vrot.slane %v10289, 6
  %v10528 = vsel %vm3691, %v10525, %v10527
  %v10529 = vrot.slane %v10290, 6
  %v10530 = vsel %vm3691, %v10527, %v10529
  %v10531 = vrot.slane %v10291, 6
  %v10532 = vsel %vm3691, %v10529, %v10531
  %v10533 = vrot.slane %v10292, 6
  %v10534 = vsel %vm3691, %v10531, %v10533
  %v10535 = vrot.slane %v10293, 6
  %v10536 = vsel %vm3691, %v10533, %v10535
  %v10537 = vrot.slane %v10294, 6
  %v10538 = vsel %vm3691, %v10535, %v10537
  %v10539 = vrot.slane %v10295, 6
  %v10540 = vsel %vm3691, %v10537, %v10539
  %v10541 = vrot.slane %v10296, 6
  %v10542 = vsel %vm3691, %v10539, %v10541
  %v10543 = vrot.slane %v10297, 6
  %v10544 = vsel %vm3691, %v10541, %v10543
  %v10545 = vrot.slane %v10298, 6
  %v10546 = vsel %vm3691, %v10543, %v10545
  %v10547 = vrot.slane %v10299, 6
  %v10548 = vsel %vm3691, %v10545, %v10547
  %v10549 = vrot.slane %v10340, 6
  %v10550 = vsel %vm3691, %v10547, %v10549
  %v10551 = vrot.slane %v10345, 6
  %v10552 = vsel %vm3691, %v10549, %v10551
  %v10557 = vunpack.c.l.b16 %v10029
  %v10558 = vunpack.c.l.b16 %v10030
  %v10559 = vunpack.c.l.b16 %v10031
  %v10560 = vunpack.c.l.b16 %v10032
  %v10561 = vpack.c.b16 %v10078, %v10557
  %v10562 = vpack.c.b16 %v10559, %v10558
  %v10563 = vpack.c.b16 %v10560, %v10560
  %v10564 = vrot.slane %v10561, 6
  %v10565 = vsel %vm3691, %v10564, %v10519
  %v10566 = vrot.slane %v10562, 6
  %v10567 = vsel %vm3691, %v10549, %v10566
  %v10568 = vrot.slane %v10563, 6
  %v10569 = vsel %vm3691, %v10566, %v10568
  %v10571 = vunpack.c.l.b16 %v10033
  %v10572 = vpack.c.b16 %v10571, %v10571
  %v10574 = vshrl.u32 %v10561, 16
  %v10576 = vrot.slane %v10574, 6
  %v10577 = vshll.u32 %v10561, 16
  %v10579 = vrot.slane %v10577, 7
  %v10580 = vor.u32 %v10576, %v10579
  %v10581 = vrot.slane %v10365, 6
  %v10582 = vrot.slane %v10368, 7
  %v10583 = vor.u32 %v10581, %v10582
  %v10584 = vsel %vm3251, %v10580, %v10583
  %v10585 = vrot.slane %v10374, 6
  %v10586 = vrot.slane %v10377, 7
  %v10587 = vor.u32 %v10585, %v10586
  %v10588 = vsel %vm3251, %v10583, %v10587
  %v10589 = vrot.slane %v10383, 6
  %v10590 = vrot.slane %v10386, 7
  %v10591 = vor.u32 %v10589, %v10590
  %v10592 = vsel %vm3251, %v10587, %v10591
  %v10593 = vrot.slane %v10392, 6
  %v10594 = vrot.slane %v10395, 7
  %v10595 = vor.u32 %v10593, %v10594
  %v10596 = vsel %vm3251, %v10591, %v10595
  %v10597 = vrot.slane %v10401, 6
  %v10598 = vrot.slane %v10404, 7
  %v10599 = vor.u32 %v10597, %v10598
  %v10600 = vsel %vm3251, %v10595, %v10599
  %v10601 = vrot.slane %v10410, 6
  %v10602 = vrot.slane %v10413, 7
  %v10603 = vor.u32 %v10601, %v10602
  %v10604 = vsel %vm3251, %v10599, %v10603
  %v10605 = vrot.slane %v10419, 6
  %v10606 = vrot.slane %v10422, 7
  %v10607 = vor.u32 %v10605, %v10606
  %v10608 = vsel %vm3251, %v10603, %v10607
  %v10609 = vrot.slane %v10428, 6
  %v10610 = vrot.slane %v10431, 7
  %v10611 = vor.u32 %v10609, %v10610
  %v10612 = vsel %vm3251, %v10607, %v10611
  %v10613 = vrot.slane %v10437, 6
  %v10614 = vrot.slane %v10440, 7
  %v10615 = vor.u32 %v10613, %v10614
  %v10616 = vsel %vm3251, %v10611, %v10615
  %v10617 = vrot.slane %v10446, 6
  %v10618 = vrot.slane %v10449, 7
  %v10619 = vor.u32 %v10617, %v10618
  %v10620 = vsel %vm3251, %v10615, %v10619
  %v10621 = vrot.slane %v10455, 6
  %v10622 = vrot.slane %v10458, 7
  %v10623 = vor.u32 %v10621, %v10622
  %v10624 = vsel %vm3251, %v10619, %v10623
  %v10625 = vrot.slane %v10464, 6
  %v10626 = vrot.slane %v10467, 7
  %v10627 = vor.u32 %v10625, %v10626
  %v10628 = vsel %vm3251, %v10623, %v10627
  %v10629 = vrot.slane %v10473, 6
  %v10630 = vrot.slane %v10476, 7
  %v10631 = vor.u32 %v10629, %v10630
  %v10632 = vsel %vm3251, %v10627, %v10631
  %v10633 = vrot.slane %v10482, 6
  %v10634 = vrot.slane %v10485, 7
  %v10635 = vor.u32 %v10633, %v10634
  %v10636 = vsel %vm3251, %v10631, %v10635
  %v10637 = vrot.slane %v10491, 6
  %v10638 = vrot.slane %v10494, 7
  %v10639 = vor.u32 %v10637, %v10638
  %v10640 = vsel %vm3251, %v10635, %v10639
  %v10641 = vrot.slane %v10500, 6
  %v10642 = vrot.slane %v10503, 7
  %v10643 = vor.u32 %v10641, %v10642
  %v10644 = vsel %vm3251, %v10639, %v10643
  %v10646 = vshrl.u32 %v10562, 16
  %v10648 = vrot.slane %v10646, 6
  %v10649 = vshll.u32 %v10562, 16
  %v10651 = vrot.slane %v10649, 7
  %v10652 = vor.u32 %v10648, %v10651
  %v10653 = vsel %vm3251, %v10643, %v10652
  %v10655 = vshrl.u32 %v10572, 16
  %v10657 = vrot.slane %v10655, 6
  %v10658 = vshll.u32 %v10572, 16
  %v10660 = vrot.slane %v10658, 7
  %v10661 = vor.u32 %v10657, %v10660
  %v10662 = vsel %vm3251, %v10652, %v10661
  %v10664 = vunpack.c.l.b16 %v10034
  %v10665 = vpack.c.b16 %v10078, %v10664
  %v10666 = vrot.slane %v10665, 7
  %v10667 = vrot.slane %v10285, 7
  %v10668 = vsel %vm9416, %v10666, %v10667
  %v10669 = vrot.slane %v10286, 7
  %v10670 = vsel %vm9416, %v10667, %v10669
  %v10671 = vrot.slane %v10287, 7
  %v10672 = vsel %vm9416, %v10669, %v10671
  %v10673 = vrot.slane %v10288, 7
  %v10674 = vsel %vm9416, %v10671, %v10673
  %v10675 = vrot.slane %v10289, 7
  %v10676 = vsel %vm9416, %v10673, %v10675
  %v10677 = vrot.slane %v10290, 7
  %v10678 = vsel %vm9416, %v10675, %v10677
  %v10679 = vrot.slane %v10291, 7
  %v10680 = vsel %vm9416, %v10677, %v10679
  %v10681 = vrot.slane %v10292, 7
  %v10682 = vsel %vm9416, %v10679, %v10681
  %v10683 = vrot.slane %v10293, 7
  %v10684 = vsel %vm9416, %v10681, %v10683
  %v10685 = vrot.slane %v10294, 7
  %v10686 = vsel %vm9416, %v10683, %v10685
  %v10687 = vrot.slane %v10295, 7
  %v10688 = vsel %vm9416, %v10685, %v10687
  %v10689 = vrot.slane %v10296, 7
  %v10690 = vsel %vm9416, %v10687, %v10689
  %v10691 = vrot.slane %v10297, 7
  %v10692 = vsel %vm9416, %v10689, %v10691
  %v10693 = vrot.slane %v10298, 7
  %v10694 = vsel %vm9416, %v10691, %v10693
  %v10695 = vrot.slane %v10299, 7
  %v10696 = vsel %vm9416, %v10693, %v10695
  %v10697 = vrot.slane %v10340, 7
  %v10698 = vsel %vm9416, %v10695, %v10697
  %v10699 = vrot.slane %v10562, 7
  %v10700 = vsel %vm9416, %v10697, %v10699
  %v10701 = vrot.slane %v10572, 7
  %v10702 = vsel %vm9416, %v10699, %v10701
  %v10703 = vld [vmem:[%s3] sm:$0xf]
  %v10704 = vld [vmem:[%s3 + $0x4] sm:$0xf]
  %v10705 = vld [vmem:[%s3 + $0x8] sm:$0xf]
  %v10706 = vld [vmem:[%s3 + $0xc] sm:$0xf]
  %v10707 = vld [vmem:[%s3 + $0x10] sm:$0xf]
  %v10708 = vld [vmem:[%s3 + $0x14] sm:$0xf]
  %v10709 = vld [vmem:[%s3 + $0x18] sm:$0xf]
  %v10710 = vld [vmem:[%s3 + $0x1c] sm:$0xf]
  %v10711 = vld [vmem:[%s3 + $0x20] sm:$0xf]
  %v10712 = vld [vmem:[%s3 + $0x24] sm:$0xf]
  %v10713 = vld [vmem:[%s3 + $0x28] sm:$0xf]
  %v10714 = vld [vmem:[%s3 + $0x2c] sm:$0xf]
  %v10715 = vld [vmem:[%s3 + $0x30] sm:$0xf]
  %v10716 = vld [vmem:[%s3 + $0x34] sm:$0xf]
  %v10717 = vld [vmem:[%s3 + $0x38] sm:$0xf]
  %v10718 = vld [vmem:[%s3 + $0x3c] sm:$0xf]
  %v10719 = vld [vmem:[%s3 + $0x40] sm:$0xf]
  %v10720 = vld [vmem:[%s3 + $0x44] sm:$0xf]
  %v10721 = vld [vmem:[%s3 + $0x48] sm:$0xf]
  %v10722 = vld [vmem:[%s3 + $0x4c] sm:$0xf]
  %v10723 = vld [vmem:[%s3 + $0x50] sm:$0xf]
  %v10724 = vld [vmem:[%s3 + $0x54] sm:$0xf]
  %v10725 = vld [vmem:[%s3 + $0x58] sm:$0xf]
  %v10726 = vld [vmem:[%s3 + $0x5c] sm:$0xf]
  %v10727 = vld [vmem:[%s3 + $0x60] sm:$0xf]
  %v10728 = vld [vmem:[%s3 + $0x64] sm:$0xf]
  %v10729 = vld [vmem:[%s3 + $0x68] sm:$0xf]
  %v10730 = vld [vmem:[%s3 + $0x6c] sm:$0xf]
  %v10731 = vld [vmem:[%s3 + $0x70] sm:$0xf]
  %v10732 = vld [vmem:[%s3 + $0x74] sm:$0xf]
  %v10733 = vld [vmem:[%s3 + $0x78] sm:$0xf]
  %v10734 = vld [vmem:[%s3 + $0x7c] sm:$0xf]
  %v10735 = vld [vmem:[%s3 + $0x80] sm:$0xf]
  %v10736 = vld [vmem:[%s3 + $0x84] sm:$0xf]
  %v10737 = vld [vmem:[%s3 + $0x88] sm:$0xf]
  %v10738 = vld [vmem:[%s3 + $0x8c] sm:$0xf]
  %v10739 = vld [vmem:[%s3 + $0x90] sm:$0xf]
  %v10740 = vld [vmem:[%s3 + $0x94] sm:$0xf]
  %v10741 = vld [vmem:[%s3 + $0x98] sm:$0xf]
  %v10742 = vld [vmem:[%s3 + $0x9c] sm:$0xf]
  %v10743 = vld [vmem:[%s3 + $0xa0] sm:$0xf]
  %v10744 = vld [vmem:[%s3 + $0xa4] sm:$0xf]
  %v10745 = vld [vmem:[%s3 + $0xa8] sm:$0xf]
  %v10746 = vld [vmem:[%s3 + $0xac] sm:$0xf]
  %v10747 = vld [vmem:[%s3 + $0xb0] sm:$0xf]
  %v10748 = vld [vmem:[%s3 + $0xb4] sm:$0xf]
  %v10749 = vld [vmem:[%s3 + $0xb8] sm:$0xf]
  %v10750 = vld [vmem:[%s3 + $0xbc] sm:$0xf]
  %v10751 = vld [vmem:[%s3 + $0xc0] sm:$0xf]
  %v10752 = vld [vmem:[%s3 + $0xc4] sm:$0xf]
  %v10753 = vld [vmem:[%s3 + $0xc8] sm:$0xf]
  %v10754 = vld [vmem:[%s3 + $0xcc] sm:$0xf]
  %v10755 = vld [vmem:[%s3 + $0xd0] sm:$0xf]
  %v10756 = vld [vmem:[%s3 + $0xd4] sm:$0xf]
  %v10757 = vld [vmem:[%s3 + $0xd8] sm:$0xf]
  %v10758 = vld [vmem:[%s3 + $0xdc] sm:$0xf]
  %v10759 = vld [vmem:[%s3 + $0xe0] sm:$0xf]
  %v10760 = vld [vmem:[%s3 + $0xe4] sm:$0xf]
  %v10761 = vld [vmem:[%s3 + $0xe8] sm:$0xf]
  %v10762 = vld [vmem:[%s3 + $0xec] sm:$0xf]
  %v10763 = vld [vmem:[%s3 + $0xf0] sm:$0xf]
  %v10764 = vld [vmem:[%s3 + $0xf4] sm:$0xf]
  %v10765 = vld [vmem:[%s3 + $0xf8] sm:$0xf]
  %v10766 = vld [vmem:[%s3 + $0xfc] sm:$0xf]
  %v10767 = vld [vmem:[%s3 + $0x100] sm:$0xf]
  %v10768 = vld [vmem:[%s3 + $0x104] sm:$0xf]
  %v10769 = vld [vmem:[%s3 + $0x108] sm:$0xf]
  %v10770 = vld [vmem:[%s3 + $0x10c] sm:$0xf]
  %v10771 = vld [vmem:[%s3 + $0x110] sm:$0xf]
  %v10772 = vld [vmem:[%s3 + $0x114] sm:$0xf]
  %v10773 = vld [vmem:[%s3 + $0x118] sm:$0xf]
  %v10774 = vld [vmem:[%s3 + $0x11c] sm:$0xf]
  %v10775 = vld [vmem:[%s3 + $0x120] sm:$0xf]
  %v10776 = vld [vmem:[%s3 + $0x124] sm:$0xf]
  %v10777 = vld [vmem:[%s3 + $0x128] sm:$0xf]
  %v10778 = vld [vmem:[%s3 + $0x12c] sm:$0xf]
  %v10779 = vld [vmem:[%s3 + $0x130] sm:$0xf]
  %v10780 = vld [vmem:[%s3 + $0x134] sm:$0xf]
  %v10781 = vld [vmem:[%s3 + $0x138] sm:$0xf]
  %v10782 = vld [vmem:[%s3 + $0x13c] sm:$0xf]
  %v10783 = vld [vmem:[%s3 + $0x140] sm:$0xf]
  %v10784 = vld [vmem:[%s3 + $0x144] sm:$0xf]
  %v10785 = vld [vmem:[%s3 + $0x148] sm:$0xf]
  %v10786 = vld [vmem:[%s3 + $0x14c] sm:$0xf]
  %v10787 = vld [vmem:[%s3 + $0x150] sm:$0xf]
  %v10788 = vld [vmem:[%s3 + $0x154] sm:$0xf]
  %v10789 = vld [vmem:[%s3 + $0x158] sm:$0xf]
  %v10790 = vld [vmem:[%s3 + $0x15c] sm:$0xf]
  %v10791 = vld [vmem:[%s3 + $0x160] sm:$0xf]
  %v10792 = vld [vmem:[%s3 + $0x164] sm:$0xf]
  %v10793 = vld [vmem:[%s3 + $0x168] sm:$0xf]
  %v10794 = vld [vmem:[%s3 + $0x16c] sm:$0xf]
  %v10795 = vld [vmem:[%s3 + $0x170] sm:$0xf]
  %v10796 = vld [vmem:[%s3 + $0x174] sm:$0xf]
  %v10797 = vld [vmem:[%s3 + $0x178] sm:$0xf]
  %v10798 = vld [vmem:[%s3 + $0x17c] sm:$0xf]
  %v10799 = vld [vmem:[%s3 + $0x180] sm:$0xf]
  %v10800 = vld [vmem:[%s3 + $0x184] sm:$0xf]
  %v10801 = vld [vmem:[%s3 + $0x188] sm:$0xf]
  %v10802 = vld [vmem:[%s3 + $0x18c] sm:$0xf]
  %v10803 = vld [vmem:[%s3 + $0x190] sm:$0xf]
  %v10804 = vld [vmem:[%s3 + $0x194] sm:$0xf]
  %v10805 = vld [vmem:[%s3 + $0x198] sm:$0xf]
  %v10806 = vld [vmem:[%s3 + $0x19c] sm:$0xf]
  %v10807 = vld [vmem:[%s3 + $0x1a0] sm:$0xf]
  %v10808 = vld [vmem:[%s3 + $0x1a4] sm:$0xf]
  %v10809 = vld [vmem:[%s3 + $0x1a8] sm:$0xf]
  %v10810 = vld [vmem:[%s3 + $0x1ac] sm:$0xf]
  %v10811 = vld [vmem:[%s3 + $0x1b0] sm:$0xf]
  %v10812 = vld [vmem:[%s3 + $0x1b4] sm:$0xf]
  %v10813 = vld [vmem:[%s3 + $0x1b8] sm:$0xf]
  %v10814 = vld [vmem:[%s3 + $0x1bc] sm:$0xf]
  %v10815 = vld [vmem:[%s3 + $0x1c0] sm:$0xf]
  %v10816 = vld [vmem:[%s3 + $0x1c4] sm:$0xf]
  %v10817 = vld [vmem:[%s3 + $0x1c8] sm:$0xf]
  %v10818 = vld [vmem:[%s3 + $0x1cc] sm:$0xf]
  %v10819 = vld [vmem:[%s3 + $0x1d0] sm:$0xf]
  %v10820 = vld [vmem:[%s3 + $0x1d4] sm:$0xf]
  %v10821 = vld [vmem:[%s3 + $0x1d8] sm:$0xf]
  %v10822 = vld [vmem:[%s3 + $0x1dc] sm:$0xf]
  %v10823 = vld [vmem:[%s3 + $0x1e0] sm:$0xf]
  %v10824 = vld [vmem:[%s3 + $0x1e4] sm:$0xf]
  %v10825 = vld [vmem:[%s3 + $0x1e8] sm:$0xf]
  %v10826 = vld [vmem:[%s3 + $0x1ec] sm:$0xf]
  %v10827 = vld [vmem:[%s3 + $0x1f0] sm:$0xf]
  %v10828 = vld [vmem:[%s3 + $0x1f4] sm:$0xf]
  %v10829 = vld [vmem:[%s3 + $0x1f8] sm:$0xf]
  %v10830 = vld [vmem:[%s3 + $0x1fc] sm:$0xf]
  %v10831 = vld [vmem:[%s3 + $0x200] sm:$0xf]
  %v10832 = vld [vmem:[%s3 + $0x204] sm:$0xf]
  %v10833 = vld [vmem:[%s3 + $0x208] sm:$0xf]
  %v10834 = vld [vmem:[%s3 + $0x20c] sm:$0xf]
  %v10835 = vld [vmem:[%s3 + $0x210] sm:$0xf]
  %v10836 = vld [vmem:[%s3 + $0x214] sm:$0xf]
  %v10837 = vld [vmem:[%s3 + $0x218] sm:$0xf]
  %v10838 = vld [vmem:[%s3 + $0x21c] sm:$0xf]
  %v10839 = vld [vmem:[%s3 + $0x220] sm:$0xf]
  %v10840 = vld [vmem:[%s3 + $0x224] sm:$0xf]
  %v10841 = vld [vmem:[%s3 + $0x228] sm:$0xf]
  %v10842 = vld [vmem:[%s3 + $0x22c] sm:$0xf]
  %v10843 = vld [vmem:[%s3 + $0x230] sm:$0xf]
  %v10844 = vld [vmem:[%s3 + $0x234] sm:$0xf]
  %v10845 = vld [vmem:[%s3 + $0x238] sm:$0xf]
  %v10846 = vld [vmem:[%s3 + $0x23c] sm:$0xf]
  %v10847 = vld [vmem:[%s4] sm:$0x1]
  %v10849 = vlaneseq
  %v10850 = vshrl.u32 %v10849, 7
  %v10851 = vsub.s32 0, %v10850
  %v10852 = vrot.slane %v10847, %v10851
  %v10854 = vrot.slane %v10109, 3
  %v10855 = vrot.slane %v10110, 3
  %v10856 = vsel %vm1547, %v10854, %v10855
  %v10857 = vrot.slane %v10142, 3
  %v10858 = vrot.slane %v10150, 3
  %v10859 = vsel %vm1547, %v10857, %v10858
  %v10860 = vrot.slane %v10301, 3
  %v10861 = vrot.slane %v10303, 3
  %v10862 = vsel %vm1547, %v10860, %v10861
  %v10863 = vrot.slane %v10302, 3
  %v10864 = vrot.slane %v10305, 3
  %v10865 = vsel %vm1547, %v10863, %v10864
  %v10866 = vrot.slane %v10354, 3
  %v10867 = vrot.slane %v10363, 3
  %v10868 = vsel %vm1547, %v10866, %v10867
  %v10869 = vrot.slane %v10516, 3
  %v10870 = vrot.slane %v10518, 3
  %v10871 = vsel %vm1547, %v10869, %v10870
  %v10872 = vrot.slane %v10564, 3
  %v10873 = vrot.slane %v10565, 3
  %v10874 = vsel %vm1547, %v10872, %v10873
  %v10875 = vrot.slane %v10580, 3
  %v10876 = vrot.slane %v10584, 3
  %v10877 = vsel %vm1547, %v10875, %v10876
  %v10878 = vrot.slane %v10666, 3
  %v10879 = vrot.slane %v10668, 3
  %v10880 = vsel %vm1547, %v10878, %v10879
  %v10881 = vrot.slane %v10111, 3
  %v10882 = vsel %vm1547, %v10855, %v10881
  %v10883 = vrot.slane %v10158, 3
  %v10884 = vsel %vm1547, %v10858, %v10883
  %v10885 = vsel %vm1547, %v10861, %v10864
  %v10886 = vrot.slane %v10307, 3
  %v10887 = vsel %vm1547, %v10864, %v10886
  %v10888 = vrot.slane %v10372, 3
  %v10889 = vsel %vm1547, %v10867, %v10888
  %v10890 = vrot.slane %v10520, 3
  %v10891 = vsel %vm1547, %v10870, %v10890
  %v10892 = vrot.slane %v10522, 3
  %v10893 = vsel %vm1547, %v10873, %v10892
  %v10894 = vrot.slane %v10588, 3
  %v10895 = vsel %vm1547, %v10876, %v10894
  %v10896 = vrot.slane %v10670, 3
  %v10897 = vsel %vm1547, %v10879, %v10896
  %v10898 = vrot.slane %v10112, 3
  %v10899 = vsel %vm1547, %v10881, %v10898
  %v10900 = vrot.slane %v10166, 3
  %v10901 = vsel %vm1547, %v10883, %v10900
  %v10902 = vrot.slane %v10309, 3
  %v10903 = vsel %vm1547, %v10886, %v10902
  %v10904 = vrot.slane %v10381, 3
  %v10905 = vsel %vm1547, %v10888, %v10904
  %v10906 = vsel %vm1547, %v10890, %v10892
  %v10907 = vrot.slane %v10524, 3
  %v10908 = vsel %vm1547, %v10892, %v10907
  %v10909 = vrot.slane %v10592, 3
  %v10910 = vsel %vm1547, %v10894, %v10909
  %v10911 = vrot.slane %v10672, 3
  %v10912 = vsel %vm1547, %v10896, %v10911
  %v10913 = vrot.slane %v10113, 3
  %v10914 = vsel %vm1547, %v10898, %v10913
  %v10915 = vrot.slane %v10174, 3
  %v10916 = vsel %vm1547, %v10900, %v10915
  %v10917 = vrot.slane %v10311, 3
  %v10918 = vsel %vm1547, %v10902, %v10917
  %v10919 = vrot.slane %v10390, 3
  %v10920 = vsel %vm1547, %v10904, %v10919
  %v10921 = vrot.slane %v10526, 3
  %v10922 = vsel %vm1547, %v10907, %v10921
  %v10923 = vrot.slane %v10596, 3
  %v10924 = vsel %vm1547, %v10909, %v10923
  %v10925 = vrot.slane %v10674, 3
  %v10926 = vsel %vm1547, %v10911, %v10925
  %v10927 = vrot.slane %v10114, 3
  %v10928 = vsel %vm1547, %v10913, %v10927
  %v10929 = vrot.slane %v10182, 3
  %v10930 = vsel %vm1547, %v10915, %v10929
  %v10931 = vrot.slane %v10313, 3
  %v10932 = vsel %vm1547, %v10917, %v10931
  %v10933 = vrot.slane %v10399, 3
  %v10934 = vsel %vm1547, %v10919, %v10933
  %v10935 = vrot.slane %v10528, 3
  %v10936 = vsel %vm1547, %v10921, %v10935
  %v10937 = vrot.slane %v10600, 3
  %v10938 = vsel %vm1547, %v10923, %v10937
  %v10939 = vrot.slane %v10676, 3
  %v10940 = vsel %vm1547, %v10925, %v10939
  %v10941 = vrot.slane %v10115, 3
  %v10942 = vsel %vm1547, %v10927, %v10941
  %v10943 = vrot.slane %v10190, 3
  %v10944 = vsel %vm1547, %v10929, %v10943
  %v10945 = vrot.slane %v10315, 3
  %v10946 = vsel %vm1547, %v10931, %v10945
  %v10947 = vrot.slane %v10408, 3
  %v10948 = vsel %vm1547, %v10933, %v10947
  %v10949 = vrot.slane %v10530, 3
  %v10950 = vsel %vm1547, %v10935, %v10949
  %v10951 = vrot.slane %v10604, 3
  %v10952 = vsel %vm1547, %v10937, %v10951
  %v10953 = vrot.slane %v10678, 3
  %v10954 = vsel %vm1547, %v10939, %v10953
  %v10955 = vrot.slane %v10116, 3
  %v10956 = vsel %vm1547, %v10941, %v10955
  %v10957 = vrot.slane %v10198, 3
  %v10958 = vsel %vm1547, %v10943, %v10957
  %v10959 = vrot.slane %v10317, 3
  %v10960 = vsel %vm1547, %v10945, %v10959
  %v10961 = vrot.slane %v10417, 3
  %v10962 = vsel %vm1547, %v10947, %v10961
  %v10963 = vrot.slane %v10532, 3
  %v10964 = vsel %vm1547, %v10949, %v10963
  %v10965 = vrot.slane %v10608, 3
  %v10966 = vsel %vm1547, %v10951, %v10965
  %v10967 = vrot.slane %v10680, 3
  %v10968 = vsel %vm1547, %v10953, %v10967
  %v10969 = vrot.slane %v10117, 3
  %v10970 = vsel %vm1547, %v10955, %v10969
  %v10971 = vrot.slane %v10206, 3
  %v10972 = vsel %vm1547, %v10957, %v10971
  %v10973 = vrot.slane %v10319, 3
  %v10974 = vsel %vm1547, %v10959, %v10973
  %v10975 = vrot.slane %v10426, 3
  %v10976 = vsel %vm1547, %v10961, %v10975
  %v10977 = vrot.slane %v10534, 3
  %v10978 = vsel %vm1547, %v10963, %v10977
  %v10979 = vrot.slane %v10612, 3
  %v10980 = vsel %vm1547, %v10965, %v10979
  %v10981 = vrot.slane %v10682, 3
  %v10982 = vsel %vm1547, %v10967, %v10981
  %v10983 = vrot.slane %v10118, 3
  %v10984 = vsel %vm1547, %v10969, %v10983
  %v10985 = vrot.slane %v10214, 3
  %v10986 = vsel %vm1547, %v10971, %v10985
  %v10987 = vrot.slane %v10321, 3
  %v10988 = vsel %vm1547, %v10973, %v10987
  %v10989 = vrot.slane %v10435, 3
  %v10990 = vsel %vm1547, %v10975, %v10989
  %v10991 = vrot.slane %v10536, 3
  %v10992 = vsel %vm1547, %v10977, %v10991
  %v10993 = vrot.slane %v10616, 3
  %v10994 = vsel %vm1547, %v10979, %v10993
  %v10995 = vrot.slane %v10684, 3
  %v10996 = vsel %vm1547, %v10981, %v10995
  %v10997 = vrot.slane %v10119, 3
  %v10998 = vsel %vm1547, %v10983, %v10997
  %v10999 = vrot.slane %v10222, 3
  %v11000 = vsel %vm1547, %v10985, %v10999
  %v11001 = vrot.slane %v10323, 3
  %v11002 = vsel %vm1547, %v10987, %v11001
  %v11003 = vrot.slane %v10444, 3
  %v11004 = vsel %vm1547, %v10989, %v11003
  %v11005 = vrot.slane %v10538, 3
  %v11006 = vsel %vm1547, %v10991, %v11005
  %v11007 = vrot.slane %v10620, 3
  %v11008 = vsel %vm1547, %v10993, %v11007
  %v11009 = vrot.slane %v10686, 3
  %v11010 = vsel %vm1547, %v10995, %v11009
  %v11011 = vrot.slane %v10120, 3
  %v11012 = vsel %vm1547, %v10997, %v11011
  %v11013 = vrot.slane %v10230, 3
  %v11014 = vsel %vm1547, %v10999, %v11013
  %v11015 = vrot.slane %v10325, 3
  %v11016 = vsel %vm1547, %v11001, %v11015
  %v11017 = vrot.slane %v10453, 3
  %v11018 = vsel %vm1547, %v11003, %v11017
  %v11019 = vrot.slane %v10540, 3
  %v11020 = vsel %vm1547, %v11005, %v11019
  %v11021 = vrot.slane %v10624, 3
  %v11022 = vsel %vm1547, %v11007, %v11021
  %v11023 = vrot.slane %v10688, 3
  %v11024 = vsel %vm1547, %v11009, %v11023
  %v11025 = vrot.slane %v10121, 3
  %v11026 = vsel %vm1547, %v11011, %v11025
  %v11027 = vrot.slane %v10238, 3
  %v11028 = vsel %vm1547, %v11013, %v11027
  %v11029 = vrot.slane %v10327, 3
  %v11030 = vsel %vm1547, %v11015, %v11029
  %v11031 = vrot.slane %v10462, 3
  %v11032 = vsel %vm1547, %v11017, %v11031
  %v11033 = vrot.slane %v10542, 3
  %v11034 = vsel %vm1547, %v11019, %v11033
  %v11035 = vrot.slane %v10628, 3
  %v11036 = vsel %vm1547, %v11021, %v11035
  %v11037 = vrot.slane %v10690, 3
  %v11038 = vsel %vm1547, %v11023, %v11037
  %v11039 = vrot.slane %v10122, 3
  %v11040 = vsel %vm1547, %v11025, %v11039
  %v11041 = vrot.slane %v10246, 3
  %v11042 = vsel %vm1547, %v11027, %v11041
  %v11043 = vrot.slane %v10329, 3
  %v11044 = vsel %vm1547, %v11029, %v11043
  %v11045 = vrot.slane %v10471, 3
  %v11046 = vsel %vm1547, %v11031, %v11045
  %v11047 = vrot.slane %v10544, 3
  %v11048 = vsel %vm1547, %v11033, %v11047
  %v11049 = vrot.slane %v10632, 3
  %v11050 = vsel %vm1547, %v11035, %v11049
  %v11051 = vrot.slane %v10692, 3
  %v11052 = vsel %vm1547, %v11037, %v11051
  %v11053 = vrot.slane %v10123, 3
  %v11054 = vsel %vm1547, %v11039, %v11053
  %v11055 = vrot.slane %v10254, 3
  %v11056 = vsel %vm1547, %v11041, %v11055
  %v11057 = vrot.slane %v10331, 3
  %v11058 = vsel %vm1547, %v11043, %v11057
  %v11059 = vrot.slane %v10480, 3
  %v11060 = vsel %vm1547, %v11045, %v11059
  %v11061 = vrot.slane %v10546, 3
  %v11062 = vsel %vm1547, %v11047, %v11061
  %v11063 = vrot.slane %v10636, 3
  %v11064 = vsel %vm1547, %v11049, %v11063
  %v11065 = vrot.slane %v10694, 3
  %v11066 = vsel %vm1547, %v11051, %v11065
  %v11067 = vrot.slane %v10124, 3
  %v11068 = vsel %vm1547, %v11053, %v11067
  %v11069 = vrot.slane %v10262, 3
  %v11070 = vsel %vm1547, %v11055, %v11069
  %v11071 = vrot.slane %v10333, 3
  %v11072 = vsel %vm1547, %v11057, %v11071
  %v11073 = vrot.slane %v10489, 3
  %v11074 = vsel %vm1547, %v11059, %v11073
  %v11075 = vrot.slane %v10548, 3
  %v11076 = vsel %vm1547, %v11061, %v11075
  %v11077 = vrot.slane %v10640, 3
  %v11078 = vsel %vm1547, %v11063, %v11077
  %v11079 = vrot.slane %v10696, 3
  %v11080 = vsel %vm1547, %v11065, %v11079
  %v11081 = vrot.slane %v10125, 3
  %v11082 = vsel %vm1547, %v11067, %v11081
  %v11083 = vrot.slane %v10270, 3
  %v11084 = vsel %vm1547, %v11069, %v11083
  %v11085 = vrot.slane %v10335, 3
  %v11086 = vsel %vm1547, %v11071, %v11085
  %v11087 = vrot.slane %v10498, 3
  %v11088 = vsel %vm1547, %v11073, %v11087
  %v11089 = vrot.slane %v10550, 3
  %v11090 = vsel %vm1547, %v11075, %v11089
  %v11091 = vrot.slane %v10644, 3
  %v11092 = vsel %vm1547, %v11077, %v11091
  %v11093 = vrot.slane %v10698, 3
  %v11094 = vsel %vm1547, %v11079, %v11093
  %v11095 = vrot.slane %v10126, 3
  %v11096 = vsel %vm1547, %v11081, %v11095
  %v11097 = vrot.slane %v10278, 3
  %v11098 = vsel %vm1547, %v11083, %v11097
  %v11099 = vrot.slane %v10342, 3
  %v11100 = vsel %vm1547, %v11085, %v11099
  %v11101 = vrot.slane %v10507, 3
  %v11102 = vsel %vm1547, %v11087, %v11101
  %v11103 = vrot.slane %v10567, 3
  %v11104 = vsel %vm1547, %v11089, %v11103
  %v11105 = vrot.slane %v10653, 3
  %v11106 = vsel %vm1547, %v11091, %v11105
  %v11107 = vrot.slane %v10700, 3
  %v11108 = vsel %vm1547, %v11093, %v11107
  %v11109 = vrot.slane %v10127, 3
  %v11110 = vsel %vm1547, %v11095, %v11109
  %v11111 = vrot.slane %v10281, 3
  %v11112 = vsel %vm1547, %v11097, %v11111
  %v11113 = vrot.slane %v10334, 3
  %v11114 = vsel %vm1547, %v11085, %v11113
  %v11115 = vrot.slane %v10341, 3
  %v11116 = vsel %vm1547, %v11099, %v11115
  %v11117 = vrot.slane %v10512, 3
  %v11118 = vsel %vm1547, %v11101, %v11117
  %v11119 = vrot.slane %v10552, 3
  %v11120 = vsel %vm1547, %v11089, %v11119
  %v11121 = vrot.slane %v10569, 3
  %v11122 = vsel %vm1547, %v11103, %v11121
  %v11123 = vrot.slane %v10662, 3
  %v11124 = vsel %vm1547, %v11105, %v11123
  %v11125 = vrot.slane %v10702, 3
  %v11126 = vsel %vm1547, %v11107, %v11125
  %v11404 = vunpack.c.l.b16 %v10703
  %v11405 = vunpack.c.l.b16 %v10704
  %v11406 = vunpack.c.l.b16 %v10705
  %v11407 = vunpack.c.l.b16 %v10706
  %v11408 = vunpack.c.l.b16 %v10707
  %v11409 = vunpack.c.l.b16 %v10708
  %v11410 = vunpack.c.l.b16 %v10709
  %v11411 = vunpack.c.l.b16 %v10710
  %v11412 = vunpack.c.l.b16 %v10711
  %v11413 = vunpack.c.l.b16 %v10712
  %v11414 = vunpack.c.l.b16 %v10713
  %v11415 = vunpack.c.l.b16 %v10714
  %v11416 = vunpack.c.l.b16 %v10715
  %v11417 = vunpack.c.l.b16 %v10716
  %v11418 = vunpack.c.l.b16 %v10717
  %v11419 = vunpack.c.l.b16 %v10718
  %v11420 = vunpack.c.l.b16 %v10719
  %v11421 = vunpack.c.l.b16 %v10720
  %v11422 = vunpack.c.l.b16 %v10721
  %v11423 = vunpack.c.l.b16 %v10722
  %v11424 = vunpack.c.l.b16 %v10723
  %v11425 = vunpack.c.l.b16 %v10724
  %v11426 = vunpack.c.l.b16 %v10725
  %v11427 = vunpack.c.l.b16 %v10726
  %v11428 = vunpack.c.l.b16 %v10727
  %v11429 = vunpack.c.l.b16 %v10728
  %v11430 = vunpack.c.l.b16 %v10729
  %v11431 = vunpack.c.l.b16 %v10730
  %v11432 = vunpack.c.l.b16 %v10731
  %v11433 = vunpack.c.l.b16 %v10732
  %v11434 = vunpack.c.l.b16 %v10733
  %v11435 = vunpack.c.l.b16 %v10734
  %v11436 = vunpack.c.l.b16 %v10735
  %v11437 = vunpack.c.l.b16 %v10736
  %v11438 = vunpack.c.l.b16 %v10737
  %v11439 = vunpack.c.l.b16 %v10738
  %v11440 = vunpack.c.l.b16 %v10739
  %v11441 = vunpack.c.l.b16 %v10740
  %v11442 = vunpack.c.l.b16 %v10741
  %v11443 = vunpack.c.l.b16 %v10742
  %v11444 = vunpack.c.l.b16 %v10743
  %v11445 = vunpack.c.l.b16 %v10744
  %v11446 = vunpack.c.l.b16 %v10745
  %v11447 = vunpack.c.l.b16 %v10746
  %v11448 = vunpack.c.l.b16 %v10747
  %v11449 = vunpack.c.l.b16 %v10748
  %v11450 = vunpack.c.l.b16 %v10749
  %v11451 = vunpack.c.l.b16 %v10750
  %v11452 = vunpack.c.l.b16 %v10751
  %v11453 = vunpack.c.l.b16 %v10752
  %v11454 = vunpack.c.l.b16 %v10753
  %v11455 = vunpack.c.l.b16 %v10754
  %v11456 = vunpack.c.l.b16 %v10755
  %v11457 = vunpack.c.l.b16 %v10756
  %v11458 = vunpack.c.l.b16 %v10757
  %v11459 = vunpack.c.l.b16 %v10758
  %v11460 = vunpack.c.l.b16 %v10759
  %v11461 = vunpack.c.l.b16 %v10760
  %v11462 = vunpack.c.l.b16 %v10761
  %v11463 = vunpack.c.l.b16 %v10762
  %v11464 = vunpack.c.l.b16 %v10763
  %v11465 = vunpack.c.l.b16 %v10764
  %v11466 = vunpack.c.l.b16 %v10765
  %v11467 = vunpack.c.l.b16 %v10766
  %v11468 = vunpack.c.l.b16 %v10767
  %v11469 = vunpack.c.l.b16 %v10768
  %v11470 = vunpack.c.l.b16 %v10769
  %v11471 = vunpack.c.l.b16 %v10770
  %v11472 = vunpack.c.l.b16 %v10771
  %v11473 = vunpack.c.l.b16 %v10772
  %v11474 = vunpack.c.l.b16 %v10773
  %v11475 = vunpack.c.l.b16 %v10774
  %v11476 = vunpack.c.l.b16 %v10775
  %v11477 = vunpack.c.l.b16 %v10776
  %v11478 = vunpack.c.l.b16 %v10777
  %v11479 = vunpack.c.l.b16 %v10778
  %v11480 = vunpack.c.l.b16 %v10779
  %v11481 = vunpack.c.l.b16 %v10780
  %v11482 = vunpack.c.l.b16 %v10781
  %v11483 = vunpack.c.l.b16 %v10782
  %v11484 = vunpack.c.l.b16 %v10783
  %v11485 = vunpack.c.l.b16 %v10784
  %v11486 = vunpack.c.l.b16 %v10785
  %v11487 = vunpack.c.l.b16 %v10786
  %v11488 = vunpack.c.l.b16 %v10787
  %v11489 = vunpack.c.l.b16 %v10788
  %v11490 = vunpack.c.l.b16 %v10789
  %v11491 = vunpack.c.l.b16 %v10790
  %v11492 = vunpack.c.l.b16 %v10791
  %v11493 = vunpack.c.l.b16 %v10792
  %v11494 = vunpack.c.l.b16 %v10793
  %v11495 = vunpack.c.l.b16 %v10794
  %v11496 = vunpack.c.l.b16 %v10795
  %v11497 = vunpack.c.l.b16 %v10796
  %v11498 = vunpack.c.l.b16 %v10797
  %v11499 = vunpack.c.l.b16 %v10798
  %v11500 = vunpack.c.l.b16 %v10799
  %v11501 = vunpack.c.l.b16 %v10800
  %v11502 = vunpack.c.l.b16 %v10801
  %v11503 = vunpack.c.l.b16 %v10802
  %v11504 = vunpack.c.l.b16 %v10803
  %v11505 = vunpack.c.l.b16 %v10804
  %v11506 = vunpack.c.l.b16 %v10805
  %v11507 = vunpack.c.l.b16 %v10806
  %v11508 = vunpack.c.l.b16 %v10807
  %v11509 = vunpack.c.l.b16 %v10808
  %v11510 = vunpack.c.l.b16 %v10809
  %v11511 = vunpack.c.l.b16 %v10810
  %v11512 = vunpack.c.l.b16 %v10811
  %v11513 = vunpack.c.l.b16 %v10812
  %v11514 = vunpack.c.l.b16 %v10813
  %v11515 = vunpack.c.l.b16 %v10814
  %v11516 = vunpack.c.l.b16 %v10815
  %v11517 = vunpack.c.l.b16 %v10816
  %v11518 = vunpack.c.l.b16 %v10817
  %v11519 = vunpack.c.l.b16 %v10818
  %v11520 = vunpack.c.l.b16 %v10819
  %v11521 = vunpack.c.l.b16 %v10820
  %v11522 = vunpack.c.l.b16 %v10821
  %v11523 = vunpack.c.l.b16 %v10822
  %v11524 = vunpack.c.l.b16 %v10823
  %v11525 = vunpack.c.l.b16 %v10824
  %v11526 = vunpack.c.l.b16 %v10825
  %v11527 = vunpack.c.l.b16 %v10826
  %v11528 = vunpack.c.l.b16 %v10827
  %v11529 = vunpack.c.l.b16 %v10828
  %v11530 = vunpack.c.l.b16 %v10829
  %v11531 = vunpack.c.l.b16 %v10830
  %v11532 = vunpack.c.l.b16 %v10831
  %v11533 = vunpack.c.l.b16 %v10832
  %v11534 = vunpack.c.l.b16 %v10833
  %v11535 = vunpack.c.l.b16 %v10834
  %v11536 = vunpack.c.l.b16 %v10835
  %v11537 = vunpack.c.l.b16 %v10836
  %v11538 = vunpack.c.l.b16 %v10837
  %v11539 = vunpack.c.l.b16 %v10838
  %v11540 = vunpack.c.l.b16 %v10839
  %v11541 = vunpack.c.l.b16 %v10840
  %v11542 = vunpack.c.l.b16 %v10841
  %v11543 = vunpack.c.l.b16 %v10842
  %v11544 = vunpack.c.l.b16 %v10843
  %v11545 = vunpack.c.l.b16 %v10844
  %v11546 = vunpack.c.l.b16 %v10845
  %v11547 = vunpack.c.l.b16 %v10846
  %v11548 = vpack.c.b16 %v11405, %v11404
  %v11549 = vpack.c.b16 %v11407, %v11406
  %v11550 = vpack.c.b16 %v11409, %v11408
  %v11551 = vpack.c.b16 %v11411, %v11410
  %v11552 = vpack.c.b16 %v11413, %v11412
  %v11553 = vpack.c.b16 %v11415, %v11414
  %v11554 = vpack.c.b16 %v11417, %v11416
  %v11555 = vpack.c.b16 %v11419, %v11418
  %v11556 = vpack.c.b16 %v11421, %v11420
  %v11557 = vpack.c.b16 %v11423, %v11422
  %v11558 = vpack.c.b16 %v11425, %v11424
  %v11559 = vpack.c.b16 %v11427, %v11426
  %v11560 = vpack.c.b16 %v11429, %v11428
  %v11561 = vpack.c.b16 %v11431, %v11430
  %v11562 = vpack.c.b16 %v11433, %v11432
  %v11563 = vpack.c.b16 %v11435, %v11434
  %v11564 = vpack.c.b16 %v11437, %v11436
  %v11565 = vpack.c.b16 %v11439, %v11438
  %v11566 = vpack.c.b16 %v11441, %v11440
  %v11567 = vpack.c.b16 %v11443, %v11442
  %v11568 = vpack.c.b16 %v11445, %v11444
  %v11569 = vpack.c.b16 %v11447, %v11446
  %v11570 = vpack.c.b16 %v11449, %v11448
  %v11571 = vpack.c.b16 %v11451, %v11450
  %v11572 = vpack.c.b16 %v11453, %v11452
  %v11573 = vpack.c.b16 %v11455, %v11454
  %v11574 = vpack.c.b16 %v11457, %v11456
  %v11575 = vpack.c.b16 %v11459, %v11458
  %v11576 = vpack.c.b16 %v11461, %v11460
  %v11577 = vpack.c.b16 %v11463, %v11462
  %v11578 = vpack.c.b16 %v11465, %v11464
  %v11579 = vpack.c.b16 %v11467, %v11466
  %v11580 = vpack.c.b16 %v11469, %v11468
  %v11581 = vpack.c.b16 %v11471, %v11470
  %v11582 = vpack.c.b16 %v11473, %v11472
  %v11583 = vpack.c.b16 %v11475, %v11474
  %v11584 = vpack.c.b16 %v11477, %v11476
  %v11585 = vpack.c.b16 %v11479, %v11478
  %v11586 = vpack.c.b16 %v11481, %v11480
  %v11587 = vpack.c.b16 %v11483, %v11482
  %v11588 = vpack.c.b16 %v11485, %v11484
  %v11589 = vpack.c.b16 %v11487, %v11486
  %v11590 = vpack.c.b16 %v11489, %v11488
  %v11591 = vpack.c.b16 %v11491, %v11490
  %v11592 = vpack.c.b16 %v11493, %v11492
  %v11593 = vpack.c.b16 %v11495, %v11494
  %v11594 = vpack.c.b16 %v11497, %v11496
  %v11595 = vpack.c.b16 %v11499, %v11498
  %v11596 = vpack.c.b16 %v11501, %v11500
  %v11597 = vpack.c.b16 %v11503, %v11502
  %v11598 = vpack.c.b16 %v11505, %v11504
  %v11599 = vpack.c.b16 %v11507, %v11506
  %v11600 = vpack.c.b16 %v11509, %v11508
  %v11601 = vpack.c.b16 %v11511, %v11510
  %v11602 = vpack.c.b16 %v11513, %v11512
  %v11603 = vpack.c.b16 %v11515, %v11514
  %v11604 = vpack.c.b16 %v11517, %v11516
  %v11605 = vpack.c.b16 %v11519, %v11518
  %v11606 = vpack.c.b16 %v11521, %v11520
  %v11607 = vpack.c.b16 %v11523, %v11522
  %v11608 = vpack.c.b16 %v11525, %v11524
  %v11609 = vpack.c.b16 %v11527, %v11526
  %v11610 = vpack.c.b16 %v11529, %v11528
  %v11611 = vpack.c.b16 %v11531, %v11530
  %v11612 = vpack.c.b16 %v11533, %v11532
  %v11613 = vpack.c.b16 %v11535, %v11534
  %v11614 = vpack.c.b16 %v11537, %v11536
  %v11615 = vpack.c.b16 %v11539, %v11538
  %v11616 = vpack.c.b16 %v11541, %v11540
  %v11617 = vpack.c.b16 %v11543, %v11542
  %v11618 = vpack.c.b16 %v11545, %v11544
  %v11619 = vpack.c.b16 %v11547, %v11546
  %11692 = vmatprep.subr.bf16.mxu0 0
  %11693 = vmatpush1.bf16.msra.mxu0 %v11548
  %11694 = vmatprep.subr.bf16.mxu0 0
  %11695 = vmatpush1.bf16.msra.mxu0 %v11549
  %11696 = vmatprep.subr.bf16.mxu0 0
  %11697 = vmatpush1.bf16.msra.mxu0 %v11550
  %11698 = vmatprep.subr.bf16.mxu0 0
  %11699 = vmatpush1.bf16.msra.mxu0 %v11551
  %11700 = vmatprep.subr.bf16.mxu0 0
  %11701 = vmatpush1.bf16.msra.mxu0 %v11552
  %11702 = vmatprep.subr.bf16.mxu0 0
  %11703 = vmatpush1.bf16.msra.mxu0 %v11553
  %11704 = vmatprep.subr.bf16.mxu0 0
  %11705 = vmatpush1.bf16.msra.mxu0 %v11554
  %11706 = vmatprep.subr.bf16.mxu0 0
  %11707 = vmatpush1.bf16.msra.mxu0 %v11555
  %11708 = vmatprep.subr.bf16.mxu0 0
  %11709 = vmatpush1.bf16.msra.mxu0 %v11556
  %11710 = vmatprep.subr.bf16.mxu0 0
  %11711 = vmatpush1.bf16.msra.mxu0 %v11557
  %11712 = vmatprep.subr.bf16.mxu0 0
  %11713 = vmatpush1.bf16.msra.mxu0 %v11558
  %11714 = vmatprep.subr.bf16.mxu0 0
  %11715 = vmatpush1.bf16.msra.mxu0 %v11559
  %11716 = vmatprep.subr.bf16.mxu0 0
  %11717 = vmatpush1.bf16.msra.mxu0 %v11560
  %11718 = vmatprep.subr.bf16.mxu0 0
  %11719 = vmatpush1.bf16.msra.mxu0 %v11561
  %11720 = vmatprep.subr.bf16.mxu0 0
  %11721 = vmatpush1.bf16.msra.mxu0 %v11562
  %11722 = vmatprep.subr.bf16.mxu0 0
  %11723 = vmatpush1.bf16.msra.mxu0 %v11563
  %11724 = vmatprep.mubr.bf16.mxu0 %v10859
  %11725 = vmatmul.mubr.bf16.gmra.mrb[0].mxu0 %v10856
  %v11726 = vpop.f32.mrb[0].mxu0
  %v11727 = vadd.f32 %v10852, %v11726
  %v11728 = vpop.f32.mrb[0].mxu0
  %v11729 = vpop.f32.mrb[0].mxu0
  %v11730 = vadd.f32 %v10852, %v11729
  %v11731 = vpop.f32.mrb[0].mxu0
  %11732 = vmatprep.mubr.bf16.mxu0 %v10884
  %11733 = vmatmul.mubr.bf16.gmra.mrb[0].mxu0 %v10882
  %v11734 = vpop.f32.mrb[0].mxu0
  %v11735 = vadd.f32 %v10852, %v11734
  %v11736 = vpop.f32.mrb[0].mxu0
  %v11737 = vpop.f32.mrb[0].mxu0
  %v11738 = vadd.f32 %v10852, %v11737
  %v11739 = vpop.f32.mrb[0].mxu0
  %11740 = vmatprep.mubr.bf16.mxu0 %v10901
  %11741 = vmatmul.mubr.bf16.gmra.mrb[0].mxu0 %v10899
  %v11742 = vpop.f32.mrb[0].mxu0
  %v11743 = vadd.f32 %v10852, %v11742
  %v11744 = vpop.f32.mrb[0].mxu0
  %v11745 = vpop.f32.mrb[0].mxu0
  %v11746 = vadd.f32 %v10852, %v11745
  %v11747 = vpop.f32.mrb[0].mxu0
  %11748 = vmatprep.mubr.bf16.mxu0 %v10916
  %11749 = vmatmul.mubr.bf16.gmra.mrb[0].mxu0 %v10914
  %v11750 = vpop.f32.mrb[0].mxu0
  %v11751 = vadd.f32 %v10852, %v11750
  %v11752 = vpop.f32.mrb[0].mxu0
  %v11753 = vpop.f32.mrb[0].mxu0
  %v11754 = vadd.f32 %v10852, %v11753
  %v11755 = vpop.f32.mrb[0].mxu0
  %11756 = vmatprep.mubr.bf16.mxu0 %v10930
  %11757 = vmatmul.mubr.bf16.gmra.mrb[0].mxu0 %v10928
  %v11758 = vpop.f32.mrb[0].mxu0
  %v11759 = vadd.f32 %v10852, %v11758
  %v11760 = vpop.f32.mrb[0].mxu0
  %v11761 = vpop.f32.mrb[0].mxu0
  %v11762 = vadd.f32 %v10852, %v11761
  %v11763 = vpop.f32.mrb[0].mxu0
  %11764 = vmatprep.mubr.bf16.mxu0 %v10944
  %11765 = vmatmul.mubr.bf16.gmra.mrb[0].mxu0 %v10942
  %v11766 = vpop.f32.mrb[0].mxu0
  %v11767 = vadd.f32 %v10852, %v11766
  %v11768 = vpop.f32.mrb[0].mxu0
  %v11769 = vpop.f32.mrb[0].mxu0
  %v11770 = vadd.f32 %v10852, %v11769
  %v11771 = vpop.f32.mrb[0].mxu0
  %11772 = vmatprep.mubr.bf16.mxu0 %v10958
  %11773 = vmatmul.mubr.bf16.gmra.mrb[0].mxu0 %v10956
  %v11774 = vpop.f32.mrb[0].mxu0
  %v11775 = vadd.f32 %v10852, %v11774
  %v11776 = vpop.f32.mrb[0].mxu0
  %v11777 = vpop.f32.mrb[0].mxu0
  %v11778 = vadd.f32 %v10852, %v11777
  %v11779 = vpop.f32.mrb[0].mxu0
  %11780 = vmatprep.mubr.bf16.mxu0 %v10972
  %11781 = vmatmul.mubr.bf16.gmra.mrb[0].mxu0 %v10970
  %v11782 = vpop.f32.mrb[0].mxu0
  %v11783 = vadd.f32 %v10852, %v11782
  %v11784 = vpop.f32.mrb[0].mxu0
  %v11785 = vpop.f32.mrb[0].mxu0
  %v11786 = vadd.f32 %v10852, %v11785
  %v11787 = vpop.f32.mrb[0].mxu0
  %11788 = vmatprep.mubr.bf16.mxu0 %v10986
  %11789 = vmatmul.mubr.bf16.gmra.mrb[0].mxu0 %v10984
  %v11790 = vpop.f32.mrb[0].mxu0
  %v11791 = vadd.f32 %v10852, %v11790
  %v11792 = vpop.f32.mrb[0].mxu0
  %v11793 = vpop.f32.mrb[0].mxu0
  %v11794 = vadd.f32 %v10852, %v11793
  %v11795 = vpop.f32.mrb[0].mxu0
  %11796 = vmatprep.mubr.bf16.mxu0 %v11000
  %11797 = vmatmul.mubr.bf16.gmra.mrb[0].mxu0 %v10998
  %v11798 = vpop.f32.mrb[0].mxu0
  %v11799 = vadd.f32 %v10852, %v11798
  %v11800 = vpop.f32.mrb[0].mxu0
  %v11801 = vpop.f32.mrb[0].mxu0
  %v11802 = vadd.f32 %v10852, %v11801
  %v11803 = vpop.f32.mrb[0].mxu0
  %11804 = vmatprep.mubr.bf16.mxu0 %v11014
  %11805 = vmatmul.mubr.bf16.gmra.mrb[0].mxu0 %v11012
  %v11806 = vpop.f32.mrb[0].mxu0
  %v11807 = vadd.f32 %v10852, %v11806
  %v11808 = vpop.f32.mrb[0].mxu0
  %v11809 = vpop.f32.mrb[0].mxu0
  %v11810 = vadd.f32 %v10852, %v11809
  %v11811 = vpop.f32.mrb[0].mxu0
  %11812 = vmatprep.mubr.bf16.mxu0 %v11028
  %11813 = vmatmul.mubr.bf16.gmra.mrb[0].mxu0 %v11026
  %v11814 = vpop.f32.mrb[0].mxu0
  %v11815 = vadd.f32 %v10852, %v11814
  %v11816 = vpop.f32.mrb[0].mxu0
  %v11817 = vpop.f32.mrb[0].mxu0
  %v11818 = vadd.f32 %v10852, %v11817
  %v11819 = vpop.f32.mrb[0].mxu0
  %11820 = vmatprep.mubr.bf16.mxu0 %v11042
  %11821 = vmatmul.mubr.bf16.gmra.mrb[0].mxu0 %v11040
  %v11822 = vpop.f32.mrb[0].mxu0
  %v11823 = vadd.f32 %v10852, %v11822
  %v11824 = vpop.f32.mrb[0].mxu0
  %v11825 = vpop.f32.mrb[0].mxu0
  %v11826 = vadd.f32 %v10852, %v11825
  %v11827 = vpop.f32.mrb[0].mxu0
  %11828 = vmatprep.mubr.bf16.mxu0 %v11056
  %11829 = vmatmul.mubr.bf16.gmra.mrb[0].mxu0 %v11054
  %v11830 = vpop.f32.mrb[0].mxu0
  %v11831 = vadd.f32 %v10852, %v11830
  %v11832 = vpop.f32.mrb[0].mxu0
  %v11833 = vpop.f32.mrb[0].mxu0
  %v11834 = vadd.f32 %v10852, %v11833
  %v11835 = vpop.f32.mrb[0].mxu0
  %11836 = vmatprep.mubr.bf16.mxu0 %v11070
  %11837 = vmatmul.mubr.bf16.gmra.mrb[0].mxu0 %v11068
  %v11838 = vpop.f32.mrb[0].mxu0
  %v11839 = vadd.f32 %v10852, %v11838
  %v11840 = vpop.f32.mrb[0].mxu0
  %v11841 = vpop.f32.mrb[0].mxu0
  %v11842 = vadd.f32 %v10852, %v11841
  %v11843 = vpop.f32.mrb[0].mxu0
  %11844 = vmatprep.mubr.bf16.mxu0 %v11084
  %11845 = vmatmul.mubr.bf16.gmra.mrb[0].mxu0 %v11082
  %v11846 = vpop.f32.mrb[0].mxu0
  %v11847 = vadd.f32 %v10852, %v11846
  %v11848 = vpop.f32.mrb[0].mxu0
  %v11849 = vpop.f32.mrb[0].mxu0
  %v11850 = vadd.f32 %v10852, %v11849
  %v11851 = vpop.f32.mrb[0].mxu0
  %11852 = vmatprep.mubr.bf16.mxu0 %v11098
  %11853 = vmatmul.mubr.bf16.gmra.mrb[0].mxu0 %v11096
  %v11854 = vpop.f32.mrb[0].mxu0
  %v11855 = vadd.f32 %v10852, %v11854
  %v11856 = vpop.f32.mrb[0].mxu0
  %v11857 = vpop.f32.mrb[0].mxu0
  %v11858 = vadd.f32 %v10852, %v11857
  %v11859 = vpop.f32.mrb[0].mxu0
  %11860 = vmatprep.mubr.bf16.mxu0 %v11112
  %11861 = vmatmul.mubr.bf16.gmra.mrb[0].mxu0 %v11110
  %v11862 = vpop.f32.mrb[0].mxu0
  %v11863 = vadd.f32 %v10852, %v11862
  %v11864 = vpop.f32.mrb[0].mxu0
  %v11865 = vpop.f32.mrb[0].mxu0
  %v11866 = vadd.f32 %v10852, %v11865
  %v11867 = vpop.f32.mrb[0].mxu0
  %11868 = vdwg.mxu0
  %11869 = vmatprep.subr.bf16.mxu0 0
  %11870 = vmatpush1.bf16.msra.mxu0 %v11564
  %11871 = vmatprep.subr.bf16.mxu0 0
  %11872 = vmatpush1.bf16.msra.mxu0 %v11565
  %11873 = vmatprep.subr.bf16.mxu0 0
  %11874 = vmatpush1.bf16.msra.mxu0 %v11566
  %11875 = vmatprep.subr.bf16.mxu0 0
  %11876 = vmatpush1.bf16.msra.mxu0 %v11567
  %11877 = vmatprep.subr.bf16.mxu0 0
  %11878 = vmatpush1.bf16.msra.mxu0 %v11568
  %11879 = vmatprep.subr.bf16.mxu0 0
  %11880 = vmatpush1.bf16.msra.mxu0 %v11569
  %11881 = vmatprep.subr.bf16.mxu0 0
  %11882 = vmatpush1.bf16.msra.mxu0 %v11570
  %11883 = vmatprep.subr.bf16.mxu0 0
  %11884 = vmatpush1.bf16.msra.mxu0 %v11571
  %11885 = vmatprep.subr.bf16.mxu0 0
  %11886 = vmatpush1.bf16.msra.mxu0 %v11572
  %11887 = vmatprep.subr.bf16.mxu0 0
  %11888 = vmatpush1.bf16.msra.mxu0 %v11573
  %11889 = vmatprep.subr.bf16.mxu0 0
  %11890 = vmatpush1.bf16.msra.mxu0 %v11574
  %11891 = vmatprep.subr.bf16.mxu0 0
  %11892 = vmatpush1.bf16.msra.mxu0 %v11575
  %11893 = vmatprep.subr.bf16.mxu0 0
  %11894 = vmatpush1.bf16.msra.mxu0 %v11576
  %11895 = vmatprep.subr.bf16.mxu0 0
  %11896 = vmatpush1.bf16.msra.mxu0 %v11577
  %11897 = vmatprep.subr.bf16.mxu0 0
  %11898 = vmatpush1.bf16.msra.mxu0 %v11578
  %11899 = vmatprep.subr.bf16.mxu0 0
  %11900 = vmatpush1.bf16.msra.mxu0 %v11579
  %11901 = vmatprep.mubr.bf16.mxu0 %v10865
  %11902 = vmatmul.mubr.bf16.gmra.mrb[0].mxu0 %v10862
  %v11903 = vpop.f32.mrb[0].mxu0
  %v11904 = vadd.f32 %v11727, %v11903
  %v11905 = vpop.f32.mrb[0].mxu0
  %v11906 = vpop.f32.mrb[0].mxu0
  %v11907 = vadd.f32 %v11730, %v11906
  %v11908 = vpop.f32.mrb[0].mxu0
  %11909 = vmatprep.mubr.bf16.mxu0 %v10887
  %11910 = vmatmul.mubr.bf16.gmra.mrb[0].mxu0 %v10885
  %v11911 = vpop.f32.mrb[0].mxu0
  %v11912 = vadd.f32 %v11735, %v11911
  %v11913 = vpop.f32.mrb[0].mxu0
  %v11914 = vpop.f32.mrb[0].mxu0
  %v11915 = vadd.f32 %v11738, %v11914
  %v11916 = vpop.f32.mrb[0].mxu0
  %11917 = vmatprep.mubr.bf16.mxu0 %v10903
  %11918 = vmatmul.mubr.bf16.gmra.mrb[0].mxu0 %v10887
  %v11919 = vpop.f32.mrb[0].mxu0
  %v11920 = vadd.f32 %v11743, %v11919
  %v11921 = vpop.f32.mrb[0].mxu0
  %v11922 = vpop.f32.mrb[0].mxu0
  %v11923 = vadd.f32 %v11746, %v11922
  %v11924 = vpop.f32.mrb[0].mxu0
  %11925 = vmatprep.mubr.bf16.mxu0 %v10918
  %11926 = vmatmul.mubr.bf16.gmra.mrb[0].mxu0 %v10903
  %v11927 = vpop.f32.mrb[0].mxu0
  %v11928 = vadd.f32 %v11751, %v11927
  %v11929 = vpop.f32.mrb[0].mxu0
  %v11930 = vpop.f32.mrb[0].mxu0
  %v11931 = vadd.f32 %v11754, %v11930
  %v11932 = vpop.f32.mrb[0].mxu0
  %11933 = vmatprep.mubr.bf16.mxu0 %v10932
  %11934 = vmatmul.mubr.bf16.gmra.mrb[0].mxu0 %v10918
  %v11935 = vpop.f32.mrb[0].mxu0
  %v11936 = vadd.f32 %v11759, %v11935
  %v11937 = vpop.f32.mrb[0].mxu0
  %v11938 = vpop.f32.mrb[0].mxu0
  %v11939 = vadd.f32 %v11762, %v11938
  %v11940 = vpop.f32.mrb[0].mxu0
  %11941 = vmatprep.mubr.bf16.mxu0 %v10946
  %11942 = vmatmul.mubr.bf16.gmra.mrb[0].mxu0 %v10932
  %v11943 = vpop.f32.mrb[0].mxu0
  %v11944 = vadd.f32 %v11767, %v11943
  %v11945 = vpop.f32.mrb[0].mxu0
  %v11946 = vpop.f32.mrb[0].mxu0
  %v11947 = vadd.f32 %v11770, %v11946
  %v11948 = vpop.f32.mrb[0].mxu0
  %11949 = vmatprep.mubr.bf16.mxu0 %v10960
  %11950 = vmatmul.mubr.bf16.gmra.mrb[0].mxu0 %v10946
  %v11951 = vpop.f32.mrb[0].mxu0
  %v11952 = vadd.f32 %v11775, %v11951
  %v11953 = vpop.f32.mrb[0].mxu0
  %v11954 = vpop.f32.mrb[0].mxu0
  %v11955 = vadd.f32 %v11778, %v11954
  %v11956 = vpop.f32.mrb[0].mxu0
  %11957 = vmatprep.mubr.bf16.mxu0 %v10974
  %11958 = vmatmul.mubr.bf16.gmra.mrb[0].mxu0 %v10960
  %v11959 = vpop.f32.mrb[0].mxu0
  %v11960 = vadd.f32 %v11783, %v11959
  %v11961 = vpop.f32.mrb[0].mxu0
  %v11962 = vpop.f32.mrb[0].mxu0
  %v11963 = vadd.f32 %v11786, %v11962
  %v11964 = vpop.f32.mrb[0].mxu0
  %11965 = vmatprep.mubr.bf16.mxu0 %v10988
  %11966 = vmatmul.mubr.bf16.gmra.mrb[0].mxu0 %v10974
  %v11967 = vpop.f32.mrb[0].mxu0
  %v11968 = vadd.f32 %v11791, %v11967
  %v11969 = vpop.f32.mrb[0].mxu0
  %v11970 = vpop.f32.mrb[0].mxu0
  %v11971 = vadd.f32 %v11794, %v11970
  %v11972 = vpop.f32.mrb[0].mxu0
  %11973 = vmatprep.mubr.bf16.mxu0 %v11002
  %11974 = vmatmul.mubr.bf16.gmra.mrb[0].mxu0 %v10988
  %v11975 = vpop.f32.mrb[0].mxu0
  %v11976 = vadd.f32 %v11799, %v11975
  %v11977 = vpop.f32.mrb[0].mxu0
  %v11978 = vpop.f32.mrb[0].mxu0
  %v11979 = vadd.f32 %v11802, %v11978
  %v11980 = vpop.f32.mrb[0].mxu0
  %11981 = vmatprep.mubr.bf16.mxu0 %v11016
  %11982 = vmatmul.mubr.bf16.gmra.mrb[0].mxu0 %v11002
  %v11983 = vpop.f32.mrb[0].mxu0
  %v11984 = vadd.f32 %v11807, %v11983
  %v11985 = vpop.f32.mrb[0].mxu0
  %v11986 = vpop.f32.mrb[0].mxu0
  %v11987 = vadd.f32 %v11810, %v11986
  %v11988 = vpop.f32.mrb[0].mxu0
  %11989 = vmatprep.mubr.bf16.mxu0 %v11030
  %11990 = vmatmul.mubr.bf16.gmra.mrb[0].mxu0 %v11016
  %v11991 = vpop.f32.mrb[0].mxu0
  %v11992 = vadd.f32 %v11815, %v11991
  %v11993 = vpop.f32.mrb[0].mxu0
  %v11994 = vpop.f32.mrb[0].mxu0
  %v11995 = vadd.f32 %v11818, %v11994
  %v11996 = vpop.f32.mrb[0].mxu0
  %11997 = vmatprep.mubr.bf16.mxu0 %v11044
  %11998 = vmatmul.mubr.bf16.gmra.mrb[0].mxu0 %v11030
  %v11999 = vpop.f32.mrb[0].mxu0
  %v12000 = vadd.f32 %v11823, %v11999
  %v12001 = vpop.f32.mrb[0].mxu0
  %v12002 = vpop.f32.mrb[0].mxu0
  %v12003 = vadd.f32 %v11826, %v12002
  %v12004 = vpop.f32.mrb[0].mxu0
  %12005 = vmatprep.mubr.bf16.mxu0 %v11058
  %12006 = vmatmul.mubr.bf16.gmra.mrb[0].mxu0 %v11044
  %v12007 = vpop.f32.mrb[0].mxu0
  %v12008 = vadd.f32 %v11831, %v12007
  %v12009 = vpop.f32.mrb[0].mxu0
  %v12010 = vpop.f32.mrb[0].mxu0
  %v12011 = vadd.f32 %v11834, %v12010
  %v12012 = vpop.f32.mrb[0].mxu0
  %12013 = vmatprep.mubr.bf16.mxu0 %v11072
  %12014 = vmatmul.mubr.bf16.gmra.mrb[0].mxu0 %v11058
  %v12015 = vpop.f32.mrb[0].mxu0
  %v12016 = vadd.f32 %v11839, %v12015
  %v12017 = vpop.f32.mrb[0].mxu0
  %v12018 = vpop.f32.mrb[0].mxu0
  %v12019 = vadd.f32 %v11842, %v12018
  %v12020 = vpop.f32.mrb[0].mxu0
  %12021 = vmatprep.mubr.bf16.mxu0 %v11086
  %12022 = vmatmul.mubr.bf16.gmra.mrb[0].mxu0 %v11072
  %v12023 = vpop.f32.mrb[0].mxu0
  %v12024 = vadd.f32 %v11847, %v12023
  %v12025 = vpop.f32.mrb[0].mxu0
  %v12026 = vpop.f32.mrb[0].mxu0
  %v12027 = vadd.f32 %v11850, %v12026
  %v12028 = vpop.f32.mrb[0].mxu0
  %12029 = vmatprep.mubr.bf16.mxu0 %v11100
  %12030 = vmatmul.mubr.bf16.gmra.mrb[0].mxu0 %v11086
  %v12031 = vpop.f32.mrb[0].mxu0
  %v12032 = vadd.f32 %v11855, %v12031
  %v12033 = vpop.f32.mrb[0].mxu0
  %v12034 = vpop.f32.mrb[0].mxu0
  %v12035 = vadd.f32 %v11858, %v12034
  %v12036 = vpop.f32.mrb[0].mxu0
  %12037 = vmatprep.mubr.bf16.mxu0 %v11116
  %12038 = vmatmul.mubr.bf16.gmra.mrb[0].mxu0 %v11114
  %v12039 = vpop.f32.mrb[0].mxu0
  %v12040 = vadd.f32 %v11863, %v12039
  %v12041 = vpop.f32.mrb[0].mxu0
  %v12042 = vpop.f32.mrb[0].mxu0
  %v12043 = vadd.f32 %v11866, %v12042
  %v12044 = vpop.f32.mrb[0].mxu0
  %12045 = vdwg.mxu0
  %12046 = vmatprep.subr.bf16.mxu0 0
  %12047 = vmatpush1.bf16.msra.mxu0 %v11580
  %12048 = vmatprep.subr.bf16.mxu0 0
  %12049 = vmatpush1.bf16.msra.mxu0 %v11581
  %12050 = vmatprep.subr.bf16.mxu0 0
  %12051 = vmatpush1.bf16.msra.mxu0 %v11582
  %12052 = vmatprep.subr.bf16.mxu0 0
  %12053 = vmatpush1.bf16.msra.mxu0 %v11583
  %12054 = vmatprep.subr.bf16.mxu0 0
  %12055 = vmatpush1.bf16.msra.mxu0 %v11584
  %12056 = vmatprep.subr.bf16.mxu0 0
  %12057 = vmatpush1.bf16.msra.mxu0 %v11585
  %12058 = vmatprep.subr.bf16.mxu0 0
  %12059 = vmatpush1.bf16.msra.mxu0 %v11586
  %12060 = vmatprep.subr.bf16.mxu0 0
  %12061 = vmatpush1.bf16.msra.mxu0 %v11587
  %12062 = vmatprep.subr.bf16.mxu0 0
  %12063 = vmatpush1.bf16.msra.mxu0 %v11588
  %12064 = vmatprep.subr.bf16.mxu0 0
  %12065 = vmatpush1.bf16.msra.mxu0 %v11589
  %12066 = vmatprep.subr.bf16.mxu0 0
  %12067 = vmatpush1.bf16.msra.mxu0 %v11590
  %12068 = vmatprep.subr.bf16.mxu0 0
  %12069 = vmatpush1.bf16.msra.mxu0 %v11591
  %12070 = vmatprep.subr.bf16.mxu0 0
  %12071 = vmatpush1.bf16.msra.mxu0 %v11592
  %12072 = vmatprep.subr.bf16.mxu0 0
  %12073 = vmatpush1.bf16.msra.mxu0 %v11593
  %12074 = vmatprep.subr.bf16.mxu0 0
  %12075 = vmatpush1.bf16.msra.mxu0 %v11594
  %12076 = vmatprep.subr.bf16.mxu0 0
  %12077 = vmatpush1.bf16.msra.mxu0 %v11595
  %12078 = vmatprep.mubr.bf16.mxu0 %v10871
  %12079 = vmatmul.mubr.bf16.gmra.mrb[0].mxu0 %v10868
  %v12080 = vpop.f32.mrb[0].mxu0
  %v12081 = vadd.f32 %v11904, %v12080
  %v12082 = vpop.f32.mrb[0].mxu0
  %v12083 = vpop.f32.mrb[0].mxu0
  %v12084 = vadd.f32 %v11907, %v12083
  %v12085 = vpop.f32.mrb[0].mxu0
  %12086 = vmatprep.mubr.bf16.mxu0 %v10891
  %12087 = vmatmul.mubr.bf16.gmra.mrb[0].mxu0 %v10889
  %v12088 = vpop.f32.mrb[0].mxu0
  %v12089 = vadd.f32 %v11912, %v12088
  %v12090 = vpop.f32.mrb[0].mxu0
  %v12091 = vpop.f32.mrb[0].mxu0
  %v12092 = vadd.f32 %v11915, %v12091
  %v12093 = vpop.f32.mrb[0].mxu0
  %12094 = vmatprep.mubr.bf16.mxu0 %v10906
  %12095 = vmatmul.mubr.bf16.gmra.mrb[0].mxu0 %v10905
  %v12096 = vpop.f32.mrb[0].mxu0
  %v12097 = vadd.f32 %v11920, %v12096
  %v12098 = vpop.f32.mrb[0].mxu0
  %v12099 = vpop.f32.mrb[0].mxu0
  %v12100 = vadd.f32 %v11923, %v12099
  %v12101 = vpop.f32.mrb[0].mxu0
  %12102 = vmatprep.mubr.bf16.mxu0 %v10908
  %12103 = vmatmul.mubr.bf16.gmra.mrb[0].mxu0 %v10920
  %v12104 = vpop.f32.mrb[0].mxu0
  %v12105 = vadd.f32 %v11928, %v12104
  %v12106 = vpop.f32.mrb[0].mxu0
  %v12107 = vpop.f32.mrb[0].mxu0
  %v12108 = vadd.f32 %v11931, %v12107
  %v12109 = vpop.f32.mrb[0].mxu0
  %12110 = vmatprep.mubr.bf16.mxu0 %v10922
  %12111 = vmatmul.mubr.bf16.gmra.mrb[0].mxu0 %v10934
  %v12112 = vpop.f32.mrb[0].mxu0
  %v12113 = vadd.f32 %v11936, %v12112
  %v12114 = vpop.f32.mrb[0].mxu0
  %v12115 = vpop.f32.mrb[0].mxu0
  %v12116 = vadd.f32 %v11939, %v12115
  %v12117 = vpop.f32.mrb[0].mxu0
  %12118 = vmatprep.mubr.bf16.mxu0 %v10936
  %12119 = vmatmul.mubr.bf16.gmra.mrb[0].mxu0 %v10948
  %v12120 = vpop.f32.mrb[0].mxu0
  %v12121 = vadd.f32 %v11944, %v12120
  %v12122 = vpop.f32.mrb[0].mxu0
  %v12123 = vpop.f32.mrb[0].mxu0
  %v12124 = vadd.f32 %v11947, %v12123
  %v12125 = vpop.f32.mrb[0].mxu0
  %12126 = vmatprep.mubr.bf16.mxu0 %v10950
  %12127 = vmatmul.mubr.bf16.gmra.mrb[0].mxu0 %v10962
  %v12128 = vpop.f32.mrb[0].mxu0
  %v12129 = vadd.f32 %v11952, %v12128
  %v12130 = vpop.f32.mrb[0].mxu0
  %v12131 = vpop.f32.mrb[0].mxu0
  %v12132 = vadd.f32 %v11955, %v12131
  %v12133 = vpop.f32.mrb[0].mxu0
  %12134 = vmatprep.mubr.bf16.mxu0 %v10964
  %12135 = vmatmul.mubr.bf16.gmra.mrb[0].mxu0 %v10976
  %v12136 = vpop.f32.mrb[0].mxu0
  %v12137 = vadd.f32 %v11960, %v12136
  %v12138 = vpop.f32.mrb[0].mxu0
  %v12139 = vpop.f32.mrb[0].mxu0
  %v12140 = vadd.f32 %v11963, %v12139
  %v12141 = vpop.f32.mrb[0].mxu0
  %12142 = vmatprep.mubr.bf16.mxu0 %v10978
  %12143 = vmatmul.mubr.bf16.gmra.mrb[0].mxu0 %v10990
  %v12144 = vpop.f32.mrb[0].mxu0
  %v12145 = vadd.f32 %v11968, %v12144
  %v12146 = vpop.f32.mrb[0].mxu0
  %v12147 = vpop.f32.mrb[0].mxu0
  %v12148 = vadd.f32 %v11971, %v12147
  %v12149 = vpop.f32.mrb[0].mxu0
  %12150 = vmatprep.mubr.bf16.mxu0 %v10992
  %12151 = vmatmul.mubr.bf16.gmra.mrb[0].mxu0 %v11004
  %v12152 = vpop.f32.mrb[0].mxu0
  %v12153 = vadd.f32 %v11976, %v12152
  %v12154 = vpop.f32.mrb[0].mxu0
  %v12155 = vpop.f32.mrb[0].mxu0
  %v12156 = vadd.f32 %v11979, %v12155
  %v12157 = vpop.f32.mrb[0].mxu0
  %12158 = vmatprep.mubr.bf16.mxu0 %v11006
  %12159 = vmatmul.mubr.bf16.gmra.mrb[0].mxu0 %v11018
  %v12160 = vpop.f32.mrb[0].mxu0
  %v12161 = vadd.f32 %v11984, %v12160
  %v12162 = vpop.f32.mrb[0].mxu0
  %v12163 = vpop.f32.mrb[0].mxu0
  %v12164 = vadd.f32 %v11987, %v12163
  %v12165 = vpop.f32.mrb[0].mxu0
  %12166 = vmatprep.mubr.bf16.mxu0 %v11020
  %12167 = vmatmul.mubr.bf16.gmra.mrb[0].mxu0 %v11032
  %v12168 = vpop.f32.mrb[0].mxu0
  %v12169 = vadd.f32 %v11992, %v12168
  %v12170 = vpop.f32.mrb[0].mxu0
  %v12171 = vpop.f32.mrb[0].mxu0
  %v12172 = vadd.f32 %v11995, %v12171
  %v12173 = vpop.f32.mrb[0].mxu0
  %12174 = vmatprep.mubr.bf16.mxu0 %v11034
  %12175 = vmatmul.mubr.bf16.gmra.mrb[0].mxu0 %v11046
  %v12176 = vpop.f32.mrb[0].mxu0
  %v12177 = vadd.f32 %v12000, %v12176
  %v12178 = vpop.f32.mrb[0].mxu0
  %v12179 = vpop.f32.mrb[0].mxu0
  %v12180 = vadd.f32 %v12003, %v12179
  %v12181 = vpop.f32.mrb[0].mxu0
  %12182 = vmatprep.mubr.bf16.mxu0 %v11048
  %12183 = vmatmul.mubr.bf16.gmra.mrb[0].mxu0 %v11060
  %v12184 = vpop.f32.mrb[0].mxu0
  %v12185 = vadd.f32 %v12008, %v12184
  %v12186 = vpop.f32.mrb[0].mxu0
  %v12187 = vpop.f32.mrb[0].mxu0
  %v12188 = vadd.f32 %v12011, %v12187
  %v12189 = vpop.f32.mrb[0].mxu0
  %12190 = vmatprep.mubr.bf16.mxu0 %v11062
  %12191 = vmatmul.mubr.bf16.gmra.mrb[0].mxu0 %v11074
  %v12192 = vpop.f32.mrb[0].mxu0
  %v12193 = vadd.f32 %v12016, %v12192
  %v12194 = vpop.f32.mrb[0].mxu0
  %v12195 = vpop.f32.mrb[0].mxu0
  %v12196 = vadd.f32 %v12019, %v12195
  %v12197 = vpop.f32.mrb[0].mxu0
  %12198 = vmatprep.mubr.bf16.mxu0 %v11076
  %12199 = vmatmul.mubr.bf16.gmra.mrb[0].mxu0 %v11088
  %v12200 = vpop.f32.mrb[0].mxu0
  %v12201 = vadd.f32 %v12024, %v12200
  %v12202 = vpop.f32.mrb[0].mxu0
  %v12203 = vpop.f32.mrb[0].mxu0
  %v12204 = vadd.f32 %v12027, %v12203
  %v12205 = vpop.f32.mrb[0].mxu0
  %12206 = vmatprep.mubr.bf16.mxu0 %v11090
  %12207 = vmatmul.mubr.bf16.gmra.mrb[0].mxu0 %v11102
  %v12208 = vpop.f32.mrb[0].mxu0
  %v12209 = vadd.f32 %v12032, %v12208
  %v12210 = vpop.f32.mrb[0].mxu0
  %v12211 = vpop.f32.mrb[0].mxu0
  %v12212 = vadd.f32 %v12035, %v12211
  %v12213 = vpop.f32.mrb[0].mxu0
  %12214 = vmatprep.mubr.bf16.mxu0 %v11120
  %12215 = vmatmul.mubr.bf16.gmra.mrb[0].mxu0 %v11118
  %v12216 = vpop.f32.mrb[0].mxu0
  %v12217 = vadd.f32 %v12040, %v12216
  %v12218 = vpop.f32.mrb[0].mxu0
  %v12219 = vpop.f32.mrb[0].mxu0
  %v12220 = vadd.f32 %v12043, %v12219
  %v12221 = vpop.f32.mrb[0].mxu0
  %12222 = vdwg.mxu0
  %12223 = vmatprep.subr.bf16.mxu0 0
  %12224 = vmatpush1.bf16.msra.mxu0 %v11596
  %12225 = vmatprep.subr.bf16.mxu0 0
  %12226 = vmatpush1.bf16.msra.mxu0 %v11597
  %12227 = vmatprep.subr.bf16.mxu0 0
  %12228 = vmatpush1.bf16.msra.mxu0 %v11598
  %12229 = vmatprep.subr.bf16.mxu0 0
  %12230 = vmatpush1.bf16.msra.mxu0 %v11599
  %12231 = vmatprep.subr.bf16.mxu0 0
  %12232 = vmatpush1.bf16.msra.mxu0 %v11600
  %12233 = vmatprep.subr.bf16.mxu0 0
  %12234 = vmatpush1.bf16.msra.mxu0 %v11601
  %12235 = vmatprep.subr.bf16.mxu0 0
  %12236 = vmatpush1.bf16.msra.mxu0 %v11602
  %12237 = vmatprep.subr.bf16.mxu0 0
  %12238 = vmatpush1.bf16.msra.mxu0 %v11603
  %12239 = vmatprep.subr.bf16.mxu0 0
  %12240 = vmatpush1.bf16.msra.mxu0 %v11604
  %12241 = vmatprep.subr.bf16.mxu0 0
  %12242 = vmatpush1.bf16.msra.mxu0 %v11605
  %12243 = vmatprep.subr.bf16.mxu0 0
  %12244 = vmatpush1.bf16.msra.mxu0 %v11606
  %12245 = vmatprep.subr.bf16.mxu0 0
  %12246 = vmatpush1.bf16.msra.mxu0 %v11607
  %12247 = vmatprep.subr.bf16.mxu0 0
  %12248 = vmatpush1.bf16.msra.mxu0 %v11608
  %12249 = vmatprep.subr.bf16.mxu0 0
  %12250 = vmatpush1.bf16.msra.mxu0 %v11609
  %12251 = vmatprep.subr.bf16.mxu0 0
  %12252 = vmatpush1.bf16.msra.mxu0 %v11610
  %12253 = vmatprep.subr.bf16.mxu0 0
  %12254 = vmatpush1.bf16.msra.mxu0 %v11611
  %12255 = vmatprep.mubr.bf16.mxu0 %v10877
  %12256 = vmatmul.mubr.bf16.gmra.mrb[0].mxu0 %v10874
  %v12257 = vpop.f32.mrb[0].mxu0
  %v12258 = vadd.f32 %v12081, %v12257
  %v12259 = vpop.f32.mrb[0].mxu0
  %v12260 = vpop.f32.mrb[0].mxu0
  %v12261 = vadd.f32 %v12084, %v12260
  %v12262 = vpop.f32.mrb[0].mxu0
  %12263 = vmatprep.mubr.bf16.mxu0 %v10895
  %12264 = vmatmul.mubr.bf16.gmra.mrb[0].mxu0 %v10893
  %v12265 = vpop.f32.mrb[0].mxu0
  %v12266 = vadd.f32 %v12089, %v12265
  %v12267 = vpop.f32.mrb[0].mxu0
  %v12268 = vpop.f32.mrb[0].mxu0
  %v12269 = vadd.f32 %v12092, %v12268
  %v12270 = vpop.f32.mrb[0].mxu0
  %12271 = vmatprep.mubr.bf16.mxu0 %v10910
  %12272 = vmatmul.mubr.bf16.gmra.mrb[0].mxu0 %v10908
  %v12273 = vpop.f32.mrb[0].mxu0
  %v12274 = vadd.f32 %v12097, %v12273
  %v12275 = vpop.f32.mrb[0].mxu0
  %v12276 = vpop.f32.mrb[0].mxu0
  %v12277 = vadd.f32 %v12100, %v12276
  %v12278 = vpop.f32.mrb[0].mxu0
  %12279 = vmatprep.mubr.bf16.mxu0 %v10924
  %12280 = vmatmul.mubr.bf16.gmra.mrb[0].mxu0 %v10922
  %v12281 = vpop.f32.mrb[0].mxu0
  %v12282 = vadd.f32 %v12105, %v12281
  %v12283 = vpop.f32.mrb[0].mxu0
  %v12284 = vpop.f32.mrb[0].mxu0
  %v12285 = vadd.f32 %v12108, %v12284
  %v12286 = vpop.f32.mrb[0].mxu0
  %12287 = vmatprep.mubr.bf16.mxu0 %v10938
  %12288 = vmatmul.mubr.bf16.gmra.mrb[0].mxu0 %v10936
  %v12289 = vpop.f32.mrb[0].mxu0
  %v12290 = vadd.f32 %v12113, %v12289
  %v12291 = vpop.f32.mrb[0].mxu0
  %v12292 = vpop.f32.mrb[0].mxu0
  %v12293 = vadd.f32 %v12116, %v12292
  %v12294 = vpop.f32.mrb[0].mxu0
  %12295 = vmatprep.mubr.bf16.mxu0 %v10952
  %12296 = vmatmul.mubr.bf16.gmra.mrb[0].mxu0 %v10950
  %v12297 = vpop.f32.mrb[0].mxu0
  %v12298 = vadd.f32 %v12121, %v12297
  %v12299 = vpop.f32.mrb[0].mxu0
  %v12300 = vpop.f32.mrb[0].mxu0
  %v12301 = vadd.f32 %v12124, %v12300
  %v12302 = vpop.f32.mrb[0].mxu0
  %12303 = vmatprep.mubr.bf16.mxu0 %v10966
  %12304 = vmatmul.mubr.bf16.gmra.mrb[0].mxu0 %v10964
  %v12305 = vpop.f32.mrb[0].mxu0
  %v12306 = vadd.f32 %v12129, %v12305
  %v12307 = vpop.f32.mrb[0].mxu0
  %v12308 = vpop.f32.mrb[0].mxu0
  %v12309 = vadd.f32 %v12132, %v12308
  %v12310 = vpop.f32.mrb[0].mxu0
  %12311 = vmatprep.mubr.bf16.mxu0 %v10980
  %12312 = vmatmul.mubr.bf16.gmra.mrb[0].mxu0 %v10978
  %v12313 = vpop.f32.mrb[0].mxu0
  %v12314 = vadd.f32 %v12137, %v12313
  %v12315 = vpop.f32.mrb[0].mxu0
  %v12316 = vpop.f32.mrb[0].mxu0
  %v12317 = vadd.f32 %v12140, %v12316
  %v12318 = vpop.f32.mrb[0].mxu0
  %12319 = vmatprep.mubr.bf16.mxu0 %v10994
  %12320 = vmatmul.mubr.bf16.gmra.mrb[0].mxu0 %v10992
  %v12321 = vpop.f32.mrb[0].mxu0
  %v12322 = vadd.f32 %v12145, %v12321
  %v12323 = vpop.f32.mrb[0].mxu0
  %v12324 = vpop.f32.mrb[0].mxu0
  %v12325 = vadd.f32 %v12148, %v12324
  %v12326 = vpop.f32.mrb[0].mxu0
  %12327 = vmatprep.mubr.bf16.mxu0 %v11008
  %12328 = vmatmul.mubr.bf16.gmra.mrb[0].mxu0 %v11006
  %v12329 = vpop.f32.mrb[0].mxu0
  %v12330 = vadd.f32 %v12153, %v12329
  %v12331 = vpop.f32.mrb[0].mxu0
  %v12332 = vpop.f32.mrb[0].mxu0
  %v12333 = vadd.f32 %v12156, %v12332
  %v12334 = vpop.f32.mrb[0].mxu0
  %12335 = vmatprep.mubr.bf16.mxu0 %v11022
  %12336 = vmatmul.mubr.bf16.gmra.mrb[0].mxu0 %v11020
  %v12337 = vpop.f32.mrb[0].mxu0
  %v12338 = vadd.f32 %v12161, %v12337
  %v12339 = vpop.f32.mrb[0].mxu0
  %v12340 = vpop.f32.mrb[0].mxu0
  %v12341 = vadd.f32 %v12164, %v12340
  %v12342 = vpop.f32.mrb[0].mxu0
  %12343 = vmatprep.mubr.bf16.mxu0 %v11036
  %12344 = vmatmul.mubr.bf16.gmra.mrb[0].mxu0 %v11034
  %v12345 = vpop.f32.mrb[0].mxu0
  %v12346 = vadd.f32 %v12169, %v12345
  %v12347 = vpop.f32.mrb[0].mxu0
  %v12348 = vpop.f32.mrb[0].mxu0
  %v12349 = vadd.f32 %v12172, %v12348
  %v12350 = vpop.f32.mrb[0].mxu0
  %12351 = vmatprep.mubr.bf16.mxu0 %v11050
  %12352 = vmatmul.mubr.bf16.gmra.mrb[0].mxu0 %v11048
  %v12353 = vpop.f32.mrb[0].mxu0
  %v12354 = vadd.f32 %v12177, %v12353
  %v12355 = vpop.f32.mrb[0].mxu0
  %v12356 = vpop.f32.mrb[0].mxu0
  %v12357 = vadd.f32 %v12180, %v12356
  %v12358 = vpop.f32.mrb[0].mxu0
  %12359 = vmatprep.mubr.bf16.mxu0 %v11064
  %12360 = vmatmul.mubr.bf16.gmra.mrb[0].mxu0 %v11062
  %v12361 = vpop.f32.mrb[0].mxu0
  %v12362 = vadd.f32 %v12185, %v12361
  %v12363 = vpop.f32.mrb[0].mxu0
  %v12364 = vpop.f32.mrb[0].mxu0
  %v12365 = vadd.f32 %v12188, %v12364
  %v12366 = vpop.f32.mrb[0].mxu0
  %12367 = vmatprep.mubr.bf16.mxu0 %v11078
  %12368 = vmatmul.mubr.bf16.gmra.mrb[0].mxu0 %v11076
  %v12369 = vpop.f32.mrb[0].mxu0
  %v12370 = vadd.f32 %v12193, %v12369
  %v12371 = vpop.f32.mrb[0].mxu0
  %v12372 = vpop.f32.mrb[0].mxu0
  %v12373 = vadd.f32 %v12196, %v12372
  %v12374 = vpop.f32.mrb[0].mxu0
  %12375 = vmatprep.mubr.bf16.mxu0 %v11092
  %12376 = vmatmul.mubr.bf16.gmra.mrb[0].mxu0 %v11090
  %v12377 = vpop.f32.mrb[0].mxu0
  %v12378 = vadd.f32 %v12201, %v12377
  %v12379 = vpop.f32.mrb[0].mxu0
  %v12380 = vpop.f32.mrb[0].mxu0
  %v12381 = vadd.f32 %v12204, %v12380
  %v12382 = vpop.f32.mrb[0].mxu0
  %12383 = vmatprep.mubr.bf16.mxu0 %v11106
  %12384 = vmatmul.mubr.bf16.gmra.mrb[0].mxu0 %v11104
  %v12385 = vpop.f32.mrb[0].mxu0
  %v12386 = vadd.f32 %v12209, %v12385
  %v12387 = vpop.f32.mrb[0].mxu0
  %v12388 = vpop.f32.mrb[0].mxu0
  %v12389 = vadd.f32 %v12212, %v12388
  %v12390 = vpop.f32.mrb[0].mxu0
  %12391 = vmatprep.mubr.bf16.mxu0 %v11124
  %12392 = vmatmul.mubr.bf16.gmra.mrb[0].mxu0 %v11122
  %v12393 = vpop.f32.mrb[0].mxu0
  %v12394 = vadd.f32 %v12217, %v12393
  %v12395 = vpop.f32.mrb[0].mxu0
  %v12396 = vpop.f32.mrb[0].mxu0
  %v12397 = vadd.f32 %v12220, %v12396
  %v12398 = vpop.f32.mrb[0].mxu0
  %12399 = vdwg.mxu0
  %12400 = vmatprep.subr.bf16.mxu0 0
  %12401 = vmatpush1.bf16.msra.mxu0 %v11612
  %12402 = vmatprep.subr.bf16.mxu0 0
  %12403 = vmatpush1.bf16.msra.mxu0 %v11613
  %12404 = vmatprep.subr.bf16.mxu0 0
  %12405 = vmatpush1.bf16.msra.mxu0 %v11614
  %12406 = vmatprep.subr.bf16.mxu0 0
  %12407 = vmatpush1.bf16.msra.mxu0 %v11615
  %12408 = vmatprep.subr.bf16.mxu0 0
  %12409 = vmatpush1.bf16.msra.mxu0 %v11616
  %12410 = vmatprep.subr.bf16.mxu0 0
  %12411 = vmatpush1.bf16.msra.mxu0 %v11617
  %12412 = vmatprep.subr.bf16.mxu0 0
  %12413 = vmatpush1.bf16.msra.mxu0 %v11618
  %12414 = vmatprep.subr.bf16.mxu0 0
  %12415 = vmatpush1.bf16.msra.mxu0 %v11619
  %12416 = vmatprep.subr.bf16.mxu0 0
  %12417 = vmatpush1.bf16.msra.mxu0 0
  %12418 = vmatprep.subr.bf16.mxu0 0
  %12419 = vmatpush1.bf16.msra.mxu0 0
  %12420 = vmatprep.subr.bf16.mxu0 0
  %12421 = vmatpush1.bf16.msra.mxu0 0
  %12422 = vmatprep.subr.bf16.mxu0 0
  %12423 = vmatpush1.bf16.msra.mxu0 0
  %12424 = vmatprep.subr.bf16.mxu0 0
  %12425 = vmatpush1.bf16.msra.mxu0 0
  %12426 = vmatprep.subr.bf16.mxu0 0
  %12427 = vmatpush1.bf16.msra.mxu0 0
  %12428 = vmatprep.subr.bf16.mxu0 0
  %12429 = vmatpush1.bf16.msra.mxu0 0
  %12430 = vmatprep.subr.bf16.mxu0 0
  %12431 = vmatpush1.bf16.msra.mxu0 0
  %12432 = vmatprep.mubr.bf16.mxu0 0
  %12433 = vmatmul.mubr.bf16.gmra.mrb[0].mxu0 %v10880
  %v12434 = vpop.f32.mrb[0].mxu0
  %v12435 = vadd.f32 %v12258, %v12434
  %v12436 = vpop.f32.mrb[0].mxu0
  %v12437 = vpop.f32.mrb[0].mxu0
  %v12438 = vadd.f32 %v12261, %v12437
  %v12439 = vpop.f32.mrb[0].mxu0
  %12440 = vmatprep.mubr.bf16.mxu0 0
  %12441 = vmatmul.mubr.bf16.gmra.mrb[0].mxu0 %v10897
  %v12442 = vpop.f32.mrb[0].mxu0
  %v12443 = vadd.f32 %v12266, %v12442
  %v12444 = vpop.f32.mrb[0].mxu0
  %v12445 = vpop.f32.mrb[0].mxu0
  %v12446 = vadd.f32 %v12269, %v12445
  %v12447 = vpop.f32.mrb[0].mxu0
  %12448 = vmatprep.mubr.bf16.mxu0 0
  %12449 = vmatmul.mubr.bf16.gmra.mrb[0].mxu0 %v10912
  %v12450 = vpop.f32.mrb[0].mxu0
  %v12451 = vadd.f32 %v12274, %v12450
  %v12452 = vpop.f32.mrb[0].mxu0
  %v12453 = vpop.f32.mrb[0].mxu0
  %v12454 = vadd.f32 %v12277, %v12453
  %v12455 = vpop.f32.mrb[0].mxu0
  %12456 = vmatprep.mubr.bf16.mxu0 0
  %12457 = vmatmul.mubr.bf16.gmra.mrb[0].mxu0 %v10926
  %v12458 = vpop.f32.mrb[0].mxu0
  %v12459 = vadd.f32 %v12282, %v12458
  %v12460 = vpop.f32.mrb[0].mxu0
  %v12461 = vpop.f32.mrb[0].mxu0
  %v12462 = vadd.f32 %v12285, %v12461
  %v12463 = vpop.f32.mrb[0].mxu0
  %12464 = vmatprep.mubr.bf16.mxu0 0
  %12465 = vmatmul.mubr.bf16.gmra.mrb[0].mxu0 %v10940
  %v12466 = vpop.f32.mrb[0].mxu0
  %v12467 = vadd.f32 %v12290, %v12466
  %v12468 = vpop.f32.mrb[0].mxu0
  %v12469 = vpop.f32.mrb[0].mxu0
  %v12470 = vadd.f32 %v12293, %v12469
  %v12471 = vpop.f32.mrb[0].mxu0
  %12472 = vmatprep.mubr.bf16.mxu0 0
  %12473 = vmatmul.mubr.bf16.gmra.mrb[0].mxu0 %v10954
  %v12474 = vpop.f32.mrb[0].mxu0
  %v12475 = vadd.f32 %v12298, %v12474
  %v12476 = vpop.f32.mrb[0].mxu0
  %v12477 = vpop.f32.mrb[0].mxu0
  %v12478 = vadd.f32 %v12301, %v12477
  %v12479 = vpop.f32.mrb[0].mxu0
  %12480 = vmatprep.mubr.bf16.mxu0 0
  %12481 = vmatmul.mubr.bf16.gmra.mrb[0].mxu0 %v10968
  %v12482 = vpop.f32.mrb[0].mxu0
  %v12483 = vadd.f32 %v12306, %v12482
  %v12484 = vpop.f32.mrb[0].mxu0
  %v12485 = vpop.f32.mrb[0].mxu0
  %v12486 = vadd.f32 %v12309, %v12485
  %v12487 = vpop.f32.mrb[0].mxu0
  %12488 = vmatprep.mubr.bf16.mxu0 0
  %12489 = vmatmul.mubr.bf16.gmra.mrb[0].mxu0 %v10982
  %v12490 = vpop.f32.mrb[0].mxu0
  %v12491 = vadd.f32 %v12314, %v12490
  %v12492 = vpop.f32.mrb[0].mxu0
  %v12493 = vpop.f32.mrb[0].mxu0
  %v12494 = vadd.f32 %v12317, %v12493
  %v12495 = vpop.f32.mrb[0].mxu0
  %12496 = vmatprep.mubr.bf16.mxu0 0
  %12497 = vmatmul.mubr.bf16.gmra.mrb[0].mxu0 %v10996
  %v12498 = vpop.f32.mrb[0].mxu0
  %v12499 = vadd.f32 %v12322, %v12498
  %v12500 = vpop.f32.mrb[0].mxu0
  %v12501 = vpop.f32.mrb[0].mxu0
  %v12502 = vadd.f32 %v12325, %v12501
  %v12503 = vpop.f32.mrb[0].mxu0
  %12504 = vmatprep.mubr.bf16.mxu0 0
  %12505 = vmatmul.mubr.bf16.gmra.mrb[0].mxu0 %v11010
  %v12506 = vpop.f32.mrb[0].mxu0
  %v12507 = vadd.f32 %v12330, %v12506
  %v12508 = vpop.f32.mrb[0].mxu0
  %v12509 = vpop.f32.mrb[0].mxu0
  %v12510 = vadd.f32 %v12333, %v12509
  %v12511 = vpop.f32.mrb[0].mxu0
  %12512 = vmatprep.mubr.bf16.mxu0 0
  %12513 = vmatmul.mubr.bf16.gmra.mrb[0].mxu0 %v11024
  %v12514 = vpop.f32.mrb[0].mxu0
  %v12515 = vadd.f32 %v12338, %v12514
  %v12516 = vpop.f32.mrb[0].mxu0
  %v12517 = vpop.f32.mrb[0].mxu0
  %v12518 = vadd.f32 %v12341, %v12517
  %v12519 = vpop.f32.mrb[0].mxu0
  %12520 = vmatprep.mubr.bf16.mxu0 0
  %12521 = vmatmul.mubr.bf16.gmra.mrb[0].mxu0 %v11038
  %v12522 = vpop.f32.mrb[0].mxu0
  %v12523 = vadd.f32 %v12346, %v12522
  %v12524 = vpop.f32.mrb[0].mxu0
  %v12525 = vpop.f32.mrb[0].mxu0
  %v12526 = vadd.f32 %v12349, %v12525
  %v12527 = vpop.f32.mrb[0].mxu0
  %12528 = vmatprep.mubr.bf16.mxu0 0
  %12529 = vmatmul.mubr.bf16.gmra.mrb[0].mxu0 %v11052
  %v12530 = vpop.f32.mrb[0].mxu0
  %v12531 = vadd.f32 %v12354, %v12530
  %v12532 = vpop.f32.mrb[0].mxu0
  %v12533 = vpop.f32.mrb[0].mxu0
  %v12534 = vadd.f32 %v12357, %v12533
  %v12535 = vpop.f32.mrb[0].mxu0
  %12536 = vmatprep.mubr.bf16.mxu0 0
  %12537 = vmatmul.mubr.bf16.gmra.mrb[0].mxu0 %v11066
  %v12538 = vpop.f32.mrb[0].mxu0
  %v12539 = vadd.f32 %v12362, %v12538
  %v12540 = vpop.f32.mrb[0].mxu0
  %v12541 = vpop.f32.mrb[0].mxu0
  %v12542 = vadd.f32 %v12365, %v12541
  %v12543 = vpop.f32.mrb[0].mxu0
  %12544 = vmatprep.mubr.bf16.mxu0 0
  %12545 = vmatmul.mubr.bf16.gmra.mrb[0].mxu0 %v11080
  %v12546 = vpop.f32.mrb[0].mxu0
  %v12547 = vadd.f32 %v12370, %v12546
  %v12548 = vpop.f32.mrb[0].mxu0
  %v12549 = vpop.f32.mrb[0].mxu0
  %v12550 = vadd.f32 %v12373, %v12549
  %v12551 = vpop.f32.mrb[0].mxu0
  %12552 = vmatprep.mubr.bf16.mxu0 0
  %12553 = vmatmul.mubr.bf16.gmra.mrb[0].mxu0 %v11094
  %v12554 = vpop.f32.mrb[0].mxu0
  %v12555 = vadd.f32 %v12378, %v12554
  %v12556 = vpop.f32.mrb[0].mxu0
  %v12557 = vpop.f32.mrb[0].mxu0
  %v12558 = vadd.f32 %v12381, %v12557
  %v12559 = vpop.f32.mrb[0].mxu0
  %12560 = vmatprep.mubr.bf16.mxu0 0
  %12561 = vmatmul.mubr.bf16.gmra.mrb[0].mxu0 %v11108
  %v12562 = vpop.f32.mrb[0].mxu0
  %v12563 = vadd.f32 %v12386, %v12562
  %v12564 = vpop.f32.mrb[0].mxu0
  %v12565 = vpop.f32.mrb[0].mxu0
  %v12566 = vadd.f32 %v12389, %v12565
  %v12567 = vpop.f32.mrb[0].mxu0
  %12568 = vmatprep.mubr.bf16.mxu0 0
  %12569 = vmatmul.mubr.bf16.gmra.mrb[0].mxu0 %v11126
  %v12570 = vpop.f32.mrb[0].mxu0
  %v12571 = vadd.f32 %v12394, %v12570
  %v12572 = vpop.f32.mrb[0].mxu0
  %v12573 = vpop.f32.mrb[0].mxu0
  %v12574 = vadd.f32 %v12397, %v12573
  %v12575 = vpop.f32.mrb[0].mxu0
  %12576 = vdwg.mxu0
  %v12577 = vadd.f32 %v12435, %v9845
  %v12578 = vadd.f32 %v12438, %v9848
  %v12579 = vadd.f32 %v12443, %v9853
  %v12580 = vadd.f32 %v12446, %v9856
  %v12581 = vadd.f32 %v12451, %v9861
  %v12582 = vadd.f32 %v12454, %v9864
  %v12583 = vadd.f32 %v12459, %v9869
  %v12584 = vadd.f32 %v12462, %v9872
  %v12585 = vadd.f32 %v12467, %v9877
  %v12586 = vadd.f32 %v12470, %v9880
  %v12587 = vadd.f32 %v12475, %v9885
  %v12588 = vadd.f32 %v12478, %v9888
  %v12589 = vadd.f32 %v12483, %v9893
  %v12590 = vadd.f32 %v12486, %v9896
  %v12591 = vadd.f32 %v12491, %v9901
  %v12592 = vadd.f32 %v12494, %v9904
  %v12593 = vadd.f32 %v12499, %v9909
  %v12594 = vadd.f32 %v12502, %v9912
  %v12595 = vadd.f32 %v12507, %v9917
  %v12596 = vadd.f32 %v12510, %v9920
  %v12597 = vadd.f32 %v12515, %v9925
  %v12598 = vadd.f32 %v12518, %v9928
  %v12599 = vadd.f32 %v12523, %v9933
  %v12600 = vadd.f32 %v12526, %v9936
  %v12601 = vadd.f32 %v12531, %v9941
  %v12602 = vadd.f32 %v12534, %v9944
  %v12603 = vadd.f32 %v12539, %v9949
  %v12604 = vadd.f32 %v12542, %v9952
  %v12605 = vadd.f32 %v12547, %v9957
  %v12606 = vadd.f32 %v12550, %v9960
  %v12607 = vadd.f32 %v12555, %v9965
  %v12608 = vadd.f32 %v12558, %v9968
  %v12609 = vadd.f32 %v12563, %v9973
  %v12610 = vadd.f32 %v12566, %v9976
  %v12611 = vadd.f32 %v12571, %v9981
  %v12612 = vadd.f32 %v12574, %v9984
  %v12613 = vmax.f32 %v12577, 0.0
  %v12614 = vmax.f32 %v12578, 0.0
  %v12615 = vmax.f32 %v12579, 0.0
  %v12616 = vmax.f32 %v12580, 0.0
  %v12617 = vmax.f32 %v12581, 0.0
  %v12618 = vmax.f32 %v12582, 0.0
  %v12619 = vmax.f32 %v12583, 0.0
  %v12620 = vmax.f32 %v12584, 0.0
  %v12621 = vmax.f32 %v12585, 0.0
  %v12622 = vmax.f32 %v12586, 0.0
  %v12623 = vmax.f32 %v12587, 0.0
  %v12624 = vmax.f32 %v12588, 0.0
  %v12625 = vmax.f32 %v12589, 0.0
  %v12626 = vmax.f32 %v12590, 0.0
  %v12627 = vmax.f32 %v12591, 0.0
  %v12628 = vmax.f32 %v12592, 0.0
  %v12629 = vmax.f32 %v12593, 0.0
  %v12630 = vmax.f32 %v12594, 0.0
  %v12631 = vmax.f32 %v12595, 0.0
  %v12632 = vmax.f32 %v12596, 0.0
  %v12633 = vmax.f32 %v12597, 0.0
  %v12634 = vmax.f32 %v12598, 0.0
  %v12635 = vmax.f32 %v12599, 0.0
  %v12636 = vmax.f32 %v12600, 0.0
  %v12637 = vmax.f32 %v12601, 0.0
  %v12638 = vmax.f32 %v12602, 0.0
  %v12639 = vmax.f32 %v12603, 0.0
  %v12640 = vmax.f32 %v12604, 0.0
  %v12641 = vmax.f32 %v12605, 0.0
  %v12642 = vmax.f32 %v12606, 0.0
  %v12643 = vmax.f32 %v12607, 0.0
  %v12644 = vmax.f32 %v12608, 0.0
  %v12645 = vmax.f32 %v12609, 0.0
  %v12646 = vmax.f32 %v12610, 0.0
  %v12647 = vmax.f32 %v12611, 0.0
  %v12648 = vmax.f32 %v12612, 0.0
  %12649 = vst [vmem:[%s7 + $0x120] sm:$0xff] %v12613
  %12650 = vst [vmem:[%s7 + $0x128] sm:$0xff] %v12614
  %12651 = vst [vmem:[%s7 + $0x130] sm:$0xff] %v12615
  %12652 = vst [vmem:[%s7 + $0x138] sm:$0xff] %v12616
  %12653 = vst [vmem:[%s7 + $0x140] sm:$0xff] %v12617
  %12654 = vst [vmem:[%s7 + $0x148] sm:$0xff] %v12618
  %12655 = vst [vmem:[%s7 + $0x150] sm:$0xff] %v12619
  %12656 = vst [vmem:[%s7 + $0x158] sm:$0xff] %v12620
  %12657 = vst [vmem:[%s7 + $0x160] sm:$0xff] %v12621
  %12658 = vst [vmem:[%s7 + $0x168] sm:$0xff] %v12622
  %12659 = vst [vmem:[%s7 + $0x170] sm:$0xff] %v12623
  %12660 = vst [vmem:[%s7 + $0x178] sm:$0xff] %v12624
  %12661 = vst [vmem:[%s7 + $0x180] sm:$0xff] %v12625
  %12662 = vst [vmem:[%s7 + $0x188] sm:$0xff] %v12626
  %12663 = vst [vmem:[%s7 + $0x190] sm:$0xff] %v12627
  %12664 = vst [vmem:[%s7 + $0x198] sm:$0xff] %v12628
  %12665 = vst [vmem:[%s7 + $0x1a0] sm:$0xff] %v12629
  %12666 = vst [vmem:[%s7 + $0x1a8] sm:$0xff] %v12630
  %12667 = vst [vmem:[%s7 + $0x1b0] sm:$0xff] %v12631
  %12668 = vst [vmem:[%s7 + $0x1b8] sm:$0xff] %v12632
  %12669 = vst [vmem:[%s7 + $0x1c0] sm:$0xff] %v12633
  %12670 = vst [vmem:[%s7 + $0x1c8] sm:$0xff] %v12634
  %12671 = vst [vmem:[%s7 + $0x1d0] sm:$0xff] %v12635
  %12672 = vst [vmem:[%s7 + $0x1d8] sm:$0xff] %v12636
  %12673 = vst [vmem:[%s7 + $0x1e0] sm:$0xff] %v12637
  %12674 = vst [vmem:[%s7 + $0x1e8] sm:$0xff] %v12638
  %12675 = vst [vmem:[%s7 + $0x1f0] sm:$0xff] %v12639
  %12676 = vst [vmem:[%s7 + $0x1f8] sm:$0xff] %v12640
  %12677 = vst [vmem:[%s7 + $0x200] sm:$0xff] %v12641
  %12678 = vst [vmem:[%s7 + $0x208] sm:$0xff] %v12642
  %12679 = vst [vmem:[%s7 + $0x210] sm:$0xff] %v12643
  %12680 = vst [vmem:[%s7 + $0x218] sm:$0xff] %v12644
  %12681 = vst [vmem:[%s7 + $0x220] sm:$0xff] %v12645
  %12682 = vst [vmem:[%s7 + $0x228] sm:$0xff] %v12646
  %12683 = vst [vmem:[%s7 + $0x230] sm:$0xff] %v12647
  %12684 = vst [vmem:[%s7 + $0x238] sm:$0xff] %v12648
  // Predicated region
  $region30: #{modified_basic_block.1} parent=0 // pred_check
    _
  $region31: #{modified_basic_block.1} parent=0 // pred_check_branch
    %12686 = sbr.rel (0) target = $region33
  $region32: #{modified_basic_block.1} parent=0 // pred_region
    _
  $region33: #{modified_basic_block.1} parent=0 // pred_fallthru
    _
  // Predicated region
  $region34: #{modified_basic_block.1} parent=0 // pred_check
    _
  $region35: #{modified_basic_block.1} parent=0 // pred_check_branch
    %12688 = sbr.rel (0) target = $region37
  $region36: #{modified_basic_block.1} parent=0 // pred_region
    _
  $region37: #{modified_basic_block.1} parent=0 // pred_fallthru
    _

</llo_original>
